<compile_context>
chip_gen: v5e
topology: v5e:2x2
jax: 0.10.0
libtpu: 0.0.40
codegen_flags: <defaults>
</compile_context>

<pallas_src>
import jax
import jax.numpy as jnp
import numpy as np
from jax.experimental import pallas as pl
from jax.experimental.pallas import tpu as pltpu

# ----------------------------------------------------------------------------
# Model dimensions
# ----------------------------------------------------------------------------
C_IN, C_OUT = 4, 8
H = W = 16
FEAT_IN = C_IN * H * W        # 1024  flattened input features, (c, i, j) order
FEAT_A = C_OUT * H * W        # 2048  flattened conv features, (o, i, j) = PyTorch flatten order
BOT, NCLS = 32, 10
EPS = 1e-5


def _round_up(x, m):
    return (x + m - 1) // m * m


# ----------------------------------------------------------------------------
# Fused kernel: modelA (conv+BN+ReLU) -> modelB (Linear+BN+ReLU) -> modelC
# ----------------------------------------------------------------------------
def _merge_kernel(x_ref, wa_ref, sa_ref, wb_ref, sb_ref, wc_ref, bc_ref, o_ref):
    """One grid step = TB samples.

    x_ref : (TB, FEAT_IN)      bf16, unpadded NCHW-flattened inputs
    wa_ref: (FEAT_IN, FEAT_A)  bf16, dense conv matrix (3x3 structure + BN-A scale folded)
    sa_ref: (1, FEAT_A)        f32,  BN-A shift (conv bias / mean / beta folded)
    wb_ref: (BOT, FEAT_A)      bf16, bottleneck weight, lane-dense, BN-B scale folded
    sb_ref: (1, BOT)           f32,  BN-B shift
    wc_ref: (BOT, NCLS)        f32,  classifier weight (pre-transposed)
    bc_ref: (1, NCLS)          f32,  classifier bias
    o_ref : (TB, NCLS)         f32 logits
    """
    # ---- modelA: conv (+BN2d +ReLU) as ONE M=TB matmul vs. the dense conv matrix
    a = jnp.dot(x_ref[...], wa_ref[...], preferred_element_type=jnp.float32)
    a = jnp.maximum(a + sa_ref[...], 0.0).astype(jnp.bfloat16)       # (TB, FEAT_A)

    # ---- modelB: Linear + BN1d + ReLU as ONE "NT" matmul (contract lane axes,
    #      keeps wb lane-dense, accumulation stays inside the MXU)
    h = jax.lax.dot_general(a, wb_ref[...],
                            dimension_numbers=(((1,), (1,)), ((), ())),
                            preferred_element_type=jnp.float32)      # (TB, BOT)
    h = jnp.maximum(h + sb_ref[...], 0.0)

    # ---- modelC: Linear
    o_ref[...] = (jnp.dot(h, wc_ref[...], preferred_element_type=jnp.float32)
                  + bc_ref[...]).astype(o_ref.dtype)


# ----------------------------------------------------------------------------
# One-time parameter preparation (BN(eval) folding + conv -> dense matrix)
# ----------------------------------------------------------------------------
def prepare_params(p):
    # modelA: fold BN2d scale into the conv weight, then build the dense
    # (FEAT_IN, FEAT_A) matrix correct-by-construction as the Jacobian of the
    # (linear) scaled conv: apply the conv to the 1024 one-hot basis images.
    # Row p = flattened input feature (c,i,j), col f = flattened output (o,i,j)
    # in exactly PyTorch's NCHW flatten order, so WB needs no reindexing.
    sA = p["gA"] / jnp.sqrt(p["varA"] + EPS)                       # (C_OUT,)
    waS = p["wA"] * sA[:, None, None, None]                        # (C_OUT,C_IN,3,3)
    eye = jnp.eye(FEAT_IN, dtype=jnp.float32).reshape(FEAT_IN, C_IN, H, W)
    cols = jax.lax.conv_general_dilated(
        eye, waS, (1, 1), "SAME",
        dimension_numbers=("NCHW", "OIHW", "NCHW"),
        precision=jax.lax.Precision.HIGHEST)
    wa_dense = cols.reshape(FEAT_IN, FEAT_A)                       # (1024, 2048)
    shiftA = sA * (p["bA"] - p["muA"]) + p["betaA"]                # (C_OUT,)
    sa_row = jnp.repeat(shiftA, H * W)[None, :]                    # (1, 2048)

    # modelB: fold BN1d scale into WB; keep PyTorch (out,in) orientation which
    # is already lane-dense (long axis last) for the in-kernel NT contraction.
    sB = p["gB"] / jnp.sqrt(p["varB"] + EPS)                       # (BOT,)
    wb = (p["WB"] * sB[:, None]).astype(jnp.bfloat16)              # (32, 2048)
    shiftB = (sB * (p["bB"] - p["muB"]) + p["betaB"])[None, :]     # (1, 32)

    return dict(wa=wa_dense.astype(jnp.bfloat16), sa=sa_row,
                wb=wb, sb=shiftB,
                wc=p["WC"].T.astype(jnp.float32),                  # (32, 10)
                bc=p["bC"][None, :].astype(jnp.float32))           # (1, 10)


# ----------------------------------------------------------------------------
# Forward (single batch-blocked pallas_call)
# ----------------------------------------------------------------------------
def merge_models_forward(x, q):
    """x: (N, C_IN, H, W) f32 NCHW; q: prepare_params(...) output."""
    N = x.shape[0]
    xf = x.reshape(N, FEAT_IN).astype(jnp.bfloat16)                # unpadded, bf16

    # Batch tile: 256 (multiple of the 256-wide v6e/v7x MXU and of v5e's 128)
    # when there is enough work, otherwise one step covering the whole batch.
    TB = 256 if N > 256 else _round_up(N, 8)
    Npad = _round_up(N, TB)
    if Npad != N:
        xf = jnp.pad(xf, ((0, Npad - N), (0, 0)))
    G = Npad // TB

    # v7x megacore: shard the batch axis only when there are >= 2 grid steps.
    dims = ("parallel",) if G >= 2 else ("arbitrary",)

    out = pl.pallas_call(
        _merge_kernel,
        out_shape=jax.ShapeDtypeStruct((Npad, NCLS), jnp.float32),
        grid_spec=pltpu.PrefetchScalarGridSpec(
            num_scalar_prefetch=0,
            grid=(G,),
            in_specs=[
                pl.BlockSpec((TB, FEAT_IN), lambda g: (g, 0)),     # x (streams)
                pl.BlockSpec((FEAT_IN, FEAT_A), lambda g: (0, 0)),  # wa (loaded once)
                pl.BlockSpec((1, FEAT_A), lambda g: (0, 0)),        # sa
                pl.BlockSpec((BOT, FEAT_A), lambda g: (0, 0)),      # wb
                pl.BlockSpec((1, BOT), lambda g: (0, 0)),           # sb
                pl.BlockSpec((BOT, NCLS), lambda g: (0, 0)),        # wc
                pl.BlockSpec((1, NCLS), lambda g: (0, 0)),          # bc
            ],
            out_specs=pl.BlockSpec((TB, NCLS), lambda g: (g, 0)),
        ),
        compiler_params=pltpu.CompilerParams(dimension_semantics=dims),
    )(xf, q["wa"], q["sa"], q["wb"], q["sb"], q["wc"], q["bc"])
    return out[:N]


# ----------------------------------------------------------------------------
# Pure-JAX f32 reference (lax.conv, HIGHEST precision) for correctness check
# ----------------------------------------------------------------------------
def reference_forward(x, p, eps=EPS):
    N = x.shape[0]
    hp = jax.lax.Precision.HIGHEST
    conv = jax.lax.conv_general_dilated(
        x, p["wA"], (1, 1), "SAME",
        dimension_numbers=("NCHW", "OIHW", "NCHW"), precision=hp,
    ) + p["bA"][None, :, None, None]
    conv = (conv - p["muA"][None, :, None, None]) / jnp.sqrt(p["varA"] + eps)[None, :, None, None]
    conv = conv * p["gA"][None, :, None, None] + p["betaA"][None, :, None, None]
    a = jnp.maximum(conv, 0.0)
    feat = a.reshape(N, -1)
    h = jnp.dot(feat, p["WB"].T, precision=hp) + p["bB"]
    h = (h - p["muB"]) / jnp.sqrt(p["varB"] + eps) * p["gB"] + p["betaB"]
    h = jnp.maximum(h, 0.0)
    return jnp.dot(h, p["WC"].T, precision=hp) + p["bC"]


# ----------------------------------------------------------------------------
def init_params(key):
    ks = jax.random.split(key, 12)
    feat_dim = C_OUT * H * W
    return dict(
        wA=0.1 * jax.random.normal(ks[0], (C_OUT, C_IN, 3, 3), jnp.float32),
        bA=0.1 * jax.random.normal(ks[1], (C_OUT,), jnp.float32),
        gA=1.0 + 0.1 * jax.random.normal(ks[2], (C_OUT,), jnp.float32),
        betaA=0.1 * jax.random.normal(ks[3], (C_OUT,), jnp.float32),
        muA=0.1 * jax.random.normal(ks[4], (C_OUT,), jnp.float32),
        varA=1.0 + 0.1 * jax.random.uniform(ks[5], (C_OUT,), jnp.float32),
        WB=0.05 * jax.random.normal(ks[6], (BOT, feat_dim), jnp.float32),
        bB=0.1 * jax.random.normal(ks[7], (BOT,), jnp.float32),
        gB=1.0 + 0.1 * jax.random.normal(ks[8], (BOT,), jnp.float32),
        betaB=0.1 * jax.random.normal(ks[9], (BOT,), jnp.float32),
        muB=jnp.zeros((BOT,), jnp.float32),
        varB=jnp.ones((BOT,), jnp.float32),
        WC=0.1 * jax.random.normal(ks[10], (NCLS, BOT), jnp.float32),
        bC=0.1 * jax.random.normal(ks[11], (NCLS,), jnp.float32),
    )


if __name__ == "__main__":
    key = jax.random.PRNGKey(0)
    kx, kp = jax.random.split(key)
    x = jax.random.normal(kx, (2, C_IN, H, W), jnp.float32)   # NCHW, like PyTorch
    params = init_params(kp)

    prepared = jax.tree_util.tree_map(jax.block_until_ready, prepare_params(params))
    fwd = jax.jit(merge_models_forward)

    out = jax.block_until_ready(fwd(x, prepared))
    ref = jax.block_until_ready(reference_forward(x, params))

    assert out.shape == (2, NCLS), out.shape
    # Kernel runs bf16 operands with f32 MXU accumulation vs. an f32/HIGHEST
    # reference on O(1) outputs -> bf16-operand-level tolerance.
    np.testing.assert_allclose(np.asarray(out), np.asarray(ref), rtol=2e-2, atol=2e-2)
    print("KERNEL_OK")
</pallas_src>

<mosaic_0001>
module attributes {stable_mosaic.version = 11 : i64} {
  func.func @_merge_kernel(%arg0: i32, %arg1: memref<8x1024xbf16, #tpu.memory_space<vmem>>, %arg2: memref<1024x2048xbf16, #tpu.memory_space<vmem>>, %arg3: memref<1x2048xf32, #tpu.memory_space<vmem>>, %arg4: memref<32x2048xbf16, #tpu.memory_space<vmem>>, %arg5: memref<1x32xf32, #tpu.memory_space<vmem>>, %arg6: memref<32x10xf32, #tpu.memory_space<vmem>>, %arg7: memref<1x10xf32, #tpu.memory_space<vmem>>, %arg8: memref<8x10xf32, #tpu.memory_space<vmem>>) attributes {dimension_semantics = [#tpu.dimension_semantics<arbitrary>], iteration_bounds = array<i64: 1>, scalar_prefetch = 0 : i64, scratch_operands = 0 : i64, tpu.core_type = #tpu.core_type<tc>, window_params = [{transform_indices = @transform_0, window_bounds = array<i64: 8, 1024>}, {pipeline_mode = #tpu.pipeline_mode<synchronous>, transform_indices = @transform_1, window_bounds = array<i64: 1024, 2048>}, {pipeline_mode = #tpu.pipeline_mode<synchronous>, transform_indices = @transform_2, window_bounds = array<i64: 1, 2048>}, {pipeline_mode = #tpu.pipeline_mode<synchronous>, transform_indices = @transform_3, window_bounds = array<i64: 32, 2048>}, {pipeline_mode = #tpu.pipeline_mode<synchronous>, transform_indices = @transform_4, window_bounds = array<i64: 1, 32>}, {pipeline_mode = #tpu.pipeline_mode<synchronous>, transform_indices = @transform_5, window_bounds = array<i64: 32, 10>}, {pipeline_mode = #tpu.pipeline_mode<synchronous>, transform_indices = @transform_6, window_bounds = array<i64: 1, 10>}, {transform_indices = @transform_7, window_bounds = array<i64: 8, 10>}]} {
    %c0 = arith.constant 0 : index
    %c0_0 = arith.constant 0 : index
    %0 = vector.load %arg1[%c0, %c0_0] : memref<8x1024xbf16, #tpu.memory_space<vmem>>, vector<8x1024xbf16>
    %c0_1 = arith.constant 0 : index
    %c0_2 = arith.constant 0 : index
    %1 = vector.load %arg2[%c0_1, %c0_2] : memref<1024x2048xbf16, #tpu.memory_space<vmem>>, vector<1024x2048xbf16>
    %cst = arith.constant dense<0.000000e+00> : vector<8x2048xf32>
    %2 = tpu.matmul %0, %1, %cst {dimension_numbers = #tpu.dot_dimension_numbers<[1], [0], [0], [1], [0, 0, 1, 1], [], []>} : vector<8x1024xbf16>, vector<1024x2048xbf16>, vector<8x2048xf32> -> vector<8x2048xf32>
    %c0_3 = arith.constant 0 : index
    %c0_4 = arith.constant 0 : index
    %3 = vector.load %arg3[%c0_3, %c0_4] : memref<1x2048xf32, #tpu.memory_space<vmem>>, vector<1x2048xf32>
    %4 = vector.broadcast %3 : vector<1x2048xf32> to vector<8x2048xf32>
    %5 = arith.addf %2, %4 : vector<8x2048xf32>
    %cst_5 = arith.constant 0.000000e+00 : f32
    %6 = vector.broadcast %cst_5 : f32 to vector<8x2048xf32>
    %7 = arith.maximumf %5, %6 : vector<8x2048xf32>
    %8 = arith.truncf %7 : vector<8x2048xf32> to vector<8x2048xbf16>
    %c0_6 = arith.constant 0 : index
    %c0_7 = arith.constant 0 : index
    %9 = vector.load %arg4[%c0_6, %c0_7] : memref<32x2048xbf16, #tpu.memory_space<vmem>>, vector<32x2048xbf16>
    %cst_8 = arith.constant dense<0.000000e+00> : vector<8x32xf32>
    %10 = tpu.matmul %8, %9, %cst_8 {dimension_numbers = #tpu.dot_dimension_numbers<[1], [1], [0], [0], [0, 0, 1, 0], [], []>} : vector<8x2048xbf16>, vector<32x2048xbf16>, vector<8x32xf32> -> vector<8x32xf32>
    %c0_9 = arith.constant 0 : index
    %c0_10 = arith.constant 0 : index
    %11 = vector.load %arg5[%c0_9, %c0_10] : memref<1x32xf32, #tpu.memory_space<vmem>>, vector<1x32xf32>
    %12 = vector.broadcast %11 : vector<1x32xf32> to vector<8x32xf32>
    %13 = arith.addf %10, %12 : vector<8x32xf32>
    %cst_11 = arith.constant 0.000000e+00 : f32
    %14 = vector.broadcast %cst_11 : f32 to vector<8x32xf32>
    %15 = arith.maximumf %13, %14 : vector<8x32xf32>
    %c0_12 = arith.constant 0 : index
    %c0_13 = arith.constant 0 : index
    %16 = vector.load %arg6[%c0_12, %c0_13] : memref<32x10xf32, #tpu.memory_space<vmem>>, vector<32x10xf32>
    %cst_14 = arith.constant dense<0.000000e+00> : vector<8x10xf32>
    %17 = tpu.matmul %15, %16, %cst_14 {dimension_numbers = #tpu.dot_dimension_numbers<[1], [0], [0], [1], [0, 0, 1, 1], [], []>} : vector<8x32xf32>, vector<32x10xf32>, vector<8x10xf32> -> vector<8x10xf32>
    %c0_15 = arith.constant 0 : index
    %c0_16 = arith.constant 0 : index
    %18 = vector.load %arg7[%c0_15, %c0_16] : memref<1x10xf32, #tpu.memory_space<vmem>>, vector<1x10xf32>
    %19 = vector.broadcast %18 : vector<1x10xf32> to vector<8x10xf32>
    %20 = arith.addf %17, %19 : vector<8x10xf32>
    %c0_17 = arith.constant 0 : index
    %c0_18 = arith.constant 0 : index
    %21 = vector.load %arg8[%c0_17, %c0_18] : memref<8x10xf32, #tpu.memory_space<vmem>>, vector<8x10xf32>
    tpu.vector_store %arg8[%c0_17, %c0_18], %20 {strides = array<i32>} : memref<8x10xf32, #tpu.memory_space<vmem>>, vector<8x10xf32>,
    return
  }
  func.func @transform_0(%arg0: i32) -> (i32, i32) {
    %c0_i32 = arith.constant 0 : i32
    %c0_i32_0 = arith.constant 0 : i32
    return %arg0, %c0_i32 : i32, i32
  }
  func.func @transform_1(%arg0: i32) -> (i32, i32) {
    %c0_i32 = arith.constant 0 : i32
    %c0_i32_0 = arith.constant 0 : i32
    %c0_i32_1 = arith.constant 0 : i32
    return %c0_i32, %c0_i32_0 : i32, i32
  }
  func.func @transform_2(%arg0: i32) -> (i32, i32) {
    %c0_i32 = arith.constant 0 : i32
    %c0_i32_0 = arith.constant 0 : i32
    %c0_i32_1 = arith.constant 0 : i32
    return %c0_i32, %c0_i32_0 : i32, i32
  }
  func.func @transform_3(%arg0: i32) -> (i32, i32) {
    %c0_i32 = arith.constant 0 : i32
    %c0_i32_0 = arith.constant 0 : i32
    %c0_i32_1 = arith.constant 0 : i32
    return %c0_i32, %c0_i32_0 : i32, i32
  }
  func.func @transform_4(%arg0: i32) -> (i32, i32) {
    %c0_i32 = arith.constant 0 : i32
    %c0_i32_0 = arith.constant 0 : i32
    %c0_i32_1 = arith.constant 0 : i32
    return %c0_i32, %c0_i32_0 : i32, i32
  }
  func.func @transform_5(%arg0: i32) -> (i32, i32) {
    %c0_i32 = arith.constant 0 : i32
    %c0_i32_0 = arith.constant 0 : i32
    %c0_i32_1 = arith.constant 0 : i32
    return %c0_i32, %c0_i32_0 : i32, i32
  }
  func.func @transform_6(%arg0: i32) -> (i32, i32) {
    %c0_i32 = arith.constant 0 : i32
    %c0_i32_0 = arith.constant 0 : i32
    %c0_i32_1 = arith.constant 0 : i32
    return %c0_i32, %c0_i32_0 : i32, i32
  }
  func.func @transform_7(%arg0: i32) -> (i32, i32) {
    %c0_i32 = arith.constant 0 : i32
    %c0_i32_0 = arith.constant 0 : i32
    return %arg0, %c0_i32 : i32, i32
  }
}

</mosaic_0001>

<llo_original>
// kernel: merge_models_forward.1
$region0: #{merge_models_forward.1}
  #allocation0 [shape = 'u32[]', space=smem, size = 0x4, offset = 0x4, fixed_abs, tag = 'smem constant byte address 0x4 - core index']
  #allocation1 [shape = 'u32[72,128]{1,0:T(1,128)}', space=vmem, size = 0x9000, scoped, tag = 'internal scratch']
  %s0 = inlined_call_operand.vmem [shape: bf16[8,1024], index: 0, kind: input, shape index: {}]
  %s1 = inlined_call_operand.hbm [shape: bf16[1024,2048], index: 1, kind: input, shape index: {}]
  %s2 = inlined_call_operand.hbm [shape: f32[1,2048], index: 2, kind: input, shape index: {}]
  %s3 = inlined_call_operand.hbm [shape: bf16[32,2048], index: 3, kind: input, shape index: {}]
  %s4 = inlined_call_operand.hbm [shape: f32[1,32], index: 4, kind: input, shape index: {}]
  %s5 = inlined_call_operand.vmem [shape: f32[32,10], index: 5, kind: input, shape index: {}]
  %s6 = inlined_call_operand.hbm [shape: f32[1,10], index: 6, kind: input, shape index: {}]
  %s7 = inlined_call_operand.vmem [shape: f32[8,10], index: 7, kind: output, shape index: {}]
  %s8 = sld [smem:[#allocation0]]
  $region58: #{merge_models_forward.1} parent=0
    _
  %s10 = ssub.s32 1, %s8
  %s11 = scalar_select 0, %s10, %s8
  $region1: #{merge_models_forward.1} parent=0
    #allocation2 [shape = 'u8[4194304]{0}', space=vmem, size = 0x400000, scoped, tag = 'input window, operand 1, single buffered']
    #allocation3 [shape = 's32[1]{0}', space=sflag, size = 0x4, scoped, tag = 'scoped memory for merge_models_forward.1']
    #allocation4 [shape = 'u8[8192]{0}', space=vmem, size = 0x2000, scoped, tag = 'input window, operand 2, single buffered']
    #allocation5 [shape = 's32[1]{0}', space=sflag, size = 0x4, scoped, tag = 'scoped memory for merge_models_forward.1']
    #allocation6 [shape = 'u8[131072]{0}', space=vmem, size = 0x20000, scoped, tag = 'input window, operand 3, single buffered']
    #allocation7 [shape = 'u8[512]{0}', space=vmem, size = 0x400, scoped, tag = 'input window, operand 4, single buffered']
    #allocation8 [shape = 's32[1]{0}', space=sflag, size = 0x4, scoped, tag = 'scoped memory for merge_models_forward.1']
    #allocation9 [shape = 'u8[512]{0}', space=vmem, size = 0x400, scoped, tag = 'input window, operand 6, single buffered']
    %12 = vsyncpa [#allocation3], 0
    %13 = vsyncpa [#allocation5], 0
    %14 = vsyncpa [#allocation8], 0
    // Predicated region
    $region2: #{merge_models_forward.1} parent=1 // pred_check
      _
    $region3: #{merge_models_forward.1} parent=1 // pred_check_branch
      %16 = sbr.rel (0) target = $region5
    $region4: #{merge_models_forward.1} parent=1 // pred_region
      _
    $region5: #{merge_models_forward.1} parent=1 // pred_fallthru
      _
    // Predicated region
    $region6: #{merge_models_forward.1} parent=1 // pred_check
      _
    $region7: #{merge_models_forward.1} parent=1 // pred_check_branch
      %18 = sbr.rel (0) target = $region9
    $region8: #{merge_models_forward.1} parent=1 // pred_region
      %20 = vsyncadd [#allocation3], 0
      %s21 = sshll.u32 %s1, 4
      %s22 = int_to_ptr.hbm [resolvable:$true] %s21
      %s23 = sshll.u32 [#allocation2], 4
      %s24 = int_to_ptr.vmem [resolvable:$true] %s23
      %29 = dma.hbm_to_vmem [thread:$0]  %s22, 131072, %s24, [#allocation3], 1024, 1024, 64
    $region9: #{merge_models_forward.1} parent=1 // pred_fallthru
      _
    // Predicated region
    $region10: #{merge_models_forward.1} parent=1 // pred_check
      _
    $region11: #{merge_models_forward.1} parent=1 // pred_check_branch
      %31 = sbr.rel (0) target = $region13
    $region12: #{merge_models_forward.1} parent=1 // pred_region
      %33 = vsyncadd [#allocation5], 0
      %s35 = sshll.u32 %s2, 4
      %s36 = int_to_ptr.hbm [resolvable:$true] %s35
      %s37 = sshll.u32 [#allocation4], 4
      %s38 = int_to_ptr.vmem [resolvable:$true] %s37
      %40 = dma.hbm_to_vmem [thread:$0]  %s36, 256, %s38, [#allocation5]
    $region13: #{merge_models_forward.1} parent=1 // pred_fallthru
      _
    // Predicated region
    $region14: #{merge_models_forward.1} parent=1 // pred_check
      _
    $region15: #{merge_models_forward.1} parent=1 // pred_check_branch
      %42 = sbr.rel (0) target = $region17
    $region16: #{merge_models_forward.1} parent=1 // pred_region
      %44 = vsyncadd [#allocation5], 0
      %s45 = sshll.u32 %s3, 4
      %s46 = int_to_ptr.hbm [resolvable:$true] %s45
      %s47 = sshll.u32 [#allocation6], 4
      %s48 = int_to_ptr.vmem [resolvable:$true] %s47
      %53 = dma.hbm_to_vmem [thread:$0]  %s46, 4096, %s48, [#allocation5], 1024, 1024, 64
    $region17: #{merge_models_forward.1} parent=1 // pred_fallthru
      _
    // Predicated region
    $region18: #{merge_models_forward.1} parent=1 // pred_check
      _
    $region19: #{merge_models_forward.1} parent=1 // pred_check_branch
      %55 = sbr.rel (0) target = $region21
    $region20: #{merge_models_forward.1} parent=1 // pred_region
      %57 = vsyncadd [#allocation8], 0
      %s59 = sshll.u32 %s4, 4
      %s60 = int_to_ptr.hbm [resolvable:$true] %s59
      %s61 = sshll.u32 [#allocation7], 4
      %s62 = int_to_ptr.vmem [resolvable:$true] %s61
      %64 = dma.hbm_to_vmem [thread:$0]  %s60, 16, %s62, [#allocation8]
    $region21: #{merge_models_forward.1} parent=1 // pred_fallthru
      _
    // Predicated region
    $region22: #{merge_models_forward.1} parent=1 // pred_check
      _
    $region23: #{merge_models_forward.1} parent=1 // pred_check_branch
      %66 = sbr.rel (0) target = $region25
    $region24: #{merge_models_forward.1} parent=1 // pred_region
      _
    $region25: #{merge_models_forward.1} parent=1 // pred_fallthru
      _
    // Predicated region
    $region26: #{merge_models_forward.1} parent=1 // pred_check
      _
    $region27: #{merge_models_forward.1} parent=1 // pred_check_branch
      %68 = sbr.rel (0) target = $region29
    $region28: #{merge_models_forward.1} parent=1 // pred_region
      %70 = vsyncadd [#allocation8], 0
      %s72 = sshll.u32 %s6, 4
      %s73 = int_to_ptr.hbm [resolvable:$true] %s72
      %s74 = sshll.u32 [#allocation9], 4
      %s75 = int_to_ptr.vmem [resolvable:$true] %s74
      %77 = dma.hbm_to_vmem [thread:$0]  %s73, 16, %s75, [#allocation8]
    $region29: #{merge_models_forward.1} parent=1 // pred_fallthru
      _
    // Predicated region
    $region30: #{merge_models_forward.1} parent=1 // pred_check
      _
    $region31: #{merge_models_forward.1} parent=1 // pred_check_branch
      %79 = sbr.rel (0) target = $region33
    $region32: #{merge_models_forward.1} parent=1 // pred_region
      %81 = dma.done [#allocation3], 131072
    $region33: #{merge_models_forward.1} parent=1 // pred_fallthru
      _
    // Predicated region
    $region34: #{merge_models_forward.1} parent=1 // pred_check
      _
    $region35: #{merge_models_forward.1} parent=1 // pred_check_branch
      %83 = sbr.rel (0) target = $region37
    $region36: #{merge_models_forward.1} parent=1 // pred_region
      %85 = dma.done [#allocation5], 256
    $region37: #{merge_models_forward.1} parent=1 // pred_fallthru
      _
    // Predicated region
    $region38: #{merge_models_forward.1} parent=1 // pred_check
      _
    $region39: #{merge_models_forward.1} parent=1 // pred_check_branch
      %87 = sbr.rel (0) target = $region41
    $region40: #{merge_models_forward.1} parent=1 // pred_region
      %89 = dma.done [#allocation5], 4096
    $region41: #{merge_models_forward.1} parent=1 // pred_fallthru
      _
    // Predicated region
    $region42: #{merge_models_forward.1} parent=1 // pred_check
      _
    $region43: #{merge_models_forward.1} parent=1 // pred_check_branch
      %91 = sbr.rel (0) target = $region45
    $region44: #{merge_models_forward.1} parent=1 // pred_region
      %93 = dma.done [#allocation8], 16
    $region45: #{merge_models_forward.1} parent=1 // pred_fallthru
      _
    // Predicated region
    $region46: #{merge_models_forward.1} parent=1 // pred_check
      _
    $region47: #{merge_models_forward.1} parent=1 // pred_check_branch
      %95 = sbr.rel (0) target = $region49
    $region48: #{merge_models_forward.1} parent=1 // pred_region
      %97 = dma.done [#allocation8], 16
    $region49: #{merge_models_forward.1} parent=1 // pred_fallthru
      _
    %v99 = vld [vmem:[%s0] sm:$0xff]
    %v100 = vld [vmem:[%s0 + $0x8] sm:$0xff]
    %v101 = vld [vmem:[%s0 + $0x10] sm:$0xff]
    %v102 = vld [vmem:[%s0 + $0x18] sm:$0xff]
    %v103 = vld [vmem:[#allocation2] sm:$0xff]
    %v104 = vld [vmem:[#allocation2 + $0x8] sm:$0xff]
    %v105 = vld [vmem:[#allocation2 + $0x10] sm:$0xff]
    %v106 = vld [vmem:[#allocation2 + $0x18] sm:$0xff]
    %v107 = vld [vmem:[#allocation2 + $0x20] sm:$0xff]
    %v108 = vld [vmem:[#allocation2 + $0x28] sm:$0xff]
    %v109 = vld [vmem:[#allocation2 + $0x30] sm:$0xff]
    %v110 = vld [vmem:[#allocation2 + $0x38] sm:$0xff]
    %v111 = vld [vmem:[#allocation2 + $0x40] sm:$0xff]
    %v112 = vld [vmem:[#allocation2 + $0x48] sm:$0xff]
    %v113 = vld [vmem:[#allocation2 + $0x50] sm:$0xff]
    %v114 = vld [vmem:[#allocation2 + $0x58] sm:$0xff]
    %v115 = vld [vmem:[#allocation2 + $0x60] sm:$0xff]
    %v116 = vld [vmem:[#allocation2 + $0x68] sm:$0xff]
    %v117 = vld [vmem:[#allocation2 + $0x70] sm:$0xff]
    %v118 = vld [vmem:[#allocation2 + $0x78] sm:$0xff]
    %v119 = vld [vmem:[#allocation2 + $0x80] sm:$0xff]
    %v120 = vld [vmem:[#allocation2 + $0x88] sm:$0xff]
    %v121 = vld [vmem:[#allocation2 + $0x90] sm:$0xff]
    %v122 = vld [vmem:[#allocation2 + $0x98] sm:$0xff]
    %v123 = vld [vmem:[#allocation2 + $0xa0] sm:$0xff]
    %v124 = vld [vmem:[#allocation2 + $0xa8] sm:$0xff]
    %v125 = vld [vmem:[#allocation2 + $0xb0] sm:$0xff]
    %v126 = vld [vmem:[#allocation2 + $0xb8] sm:$0xff]
    %v127 = vld [vmem:[#allocation2 + $0xc0] sm:$0xff]
    %v128 = vld [vmem:[#allocation2 + $0xc8] sm:$0xff]
    %v129 = vld [vmem:[#allocation2 + $0xd0] sm:$0xff]
    %v130 = vld [vmem:[#allocation2 + $0xd8] sm:$0xff]
    %v131 = vld [vmem:[#allocation2 + $0xe0] sm:$0xff]
    %v132 = vld [vmem:[#allocation2 + $0xe8] sm:$0xff]
    %v133 = vld [vmem:[#allocation2 + $0xf0] sm:$0xff]
    %v134 = vld [vmem:[#allocation2 + $0xf8] sm:$0xff]
    %v135 = vld [vmem:[#allocation2 + $0x100] sm:$0xff]
    %v136 = vld [vmem:[#allocation2 + $0x108] sm:$0xff]
    %v137 = vld [vmem:[#allocation2 + $0x110] sm:$0xff]
    %v138 = vld [vmem:[#allocation2 + $0x118] sm:$0xff]
    %v139 = vld [vmem:[#allocation2 + $0x120] sm:$0xff]
    %v140 = vld [vmem:[#allocation2 + $0x128] sm:$0xff]
    %v141 = vld [vmem:[#allocation2 + $0x130] sm:$0xff]
    %v142 = vld [vmem:[#allocation2 + $0x138] sm:$0xff]
    %v143 = vld [vmem:[#allocation2 + $0x140] sm:$0xff]
    %v144 = vld [vmem:[#allocation2 + $0x148] sm:$0xff]
    %v145 = vld [vmem:[#allocation2 + $0x150] sm:$0xff]
    %v146 = vld [vmem:[#allocation2 + $0x158] sm:$0xff]
    %v147 = vld [vmem:[#allocation2 + $0x160] sm:$0xff]
    %v148 = vld [vmem:[#allocation2 + $0x168] sm:$0xff]
    %v149 = vld [vmem:[#allocation2 + $0x170] sm:$0xff]
    %v150 = vld [vmem:[#allocation2 + $0x178] sm:$0xff]
    %v151 = vld [vmem:[#allocation2 + $0x180] sm:$0xff]
    %v152 = vld [vmem:[#allocation2 + $0x188] sm:$0xff]
    %v153 = vld [vmem:[#allocation2 + $0x190] sm:$0xff]
    %v154 = vld [vmem:[#allocation2 + $0x198] sm:$0xff]
    %v155 = vld [vmem:[#allocation2 + $0x1a0] sm:$0xff]
    %v156 = vld [vmem:[#allocation2 + $0x1a8] sm:$0xff]
    %v157 = vld [vmem:[#allocation2 + $0x1b0] sm:$0xff]
    %v158 = vld [vmem:[#allocation2 + $0x1b8] sm:$0xff]
    %v159 = vld [vmem:[#allocation2 + $0x1c0] sm:$0xff]
    %v160 = vld [vmem:[#allocation2 + $0x1c8] sm:$0xff]
    %v161 = vld [vmem:[#allocation2 + $0x1d0] sm:$0xff]
    %v162 = vld [vmem:[#allocation2 + $0x1d8] sm:$0xff]
    %v163 = vld [vmem:[#allocation2 + $0x1e0] sm:$0xff]
    %v164 = vld [vmem:[#allocation2 + $0x1e8] sm:$0xff]
    %v165 = vld [vmem:[#allocation2 + $0x1f0] sm:$0xff]
    %v166 = vld [vmem:[#allocation2 + $0x1f8] sm:$0xff]
    %v167 = vld [vmem:[#allocation2 + $0x200] sm:$0xff]
    %v168 = vld [vmem:[#allocation2 + $0x208] sm:$0xff]
    %v169 = vld [vmem:[#allocation2 + $0x210] sm:$0xff]
    %v170 = vld [vmem:[#allocation2 + $0x218] sm:$0xff]
    %v171 = vld [vmem:[#allocation2 + $0x220] sm:$0xff]
    %v172 = vld [vmem:[#allocation2 + $0x228] sm:$0xff]
    %v173 = vld [vmem:[#allocation2 + $0x230] sm:$0xff]
    %v174 = vld [vmem:[#allocation2 + $0x238] sm:$0xff]
    %v175 = vld [vmem:[#allocation2 + $0x240] sm:$0xff]
    %v176 = vld [vmem:[#allocation2 + $0x248] sm:$0xff]
    %v177 = vld [vmem:[#allocation2 + $0x250] sm:$0xff]
    %v178 = vld [vmem:[#allocation2 + $0x258] sm:$0xff]
    %v179 = vld [vmem:[#allocation2 + $0x260] sm:$0xff]
    %v180 = vld [vmem:[#allocation2 + $0x268] sm:$0xff]
    %v181 = vld [vmem:[#allocation2 + $0x270] sm:$0xff]
    %v182 = vld [vmem:[#allocation2 + $0x278] sm:$0xff]
    %v183 = vld [vmem:[#allocation2 + $0x280] sm:$0xff]
    %v184 = vld [vmem:[#allocation2 + $0x288] sm:$0xff]
    %v185 = vld [vmem:[#allocation2 + $0x290] sm:$0xff]
    %v186 = vld [vmem:[#allocation2 + $0x298] sm:$0xff]
    %v187 = vld [vmem:[#allocation2 + $0x2a0] sm:$0xff]
    %v188 = vld [vmem:[#allocation2 + $0x2a8] sm:$0xff]
    %v189 = vld [vmem:[#allocation2 + $0x2b0] sm:$0xff]
    %v190 = vld [vmem:[#allocation2 + $0x2b8] sm:$0xff]
    %v191 = vld [vmem:[#allocation2 + $0x2c0] sm:$0xff]
    %v192 = vld [vmem:[#allocation2 + $0x2c8] sm:$0xff]
    %v193 = vld [vmem:[#allocation2 + $0x2d0] sm:$0xff]
    %v194 = vld [vmem:[#allocation2 + $0x2d8] sm:$0xff]
    %v195 = vld [vmem:[#allocation2 + $0x2e0] sm:$0xff]
    %v196 = vld [vmem:[#allocation2 + $0x2e8] sm:$0xff]
    %v197 = vld [vmem:[#allocation2 + $0x2f0] sm:$0xff]
    %v198 = vld [vmem:[#allocation2 + $0x2f8] sm:$0xff]
    %v199 = vld [vmem:[#allocation2 + $0x300] sm:$0xff]
    %v200 = vld [vmem:[#allocation2 + $0x308] sm:$0xff]
    %v201 = vld [vmem:[#allocation2 + $0x310] sm:$0xff]
    %v202 = vld [vmem:[#allocation2 + $0x318] sm:$0xff]
    %v203 = vld [vmem:[#allocation2 + $0x320] sm:$0xff]
    %v204 = vld [vmem:[#allocation2 + $0x328] sm:$0xff]
    %v205 = vld [vmem:[#allocation2 + $0x330] sm:$0xff]
    %v206 = vld [vmem:[#allocation2 + $0x338] sm:$0xff]
    %v207 = vld [vmem:[#allocation2 + $0x340] sm:$0xff]
    %v208 = vld [vmem:[#allocation2 + $0x348] sm:$0xff]
    %v209 = vld [vmem:[#allocation2 + $0x350] sm:$0xff]
    %v210 = vld [vmem:[#allocation2 + $0x358] sm:$0xff]
    %v211 = vld [vmem:[#allocation2 + $0x360] sm:$0xff]
    %v212 = vld [vmem:[#allocation2 + $0x368] sm:$0xff]
    %v213 = vld [vmem:[#allocation2 + $0x370] sm:$0xff]
    %v214 = vld [vmem:[#allocation2 + $0x378] sm:$0xff]
    %v215 = vld [vmem:[#allocation2 + $0x380] sm:$0xff]
    %v216 = vld [vmem:[#allocation2 + $0x388] sm:$0xff]
    %v217 = vld [vmem:[#allocation2 + $0x390] sm:$0xff]
    %v218 = vld [vmem:[#allocation2 + $0x398] sm:$0xff]
    %v219 = vld [vmem:[#allocation2 + $0x3a0] sm:$0xff]
    %v220 = vld [vmem:[#allocation2 + $0x3a8] sm:$0xff]
    %v221 = vld [vmem:[#allocation2 + $0x3b0] sm:$0xff]
    %v222 = vld [vmem:[#allocation2 + $0x3b8] sm:$0xff]
    %v223 = vld [vmem:[#allocation2 + $0x3c0] sm:$0xff]
    %v224 = vld [vmem:[#allocation2 + $0x3c8] sm:$0xff]
    %v225 = vld [vmem:[#allocation2 + $0x3d0] sm:$0xff]
    %v226 = vld [vmem:[#allocation2 + $0x3d8] sm:$0xff]
    %v227 = vld [vmem:[#allocation2 + $0x3e0] sm:$0xff]
    %v228 = vld [vmem:[#allocation2 + $0x3e8] sm:$0xff]
    %v229 = vld [vmem:[#allocation2 + $0x3f0] sm:$0xff]
    %v230 = vld [vmem:[#allocation2 + $0x3f8] sm:$0xff]
    %v231 = vld [vmem:[#allocation2 + $0x400] sm:$0xff]
    %v232 = vld [vmem:[#allocation2 + $0x408] sm:$0xff]
    %v233 = vld [vmem:[#allocation2 + $0x410] sm:$0xff]
    %v234 = vld [vmem:[#allocation2 + $0x418] sm:$0xff]
    %v235 = vld [vmem:[#allocation2 + $0x420] sm:$0xff]
    %v236 = vld [vmem:[#allocation2 + $0x428] sm:$0xff]
    %v237 = vld [vmem:[#allocation2 + $0x430] sm:$0xff]
    %v238 = vld [vmem:[#allocation2 + $0x438] sm:$0xff]
    %v239 = vld [vmem:[#allocation2 + $0x440] sm:$0xff]
    %v240 = vld [vmem:[#allocation2 + $0x448] sm:$0xff]
    %v241 = vld [vmem:[#allocation2 + $0x450] sm:$0xff]
    %v242 = vld [vmem:[#allocation2 + $0x458] sm:$0xff]
    %v243 = vld [vmem:[#allocation2 + $0x460] sm:$0xff]
    %v244 = vld [vmem:[#allocation2 + $0x468] sm:$0xff]
    %v245 = vld [vmem:[#allocation2 + $0x470] sm:$0xff]
    %v246 = vld [vmem:[#allocation2 + $0x478] sm:$0xff]
    %v247 = vld [vmem:[#allocation2 + $0x480] sm:$0xff]
    %v248 = vld [vmem:[#allocation2 + $0x488] sm:$0xff]
    %v249 = vld [vmem:[#allocation2 + $0x490] sm:$0xff]
    %v250 = vld [vmem:[#allocation2 + $0x498] sm:$0xff]
    %v251 = vld [vmem:[#allocation2 + $0x4a0] sm:$0xff]
    %v252 = vld [vmem:[#allocation2 + $0x4a8] sm:$0xff]
    %v253 = vld [vmem:[#allocation2 + $0x4b0] sm:$0xff]
    %v254 = vld [vmem:[#allocation2 + $0x4b8] sm:$0xff]
    %v255 = vld [vmem:[#allocation2 + $0x4c0] sm:$0xff]
    %v256 = vld [vmem:[#allocation2 + $0x4c8] sm:$0xff]
    %v257 = vld [vmem:[#allocation2 + $0x4d0] sm:$0xff]
    %v258 = vld [vmem:[#allocation2 + $0x4d8] sm:$0xff]
    %v259 = vld [vmem:[#allocation2 + $0x4e0] sm:$0xff]
    %v260 = vld [vmem:[#allocation2 + $0x4e8] sm:$0xff]
    %v261 = vld [vmem:[#allocation2 + $0x4f0] sm:$0xff]
    %v262 = vld [vmem:[#allocation2 + $0x4f8] sm:$0xff]
    %v263 = vld [vmem:[#allocation2 + $0x500] sm:$0xff]
    %v264 = vld [vmem:[#allocation2 + $0x508] sm:$0xff]
    %v265 = vld [vmem:[#allocation2 + $0x510] sm:$0xff]
    %v266 = vld [vmem:[#allocation2 + $0x518] sm:$0xff]
    %v267 = vld [vmem:[#allocation2 + $0x520] sm:$0xff]
    %v268 = vld [vmem:[#allocation2 + $0x528] sm:$0xff]
    %v269 = vld [vmem:[#allocation2 + $0x530] sm:$0xff]
    %v270 = vld [vmem:[#allocation2 + $0x538] sm:$0xff]
    %v271 = vld [vmem:[#allocation2 + $0x540] sm:$0xff]
    %v272 = vld [vmem:[#allocation2 + $0x548] sm:$0xff]
    %v273 = vld [vmem:[#allocation2 + $0x550] sm:$0xff]
    %v274 = vld [vmem:[#allocation2 + $0x558] sm:$0xff]
    %v275 = vld [vmem:[#allocation2 + $0x560] sm:$0xff]
    %v276 = vld [vmem:[#allocation2 + $0x568] sm:$0xff]
    %v277 = vld [vmem:[#allocation2 + $0x570] sm:$0xff]
    %v278 = vld [vmem:[#allocation2 + $0x578] sm:$0xff]
    %v279 = vld [vmem:[#allocation2 + $0x580] sm:$0xff]
    %v280 = vld [vmem:[#allocation2 + $0x588] sm:$0xff]
    %v281 = vld [vmem:[#allocation2 + $0x590] sm:$0xff]
    %v282 = vld [vmem:[#allocation2 + $0x598] sm:$0xff]
    %v283 = vld [vmem:[#allocation2 + $0x5a0] sm:$0xff]
    %v284 = vld [vmem:[#allocation2 + $0x5a8] sm:$0xff]
    %v285 = vld [vmem:[#allocation2 + $0x5b0] sm:$0xff]
    %v286 = vld [vmem:[#allocation2 + $0x5b8] sm:$0xff]
    %v287 = vld [vmem:[#allocation2 + $0x5c0] sm:$0xff]
    %v288 = vld [vmem:[#allocation2 + $0x5c8] sm:$0xff]
    %v289 = vld [vmem:[#allocation2 + $0x5d0] sm:$0xff]
    %v290 = vld [vmem:[#allocation2 + $0x5d8] sm:$0xff]
    %v291 = vld [vmem:[#allocation2 + $0x5e0] sm:$0xff]
    %v292 = vld [vmem:[#allocation2 + $0x5e8] sm:$0xff]
    %v293 = vld [vmem:[#allocation2 + $0x5f0] sm:$0xff]
    %v294 = vld [vmem:[#allocation2 + $0x5f8] sm:$0xff]
    %v295 = vld [vmem:[#allocation2 + $0x600] sm:$0xff]
    %v296 = vld [vmem:[#allocation2 + $0x608] sm:$0xff]
    %v297 = vld [vmem:[#allocation2 + $0x610] sm:$0xff]
    %v298 = vld [vmem:[#allocation2 + $0x618] sm:$0xff]
    %v299 = vld [vmem:[#allocation2 + $0x620] sm:$0xff]
    %v300 = vld [vmem:[#allocation2 + $0x628] sm:$0xff]
    %v301 = vld [vmem:[#allocation2 + $0x630] sm:$0xff]
    %v302 = vld [vmem:[#allocation2 + $0x638] sm:$0xff]
    %v303 = vld [vmem:[#allocation2 + $0x640] sm:$0xff]
    %v304 = vld [vmem:[#allocation2 + $0x648] sm:$0xff]
    %v305 = vld [vmem:[#allocation2 + $0x650] sm:$0xff]
    %v306 = vld [vmem:[#allocation2 + $0x658] sm:$0xff]
    %v307 = vld [vmem:[#allocation2 + $0x660] sm:$0xff]
    %v308 = vld [vmem:[#allocation2 + $0x668] sm:$0xff]
    %v309 = vld [vmem:[#allocation2 + $0x670] sm:$0xff]
    %v310 = vld [vmem:[#allocation2 + $0x678] sm:$0xff]
    %v311 = vld [vmem:[#allocation2 + $0x680] sm:$0xff]
    %v312 = vld [vmem:[#allocation2 + $0x688] sm:$0xff]
    %v313 = vld [vmem:[#allocation2 + $0x690] sm:$0xff]
    %v314 = vld [vmem:[#allocation2 + $0x698] sm:$0xff]
    %v315 = vld [vmem:[#allocation2 + $0x6a0] sm:$0xff]
    %v316 = vld [vmem:[#allocation2 + $0x6a8] sm:$0xff]
    %v317 = vld [vmem:[#allocation2 + $0x6b0] sm:$0xff]
    %v318 = vld [vmem:[#allocation2 + $0x6b8] sm:$0xff]
    %v319 = vld [vmem:[#allocation2 + $0x6c0] sm:$0xff]
    %v320 = vld [vmem:[#allocation2 + $0x6c8] sm:$0xff]
    %v321 = vld [vmem:[#allocation2 + $0x6d0] sm:$0xff]
    %v322 = vld [vmem:[#allocation2 + $0x6d8] sm:$0xff]
    %v323 = vld [vmem:[#allocation2 + $0x6e0] sm:$0xff]
    %v324 = vld [vmem:[#allocation2 + $0x6e8] sm:$0xff]
    %v325 = vld [vmem:[#allocation2 + $0x6f0] sm:$0xff]
    %v326 = vld [vmem:[#allocation2 + $0x6f8] sm:$0xff]
    %v327 = vld [vmem:[#allocation2 + $0x700] sm:$0xff]
    %v328 = vld [vmem:[#allocation2 + $0x708] sm:$0xff]
    %v329 = vld [vmem:[#allocation2 + $0x710] sm:$0xff]
    %v330 = vld [vmem:[#allocation2 + $0x718] sm:$0xff]
    %v331 = vld [vmem:[#allocation2 + $0x720] sm:$0xff]
    %v332 = vld [vmem:[#allocation2 + $0x728] sm:$0xff]
    %v333 = vld [vmem:[#allocation2 + $0x730] sm:$0xff]
    %v334 = vld [vmem:[#allocation2 + $0x738] sm:$0xff]
    %v335 = vld [vmem:[#allocation2 + $0x740] sm:$0xff]
    %v336 = vld [vmem:[#allocation2 + $0x748] sm:$0xff]
    %v337 = vld [vmem:[#allocation2 + $0x750] sm:$0xff]
    %v338 = vld [vmem:[#allocation2 + $0x758] sm:$0xff]
    %v339 = vld [vmem:[#allocation2 + $0x760] sm:$0xff]
    %v340 = vld [vmem:[#allocation2 + $0x768] sm:$0xff]
    %v341 = vld [vmem:[#allocation2 + $0x770] sm:$0xff]
    %v342 = vld [vmem:[#allocation2 + $0x778] sm:$0xff]
    %v343 = vld [vmem:[#allocation2 + $0x780] sm:$0xff]
    %v344 = vld [vmem:[#allocation2 + $0x788] sm:$0xff]
    %v345 = vld [vmem:[#allocation2 + $0x790] sm:$0xff]
    %v346 = vld [vmem:[#allocation2 + $0x798] sm:$0xff]
    %v347 = vld [vmem:[#allocation2 + $0x7a0] sm:$0xff]
    %v348 = vld [vmem:[#allocation2 + $0x7a8] sm:$0xff]
    %v349 = vld [vmem:[#allocation2 + $0x7b0] sm:$0xff]
    %v350 = vld [vmem:[#allocation2 + $0x7b8] sm:$0xff]
    %v351 = vld [vmem:[#allocation2 + $0x7c0] sm:$0xff]
    %v352 = vld [vmem:[#allocation2 + $0x7c8] sm:$0xff]
    %v353 = vld [vmem:[#allocation2 + $0x7d0] sm:$0xff]
    %v354 = vld [vmem:[#allocation2 + $0x7d8] sm:$0xff]
    %v355 = vld [vmem:[#allocation2 + $0x7e0] sm:$0xff]
    %v356 = vld [vmem:[#allocation2 + $0x7e8] sm:$0xff]
    %v357 = vld [vmem:[#allocation2 + $0x7f0] sm:$0xff]
    %v358 = vld [vmem:[#allocation2 + $0x7f8] sm:$0xff]
    %v359 = vld [vmem:[#allocation2 + $0x800] sm:$0xff]
    %v360 = vld [vmem:[#allocation2 + $0x808] sm:$0xff]
    %v361 = vld [vmem:[#allocation2 + $0x810] sm:$0xff]
    %v362 = vld [vmem:[#allocation2 + $0x818] sm:$0xff]
    %v363 = vld [vmem:[#allocation2 + $0x820] sm:$0xff]
    %v364 = vld [vmem:[#allocation2 + $0x828] sm:$0xff]
    %v365 = vld [vmem:[#allocation2 + $0x830] sm:$0xff]
    %v366 = vld [vmem:[#allocation2 + $0x838] sm:$0xff]
    %v367 = vld [vmem:[#allocation2 + $0x840] sm:$0xff]
    %v368 = vld [vmem:[#allocation2 + $0x848] sm:$0xff]
    %v369 = vld [vmem:[#allocation2 + $0x850] sm:$0xff]
    %v370 = vld [vmem:[#allocation2 + $0x858] sm:$0xff]
    %v371 = vld [vmem:[#allocation2 + $0x860] sm:$0xff]
    %v372 = vld [vmem:[#allocation2 + $0x868] sm:$0xff]
    %v373 = vld [vmem:[#allocation2 + $0x870] sm:$0xff]
    %v374 = vld [vmem:[#allocation2 + $0x878] sm:$0xff]
    %v375 = vld [vmem:[#allocation2 + $0x880] sm:$0xff]
    %v376 = vld [vmem:[#allocation2 + $0x888] sm:$0xff]
    %v377 = vld [vmem:[#allocation2 + $0x890] sm:$0xff]
    %v378 = vld [vmem:[#allocation2 + $0x898] sm:$0xff]
    %v379 = vld [vmem:[#allocation2 + $0x8a0] sm:$0xff]
    %v380 = vld [vmem:[#allocation2 + $0x8a8] sm:$0xff]
    %v381 = vld [vmem:[#allocation2 + $0x8b0] sm:$0xff]
    %v382 = vld [vmem:[#allocation2 + $0x8b8] sm:$0xff]
    %v383 = vld [vmem:[#allocation2 + $0x8c0] sm:$0xff]
    %v384 = vld [vmem:[#allocation2 + $0x8c8] sm:$0xff]
    %v385 = vld [vmem:[#allocation2 + $0x8d0] sm:$0xff]
    %v386 = vld [vmem:[#allocation2 + $0x8d8] sm:$0xff]
    %v387 = vld [vmem:[#allocation2 + $0x8e0] sm:$0xff]
    %v388 = vld [vmem:[#allocation2 + $0x8e8] sm:$0xff]
    %v389 = vld [vmem:[#allocation2 + $0x8f0] sm:$0xff]
    %v390 = vld [vmem:[#allocation2 + $0x8f8] sm:$0xff]
    %v391 = vld [vmem:[#allocation2 + $0x900] sm:$0xff]
    %v392 = vld [vmem:[#allocation2 + $0x908] sm:$0xff]
    %v393 = vld [vmem:[#allocation2 + $0x910] sm:$0xff]
    %v394 = vld [vmem:[#allocation2 + $0x918] sm:$0xff]
    %v395 = vld [vmem:[#allocation2 + $0x920] sm:$0xff]
    %v396 = vld [vmem:[#allocation2 + $0x928] sm:$0xff]
    %v397 = vld [vmem:[#allocation2 + $0x930] sm:$0xff]
    %v398 = vld [vmem:[#allocation2 + $0x938] sm:$0xff]
    %v399 = vld [vmem:[#allocation2 + $0x940] sm:$0xff]
    %v400 = vld [vmem:[#allocation2 + $0x948] sm:$0xff]
    %v401 = vld [vmem:[#allocation2 + $0x950] sm:$0xff]
    %v402 = vld [vmem:[#allocation2 + $0x958] sm:$0xff]
    %v403 = vld [vmem:[#allocation2 + $0x960] sm:$0xff]
    %v404 = vld [vmem:[#allocation2 + $0x968] sm:$0xff]
    %v405 = vld [vmem:[#allocation2 + $0x970] sm:$0xff]
    %v406 = vld [vmem:[#allocation2 + $0x978] sm:$0xff]
    %v407 = vld [vmem:[#allocation2 + $0x980] sm:$0xff]
    %v408 = vld [vmem:[#allocation2 + $0x988] sm:$0xff]
    %v409 = vld [vmem:[#allocation2 + $0x990] sm:$0xff]
    %v410 = vld [vmem:[#allocation2 + $0x998] sm:$0xff]
    %v411 = vld [vmem:[#allocation2 + $0x9a0] sm:$0xff]
    %v412 = vld [vmem:[#allocation2 + $0x9a8] sm:$0xff]
    %v413 = vld [vmem:[#allocation2 + $0x9b0] sm:$0xff]
    %v414 = vld [vmem:[#allocation2 + $0x9b8] sm:$0xff]
    %v415 = vld [vmem:[#allocation2 + $0x9c0] sm:$0xff]
    %v416 = vld [vmem:[#allocation2 + $0x9c8] sm:$0xff]
    %v417 = vld [vmem:[#allocation2 + $0x9d0] sm:$0xff]
    %v418 = vld [vmem:[#allocation2 + $0x9d8] sm:$0xff]
    %v419 = vld [vmem:[#allocation2 + $0x9e0] sm:$0xff]
    %v420 = vld [vmem:[#allocation2 + $0x9e8] sm:$0xff]
    %v421 = vld [vmem:[#allocation2 + $0x9f0] sm:$0xff]
    %v422 = vld [vmem:[#allocation2 + $0x9f8] sm:$0xff]
    %v423 = vld [vmem:[#allocation2 + $0xa00] sm:$0xff]
    %v424 = vld [vmem:[#allocation2 + $0xa08] sm:$0xff]
    %v425 = vld [vmem:[#allocation2 + $0xa10] sm:$0xff]
    %v426 = vld [vmem:[#allocation2 + $0xa18] sm:$0xff]
    %v427 = vld [vmem:[#allocation2 + $0xa20] sm:$0xff]
    %v428 = vld [vmem:[#allocation2 + $0xa28] sm:$0xff]
    %v429 = vld [vmem:[#allocation2 + $0xa30] sm:$0xff]
    %v430 = vld [vmem:[#allocation2 + $0xa38] sm:$0xff]
    %v431 = vld [vmem:[#allocation2 + $0xa40] sm:$0xff]
    %v432 = vld [vmem:[#allocation2 + $0xa48] sm:$0xff]
    %v433 = vld [vmem:[#allocation2 + $0xa50] sm:$0xff]
    %v434 = vld [vmem:[#allocation2 + $0xa58] sm:$0xff]
    %v435 = vld [vmem:[#allocation2 + $0xa60] sm:$0xff]
    %v436 = vld [vmem:[#allocation2 + $0xa68] sm:$0xff]
    %v437 = vld [vmem:[#allocation2 + $0xa70] sm:$0xff]
    %v438 = vld [vmem:[#allocation2 + $0xa78] sm:$0xff]
    %v439 = vld [vmem:[#allocation2 + $0xa80] sm:$0xff]
    %v440 = vld [vmem:[#allocation2 + $0xa88] sm:$0xff]
    %v441 = vld [vmem:[#allocation2 + $0xa90] sm:$0xff]
    %v442 = vld [vmem:[#allocation2 + $0xa98] sm:$0xff]
    %v443 = vld [vmem:[#allocation2 + $0xaa0] sm:$0xff]
    %v444 = vld [vmem:[#allocation2 + $0xaa8] sm:$0xff]
    %v445 = vld [vmem:[#allocation2 + $0xab0] sm:$0xff]
    %v446 = vld [vmem:[#allocation2 + $0xab8] sm:$0xff]
    %v447 = vld [vmem:[#allocation2 + $0xac0] sm:$0xff]
    %v448 = vld [vmem:[#allocation2 + $0xac8] sm:$0xff]
    %v449 = vld [vmem:[#allocation2 + $0xad0] sm:$0xff]
    %v450 = vld [vmem:[#allocation2 + $0xad8] sm:$0xff]
    %v451 = vld [vmem:[#allocation2 + $0xae0] sm:$0xff]
    %v452 = vld [vmem:[#allocation2 + $0xae8] sm:$0xff]
    %v453 = vld [vmem:[#allocation2 + $0xaf0] sm:$0xff]
    %v454 = vld [vmem:[#allocation2 + $0xaf8] sm:$0xff]
    %v455 = vld [vmem:[#allocation2 + $0xb00] sm:$0xff]
    %v456 = vld [vmem:[#allocation2 + $0xb08] sm:$0xff]
    %v457 = vld [vmem:[#allocation2 + $0xb10] sm:$0xff]
    %v458 = vld [vmem:[#allocation2 + $0xb18] sm:$0xff]
    %v459 = vld [vmem:[#allocation2 + $0xb20] sm:$0xff]
    %v460 = vld [vmem:[#allocation2 + $0xb28] sm:$0xff]
    %v461 = vld [vmem:[#allocation2 + $0xb30] sm:$0xff]
    %v462 = vld [vmem:[#allocation2 + $0xb38] sm:$0xff]
    %v463 = vld [vmem:[#allocation2 + $0xb40] sm:$0xff]
    %v464 = vld [vmem:[#allocation2 + $0xb48] sm:$0xff]
    %v465 = vld [vmem:[#allocation2 + $0xb50] sm:$0xff]
    %v466 = vld [vmem:[#allocation2 + $0xb58] sm:$0xff]
    %v467 = vld [vmem:[#allocation2 + $0xb60] sm:$0xff]
    %v468 = vld [vmem:[#allocation2 + $0xb68] sm:$0xff]
    %v469 = vld [vmem:[#allocation2 + $0xb70] sm:$0xff]
    %v470 = vld [vmem:[#allocation2 + $0xb78] sm:$0xff]
    %v471 = vld [vmem:[#allocation2 + $0xb80] sm:$0xff]
    %v472 = vld [vmem:[#allocation2 + $0xb88] sm:$0xff]
    %v473 = vld [vmem:[#allocation2 + $0xb90] sm:$0xff]
    %v474 = vld [vmem:[#allocation2 + $0xb98] sm:$0xff]
    %v475 = vld [vmem:[#allocation2 + $0xba0] sm:$0xff]
    %v476 = vld [vmem:[#allocation2 + $0xba8] sm:$0xff]
    %v477 = vld [vmem:[#allocation2 + $0xbb0] sm:$0xff]
    %v478 = vld [vmem:[#allocation2 + $0xbb8] sm:$0xff]
    %v479 = vld [vmem:[#allocation2 + $0xbc0] sm:$0xff]
    %v480 = vld [vmem:[#allocation2 + $0xbc8] sm:$0xff]
    %v481 = vld [vmem:[#allocation2 + $0xbd0] sm:$0xff]
    %v482 = vld [vmem:[#allocation2 + $0xbd8] sm:$0xff]
    %v483 = vld [vmem:[#allocation2 + $0xbe0] sm:$0xff]
    %v484 = vld [vmem:[#allocation2 + $0xbe8] sm:$0xff]
    %v485 = vld [vmem:[#allocation2 + $0xbf0] sm:$0xff]
    %v486 = vld [vmem:[#allocation2 + $0xbf8] sm:$0xff]
    %v487 = vld [vmem:[#allocation2 + $0xc00] sm:$0xff]
    %v488 = vld [vmem:[#allocation2 + $0xc08] sm:$0xff]
    %v489 = vld [vmem:[#allocation2 + $0xc10] sm:$0xff]
    %v490 = vld [vmem:[#allocation2 + $0xc18] sm:$0xff]
    %v491 = vld [vmem:[#allocation2 + $0xc20] sm:$0xff]
    %v492 = vld [vmem:[#allocation2 + $0xc28] sm:$0xff]
    %v493 = vld [vmem:[#allocation2 + $0xc30] sm:$0xff]
    %v494 = vld [vmem:[#allocation2 + $0xc38] sm:$0xff]
    %v495 = vld [vmem:[#allocation2 + $0xc40] sm:$0xff]
    %v496 = vld [vmem:[#allocation2 + $0xc48] sm:$0xff]
    %v497 = vld [vmem:[#allocation2 + $0xc50] sm:$0xff]
    %v498 = vld [vmem:[#allocation2 + $0xc58] sm:$0xff]
    %v499 = vld [vmem:[#allocation2 + $0xc60] sm:$0xff]
    %v500 = vld [vmem:[#allocation2 + $0xc68] sm:$0xff]
    %v501 = vld [vmem:[#allocation2 + $0xc70] sm:$0xff]
    %v502 = vld [vmem:[#allocation2 + $0xc78] sm:$0xff]
    %v503 = vld [vmem:[#allocation2 + $0xc80] sm:$0xff]
    %v504 = vld [vmem:[#allocation2 + $0xc88] sm:$0xff]
    %v505 = vld [vmem:[#allocation2 + $0xc90] sm:$0xff]
    %v506 = vld [vmem:[#allocation2 + $0xc98] sm:$0xff]
    %v507 = vld [vmem:[#allocation2 + $0xca0] sm:$0xff]
    %v508 = vld [vmem:[#allocation2 + $0xca8] sm:$0xff]
    %v509 = vld [vmem:[#allocation2 + $0xcb0] sm:$0xff]
    %v510 = vld [vmem:[#allocation2 + $0xcb8] sm:$0xff]
    %v511 = vld [vmem:[#allocation2 + $0xcc0] sm:$0xff]
    %v512 = vld [vmem:[#allocation2 + $0xcc8] sm:$0xff]
    %v513 = vld [vmem:[#allocation2 + $0xcd0] sm:$0xff]
    %v514 = vld [vmem:[#allocation2 + $0xcd8] sm:$0xff]
    %v515 = vld [vmem:[#allocation2 + $0xce0] sm:$0xff]
    %v516 = vld [vmem:[#allocation2 + $0xce8] sm:$0xff]
    %v517 = vld [vmem:[#allocation2 + $0xcf0] sm:$0xff]
    %v518 = vld [vmem:[#allocation2 + $0xcf8] sm:$0xff]
    %v519 = vld [vmem:[#allocation2 + $0xd00] sm:$0xff]
    %v520 = vld [vmem:[#allocation2 + $0xd08] sm:$0xff]
    %v521 = vld [vmem:[#allocation2 + $0xd10] sm:$0xff]
    %v522 = vld [vmem:[#allocation2 + $0xd18] sm:$0xff]
    %v523 = vld [vmem:[#allocation2 + $0xd20] sm:$0xff]
    %v524 = vld [vmem:[#allocation2 + $0xd28] sm:$0xff]
    %v525 = vld [vmem:[#allocation2 + $0xd30] sm:$0xff]
    %v526 = vld [vmem:[#allocation2 + $0xd38] sm:$0xff]
    %v527 = vld [vmem:[#allocation2 + $0xd40] sm:$0xff]
    %v528 = vld [vmem:[#allocation2 + $0xd48] sm:$0xff]
    %v529 = vld [vmem:[#allocation2 + $0xd50] sm:$0xff]
    %v530 = vld [vmem:[#allocation2 + $0xd58] sm:$0xff]
    %v531 = vld [vmem:[#allocation2 + $0xd60] sm:$0xff]
    %v532 = vld [vmem:[#allocation2 + $0xd68] sm:$0xff]
    %v533 = vld [vmem:[#allocation2 + $0xd70] sm:$0xff]
    %v534 = vld [vmem:[#allocation2 + $0xd78] sm:$0xff]
    %v535 = vld [vmem:[#allocation2 + $0xd80] sm:$0xff]
    %v536 = vld [vmem:[#allocation2 + $0xd88] sm:$0xff]
    %v537 = vld [vmem:[#allocation2 + $0xd90] sm:$0xff]
    %v538 = vld [vmem:[#allocation2 + $0xd98] sm:$0xff]
    %v539 = vld [vmem:[#allocation2 + $0xda0] sm:$0xff]
    %v540 = vld [vmem:[#allocation2 + $0xda8] sm:$0xff]
    %v541 = vld [vmem:[#allocation2 + $0xdb0] sm:$0xff]
    %v542 = vld [vmem:[#allocation2 + $0xdb8] sm:$0xff]
    %v543 = vld [vmem:[#allocation2 + $0xdc0] sm:$0xff]
    %v544 = vld [vmem:[#allocation2 + $0xdc8] sm:$0xff]
    %v545 = vld [vmem:[#allocation2 + $0xdd0] sm:$0xff]
    %v546 = vld [vmem:[#allocation2 + $0xdd8] sm:$0xff]
    %v547 = vld [vmem:[#allocation2 + $0xde0] sm:$0xff]
    %v548 = vld [vmem:[#allocation2 + $0xde8] sm:$0xff]
    %v549 = vld [vmem:[#allocation2 + $0xdf0] sm:$0xff]
    %v550 = vld [vmem:[#allocation2 + $0xdf8] sm:$0xff]
    %v551 = vld [vmem:[#allocation2 + $0xe00] sm:$0xff]
    %v552 = vld [vmem:[#allocation2 + $0xe08] sm:$0xff]
    %v553 = vld [vmem:[#allocation2 + $0xe10] sm:$0xff]
    %v554 = vld [vmem:[#allocation2 + $0xe18] sm:$0xff]
    %v555 = vld [vmem:[#allocation2 + $0xe20] sm:$0xff]
    %v556 = vld [vmem:[#allocation2 + $0xe28] sm:$0xff]
    %v557 = vld [vmem:[#allocation2 + $0xe30] sm:$0xff]
    %v558 = vld [vmem:[#allocation2 + $0xe38] sm:$0xff]
    %v559 = vld [vmem:[#allocation2 + $0xe40] sm:$0xff]
    %v560 = vld [vmem:[#allocation2 + $0xe48] sm:$0xff]
    %v561 = vld [vmem:[#allocation2 + $0xe50] sm:$0xff]
    %v562 = vld [vmem:[#allocation2 + $0xe58] sm:$0xff]
    %v563 = vld [vmem:[#allocation2 + $0xe60] sm:$0xff]
    %v564 = vld [vmem:[#allocation2 + $0xe68] sm:$0xff]
    %v565 = vld [vmem:[#allocation2 + $0xe70] sm:$0xff]
    %v566 = vld [vmem:[#allocation2 + $0xe78] sm:$0xff]
    %v567 = vld [vmem:[#allocation2 + $0xe80] sm:$0xff]
    %v568 = vld [vmem:[#allocation2 + $0xe88] sm:$0xff]
    %v569 = vld [vmem:[#allocation2 + $0xe90] sm:$0xff]
    %v570 = vld [vmem:[#allocation2 + $0xe98] sm:$0xff]
    %v571 = vld [vmem:[#allocation2 + $0xea0] sm:$0xff]
    %v572 = vld [vmem:[#allocation2 + $0xea8] sm:$0xff]
    %v573 = vld [vmem:[#allocation2 + $0xeb0] sm:$0xff]
    %v574 = vld [vmem:[#allocation2 + $0xeb8] sm:$0xff]
    %v575 = vld [vmem:[#allocation2 + $0xec0] sm:$0xff]
    %v576 = vld [vmem:[#allocation2 + $0xec8] sm:$0xff]
    %v577 = vld [vmem:[#allocation2 + $0xed0] sm:$0xff]
    %v578 = vld [vmem:[#allocation2 + $0xed8] sm:$0xff]
    %v579 = vld [vmem:[#allocation2 + $0xee0] sm:$0xff]
    %v580 = vld [vmem:[#allocation2 + $0xee8] sm:$0xff]
    %v581 = vld [vmem:[#allocation2 + $0xef0] sm:$0xff]
    %v582 = vld [vmem:[#allocation2 + $0xef8] sm:$0xff]
    %v583 = vld [vmem:[#allocation2 + $0xf00] sm:$0xff]
    %v584 = vld [vmem:[#allocation2 + $0xf08] sm:$0xff]
    %v585 = vld [vmem:[#allocation2 + $0xf10] sm:$0xff]
    %v586 = vld [vmem:[#allocation2 + $0xf18] sm:$0xff]
    %v587 = vld [vmem:[#allocation2 + $0xf20] sm:$0xff]
    %v588 = vld [vmem:[#allocation2 + $0xf28] sm:$0xff]
    %v589 = vld [vmem:[#allocation2 + $0xf30] sm:$0xff]
    %v590 = vld [vmem:[#allocation2 + $0xf38] sm:$0xff]
    %v591 = vld [vmem:[#allocation2 + $0xf40] sm:$0xff]
    %v592 = vld [vmem:[#allocation2 + $0xf48] sm:$0xff]
    %v593 = vld [vmem:[#allocation2 + $0xf50] sm:$0xff]
    %v594 = vld [vmem:[#allocation2 + $0xf58] sm:$0xff]
    %v595 = vld [vmem:[#allocation2 + $0xf60] sm:$0xff]
    %v596 = vld [vmem:[#allocation2 + $0xf68] sm:$0xff]
    %v597 = vld [vmem:[#allocation2 + $0xf70] sm:$0xff]
    %v598 = vld [vmem:[#allocation2 + $0xf78] sm:$0xff]
    %v599 = vld [vmem:[#allocation2 + $0xf80] sm:$0xff]
    %v600 = vld [vmem:[#allocation2 + $0xf88] sm:$0xff]
    %v601 = vld [vmem:[#allocation2 + $0xf90] sm:$0xff]
    %v602 = vld [vmem:[#allocation2 + $0xf98] sm:$0xff]
    %v603 = vld [vmem:[#allocation2 + $0xfa0] sm:$0xff]
    %v604 = vld [vmem:[#allocation2 + $0xfa8] sm:$0xff]
    %v605 = vld [vmem:[#allocation2 + $0xfb0] sm:$0xff]
    %v606 = vld [vmem:[#allocation2 + $0xfb8] sm:$0xff]
    %v607 = vld [vmem:[#allocation2 + $0xfc0] sm:$0xff]
    %v608 = vld [vmem:[#allocation2 + $0xfc8] sm:$0xff]
    %v609 = vld [vmem:[#allocation2 + $0xfd0] sm:$0xff]
    %v610 = vld [vmem:[#allocation2 + $0xfd8] sm:$0xff]
    %v611 = vld [vmem:[#allocation2 + $0xfe0] sm:$0xff]
    %v612 = vld [vmem:[#allocation2 + $0xfe8] sm:$0xff]
    %v613 = vld [vmem:[#allocation2 + $0xff0] sm:$0xff]
    %v614 = vld [vmem:[#allocation2 + $0xff8] sm:$0xff]
    %v615 = vld [vmem:[#allocation2 + $0x1000] sm:$0xff]
    %v616 = vld [vmem:[#allocation2 + $0x1008] sm:$0xff]
    %v617 = vld [vmem:[#allocation2 + $0x1010] sm:$0xff]
    %v618 = vld [vmem:[#allocation2 + $0x1018] sm:$0xff]
    %v619 = vld [vmem:[#allocation2 + $0x1020] sm:$0xff]
    %v620 = vld [vmem:[#allocation2 + $0x1028] sm:$0xff]
    %v621 = vld [vmem:[#allocation2 + $0x1030] sm:$0xff]
    %v622 = vld [vmem:[#allocation2 + $0x1038] sm:$0xff]
    %v623 = vld [vmem:[#allocation2 + $0x1040] sm:$0xff]
    %v624 = vld [vmem:[#allocation2 + $0x1048] sm:$0xff]
    %v625 = vld [vmem:[#allocation2 + $0x1050] sm:$0xff]
    %v626 = vld [vmem:[#allocation2 + $0x1058] sm:$0xff]
    %v627 = vld [vmem:[#allocation2 + $0x1060] sm:$0xff]
    %v628 = vld [vmem:[#allocation2 + $0x1068] sm:$0xff]
    %v629 = vld [vmem:[#allocation2 + $0x1070] sm:$0xff]
    %v630 = vld [vmem:[#allocation2 + $0x1078] sm:$0xff]
    %v631 = vld [vmem:[#allocation2 + $0x1080] sm:$0xff]
    %v632 = vld [vmem:[#allocation2 + $0x1088] sm:$0xff]
    %v633 = vld [vmem:[#allocation2 + $0x1090] sm:$0xff]
    %v634 = vld [vmem:[#allocation2 + $0x1098] sm:$0xff]
    %v635 = vld [vmem:[#allocation2 + $0x10a0] sm:$0xff]
    %v636 = vld [vmem:[#allocation2 + $0x10a8] sm:$0xff]
    %v637 = vld [vmem:[#allocation2 + $0x10b0] sm:$0xff]
    %v638 = vld [vmem:[#allocation2 + $0x10b8] sm:$0xff]
    %v639 = vld [vmem:[#allocation2 + $0x10c0] sm:$0xff]
    %v640 = vld [vmem:[#allocation2 + $0x10c8] sm:$0xff]
    %v641 = vld [vmem:[#allocation2 + $0x10d0] sm:$0xff]
    %v642 = vld [vmem:[#allocation2 + $0x10d8] sm:$0xff]
    %v643 = vld [vmem:[#allocation2 + $0x10e0] sm:$0xff]
    %v644 = vld [vmem:[#allocation2 + $0x10e8] sm:$0xff]
    %v645 = vld [vmem:[#allocation2 + $0x10f0] sm:$0xff]
    %v646 = vld [vmem:[#allocation2 + $0x10f8] sm:$0xff]
    %v647 = vld [vmem:[#allocation2 + $0x1100] sm:$0xff]
    %v648 = vld [vmem:[#allocation2 + $0x1108] sm:$0xff]
    %v649 = vld [vmem:[#allocation2 + $0x1110] sm:$0xff]
    %v650 = vld [vmem:[#allocation2 + $0x1118] sm:$0xff]
    %v651 = vld [vmem:[#allocation2 + $0x1120] sm:$0xff]
    %v652 = vld [vmem:[#allocation2 + $0x1128] sm:$0xff]
    %v653 = vld [vmem:[#allocation2 + $0x1130] sm:$0xff]
    %v654 = vld [vmem:[#allocation2 + $0x1138] sm:$0xff]
    %v655 = vld [vmem:[#allocation2 + $0x1140] sm:$0xff]
    %v656 = vld [vmem:[#allocation2 + $0x1148] sm:$0xff]
    %v657 = vld [vmem:[#allocation2 + $0x1150] sm:$0xff]
    %v658 = vld [vmem:[#allocation2 + $0x1158] sm:$0xff]
    %v659 = vld [vmem:[#allocation2 + $0x1160] sm:$0xff]
    %v660 = vld [vmem:[#allocation2 + $0x1168] sm:$0xff]
    %v661 = vld [vmem:[#allocation2 + $0x1170] sm:$0xff]
    %v662 = vld [vmem:[#allocation2 + $0x1178] sm:$0xff]
    %v663 = vld [vmem:[#allocation2 + $0x1180] sm:$0xff]
    %v664 = vld [vmem:[#allocation2 + $0x1188] sm:$0xff]
    %v665 = vld [vmem:[#allocation2 + $0x1190] sm:$0xff]
    %v666 = vld [vmem:[#allocation2 + $0x1198] sm:$0xff]
    %v667 = vld [vmem:[#allocation2 + $0x11a0] sm:$0xff]
    %v668 = vld [vmem:[#allocation2 + $0x11a8] sm:$0xff]
    %v669 = vld [vmem:[#allocation2 + $0x11b0] sm:$0xff]
    %v670 = vld [vmem:[#allocation2 + $0x11b8] sm:$0xff]
    %v671 = vld [vmem:[#allocation2 + $0x11c0] sm:$0xff]
    %v672 = vld [vmem:[#allocation2 + $0x11c8] sm:$0xff]
    %v673 = vld [vmem:[#allocation2 + $0x11d0] sm:$0xff]
    %v674 = vld [vmem:[#allocation2 + $0x11d8] sm:$0xff]
    %v675 = vld [vmem:[#allocation2 + $0x11e0] sm:$0xff]
    %v676 = vld [vmem:[#allocation2 + $0x11e8] sm:$0xff]
    %v677 = vld [vmem:[#allocation2 + $0x11f0] sm:$0xff]
    %v678 = vld [vmem:[#allocation2 + $0x11f8] sm:$0xff]
    %v679 = vld [vmem:[#allocation2 + $0x1200] sm:$0xff]
    %v680 = vld [vmem:[#allocation2 + $0x1208] sm:$0xff]
    %v681 = vld [vmem:[#allocation2 + $0x1210] sm:$0xff]
    %v682 = vld [vmem:[#allocation2 + $0x1218] sm:$0xff]
    %v683 = vld [vmem:[#allocation2 + $0x1220] sm:$0xff]
    %v684 = vld [vmem:[#allocation2 + $0x1228] sm:$0xff]
    %v685 = vld [vmem:[#allocation2 + $0x1230] sm:$0xff]
    %v686 = vld [vmem:[#allocation2 + $0x1238] sm:$0xff]
    %v687 = vld [vmem:[#allocation2 + $0x1240] sm:$0xff]
    %v688 = vld [vmem:[#allocation2 + $0x1248] sm:$0xff]
    %v689 = vld [vmem:[#allocation2 + $0x1250] sm:$0xff]
    %v690 = vld [vmem:[#allocation2 + $0x1258] sm:$0xff]
    %v691 = vld [vmem:[#allocation2 + $0x1260] sm:$0xff]
    %v692 = vld [vmem:[#allocation2 + $0x1268] sm:$0xff]
    %v693 = vld [vmem:[#allocation2 + $0x1270] sm:$0xff]
    %v694 = vld [vmem:[#allocation2 + $0x1278] sm:$0xff]
    %v695 = vld [vmem:[#allocation2 + $0x1280] sm:$0xff]
    %v696 = vld [vmem:[#allocation2 + $0x1288] sm:$0xff]
    %v697 = vld [vmem:[#allocation2 + $0x1290] sm:$0xff]
    %v698 = vld [vmem:[#allocation2 + $0x1298] sm:$0xff]
    %v699 = vld [vmem:[#allocation2 + $0x12a0] sm:$0xff]
    %v700 = vld [vmem:[#allocation2 + $0x12a8] sm:$0xff]
    %v701 = vld [vmem:[#allocation2 + $0x12b0] sm:$0xff]
    %v702 = vld [vmem:[#allocation2 + $0x12b8] sm:$0xff]
    %v703 = vld [vmem:[#allocation2 + $0x12c0] sm:$0xff]
    %v704 = vld [vmem:[#allocation2 + $0x12c8] sm:$0xff]
    %v705 = vld [vmem:[#allocation2 + $0x12d0] sm:$0xff]
    %v706 = vld [vmem:[#allocation2 + $0x12d8] sm:$0xff]
    %v707 = vld [vmem:[#allocation2 + $0x12e0] sm:$0xff]
    %v708 = vld [vmem:[#allocation2 + $0x12e8] sm:$0xff]
    %v709 = vld [vmem:[#allocation2 + $0x12f0] sm:$0xff]
    %v710 = vld [vmem:[#allocation2 + $0x12f8] sm:$0xff]
    %v711 = vld [vmem:[#allocation2 + $0x1300] sm:$0xff]
    %v712 = vld [vmem:[#allocation2 + $0x1308] sm:$0xff]
    %v713 = vld [vmem:[#allocation2 + $0x1310] sm:$0xff]
    %v714 = vld [vmem:[#allocation2 + $0x1318] sm:$0xff]
    %v715 = vld [vmem:[#allocation2 + $0x1320] sm:$0xff]
    %v716 = vld [vmem:[#allocation2 + $0x1328] sm:$0xff]
    %v717 = vld [vmem:[#allocation2 + $0x1330] sm:$0xff]
    %v718 = vld [vmem:[#allocation2 + $0x1338] sm:$0xff]
    %v719 = vld [vmem:[#allocation2 + $0x1340] sm:$0xff]
    %v720 = vld [vmem:[#allocation2 + $0x1348] sm:$0xff]
    %v721 = vld [vmem:[#allocation2 + $0x1350] sm:$0xff]
    %v722 = vld [vmem:[#allocation2 + $0x1358] sm:$0xff]
    %v723 = vld [vmem:[#allocation2 + $0x1360] sm:$0xff]
    %v724 = vld [vmem:[#allocation2 + $0x1368] sm:$0xff]
    %v725 = vld [vmem:[#allocation2 + $0x1370] sm:$0xff]
    %v726 = vld [vmem:[#allocation2 + $0x1378] sm:$0xff]
    %v727 = vld [vmem:[#allocation2 + $0x1380] sm:$0xff]
    %v728 = vld [vmem:[#allocation2 + $0x1388] sm:$0xff]
    %v729 = vld [vmem:[#allocation2 + $0x1390] sm:$0xff]
    %v730 = vld [vmem:[#allocation2 + $0x1398] sm:$0xff]
    %v731 = vld [vmem:[#allocation2 + $0x13a0] sm:$0xff]
    %v732 = vld [vmem:[#allocation2 + $0x13a8] sm:$0xff]
    %v733 = vld [vmem:[#allocation2 + $0x13b0] sm:$0xff]
    %v734 = vld [vmem:[#allocation2 + $0x13b8] sm:$0xff]
    %v735 = vld [vmem:[#allocation2 + $0x13c0] sm:$0xff]
    %v736 = vld [vmem:[#allocation2 + $0x13c8] sm:$0xff]
    %v737 = vld [vmem:[#allocation2 + $0x13d0] sm:$0xff]
    %v738 = vld [vmem:[#allocation2 + $0x13d8] sm:$0xff]
    %v739 = vld [vmem:[#allocation2 + $0x13e0] sm:$0xff]
    %v740 = vld [vmem:[#allocation2 + $0x13e8] sm:$0xff]
    %v741 = vld [vmem:[#allocation2 + $0x13f0] sm:$0xff]
    %v742 = vld [vmem:[#allocation2 + $0x13f8] sm:$0xff]
    %v743 = vld [vmem:[#allocation2 + $0x1400] sm:$0xff]
    %v744 = vld [vmem:[#allocation2 + $0x1408] sm:$0xff]
    %v745 = vld [vmem:[#allocation2 + $0x1410] sm:$0xff]
    %v746 = vld [vmem:[#allocation2 + $0x1418] sm:$0xff]
    %v747 = vld [vmem:[#allocation2 + $0x1420] sm:$0xff]
    %v748 = vld [vmem:[#allocation2 + $0x1428] sm:$0xff]
    %v749 = vld [vmem:[#allocation2 + $0x1430] sm:$0xff]
    %v750 = vld [vmem:[#allocation2 + $0x1438] sm:$0xff]
    %v751 = vld [vmem:[#allocation2 + $0x1440] sm:$0xff]
    %v752 = vld [vmem:[#allocation2 + $0x1448] sm:$0xff]
    %v753 = vld [vmem:[#allocation2 + $0x1450] sm:$0xff]
    %v754 = vld [vmem:[#allocation2 + $0x1458] sm:$0xff]
    %v755 = vld [vmem:[#allocation2 + $0x1460] sm:$0xff]
    %v756 = vld [vmem:[#allocation2 + $0x1468] sm:$0xff]
    %v757 = vld [vmem:[#allocation2 + $0x1470] sm:$0xff]
    %v758 = vld [vmem:[#allocation2 + $0x1478] sm:$0xff]
    %v759 = vld [vmem:[#allocation2 + $0x1480] sm:$0xff]
    %v760 = vld [vmem:[#allocation2 + $0x1488] sm:$0xff]
    %v761 = vld [vmem:[#allocation2 + $0x1490] sm:$0xff]
    %v762 = vld [vmem:[#allocation2 + $0x1498] sm:$0xff]
    %v763 = vld [vmem:[#allocation2 + $0x14a0] sm:$0xff]
    %v764 = vld [vmem:[#allocation2 + $0x14a8] sm:$0xff]
    %v765 = vld [vmem:[#allocation2 + $0x14b0] sm:$0xff]
    %v766 = vld [vmem:[#allocation2 + $0x14b8] sm:$0xff]
    %v767 = vld [vmem:[#allocation2 + $0x14c0] sm:$0xff]
    %v768 = vld [vmem:[#allocation2 + $0x14c8] sm:$0xff]
    %v769 = vld [vmem:[#allocation2 + $0x14d0] sm:$0xff]
    %v770 = vld [vmem:[#allocation2 + $0x14d8] sm:$0xff]
    %v771 = vld [vmem:[#allocation2 + $0x14e0] sm:$0xff]
    %v772 = vld [vmem:[#allocation2 + $0x14e8] sm:$0xff]
    %v773 = vld [vmem:[#allocation2 + $0x14f0] sm:$0xff]
    %v774 = vld [vmem:[#allocation2 + $0x14f8] sm:$0xff]
    %v775 = vld [vmem:[#allocation2 + $0x1500] sm:$0xff]
    %v776 = vld [vmem:[#allocation2 + $0x1508] sm:$0xff]
    %v777 = vld [vmem:[#allocation2 + $0x1510] sm:$0xff]
    %v778 = vld [vmem:[#allocation2 + $0x1518] sm:$0xff]
    %v779 = vld [vmem:[#allocation2 + $0x1520] sm:$0xff]
    %v780 = vld [vmem:[#allocation2 + $0x1528] sm:$0xff]
    %v781 = vld [vmem:[#allocation2 + $0x1530] sm:$0xff]
    %v782 = vld [vmem:[#allocation2 + $0x1538] sm:$0xff]
    %v783 = vld [vmem:[#allocation2 + $0x1540] sm:$0xff]
    %v784 = vld [vmem:[#allocation2 + $0x1548] sm:$0xff]
    %v785 = vld [vmem:[#allocation2 + $0x1550] sm:$0xff]
    %v786 = vld [vmem:[#allocation2 + $0x1558] sm:$0xff]
    %v787 = vld [vmem:[#allocation2 + $0x1560] sm:$0xff]
    %v788 = vld [vmem:[#allocation2 + $0x1568] sm:$0xff]
    %v789 = vld [vmem:[#allocation2 + $0x1570] sm:$0xff]
    %v790 = vld [vmem:[#allocation2 + $0x1578] sm:$0xff]
    %v791 = vld [vmem:[#allocation2 + $0x1580] sm:$0xff]
    %v792 = vld [vmem:[#allocation2 + $0x1588] sm:$0xff]
    %v793 = vld [vmem:[#allocation2 + $0x1590] sm:$0xff]
    %v794 = vld [vmem:[#allocation2 + $0x1598] sm:$0xff]
    %v795 = vld [vmem:[#allocation2 + $0x15a0] sm:$0xff]
    %v796 = vld [vmem:[#allocation2 + $0x15a8] sm:$0xff]
    %v797 = vld [vmem:[#allocation2 + $0x15b0] sm:$0xff]
    %v798 = vld [vmem:[#allocation2 + $0x15b8] sm:$0xff]
    %v799 = vld [vmem:[#allocation2 + $0x15c0] sm:$0xff]
    %v800 = vld [vmem:[#allocation2 + $0x15c8] sm:$0xff]
    %v801 = vld [vmem:[#allocation2 + $0x15d0] sm:$0xff]
    %v802 = vld [vmem:[#allocation2 + $0x15d8] sm:$0xff]
    %v803 = vld [vmem:[#allocation2 + $0x15e0] sm:$0xff]
    %v804 = vld [vmem:[#allocation2 + $0x15e8] sm:$0xff]
    %v805 = vld [vmem:[#allocation2 + $0x15f0] sm:$0xff]
    %v806 = vld [vmem:[#allocation2 + $0x15f8] sm:$0xff]
    %v807 = vld [vmem:[#allocation2 + $0x1600] sm:$0xff]
    %v808 = vld [vmem:[#allocation2 + $0x1608] sm:$0xff]
    %v809 = vld [vmem:[#allocation2 + $0x1610] sm:$0xff]
    %v810 = vld [vmem:[#allocation2 + $0x1618] sm:$0xff]
    %v811 = vld [vmem:[#allocation2 + $0x1620] sm:$0xff]
    %v812 = vld [vmem:[#allocation2 + $0x1628] sm:$0xff]
    %v813 = vld [vmem:[#allocation2 + $0x1630] sm:$0xff]
    %v814 = vld [vmem:[#allocation2 + $0x1638] sm:$0xff]
    %v815 = vld [vmem:[#allocation2 + $0x1640] sm:$0xff]
    %v816 = vld [vmem:[#allocation2 + $0x1648] sm:$0xff]
    %v817 = vld [vmem:[#allocation2 + $0x1650] sm:$0xff]
    %v818 = vld [vmem:[#allocation2 + $0x1658] sm:$0xff]
    %v819 = vld [vmem:[#allocation2 + $0x1660] sm:$0xff]
    %v820 = vld [vmem:[#allocation2 + $0x1668] sm:$0xff]
    %v821 = vld [vmem:[#allocation2 + $0x1670] sm:$0xff]
    %v822 = vld [vmem:[#allocation2 + $0x1678] sm:$0xff]
    %v823 = vld [vmem:[#allocation2 + $0x1680] sm:$0xff]
    %v824 = vld [vmem:[#allocation2 + $0x1688] sm:$0xff]
    %v825 = vld [vmem:[#allocation2 + $0x1690] sm:$0xff]
    %v826 = vld [vmem:[#allocation2 + $0x1698] sm:$0xff]
    %v827 = vld [vmem:[#allocation2 + $0x16a0] sm:$0xff]
    %v828 = vld [vmem:[#allocation2 + $0x16a8] sm:$0xff]
    %v829 = vld [vmem:[#allocation2 + $0x16b0] sm:$0xff]
    %v830 = vld [vmem:[#allocation2 + $0x16b8] sm:$0xff]
    %v831 = vld [vmem:[#allocation2 + $0x16c0] sm:$0xff]
    %v832 = vld [vmem:[#allocation2 + $0x16c8] sm:$0xff]
    %v833 = vld [vmem:[#allocation2 + $0x16d0] sm:$0xff]
    %v834 = vld [vmem:[#allocation2 + $0x16d8] sm:$0xff]
    %v835 = vld [vmem:[#allocation2 + $0x16e0] sm:$0xff]
    %v836 = vld [vmem:[#allocation2 + $0x16e8] sm:$0xff]
    %v837 = vld [vmem:[#allocation2 + $0x16f0] sm:$0xff]
    %v838 = vld [vmem:[#allocation2 + $0x16f8] sm:$0xff]
    %v839 = vld [vmem:[#allocation2 + $0x1700] sm:$0xff]
    %v840 = vld [vmem:[#allocation2 + $0x1708] sm:$0xff]
    %v841 = vld [vmem:[#allocation2 + $0x1710] sm:$0xff]
    %v842 = vld [vmem:[#allocation2 + $0x1718] sm:$0xff]
    %v843 = vld [vmem:[#allocation2 + $0x1720] sm:$0xff]
    %v844 = vld [vmem:[#allocation2 + $0x1728] sm:$0xff]
    %v845 = vld [vmem:[#allocation2 + $0x1730] sm:$0xff]
    %v846 = vld [vmem:[#allocation2 + $0x1738] sm:$0xff]
    %v847 = vld [vmem:[#allocation2 + $0x1740] sm:$0xff]
    %v848 = vld [vmem:[#allocation2 + $0x1748] sm:$0xff]
    %v849 = vld [vmem:[#allocation2 + $0x1750] sm:$0xff]
    %v850 = vld [vmem:[#allocation2 + $0x1758] sm:$0xff]
    %v851 = vld [vmem:[#allocation2 + $0x1760] sm:$0xff]
    %v852 = vld [vmem:[#allocation2 + $0x1768] sm:$0xff]
    %v853 = vld [vmem:[#allocation2 + $0x1770] sm:$0xff]
    %v854 = vld [vmem:[#allocation2 + $0x1778] sm:$0xff]
    %v855 = vld [vmem:[#allocation2 + $0x1780] sm:$0xff]
    %v856 = vld [vmem:[#allocation2 + $0x1788] sm:$0xff]
    %v857 = vld [vmem:[#allocation2 + $0x1790] sm:$0xff]
    %v858 = vld [vmem:[#allocation2 + $0x1798] sm:$0xff]
    %v859 = vld [vmem:[#allocation2 + $0x17a0] sm:$0xff]
    %v860 = vld [vmem:[#allocation2 + $0x17a8] sm:$0xff]
    %v861 = vld [vmem:[#allocation2 + $0x17b0] sm:$0xff]
    %v862 = vld [vmem:[#allocation2 + $0x17b8] sm:$0xff]
    %v863 = vld [vmem:[#allocation2 + $0x17c0] sm:$0xff]
    %v864 = vld [vmem:[#allocation2 + $0x17c8] sm:$0xff]
    %v865 = vld [vmem:[#allocation2 + $0x17d0] sm:$0xff]
    %v866 = vld [vmem:[#allocation2 + $0x17d8] sm:$0xff]
    %v867 = vld [vmem:[#allocation2 + $0x17e0] sm:$0xff]
    %v868 = vld [vmem:[#allocation2 + $0x17e8] sm:$0xff]
    %v869 = vld [vmem:[#allocation2 + $0x17f0] sm:$0xff]
    %v870 = vld [vmem:[#allocation2 + $0x17f8] sm:$0xff]
    %v871 = vld [vmem:[#allocation2 + $0x1800] sm:$0xff]
    %v872 = vld [vmem:[#allocation2 + $0x1808] sm:$0xff]
    %v873 = vld [vmem:[#allocation2 + $0x1810] sm:$0xff]
    %v874 = vld [vmem:[#allocation2 + $0x1818] sm:$0xff]
    %v875 = vld [vmem:[#allocation2 + $0x1820] sm:$0xff]
    %v876 = vld [vmem:[#allocation2 + $0x1828] sm:$0xff]
    %v877 = vld [vmem:[#allocation2 + $0x1830] sm:$0xff]
    %v878 = vld [vmem:[#allocation2 + $0x1838] sm:$0xff]
    %v879 = vld [vmem:[#allocation2 + $0x1840] sm:$0xff]
    %v880 = vld [vmem:[#allocation2 + $0x1848] sm:$0xff]
    %v881 = vld [vmem:[#allocation2 + $0x1850] sm:$0xff]
    %v882 = vld [vmem:[#allocation2 + $0x1858] sm:$0xff]
    %v883 = vld [vmem:[#allocation2 + $0x1860] sm:$0xff]
    %v884 = vld [vmem:[#allocation2 + $0x1868] sm:$0xff]
    %v885 = vld [vmem:[#allocation2 + $0x1870] sm:$0xff]
    %v886 = vld [vmem:[#allocation2 + $0x1878] sm:$0xff]
    %v887 = vld [vmem:[#allocation2 + $0x1880] sm:$0xff]
    %v888 = vld [vmem:[#allocation2 + $0x1888] sm:$0xff]
    %v889 = vld [vmem:[#allocation2 + $0x1890] sm:$0xff]
    %v890 = vld [vmem:[#allocation2 + $0x1898] sm:$0xff]
    %v891 = vld [vmem:[#allocation2 + $0x18a0] sm:$0xff]
    %v892 = vld [vmem:[#allocation2 + $0x18a8] sm:$0xff]
    %v893 = vld [vmem:[#allocation2 + $0x18b0] sm:$0xff]
    %v894 = vld [vmem:[#allocation2 + $0x18b8] sm:$0xff]
    %v895 = vld [vmem:[#allocation2 + $0x18c0] sm:$0xff]
    %v896 = vld [vmem:[#allocation2 + $0x18c8] sm:$0xff]
    %v897 = vld [vmem:[#allocation2 + $0x18d0] sm:$0xff]
    %v898 = vld [vmem:[#allocation2 + $0x18d8] sm:$0xff]
    %v899 = vld [vmem:[#allocation2 + $0x18e0] sm:$0xff]
    %v900 = vld [vmem:[#allocation2 + $0x18e8] sm:$0xff]
    %v901 = vld [vmem:[#allocation2 + $0x18f0] sm:$0xff]
    %v902 = vld [vmem:[#allocation2 + $0x18f8] sm:$0xff]
    %v903 = vld [vmem:[#allocation2 + $0x1900] sm:$0xff]
    %v904 = vld [vmem:[#allocation2 + $0x1908] sm:$0xff]
    %v905 = vld [vmem:[#allocation2 + $0x1910] sm:$0xff]
    %v906 = vld [vmem:[#allocation2 + $0x1918] sm:$0xff]
    %v907 = vld [vmem:[#allocation2 + $0x1920] sm:$0xff]
    %v908 = vld [vmem:[#allocation2 + $0x1928] sm:$0xff]
    %v909 = vld [vmem:[#allocation2 + $0x1930] sm:$0xff]
    %v910 = vld [vmem:[#allocation2 + $0x1938] sm:$0xff]
    %v911 = vld [vmem:[#allocation2 + $0x1940] sm:$0xff]
    %v912 = vld [vmem:[#allocation2 + $0x1948] sm:$0xff]
    %v913 = vld [vmem:[#allocation2 + $0x1950] sm:$0xff]
    %v914 = vld [vmem:[#allocation2 + $0x1958] sm:$0xff]
    %v915 = vld [vmem:[#allocation2 + $0x1960] sm:$0xff]
    %v916 = vld [vmem:[#allocation2 + $0x1968] sm:$0xff]
    %v917 = vld [vmem:[#allocation2 + $0x1970] sm:$0xff]
    %v918 = vld [vmem:[#allocation2 + $0x1978] sm:$0xff]
    %v919 = vld [vmem:[#allocation2 + $0x1980] sm:$0xff]
    %v920 = vld [vmem:[#allocation2 + $0x1988] sm:$0xff]
    %v921 = vld [vmem:[#allocation2 + $0x1990] sm:$0xff]
    %v922 = vld [vmem:[#allocation2 + $0x1998] sm:$0xff]
    %v923 = vld [vmem:[#allocation2 + $0x19a0] sm:$0xff]
    %v924 = vld [vmem:[#allocation2 + $0x19a8] sm:$0xff]
    %v925 = vld [vmem:[#allocation2 + $0x19b0] sm:$0xff]
    %v926 = vld [vmem:[#allocation2 + $0x19b8] sm:$0xff]
    %v927 = vld [vmem:[#allocation2 + $0x19c0] sm:$0xff]
    %v928 = vld [vmem:[#allocation2 + $0x19c8] sm:$0xff]
    %v929 = vld [vmem:[#allocation2 + $0x19d0] sm:$0xff]
    %v930 = vld [vmem:[#allocation2 + $0x19d8] sm:$0xff]
    %v931 = vld [vmem:[#allocation2 + $0x19e0] sm:$0xff]
    %v932 = vld [vmem:[#allocation2 + $0x19e8] sm:$0xff]
    %v933 = vld [vmem:[#allocation2 + $0x19f0] sm:$0xff]
    %v934 = vld [vmem:[#allocation2 + $0x19f8] sm:$0xff]
    %v935 = vld [vmem:[#allocation2 + $0x1a00] sm:$0xff]
    %v936 = vld [vmem:[#allocation2 + $0x1a08] sm:$0xff]
    %v937 = vld [vmem:[#allocation2 + $0x1a10] sm:$0xff]
    %v938 = vld [vmem:[#allocation2 + $0x1a18] sm:$0xff]
    %v939 = vld [vmem:[#allocation2 + $0x1a20] sm:$0xff]
    %v940 = vld [vmem:[#allocation2 + $0x1a28] sm:$0xff]
    %v941 = vld [vmem:[#allocation2 + $0x1a30] sm:$0xff]
    %v942 = vld [vmem:[#allocation2 + $0x1a38] sm:$0xff]
    %v943 = vld [vmem:[#allocation2 + $0x1a40] sm:$0xff]
    %v944 = vld [vmem:[#allocation2 + $0x1a48] sm:$0xff]
    %v945 = vld [vmem:[#allocation2 + $0x1a50] sm:$0xff]
    %v946 = vld [vmem:[#allocation2 + $0x1a58] sm:$0xff]
    %v947 = vld [vmem:[#allocation2 + $0x1a60] sm:$0xff]
    %v948 = vld [vmem:[#allocation2 + $0x1a68] sm:$0xff]
    %v949 = vld [vmem:[#allocation2 + $0x1a70] sm:$0xff]
    %v950 = vld [vmem:[#allocation2 + $0x1a78] sm:$0xff]
    %v951 = vld [vmem:[#allocation2 + $0x1a80] sm:$0xff]
    %v952 = vld [vmem:[#allocation2 + $0x1a88] sm:$0xff]
    %v953 = vld [vmem:[#allocation2 + $0x1a90] sm:$0xff]
    %v954 = vld [vmem:[#allocation2 + $0x1a98] sm:$0xff]
    %v955 = vld [vmem:[#allocation2 + $0x1aa0] sm:$0xff]
    %v956 = vld [vmem:[#allocation2 + $0x1aa8] sm:$0xff]
    %v957 = vld [vmem:[#allocation2 + $0x1ab0] sm:$0xff]
    %v958 = vld [vmem:[#allocation2 + $0x1ab8] sm:$0xff]
    %v959 = vld [vmem:[#allocation2 + $0x1ac0] sm:$0xff]
    %v960 = vld [vmem:[#allocation2 + $0x1ac8] sm:$0xff]
    %v961 = vld [vmem:[#allocation2 + $0x1ad0] sm:$0xff]
    %v962 = vld [vmem:[#allocation2 + $0x1ad8] sm:$0xff]
    %v963 = vld [vmem:[#allocation2 + $0x1ae0] sm:$0xff]
    %v964 = vld [vmem:[#allocation2 + $0x1ae8] sm:$0xff]
    %v965 = vld [vmem:[#allocation2 + $0x1af0] sm:$0xff]
    %v966 = vld [vmem:[#allocation2 + $0x1af8] sm:$0xff]
    %v967 = vld [vmem:[#allocation2 + $0x1b00] sm:$0xff]
    %v968 = vld [vmem:[#allocation2 + $0x1b08] sm:$0xff]
    %v969 = vld [vmem:[#allocation2 + $0x1b10] sm:$0xff]
    %v970 = vld [vmem:[#allocation2 + $0x1b18] sm:$0xff]
    %v971 = vld [vmem:[#allocation2 + $0x1b20] sm:$0xff]
    %v972 = vld [vmem:[#allocation2 + $0x1b28] sm:$0xff]
    %v973 = vld [vmem:[#allocation2 + $0x1b30] sm:$0xff]
    %v974 = vld [vmem:[#allocation2 + $0x1b38] sm:$0xff]
    %v975 = vld [vmem:[#allocation2 + $0x1b40] sm:$0xff]
    %v976 = vld [vmem:[#allocation2 + $0x1b48] sm:$0xff]
    %v977 = vld [vmem:[#allocation2 + $0x1b50] sm:$0xff]
    %v978 = vld [vmem:[#allocation2 + $0x1b58] sm:$0xff]
    %v979 = vld [vmem:[#allocation2 + $0x1b60] sm:$0xff]
    %v980 = vld [vmem:[#allocation2 + $0x1b68] sm:$0xff]
    %v981 = vld [vmem:[#allocation2 + $0x1b70] sm:$0xff]
    %v982 = vld [vmem:[#allocation2 + $0x1b78] sm:$0xff]
    %v983 = vld [vmem:[#allocation2 + $0x1b80] sm:$0xff]
    %v984 = vld [vmem:[#allocation2 + $0x1b88] sm:$0xff]
    %v985 = vld [vmem:[#allocation2 + $0x1b90] sm:$0xff]
    %v986 = vld [vmem:[#allocation2 + $0x1b98] sm:$0xff]
    %v987 = vld [vmem:[#allocation2 + $0x1ba0] sm:$0xff]
    %v988 = vld [vmem:[#allocation2 + $0x1ba8] sm:$0xff]
    %v989 = vld [vmem:[#allocation2 + $0x1bb0] sm:$0xff]
    %v990 = vld [vmem:[#allocation2 + $0x1bb8] sm:$0xff]
    %v991 = vld [vmem:[#allocation2 + $0x1bc0] sm:$0xff]
    %v992 = vld [vmem:[#allocation2 + $0x1bc8] sm:$0xff]
    %v993 = vld [vmem:[#allocation2 + $0x1bd0] sm:$0xff]
    %v994 = vld [vmem:[#allocation2 + $0x1bd8] sm:$0xff]
    %v995 = vld [vmem:[#allocation2 + $0x1be0] sm:$0xff]
    %v996 = vld [vmem:[#allocation2 + $0x1be8] sm:$0xff]
    %v997 = vld [vmem:[#allocation2 + $0x1bf0] sm:$0xff]
    %v998 = vld [vmem:[#allocation2 + $0x1bf8] sm:$0xff]
    %v999 = vld [vmem:[#allocation2 + $0x1c00] sm:$0xff]
    %v1000 = vld [vmem:[#allocation2 + $0x1c08] sm:$0xff]
    %v1001 = vld [vmem:[#allocation2 + $0x1c10] sm:$0xff]
    %v1002 = vld [vmem:[#allocation2 + $0x1c18] sm:$0xff]
    %v1003 = vld [vmem:[#allocation2 + $0x1c20] sm:$0xff]
    %v1004 = vld [vmem:[#allocation2 + $0x1c28] sm:$0xff]
    %v1005 = vld [vmem:[#allocation2 + $0x1c30] sm:$0xff]
    %v1006 = vld [vmem:[#allocation2 + $0x1c38] sm:$0xff]
    %v1007 = vld [vmem:[#allocation2 + $0x1c40] sm:$0xff]
    %v1008 = vld [vmem:[#allocation2 + $0x1c48] sm:$0xff]
    %v1009 = vld [vmem:[#allocation2 + $0x1c50] sm:$0xff]
    %v1010 = vld [vmem:[#allocation2 + $0x1c58] sm:$0xff]
    %v1011 = vld [vmem:[#allocation2 + $0x1c60] sm:$0xff]
    %v1012 = vld [vmem:[#allocation2 + $0x1c68] sm:$0xff]
    %v1013 = vld [vmem:[#allocation2 + $0x1c70] sm:$0xff]
    %v1014 = vld [vmem:[#allocation2 + $0x1c78] sm:$0xff]
    %v1015 = vld [vmem:[#allocation2 + $0x1c80] sm:$0xff]
    %v1016 = vld [vmem:[#allocation2 + $0x1c88] sm:$0xff]
    %v1017 = vld [vmem:[#allocation2 + $0x1c90] sm:$0xff]
    %v1018 = vld [vmem:[#allocation2 + $0x1c98] sm:$0xff]
    %v1019 = vld [vmem:[#allocation2 + $0x1ca0] sm:$0xff]
    %v1020 = vld [vmem:[#allocation2 + $0x1ca8] sm:$0xff]
    %v1021 = vld [vmem:[#allocation2 + $0x1cb0] sm:$0xff]
    %v1022 = vld [vmem:[#allocation2 + $0x1cb8] sm:$0xff]
    %v1023 = vld [vmem:[#allocation2 + $0x1cc0] sm:$0xff]
    %v1024 = vld [vmem:[#allocation2 + $0x1cc8] sm:$0xff]
    %v1025 = vld [vmem:[#allocation2 + $0x1cd0] sm:$0xff]
    %v1026 = vld [vmem:[#allocation2 + $0x1cd8] sm:$0xff]
    %v1027 = vld [vmem:[#allocation2 + $0x1ce0] sm:$0xff]
    %v1028 = vld [vmem:[#allocation2 + $0x1ce8] sm:$0xff]
    %v1029 = vld [vmem:[#allocation2 + $0x1cf0] sm:$0xff]
    %v1030 = vld [vmem:[#allocation2 + $0x1cf8] sm:$0xff]
    %v1031 = vld [vmem:[#allocation2 + $0x1d00] sm:$0xff]
    %v1032 = vld [vmem:[#allocation2 + $0x1d08] sm:$0xff]
    %v1033 = vld [vmem:[#allocation2 + $0x1d10] sm:$0xff]
    %v1034 = vld [vmem:[#allocation2 + $0x1d18] sm:$0xff]
    %v1035 = vld [vmem:[#allocation2 + $0x1d20] sm:$0xff]
    %v1036 = vld [vmem:[#allocation2 + $0x1d28] sm:$0xff]
    %v1037 = vld [vmem:[#allocation2 + $0x1d30] sm:$0xff]
    %v1038 = vld [vmem:[#allocation2 + $0x1d38] sm:$0xff]
    %v1039 = vld [vmem:[#allocation2 + $0x1d40] sm:$0xff]
    %v1040 = vld [vmem:[#allocation2 + $0x1d48] sm:$0xff]
    %v1041 = vld [vmem:[#allocation2 + $0x1d50] sm:$0xff]
    %v1042 = vld [vmem:[#allocation2 + $0x1d58] sm:$0xff]
    %v1043 = vld [vmem:[#allocation2 + $0x1d60] sm:$0xff]
    %v1044 = vld [vmem:[#allocation2 + $0x1d68] sm:$0xff]
    %v1045 = vld [vmem:[#allocation2 + $0x1d70] sm:$0xff]
    %v1046 = vld [vmem:[#allocation2 + $0x1d78] sm:$0xff]
    %v1047 = vld [vmem:[#allocation2 + $0x1d80] sm:$0xff]
    %v1048 = vld [vmem:[#allocation2 + $0x1d88] sm:$0xff]
    %v1049 = vld [vmem:[#allocation2 + $0x1d90] sm:$0xff]
    %v1050 = vld [vmem:[#allocation2 + $0x1d98] sm:$0xff]
    %v1051 = vld [vmem:[#allocation2 + $0x1da0] sm:$0xff]
    %v1052 = vld [vmem:[#allocation2 + $0x1da8] sm:$0xff]
    %v1053 = vld [vmem:[#allocation2 + $0x1db0] sm:$0xff]
    %v1054 = vld [vmem:[#allocation2 + $0x1db8] sm:$0xff]
    %v1055 = vld [vmem:[#allocation2 + $0x1dc0] sm:$0xff]
    %v1056 = vld [vmem:[#allocation2 + $0x1dc8] sm:$0xff]
    %v1057 = vld [vmem:[#allocation2 + $0x1dd0] sm:$0xff]
    %v1058 = vld [vmem:[#allocation2 + $0x1dd8] sm:$0xff]
    %v1059 = vld [vmem:[#allocation2 + $0x1de0] sm:$0xff]
    %v1060 = vld [vmem:[#allocation2 + $0x1de8] sm:$0xff]
    %v1061 = vld [vmem:[#allocation2 + $0x1df0] sm:$0xff]
    %v1062 = vld [vmem:[#allocation2 + $0x1df8] sm:$0xff]
    %v1063 = vld [vmem:[#allocation2 + $0x1e00] sm:$0xff]
    %v1064 = vld [vmem:[#allocation2 + $0x1e08] sm:$0xff]
    %v1065 = vld [vmem:[#allocation2 + $0x1e10] sm:$0xff]
    %v1066 = vld [vmem:[#allocation2 + $0x1e18] sm:$0xff]
    %v1067 = vld [vmem:[#allocation2 + $0x1e20] sm:$0xff]
    %v1068 = vld [vmem:[#allocation2 + $0x1e28] sm:$0xff]
    %v1069 = vld [vmem:[#allocation2 + $0x1e30] sm:$0xff]
    %v1070 = vld [vmem:[#allocation2 + $0x1e38] sm:$0xff]
    %v1071 = vld [vmem:[#allocation2 + $0x1e40] sm:$0xff]
    %v1072 = vld [vmem:[#allocation2 + $0x1e48] sm:$0xff]
    %v1073 = vld [vmem:[#allocation2 + $0x1e50] sm:$0xff]
    %v1074 = vld [vmem:[#allocation2 + $0x1e58] sm:$0xff]
    %v1075 = vld [vmem:[#allocation2 + $0x1e60] sm:$0xff]
    %v1076 = vld [vmem:[#allocation2 + $0x1e68] sm:$0xff]
    %v1077 = vld [vmem:[#allocation2 + $0x1e70] sm:$0xff]
    %v1078 = vld [vmem:[#allocation2 + $0x1e78] sm:$0xff]
    %v1079 = vld [vmem:[#allocation2 + $0x1e80] sm:$0xff]
    %v1080 = vld [vmem:[#allocation2 + $0x1e88] sm:$0xff]
    %v1081 = vld [vmem:[#allocation2 + $0x1e90] sm:$0xff]
    %v1082 = vld [vmem:[#allocation2 + $0x1e98] sm:$0xff]
    %v1083 = vld [vmem:[#allocation2 + $0x1ea0] sm:$0xff]
    %v1084 = vld [vmem:[#allocation2 + $0x1ea8] sm:$0xff]
    %v1085 = vld [vmem:[#allocation2 + $0x1eb0] sm:$0xff]
    %v1086 = vld [vmem:[#allocation2 + $0x1eb8] sm:$0xff]
    %v1087 = vld [vmem:[#allocation2 + $0x1ec0] sm:$0xff]
    %v1088 = vld [vmem:[#allocation2 + $0x1ec8] sm:$0xff]
    %v1089 = vld [vmem:[#allocation2 + $0x1ed0] sm:$0xff]
    %v1090 = vld [vmem:[#allocation2 + $0x1ed8] sm:$0xff]
    %v1091 = vld [vmem:[#allocation2 + $0x1ee0] sm:$0xff]
    %v1092 = vld [vmem:[#allocation2 + $0x1ee8] sm:$0xff]
    %v1093 = vld [vmem:[#allocation2 + $0x1ef0] sm:$0xff]
    %v1094 = vld [vmem:[#allocation2 + $0x1ef8] sm:$0xff]
    %v1095 = vld [vmem:[#allocation2 + $0x1f00] sm:$0xff]
    %v1096 = vld [vmem:[#allocation2 + $0x1f08] sm:$0xff]
    %v1097 = vld [vmem:[#allocation2 + $0x1f10] sm:$0xff]
    %v1098 = vld [vmem:[#allocation2 + $0x1f18] sm:$0xff]
    %v1099 = vld [vmem:[#allocation2 + $0x1f20] sm:$0xff]
    %v1100 = vld [vmem:[#allocation2 + $0x1f28] sm:$0xff]
    %v1101 = vld [vmem:[#allocation2 + $0x1f30] sm:$0xff]
    %v1102 = vld [vmem:[#allocation2 + $0x1f38] sm:$0xff]
    %v1103 = vld [vmem:[#allocation2 + $0x1f40] sm:$0xff]
    %v1104 = vld [vmem:[#allocation2 + $0x1f48] sm:$0xff]
    %v1105 = vld [vmem:[#allocation2 + $0x1f50] sm:$0xff]
    %v1106 = vld [vmem:[#allocation2 + $0x1f58] sm:$0xff]
    %v1107 = vld [vmem:[#allocation2 + $0x1f60] sm:$0xff]
    %v1108 = vld [vmem:[#allocation2 + $0x1f68] sm:$0xff]
    %v1109 = vld [vmem:[#allocation2 + $0x1f70] sm:$0xff]
    %v1110 = vld [vmem:[#allocation2 + $0x1f78] sm:$0xff]
    %v1111 = vld [vmem:[#allocation2 + $0x1f80] sm:$0xff]
    %v1112 = vld [vmem:[#allocation2 + $0x1f88] sm:$0xff]
    %v1113 = vld [vmem:[#allocation2 + $0x1f90] sm:$0xff]
    %v1114 = vld [vmem:[#allocation2 + $0x1f98] sm:$0xff]
    %v1115 = vld [vmem:[#allocation2 + $0x1fa0] sm:$0xff]
    %v1116 = vld [vmem:[#allocation2 + $0x1fa8] sm:$0xff]
    %v1117 = vld [vmem:[#allocation2 + $0x1fb0] sm:$0xff]
    %v1118 = vld [vmem:[#allocation2 + $0x1fb8] sm:$0xff]
    %v1119 = vld [vmem:[#allocation2 + $0x1fc0] sm:$0xff]
    %v1120 = vld [vmem:[#allocation2 + $0x1fc8] sm:$0xff]
    %v1121 = vld [vmem:[#allocation2 + $0x1fd0] sm:$0xff]
    %v1122 = vld [vmem:[#allocation2 + $0x1fd8] sm:$0xff]
    %v1123 = vld [vmem:[#allocation2 + $0x1fe0] sm:$0xff]
    %v1124 = vld [vmem:[#allocation2 + $0x1fe8] sm:$0xff]
    %v1125 = vld [vmem:[#allocation2 + $0x1ff0] sm:$0xff]
    %v1126 = vld [vmem:[#allocation2 + $0x1ff8] sm:$0xff]
    %v1127 = vld [vmem:[#allocation4] sm:$0xff]
    %v1128 = vld [vmem:[#allocation4 + $0x8] sm:$0xff]
    %v1131 = vperm.slane %v1127, 0
    %v1132 = vperm.slane %v1127, 1
    %v1133 = vperm.slane %v1127, 2
    %v1134 = vperm.slane %v1127, 3
    %v1135 = vperm.slane %v1127, 4
    %v1136 = vperm.slane %v1127, 5
    %v1137 = vperm.slane %v1127, 6
    %v1138 = vperm.slane %v1127, 7
    %v1139 = vperm.slane %v1128, 0
    %v1140 = vperm.slane %v1128, 1
    %v1141 = vperm.slane %v1128, 2
    %v1142 = vperm.slane %v1128, 3
    %v1143 = vperm.slane %v1128, 4
    %v1144 = vperm.slane %v1128, 5
    %v1145 = vperm.slane %v1128, 6
    %v1146 = vperm.slane %v1128, 7
    %v1167 = vunpack.c.l.b16 %v99
    %v1168 = vunpack.c.h.b16 %v99
    %v1169 = vunpack.c.l.b16 %v100
    %v1170 = vunpack.c.h.b16 %v100
    %v1171 = vunpack.c.l.b16 %v101
    %v1172 = vunpack.c.h.b16 %v101
    %v1173 = vunpack.c.l.b16 %v102
    %v1174 = vunpack.c.h.b16 %v102
    %v1175 = vpack.c.b16 %v1167, %v1167
    %v1176 = vpack.c.b16 %v1168, %v1168
    %v1177 = vpack.c.b16 %v1169, %v1169
    %v1178 = vpack.c.b16 %v1170, %v1170
    %v1179 = vpack.c.b16 %v1171, %v1171
    %v1180 = vpack.c.b16 %v1172, %v1172
    %v1181 = vpack.c.b16 %v1173, %v1173
    %v1182 = vpack.c.b16 %v1174, %v1174
    %v2215 = vunpack.c.l.b16 %v103
    %v2216 = vunpack.c.h.b16 %v103
    %v2217 = vunpack.c.l.b16 %v104
    %v2218 = vunpack.c.h.b16 %v104
    %v2219 = vunpack.c.l.b16 %v105
    %v2220 = vunpack.c.h.b16 %v105
    %v2221 = vunpack.c.l.b16 %v106
    %v2222 = vunpack.c.h.b16 %v106
    %v2223 = vunpack.c.l.b16 %v107
    %v2224 = vunpack.c.h.b16 %v107
    %v2225 = vunpack.c.l.b16 %v108
    %v2226 = vunpack.c.h.b16 %v108
    %v2227 = vunpack.c.l.b16 %v109
    %v2228 = vunpack.c.h.b16 %v109
    %v2229 = vunpack.c.l.b16 %v110
    %v2230 = vunpack.c.h.b16 %v110
    %v2231 = vunpack.c.l.b16 %v111
    %v2232 = vunpack.c.h.b16 %v111
    %v2233 = vunpack.c.l.b16 %v112
    %v2234 = vunpack.c.h.b16 %v112
    %v2235 = vunpack.c.l.b16 %v113
    %v2236 = vunpack.c.h.b16 %v113
    %v2237 = vunpack.c.l.b16 %v114
    %v2238 = vunpack.c.h.b16 %v114
    %v2239 = vunpack.c.l.b16 %v115
    %v2240 = vunpack.c.h.b16 %v115
    %v2241 = vunpack.c.l.b16 %v116
    %v2242 = vunpack.c.h.b16 %v116
    %v2243 = vunpack.c.l.b16 %v117
    %v2244 = vunpack.c.h.b16 %v117
    %v2245 = vunpack.c.l.b16 %v118
    %v2246 = vunpack.c.h.b16 %v118
    %v2247 = vunpack.c.l.b16 %v119
    %v2248 = vunpack.c.h.b16 %v119
    %v2249 = vunpack.c.l.b16 %v120
    %v2250 = vunpack.c.h.b16 %v120
    %v2251 = vunpack.c.l.b16 %v121
    %v2252 = vunpack.c.h.b16 %v121
    %v2253 = vunpack.c.l.b16 %v122
    %v2254 = vunpack.c.h.b16 %v122
    %v2255 = vunpack.c.l.b16 %v123
    %v2256 = vunpack.c.h.b16 %v123
    %v2257 = vunpack.c.l.b16 %v124
    %v2258 = vunpack.c.h.b16 %v124
    %v2259 = vunpack.c.l.b16 %v125
    %v2260 = vunpack.c.h.b16 %v125
    %v2261 = vunpack.c.l.b16 %v126
    %v2262 = vunpack.c.h.b16 %v126
    %v2263 = vunpack.c.l.b16 %v127
    %v2264 = vunpack.c.h.b16 %v127
    %v2265 = vunpack.c.l.b16 %v128
    %v2266 = vunpack.c.h.b16 %v128
    %v2267 = vunpack.c.l.b16 %v129
    %v2268 = vunpack.c.h.b16 %v129
    %v2269 = vunpack.c.l.b16 %v130
    %v2270 = vunpack.c.h.b16 %v130
    %v2271 = vunpack.c.l.b16 %v131
    %v2272 = vunpack.c.h.b16 %v131
    %v2273 = vunpack.c.l.b16 %v132
    %v2274 = vunpack.c.h.b16 %v132
    %v2275 = vunpack.c.l.b16 %v133
    %v2276 = vunpack.c.h.b16 %v133
    %v2277 = vunpack.c.l.b16 %v134
    %v2278 = vunpack.c.h.b16 %v134
    %v2279 = vunpack.c.l.b16 %v135
    %v2280 = vunpack.c.h.b16 %v135
    %v2281 = vunpack.c.l.b16 %v136
    %v2282 = vunpack.c.h.b16 %v136
    %v2283 = vunpack.c.l.b16 %v137
    %v2284 = vunpack.c.h.b16 %v137
    %v2285 = vunpack.c.l.b16 %v138
    %v2286 = vunpack.c.h.b16 %v138
    %v2287 = vunpack.c.l.b16 %v139
    %v2288 = vunpack.c.h.b16 %v139
    %v2289 = vunpack.c.l.b16 %v140
    %v2290 = vunpack.c.h.b16 %v140
    %v2291 = vunpack.c.l.b16 %v141
    %v2292 = vunpack.c.h.b16 %v141
    %v2293 = vunpack.c.l.b16 %v142
    %v2294 = vunpack.c.h.b16 %v142
    %v2295 = vunpack.c.l.b16 %v143
    %v2296 = vunpack.c.h.b16 %v143
    %v2297 = vunpack.c.l.b16 %v144
    %v2298 = vunpack.c.h.b16 %v144
    %v2299 = vunpack.c.l.b16 %v145
    %v2300 = vunpack.c.h.b16 %v145
    %v2301 = vunpack.c.l.b16 %v146
    %v2302 = vunpack.c.h.b16 %v146
    %v2303 = vunpack.c.l.b16 %v147
    %v2304 = vunpack.c.h.b16 %v147
    %v2305 = vunpack.c.l.b16 %v148
    %v2306 = vunpack.c.h.b16 %v148
    %v2307 = vunpack.c.l.b16 %v149
    %v2308 = vunpack.c.h.b16 %v149
    %v2309 = vunpack.c.l.b16 %v150
    %v2310 = vunpack.c.h.b16 %v150
    %v2311 = vunpack.c.l.b16 %v151
    %v2312 = vunpack.c.h.b16 %v151
    %v2313 = vunpack.c.l.b16 %v152
    %v2314 = vunpack.c.h.b16 %v152
    %v2315 = vunpack.c.l.b16 %v153
    %v2316 = vunpack.c.h.b16 %v153
    %v2317 = vunpack.c.l.b16 %v154
    %v2318 = vunpack.c.h.b16 %v154
    %v2319 = vunpack.c.l.b16 %v155
    %v2320 = vunpack.c.h.b16 %v155
    %v2321 = vunpack.c.l.b16 %v156
    %v2322 = vunpack.c.h.b16 %v156
    %v2323 = vunpack.c.l.b16 %v157
    %v2324 = vunpack.c.h.b16 %v157
    %v2325 = vunpack.c.l.b16 %v158
    %v2326 = vunpack.c.h.b16 %v158
    %v2327 = vunpack.c.l.b16 %v159
    %v2328 = vunpack.c.h.b16 %v159
    %v2329 = vunpack.c.l.b16 %v160
    %v2330 = vunpack.c.h.b16 %v160
    %v2331 = vunpack.c.l.b16 %v161
    %v2332 = vunpack.c.h.b16 %v161
    %v2333 = vunpack.c.l.b16 %v162
    %v2334 = vunpack.c.h.b16 %v162
    %v2335 = vunpack.c.l.b16 %v163
    %v2336 = vunpack.c.h.b16 %v163
    %v2337 = vunpack.c.l.b16 %v164
    %v2338 = vunpack.c.h.b16 %v164
    %v2339 = vunpack.c.l.b16 %v165
    %v2340 = vunpack.c.h.b16 %v165
    %v2341 = vunpack.c.l.b16 %v166
    %v2342 = vunpack.c.h.b16 %v166
    %v2343 = vunpack.c.l.b16 %v167
    %v2344 = vunpack.c.h.b16 %v167
    %v2345 = vunpack.c.l.b16 %v168
    %v2346 = vunpack.c.h.b16 %v168
    %v2347 = vunpack.c.l.b16 %v169
    %v2348 = vunpack.c.h.b16 %v169
    %v2349 = vunpack.c.l.b16 %v170
    %v2350 = vunpack.c.h.b16 %v170
    %v2351 = vunpack.c.l.b16 %v171
    %v2352 = vunpack.c.h.b16 %v171
    %v2353 = vunpack.c.l.b16 %v172
    %v2354 = vunpack.c.h.b16 %v172
    %v2355 = vunpack.c.l.b16 %v173
    %v2356 = vunpack.c.h.b16 %v173
    %v2357 = vunpack.c.l.b16 %v174
    %v2358 = vunpack.c.h.b16 %v174
    %v2359 = vunpack.c.l.b16 %v175
    %v2360 = vunpack.c.h.b16 %v175
    %v2361 = vunpack.c.l.b16 %v176
    %v2362 = vunpack.c.h.b16 %v176
    %v2363 = vunpack.c.l.b16 %v177
    %v2364 = vunpack.c.h.b16 %v177
    %v2365 = vunpack.c.l.b16 %v178
    %v2366 = vunpack.c.h.b16 %v178
    %v2367 = vunpack.c.l.b16 %v179
    %v2368 = vunpack.c.h.b16 %v179
    %v2369 = vunpack.c.l.b16 %v180
    %v2370 = vunpack.c.h.b16 %v180
    %v2371 = vunpack.c.l.b16 %v181
    %v2372 = vunpack.c.h.b16 %v181
    %v2373 = vunpack.c.l.b16 %v182
    %v2374 = vunpack.c.h.b16 %v182
    %v2375 = vunpack.c.l.b16 %v183
    %v2376 = vunpack.c.h.b16 %v183
    %v2377 = vunpack.c.l.b16 %v184
    %v2378 = vunpack.c.h.b16 %v184
    %v2379 = vunpack.c.l.b16 %v185
    %v2380 = vunpack.c.h.b16 %v185
    %v2381 = vunpack.c.l.b16 %v186
    %v2382 = vunpack.c.h.b16 %v186
    %v2383 = vunpack.c.l.b16 %v187
    %v2384 = vunpack.c.h.b16 %v187
    %v2385 = vunpack.c.l.b16 %v188
    %v2386 = vunpack.c.h.b16 %v188
    %v2387 = vunpack.c.l.b16 %v189
    %v2388 = vunpack.c.h.b16 %v189
    %v2389 = vunpack.c.l.b16 %v190
    %v2390 = vunpack.c.h.b16 %v190
    %v2391 = vunpack.c.l.b16 %v191
    %v2392 = vunpack.c.h.b16 %v191
    %v2393 = vunpack.c.l.b16 %v192
    %v2394 = vunpack.c.h.b16 %v192
    %v2395 = vunpack.c.l.b16 %v193
    %v2396 = vunpack.c.h.b16 %v193
    %v2397 = vunpack.c.l.b16 %v194
    %v2398 = vunpack.c.h.b16 %v194
    %v2399 = vunpack.c.l.b16 %v195
    %v2400 = vunpack.c.h.b16 %v195
    %v2401 = vunpack.c.l.b16 %v196
    %v2402 = vunpack.c.h.b16 %v196
    %v2403 = vunpack.c.l.b16 %v197
    %v2404 = vunpack.c.h.b16 %v197
    %v2405 = vunpack.c.l.b16 %v198
    %v2406 = vunpack.c.h.b16 %v198
    %v2407 = vunpack.c.l.b16 %v199
    %v2408 = vunpack.c.h.b16 %v199
    %v2409 = vunpack.c.l.b16 %v200
    %v2410 = vunpack.c.h.b16 %v200
    %v2411 = vunpack.c.l.b16 %v201
    %v2412 = vunpack.c.h.b16 %v201
    %v2413 = vunpack.c.l.b16 %v202
    %v2414 = vunpack.c.h.b16 %v202
    %v2415 = vunpack.c.l.b16 %v203
    %v2416 = vunpack.c.h.b16 %v203
    %v2417 = vunpack.c.l.b16 %v204
    %v2418 = vunpack.c.h.b16 %v204
    %v2419 = vunpack.c.l.b16 %v205
    %v2420 = vunpack.c.h.b16 %v205
    %v2421 = vunpack.c.l.b16 %v206
    %v2422 = vunpack.c.h.b16 %v206
    %v2423 = vunpack.c.l.b16 %v207
    %v2424 = vunpack.c.h.b16 %v207
    %v2425 = vunpack.c.l.b16 %v208
    %v2426 = vunpack.c.h.b16 %v208
    %v2427 = vunpack.c.l.b16 %v209
    %v2428 = vunpack.c.h.b16 %v209
    %v2429 = vunpack.c.l.b16 %v210
    %v2430 = vunpack.c.h.b16 %v210
    %v2431 = vunpack.c.l.b16 %v211
    %v2432 = vunpack.c.h.b16 %v211
    %v2433 = vunpack.c.l.b16 %v212
    %v2434 = vunpack.c.h.b16 %v212
    %v2435 = vunpack.c.l.b16 %v213
    %v2436 = vunpack.c.h.b16 %v213
    %v2437 = vunpack.c.l.b16 %v214
    %v2438 = vunpack.c.h.b16 %v214
    %v2439 = vunpack.c.l.b16 %v215
    %v2440 = vunpack.c.h.b16 %v215
    %v2441 = vunpack.c.l.b16 %v216
    %v2442 = vunpack.c.h.b16 %v216
    %v2443 = vunpack.c.l.b16 %v217
    %v2444 = vunpack.c.h.b16 %v217
    %v2445 = vunpack.c.l.b16 %v218
    %v2446 = vunpack.c.h.b16 %v218
    %v2447 = vunpack.c.l.b16 %v219
    %v2448 = vunpack.c.h.b16 %v219
    %v2449 = vunpack.c.l.b16 %v220
    %v2450 = vunpack.c.h.b16 %v220
    %v2451 = vunpack.c.l.b16 %v221
    %v2452 = vunpack.c.h.b16 %v221
    %v2453 = vunpack.c.l.b16 %v222
    %v2454 = vunpack.c.h.b16 %v222
    %v2455 = vunpack.c.l.b16 %v223
    %v2456 = vunpack.c.h.b16 %v223
    %v2457 = vunpack.c.l.b16 %v224
    %v2458 = vunpack.c.h.b16 %v224
    %v2459 = vunpack.c.l.b16 %v225
    %v2460 = vunpack.c.h.b16 %v225
    %v2461 = vunpack.c.l.b16 %v226
    %v2462 = vunpack.c.h.b16 %v226
    %v2463 = vunpack.c.l.b16 %v227
    %v2464 = vunpack.c.h.b16 %v227
    %v2465 = vunpack.c.l.b16 %v228
    %v2466 = vunpack.c.h.b16 %v228
    %v2467 = vunpack.c.l.b16 %v229
    %v2468 = vunpack.c.h.b16 %v229
    %v2469 = vunpack.c.l.b16 %v230
    %v2470 = vunpack.c.h.b16 %v230
    %v2471 = vunpack.c.l.b16 %v231
    %v2472 = vunpack.c.h.b16 %v231
    %v2473 = vunpack.c.l.b16 %v232
    %v2474 = vunpack.c.h.b16 %v232
    %v2475 = vunpack.c.l.b16 %v233
    %v2476 = vunpack.c.h.b16 %v233
    %v2477 = vunpack.c.l.b16 %v234
    %v2478 = vunpack.c.h.b16 %v234
    %v2479 = vunpack.c.l.b16 %v235
    %v2480 = vunpack.c.h.b16 %v235
    %v2481 = vunpack.c.l.b16 %v236
    %v2482 = vunpack.c.h.b16 %v236
    %v2483 = vunpack.c.l.b16 %v237
    %v2484 = vunpack.c.h.b16 %v237
    %v2485 = vunpack.c.l.b16 %v238
    %v2486 = vunpack.c.h.b16 %v238
    %v2487 = vunpack.c.l.b16 %v239
    %v2488 = vunpack.c.h.b16 %v239
    %v2489 = vunpack.c.l.b16 %v240
    %v2490 = vunpack.c.h.b16 %v240
    %v2491 = vunpack.c.l.b16 %v241
    %v2492 = vunpack.c.h.b16 %v241
    %v2493 = vunpack.c.l.b16 %v242
    %v2494 = vunpack.c.h.b16 %v242
    %v2495 = vunpack.c.l.b16 %v243
    %v2496 = vunpack.c.h.b16 %v243
    %v2497 = vunpack.c.l.b16 %v244
    %v2498 = vunpack.c.h.b16 %v244
    %v2499 = vunpack.c.l.b16 %v245
    %v2500 = vunpack.c.h.b16 %v245
    %v2501 = vunpack.c.l.b16 %v246
    %v2502 = vunpack.c.h.b16 %v246
    %v2503 = vunpack.c.l.b16 %v247
    %v2504 = vunpack.c.h.b16 %v247
    %v2505 = vunpack.c.l.b16 %v248
    %v2506 = vunpack.c.h.b16 %v248
    %v2507 = vunpack.c.l.b16 %v249
    %v2508 = vunpack.c.h.b16 %v249
    %v2509 = vunpack.c.l.b16 %v250
    %v2510 = vunpack.c.h.b16 %v250
    %v2511 = vunpack.c.l.b16 %v251
    %v2512 = vunpack.c.h.b16 %v251
    %v2513 = vunpack.c.l.b16 %v252
    %v2514 = vunpack.c.h.b16 %v252
    %v2515 = vunpack.c.l.b16 %v253
    %v2516 = vunpack.c.h.b16 %v253
    %v2517 = vunpack.c.l.b16 %v254
    %v2518 = vunpack.c.h.b16 %v254
    %v2519 = vunpack.c.l.b16 %v255
    %v2520 = vunpack.c.h.b16 %v255
    %v2521 = vunpack.c.l.b16 %v256
    %v2522 = vunpack.c.h.b16 %v256
    %v2523 = vunpack.c.l.b16 %v257
    %v2524 = vunpack.c.h.b16 %v257
    %v2525 = vunpack.c.l.b16 %v258
    %v2526 = vunpack.c.h.b16 %v258
    %v2527 = vunpack.c.l.b16 %v259
    %v2528 = vunpack.c.h.b16 %v259
    %v2529 = vunpack.c.l.b16 %v260
    %v2530 = vunpack.c.h.b16 %v260
    %v2531 = vunpack.c.l.b16 %v261
    %v2532 = vunpack.c.h.b16 %v261
    %v2533 = vunpack.c.l.b16 %v262
    %v2534 = vunpack.c.h.b16 %v262
    %v2535 = vunpack.c.l.b16 %v263
    %v2536 = vunpack.c.h.b16 %v263
    %v2537 = vunpack.c.l.b16 %v264
    %v2538 = vunpack.c.h.b16 %v264
    %v2539 = vunpack.c.l.b16 %v265
    %v2540 = vunpack.c.h.b16 %v265
    %v2541 = vunpack.c.l.b16 %v266
    %v2542 = vunpack.c.h.b16 %v266
    %v2543 = vunpack.c.l.b16 %v267
    %v2544 = vunpack.c.h.b16 %v267
    %v2545 = vunpack.c.l.b16 %v268
    %v2546 = vunpack.c.h.b16 %v268
    %v2547 = vunpack.c.l.b16 %v269
    %v2548 = vunpack.c.h.b16 %v269
    %v2549 = vunpack.c.l.b16 %v270
    %v2550 = vunpack.c.h.b16 %v270
    %v2551 = vunpack.c.l.b16 %v271
    %v2552 = vunpack.c.h.b16 %v271
    %v2553 = vunpack.c.l.b16 %v272
    %v2554 = vunpack.c.h.b16 %v272
    %v2555 = vunpack.c.l.b16 %v273
    %v2556 = vunpack.c.h.b16 %v273
    %v2557 = vunpack.c.l.b16 %v274
    %v2558 = vunpack.c.h.b16 %v274
    %v2559 = vunpack.c.l.b16 %v275
    %v2560 = vunpack.c.h.b16 %v275
    %v2561 = vunpack.c.l.b16 %v276
    %v2562 = vunpack.c.h.b16 %v276
    %v2563 = vunpack.c.l.b16 %v277
    %v2564 = vunpack.c.h.b16 %v277
    %v2565 = vunpack.c.l.b16 %v278
    %v2566 = vunpack.c.h.b16 %v278
    %v2567 = vunpack.c.l.b16 %v279
    %v2568 = vunpack.c.h.b16 %v279
    %v2569 = vunpack.c.l.b16 %v280
    %v2570 = vunpack.c.h.b16 %v280
    %v2571 = vunpack.c.l.b16 %v281
    %v2572 = vunpack.c.h.b16 %v281
    %v2573 = vunpack.c.l.b16 %v282
    %v2574 = vunpack.c.h.b16 %v282
    %v2575 = vunpack.c.l.b16 %v283
    %v2576 = vunpack.c.h.b16 %v283
    %v2577 = vunpack.c.l.b16 %v284
    %v2578 = vunpack.c.h.b16 %v284
    %v2579 = vunpack.c.l.b16 %v285
    %v2580 = vunpack.c.h.b16 %v285
    %v2581 = vunpack.c.l.b16 %v286
    %v2582 = vunpack.c.h.b16 %v286
    %v2583 = vunpack.c.l.b16 %v287
    %v2584 = vunpack.c.h.b16 %v287
    %v2585 = vunpack.c.l.b16 %v288
    %v2586 = vunpack.c.h.b16 %v288
    %v2587 = vunpack.c.l.b16 %v289
    %v2588 = vunpack.c.h.b16 %v289
    %v2589 = vunpack.c.l.b16 %v290
    %v2590 = vunpack.c.h.b16 %v290
    %v2591 = vunpack.c.l.b16 %v291
    %v2592 = vunpack.c.h.b16 %v291
    %v2593 = vunpack.c.l.b16 %v292
    %v2594 = vunpack.c.h.b16 %v292
    %v2595 = vunpack.c.l.b16 %v293
    %v2596 = vunpack.c.h.b16 %v293
    %v2597 = vunpack.c.l.b16 %v294
    %v2598 = vunpack.c.h.b16 %v294
    %v2599 = vunpack.c.l.b16 %v295
    %v2600 = vunpack.c.h.b16 %v295
    %v2601 = vunpack.c.l.b16 %v296
    %v2602 = vunpack.c.h.b16 %v296
    %v2603 = vunpack.c.l.b16 %v297
    %v2604 = vunpack.c.h.b16 %v297
    %v2605 = vunpack.c.l.b16 %v298
    %v2606 = vunpack.c.h.b16 %v298
    %v2607 = vunpack.c.l.b16 %v299
    %v2608 = vunpack.c.h.b16 %v299
    %v2609 = vunpack.c.l.b16 %v300
    %v2610 = vunpack.c.h.b16 %v300
    %v2611 = vunpack.c.l.b16 %v301
    %v2612 = vunpack.c.h.b16 %v301
    %v2613 = vunpack.c.l.b16 %v302
    %v2614 = vunpack.c.h.b16 %v302
    %v2615 = vunpack.c.l.b16 %v303
    %v2616 = vunpack.c.h.b16 %v303
    %v2617 = vunpack.c.l.b16 %v304
    %v2618 = vunpack.c.h.b16 %v304
    %v2619 = vunpack.c.l.b16 %v305
    %v2620 = vunpack.c.h.b16 %v305
    %v2621 = vunpack.c.l.b16 %v306
    %v2622 = vunpack.c.h.b16 %v306
    %v2623 = vunpack.c.l.b16 %v307
    %v2624 = vunpack.c.h.b16 %v307
    %v2625 = vunpack.c.l.b16 %v308
    %v2626 = vunpack.c.h.b16 %v308
    %v2627 = vunpack.c.l.b16 %v309
    %v2628 = vunpack.c.h.b16 %v309
    %v2629 = vunpack.c.l.b16 %v310
    %v2630 = vunpack.c.h.b16 %v310
    %v2631 = vunpack.c.l.b16 %v311
    %v2632 = vunpack.c.h.b16 %v311
    %v2633 = vunpack.c.l.b16 %v312
    %v2634 = vunpack.c.h.b16 %v312
    %v2635 = vunpack.c.l.b16 %v313
    %v2636 = vunpack.c.h.b16 %v313
    %v2637 = vunpack.c.l.b16 %v314
    %v2638 = vunpack.c.h.b16 %v314
    %v2639 = vunpack.c.l.b16 %v315
    %v2640 = vunpack.c.h.b16 %v315
    %v2641 = vunpack.c.l.b16 %v316
    %v2642 = vunpack.c.h.b16 %v316
    %v2643 = vunpack.c.l.b16 %v317
    %v2644 = vunpack.c.h.b16 %v317
    %v2645 = vunpack.c.l.b16 %v318
    %v2646 = vunpack.c.h.b16 %v318
    %v2647 = vunpack.c.l.b16 %v319
    %v2648 = vunpack.c.h.b16 %v319
    %v2649 = vunpack.c.l.b16 %v320
    %v2650 = vunpack.c.h.b16 %v320
    %v2651 = vunpack.c.l.b16 %v321
    %v2652 = vunpack.c.h.b16 %v321
    %v2653 = vunpack.c.l.b16 %v322
    %v2654 = vunpack.c.h.b16 %v322
    %v2655 = vunpack.c.l.b16 %v323
    %v2656 = vunpack.c.h.b16 %v323
    %v2657 = vunpack.c.l.b16 %v324
    %v2658 = vunpack.c.h.b16 %v324
    %v2659 = vunpack.c.l.b16 %v325
    %v2660 = vunpack.c.h.b16 %v325
    %v2661 = vunpack.c.l.b16 %v326
    %v2662 = vunpack.c.h.b16 %v326
    %v2663 = vunpack.c.l.b16 %v327
    %v2664 = vunpack.c.h.b16 %v327
    %v2665 = vunpack.c.l.b16 %v328
    %v2666 = vunpack.c.h.b16 %v328
    %v2667 = vunpack.c.l.b16 %v329
    %v2668 = vunpack.c.h.b16 %v329
    %v2669 = vunpack.c.l.b16 %v330
    %v2670 = vunpack.c.h.b16 %v330
    %v2671 = vunpack.c.l.b16 %v331
    %v2672 = vunpack.c.h.b16 %v331
    %v2673 = vunpack.c.l.b16 %v332
    %v2674 = vunpack.c.h.b16 %v332
    %v2675 = vunpack.c.l.b16 %v333
    %v2676 = vunpack.c.h.b16 %v333
    %v2677 = vunpack.c.l.b16 %v334
    %v2678 = vunpack.c.h.b16 %v334
    %v2679 = vunpack.c.l.b16 %v335
    %v2680 = vunpack.c.h.b16 %v335
    %v2681 = vunpack.c.l.b16 %v336
    %v2682 = vunpack.c.h.b16 %v336
    %v2683 = vunpack.c.l.b16 %v337
    %v2684 = vunpack.c.h.b16 %v337
    %v2685 = vunpack.c.l.b16 %v338
    %v2686 = vunpack.c.h.b16 %v338
    %v2687 = vunpack.c.l.b16 %v339
    %v2688 = vunpack.c.h.b16 %v339
    %v2689 = vunpack.c.l.b16 %v340
    %v2690 = vunpack.c.h.b16 %v340
    %v2691 = vunpack.c.l.b16 %v341
    %v2692 = vunpack.c.h.b16 %v341
    %v2693 = vunpack.c.l.b16 %v342
    %v2694 = vunpack.c.h.b16 %v342
    %v2695 = vunpack.c.l.b16 %v343
    %v2696 = vunpack.c.h.b16 %v343
    %v2697 = vunpack.c.l.b16 %v344
    %v2698 = vunpack.c.h.b16 %v344
    %v2699 = vunpack.c.l.b16 %v345
    %v2700 = vunpack.c.h.b16 %v345
    %v2701 = vunpack.c.l.b16 %v346
    %v2702 = vunpack.c.h.b16 %v346
    %v2703 = vunpack.c.l.b16 %v347
    %v2704 = vunpack.c.h.b16 %v347
    %v2705 = vunpack.c.l.b16 %v348
    %v2706 = vunpack.c.h.b16 %v348
    %v2707 = vunpack.c.l.b16 %v349
    %v2708 = vunpack.c.h.b16 %v349
    %v2709 = vunpack.c.l.b16 %v350
    %v2710 = vunpack.c.h.b16 %v350
    %v2711 = vunpack.c.l.b16 %v351
    %v2712 = vunpack.c.h.b16 %v351
    %v2713 = vunpack.c.l.b16 %v352
    %v2714 = vunpack.c.h.b16 %v352
    %v2715 = vunpack.c.l.b16 %v353
    %v2716 = vunpack.c.h.b16 %v353
    %v2717 = vunpack.c.l.b16 %v354
    %v2718 = vunpack.c.h.b16 %v354
    %v2719 = vunpack.c.l.b16 %v355
    %v2720 = vunpack.c.h.b16 %v355
    %v2721 = vunpack.c.l.b16 %v356
    %v2722 = vunpack.c.h.b16 %v356
    %v2723 = vunpack.c.l.b16 %v357
    %v2724 = vunpack.c.h.b16 %v357
    %v2725 = vunpack.c.l.b16 %v358
    %v2726 = vunpack.c.h.b16 %v358
    %v2727 = vunpack.c.l.b16 %v359
    %v2728 = vunpack.c.h.b16 %v359
    %v2729 = vunpack.c.l.b16 %v360
    %v2730 = vunpack.c.h.b16 %v360
    %v2731 = vunpack.c.l.b16 %v361
    %v2732 = vunpack.c.h.b16 %v361
    %v2733 = vunpack.c.l.b16 %v362
    %v2734 = vunpack.c.h.b16 %v362
    %v2735 = vunpack.c.l.b16 %v363
    %v2736 = vunpack.c.h.b16 %v363
    %v2737 = vunpack.c.l.b16 %v364
    %v2738 = vunpack.c.h.b16 %v364
    %v2739 = vunpack.c.l.b16 %v365
    %v2740 = vunpack.c.h.b16 %v365
    %v2741 = vunpack.c.l.b16 %v366
    %v2742 = vunpack.c.h.b16 %v366
    %v2743 = vunpack.c.l.b16 %v367
    %v2744 = vunpack.c.h.b16 %v367
    %v2745 = vunpack.c.l.b16 %v368
    %v2746 = vunpack.c.h.b16 %v368
    %v2747 = vunpack.c.l.b16 %v369
    %v2748 = vunpack.c.h.b16 %v369
    %v2749 = vunpack.c.l.b16 %v370
    %v2750 = vunpack.c.h.b16 %v370
    %v2751 = vunpack.c.l.b16 %v371
    %v2752 = vunpack.c.h.b16 %v371
    %v2753 = vunpack.c.l.b16 %v372
    %v2754 = vunpack.c.h.b16 %v372
    %v2755 = vunpack.c.l.b16 %v373
    %v2756 = vunpack.c.h.b16 %v373
    %v2757 = vunpack.c.l.b16 %v374
    %v2758 = vunpack.c.h.b16 %v374
    %v2759 = vunpack.c.l.b16 %v375
    %v2760 = vunpack.c.h.b16 %v375
    %v2761 = vunpack.c.l.b16 %v376
    %v2762 = vunpack.c.h.b16 %v376
    %v2763 = vunpack.c.l.b16 %v377
    %v2764 = vunpack.c.h.b16 %v377
    %v2765 = vunpack.c.l.b16 %v378
    %v2766 = vunpack.c.h.b16 %v378
    %v2767 = vunpack.c.l.b16 %v379
    %v2768 = vunpack.c.h.b16 %v379
    %v2769 = vunpack.c.l.b16 %v380
    %v2770 = vunpack.c.h.b16 %v380
    %v2771 = vunpack.c.l.b16 %v381
    %v2772 = vunpack.c.h.b16 %v381
    %v2773 = vunpack.c.l.b16 %v382
    %v2774 = vunpack.c.h.b16 %v382
    %v2775 = vunpack.c.l.b16 %v383
    %v2776 = vunpack.c.h.b16 %v383
    %v2777 = vunpack.c.l.b16 %v384
    %v2778 = vunpack.c.h.b16 %v384
    %v2779 = vunpack.c.l.b16 %v385
    %v2780 = vunpack.c.h.b16 %v385
    %v2781 = vunpack.c.l.b16 %v386
    %v2782 = vunpack.c.h.b16 %v386
    %v2783 = vunpack.c.l.b16 %v387
    %v2784 = vunpack.c.h.b16 %v387
    %v2785 = vunpack.c.l.b16 %v388
    %v2786 = vunpack.c.h.b16 %v388
    %v2787 = vunpack.c.l.b16 %v389
    %v2788 = vunpack.c.h.b16 %v389
    %v2789 = vunpack.c.l.b16 %v390
    %v2790 = vunpack.c.h.b16 %v390
    %v2791 = vunpack.c.l.b16 %v391
    %v2792 = vunpack.c.h.b16 %v391
    %v2793 = vunpack.c.l.b16 %v392
    %v2794 = vunpack.c.h.b16 %v392
    %v2795 = vunpack.c.l.b16 %v393
    %v2796 = vunpack.c.h.b16 %v393
    %v2797 = vunpack.c.l.b16 %v394
    %v2798 = vunpack.c.h.b16 %v394
    %v2799 = vunpack.c.l.b16 %v395
    %v2800 = vunpack.c.h.b16 %v395
    %v2801 = vunpack.c.l.b16 %v396
    %v2802 = vunpack.c.h.b16 %v396
    %v2803 = vunpack.c.l.b16 %v397
    %v2804 = vunpack.c.h.b16 %v397
    %v2805 = vunpack.c.l.b16 %v398
    %v2806 = vunpack.c.h.b16 %v398
    %v2807 = vunpack.c.l.b16 %v399
    %v2808 = vunpack.c.h.b16 %v399
    %v2809 = vunpack.c.l.b16 %v400
    %v2810 = vunpack.c.h.b16 %v400
    %v2811 = vunpack.c.l.b16 %v401
    %v2812 = vunpack.c.h.b16 %v401
    %v2813 = vunpack.c.l.b16 %v402
    %v2814 = vunpack.c.h.b16 %v402
    %v2815 = vunpack.c.l.b16 %v403
    %v2816 = vunpack.c.h.b16 %v403
    %v2817 = vunpack.c.l.b16 %v404
    %v2818 = vunpack.c.h.b16 %v404
    %v2819 = vunpack.c.l.b16 %v405
    %v2820 = vunpack.c.h.b16 %v405
    %v2821 = vunpack.c.l.b16 %v406
    %v2822 = vunpack.c.h.b16 %v406
    %v2823 = vunpack.c.l.b16 %v407
    %v2824 = vunpack.c.h.b16 %v407
    %v2825 = vunpack.c.l.b16 %v408
    %v2826 = vunpack.c.h.b16 %v408
    %v2827 = vunpack.c.l.b16 %v409
    %v2828 = vunpack.c.h.b16 %v409
    %v2829 = vunpack.c.l.b16 %v410
    %v2830 = vunpack.c.h.b16 %v410
    %v2831 = vunpack.c.l.b16 %v411
    %v2832 = vunpack.c.h.b16 %v411
    %v2833 = vunpack.c.l.b16 %v412
    %v2834 = vunpack.c.h.b16 %v412
    %v2835 = vunpack.c.l.b16 %v413
    %v2836 = vunpack.c.h.b16 %v413
    %v2837 = vunpack.c.l.b16 %v414
    %v2838 = vunpack.c.h.b16 %v414
    %v2839 = vunpack.c.l.b16 %v415
    %v2840 = vunpack.c.h.b16 %v415
    %v2841 = vunpack.c.l.b16 %v416
    %v2842 = vunpack.c.h.b16 %v416
    %v2843 = vunpack.c.l.b16 %v417
    %v2844 = vunpack.c.h.b16 %v417
    %v2845 = vunpack.c.l.b16 %v418
    %v2846 = vunpack.c.h.b16 %v418
    %v2847 = vunpack.c.l.b16 %v419
    %v2848 = vunpack.c.h.b16 %v419
    %v2849 = vunpack.c.l.b16 %v420
    %v2850 = vunpack.c.h.b16 %v420
    %v2851 = vunpack.c.l.b16 %v421
    %v2852 = vunpack.c.h.b16 %v421
    %v2853 = vunpack.c.l.b16 %v422
    %v2854 = vunpack.c.h.b16 %v422
    %v2855 = vunpack.c.l.b16 %v423
    %v2856 = vunpack.c.h.b16 %v423
    %v2857 = vunpack.c.l.b16 %v424
    %v2858 = vunpack.c.h.b16 %v424
    %v2859 = vunpack.c.l.b16 %v425
    %v2860 = vunpack.c.h.b16 %v425
    %v2861 = vunpack.c.l.b16 %v426
    %v2862 = vunpack.c.h.b16 %v426
    %v2863 = vunpack.c.l.b16 %v427
    %v2864 = vunpack.c.h.b16 %v427
    %v2865 = vunpack.c.l.b16 %v428
    %v2866 = vunpack.c.h.b16 %v428
    %v2867 = vunpack.c.l.b16 %v429
    %v2868 = vunpack.c.h.b16 %v429
    %v2869 = vunpack.c.l.b16 %v430
    %v2870 = vunpack.c.h.b16 %v430
    %v2871 = vunpack.c.l.b16 %v431
    %v2872 = vunpack.c.h.b16 %v431
    %v2873 = vunpack.c.l.b16 %v432
    %v2874 = vunpack.c.h.b16 %v432
    %v2875 = vunpack.c.l.b16 %v433
    %v2876 = vunpack.c.h.b16 %v433
    %v2877 = vunpack.c.l.b16 %v434
    %v2878 = vunpack.c.h.b16 %v434
    %v2879 = vunpack.c.l.b16 %v435
    %v2880 = vunpack.c.h.b16 %v435
    %v2881 = vunpack.c.l.b16 %v436
    %v2882 = vunpack.c.h.b16 %v436
    %v2883 = vunpack.c.l.b16 %v437
    %v2884 = vunpack.c.h.b16 %v437
    %v2885 = vunpack.c.l.b16 %v438
    %v2886 = vunpack.c.h.b16 %v438
    %v2887 = vunpack.c.l.b16 %v439
    %v2888 = vunpack.c.h.b16 %v439
    %v2889 = vunpack.c.l.b16 %v440
    %v2890 = vunpack.c.h.b16 %v440
    %v2891 = vunpack.c.l.b16 %v441
    %v2892 = vunpack.c.h.b16 %v441
    %v2893 = vunpack.c.l.b16 %v442
    %v2894 = vunpack.c.h.b16 %v442
    %v2895 = vunpack.c.l.b16 %v443
    %v2896 = vunpack.c.h.b16 %v443
    %v2897 = vunpack.c.l.b16 %v444
    %v2898 = vunpack.c.h.b16 %v444
    %v2899 = vunpack.c.l.b16 %v445
    %v2900 = vunpack.c.h.b16 %v445
    %v2901 = vunpack.c.l.b16 %v446
    %v2902 = vunpack.c.h.b16 %v446
    %v2903 = vunpack.c.l.b16 %v447
    %v2904 = vunpack.c.h.b16 %v447
    %v2905 = vunpack.c.l.b16 %v448
    %v2906 = vunpack.c.h.b16 %v448
    %v2907 = vunpack.c.l.b16 %v449
    %v2908 = vunpack.c.h.b16 %v449
    %v2909 = vunpack.c.l.b16 %v450
    %v2910 = vunpack.c.h.b16 %v450
    %v2911 = vunpack.c.l.b16 %v451
    %v2912 = vunpack.c.h.b16 %v451
    %v2913 = vunpack.c.l.b16 %v452
    %v2914 = vunpack.c.h.b16 %v452
    %v2915 = vunpack.c.l.b16 %v453
    %v2916 = vunpack.c.h.b16 %v453
    %v2917 = vunpack.c.l.b16 %v454
    %v2918 = vunpack.c.h.b16 %v454
    %v2919 = vunpack.c.l.b16 %v455
    %v2920 = vunpack.c.h.b16 %v455
    %v2921 = vunpack.c.l.b16 %v456
    %v2922 = vunpack.c.h.b16 %v456
    %v2923 = vunpack.c.l.b16 %v457
    %v2924 = vunpack.c.h.b16 %v457
    %v2925 = vunpack.c.l.b16 %v458
    %v2926 = vunpack.c.h.b16 %v458
    %v2927 = vunpack.c.l.b16 %v459
    %v2928 = vunpack.c.h.b16 %v459
    %v2929 = vunpack.c.l.b16 %v460
    %v2930 = vunpack.c.h.b16 %v460
    %v2931 = vunpack.c.l.b16 %v461
    %v2932 = vunpack.c.h.b16 %v461
    %v2933 = vunpack.c.l.b16 %v462
    %v2934 = vunpack.c.h.b16 %v462
    %v2935 = vunpack.c.l.b16 %v463
    %v2936 = vunpack.c.h.b16 %v463
    %v2937 = vunpack.c.l.b16 %v464
    %v2938 = vunpack.c.h.b16 %v464
    %v2939 = vunpack.c.l.b16 %v465
    %v2940 = vunpack.c.h.b16 %v465
    %v2941 = vunpack.c.l.b16 %v466
    %v2942 = vunpack.c.h.b16 %v466
    %v2943 = vunpack.c.l.b16 %v467
    %v2944 = vunpack.c.h.b16 %v467
    %v2945 = vunpack.c.l.b16 %v468
    %v2946 = vunpack.c.h.b16 %v468
    %v2947 = vunpack.c.l.b16 %v469
    %v2948 = vunpack.c.h.b16 %v469
    %v2949 = vunpack.c.l.b16 %v470
    %v2950 = vunpack.c.h.b16 %v470
    %v2951 = vunpack.c.l.b16 %v471
    %v2952 = vunpack.c.h.b16 %v471
    %v2953 = vunpack.c.l.b16 %v472
    %v2954 = vunpack.c.h.b16 %v472
    %v2955 = vunpack.c.l.b16 %v473
    %v2956 = vunpack.c.h.b16 %v473
    %v2957 = vunpack.c.l.b16 %v474
    %v2958 = vunpack.c.h.b16 %v474
    %v2959 = vunpack.c.l.b16 %v475
    %v2960 = vunpack.c.h.b16 %v475
    %v2961 = vunpack.c.l.b16 %v476
    %v2962 = vunpack.c.h.b16 %v476
    %v2963 = vunpack.c.l.b16 %v477
    %v2964 = vunpack.c.h.b16 %v477
    %v2965 = vunpack.c.l.b16 %v478
    %v2966 = vunpack.c.h.b16 %v478
    %v2967 = vunpack.c.l.b16 %v479
    %v2968 = vunpack.c.h.b16 %v479
    %v2969 = vunpack.c.l.b16 %v480
    %v2970 = vunpack.c.h.b16 %v480
    %v2971 = vunpack.c.l.b16 %v481
    %v2972 = vunpack.c.h.b16 %v481
    %v2973 = vunpack.c.l.b16 %v482
    %v2974 = vunpack.c.h.b16 %v482
    %v2975 = vunpack.c.l.b16 %v483
    %v2976 = vunpack.c.h.b16 %v483
    %v2977 = vunpack.c.l.b16 %v484
    %v2978 = vunpack.c.h.b16 %v484
    %v2979 = vunpack.c.l.b16 %v485
    %v2980 = vunpack.c.h.b16 %v485
    %v2981 = vunpack.c.l.b16 %v486
    %v2982 = vunpack.c.h.b16 %v486
    %v2983 = vunpack.c.l.b16 %v487
    %v2984 = vunpack.c.h.b16 %v487
    %v2985 = vunpack.c.l.b16 %v488
    %v2986 = vunpack.c.h.b16 %v488
    %v2987 = vunpack.c.l.b16 %v489
    %v2988 = vunpack.c.h.b16 %v489
    %v2989 = vunpack.c.l.b16 %v490
    %v2990 = vunpack.c.h.b16 %v490
    %v2991 = vunpack.c.l.b16 %v491
    %v2992 = vunpack.c.h.b16 %v491
    %v2993 = vunpack.c.l.b16 %v492
    %v2994 = vunpack.c.h.b16 %v492
    %v2995 = vunpack.c.l.b16 %v493
    %v2996 = vunpack.c.h.b16 %v493
    %v2997 = vunpack.c.l.b16 %v494
    %v2998 = vunpack.c.h.b16 %v494
    %v2999 = vunpack.c.l.b16 %v495
    %v3000 = vunpack.c.h.b16 %v495
    %v3001 = vunpack.c.l.b16 %v496
    %v3002 = vunpack.c.h.b16 %v496
    %v3003 = vunpack.c.l.b16 %v497
    %v3004 = vunpack.c.h.b16 %v497
    %v3005 = vunpack.c.l.b16 %v498
    %v3006 = vunpack.c.h.b16 %v498
    %v3007 = vunpack.c.l.b16 %v499
    %v3008 = vunpack.c.h.b16 %v499
    %v3009 = vunpack.c.l.b16 %v500
    %v3010 = vunpack.c.h.b16 %v500
    %v3011 = vunpack.c.l.b16 %v501
    %v3012 = vunpack.c.h.b16 %v501
    %v3013 = vunpack.c.l.b16 %v502
    %v3014 = vunpack.c.h.b16 %v502
    %v3015 = vunpack.c.l.b16 %v503
    %v3016 = vunpack.c.h.b16 %v503
    %v3017 = vunpack.c.l.b16 %v504
    %v3018 = vunpack.c.h.b16 %v504
    %v3019 = vunpack.c.l.b16 %v505
    %v3020 = vunpack.c.h.b16 %v505
    %v3021 = vunpack.c.l.b16 %v506
    %v3022 = vunpack.c.h.b16 %v506
    %v3023 = vunpack.c.l.b16 %v507
    %v3024 = vunpack.c.h.b16 %v507
    %v3025 = vunpack.c.l.b16 %v508
    %v3026 = vunpack.c.h.b16 %v508
    %v3027 = vunpack.c.l.b16 %v509
    %v3028 = vunpack.c.h.b16 %v509
    %v3029 = vunpack.c.l.b16 %v510
    %v3030 = vunpack.c.h.b16 %v510
    %v3031 = vunpack.c.l.b16 %v511
    %v3032 = vunpack.c.h.b16 %v511
    %v3033 = vunpack.c.l.b16 %v512
    %v3034 = vunpack.c.h.b16 %v512
    %v3035 = vunpack.c.l.b16 %v513
    %v3036 = vunpack.c.h.b16 %v513
    %v3037 = vunpack.c.l.b16 %v514
    %v3038 = vunpack.c.h.b16 %v514
    %v3039 = vunpack.c.l.b16 %v515
    %v3040 = vunpack.c.h.b16 %v515
    %v3041 = vunpack.c.l.b16 %v516
    %v3042 = vunpack.c.h.b16 %v516
    %v3043 = vunpack.c.l.b16 %v517
    %v3044 = vunpack.c.h.b16 %v517
    %v3045 = vunpack.c.l.b16 %v518
    %v3046 = vunpack.c.h.b16 %v518
    %v3047 = vunpack.c.l.b16 %v519
    %v3048 = vunpack.c.h.b16 %v519
    %v3049 = vunpack.c.l.b16 %v520
    %v3050 = vunpack.c.h.b16 %v520
    %v3051 = vunpack.c.l.b16 %v521
    %v3052 = vunpack.c.h.b16 %v521
    %v3053 = vunpack.c.l.b16 %v522
    %v3054 = vunpack.c.h.b16 %v522
    %v3055 = vunpack.c.l.b16 %v523
    %v3056 = vunpack.c.h.b16 %v523
    %v3057 = vunpack.c.l.b16 %v524
    %v3058 = vunpack.c.h.b16 %v524
    %v3059 = vunpack.c.l.b16 %v525
    %v3060 = vunpack.c.h.b16 %v525
    %v3061 = vunpack.c.l.b16 %v526
    %v3062 = vunpack.c.h.b16 %v526
    %v3063 = vunpack.c.l.b16 %v527
    %v3064 = vunpack.c.h.b16 %v527
    %v3065 = vunpack.c.l.b16 %v528
    %v3066 = vunpack.c.h.b16 %v528
    %v3067 = vunpack.c.l.b16 %v529
    %v3068 = vunpack.c.h.b16 %v529
    %v3069 = vunpack.c.l.b16 %v530
    %v3070 = vunpack.c.h.b16 %v530
    %v3071 = vunpack.c.l.b16 %v531
    %v3072 = vunpack.c.h.b16 %v531
    %v3073 = vunpack.c.l.b16 %v532
    %v3074 = vunpack.c.h.b16 %v532
    %v3075 = vunpack.c.l.b16 %v533
    %v3076 = vunpack.c.h.b16 %v533
    %v3077 = vunpack.c.l.b16 %v534
    %v3078 = vunpack.c.h.b16 %v534
    %v3079 = vunpack.c.l.b16 %v535
    %v3080 = vunpack.c.h.b16 %v535
    %v3081 = vunpack.c.l.b16 %v536
    %v3082 = vunpack.c.h.b16 %v536
    %v3083 = vunpack.c.l.b16 %v537
    %v3084 = vunpack.c.h.b16 %v537
    %v3085 = vunpack.c.l.b16 %v538
    %v3086 = vunpack.c.h.b16 %v538
    %v3087 = vunpack.c.l.b16 %v539
    %v3088 = vunpack.c.h.b16 %v539
    %v3089 = vunpack.c.l.b16 %v540
    %v3090 = vunpack.c.h.b16 %v540
    %v3091 = vunpack.c.l.b16 %v541
    %v3092 = vunpack.c.h.b16 %v541
    %v3093 = vunpack.c.l.b16 %v542
    %v3094 = vunpack.c.h.b16 %v542
    %v3095 = vunpack.c.l.b16 %v543
    %v3096 = vunpack.c.h.b16 %v543
    %v3097 = vunpack.c.l.b16 %v544
    %v3098 = vunpack.c.h.b16 %v544
    %v3099 = vunpack.c.l.b16 %v545
    %v3100 = vunpack.c.h.b16 %v545
    %v3101 = vunpack.c.l.b16 %v546
    %v3102 = vunpack.c.h.b16 %v546
    %v3103 = vunpack.c.l.b16 %v547
    %v3104 = vunpack.c.h.b16 %v547
    %v3105 = vunpack.c.l.b16 %v548
    %v3106 = vunpack.c.h.b16 %v548
    %v3107 = vunpack.c.l.b16 %v549
    %v3108 = vunpack.c.h.b16 %v549
    %v3109 = vunpack.c.l.b16 %v550
    %v3110 = vunpack.c.h.b16 %v550
    %v3111 = vunpack.c.l.b16 %v551
    %v3112 = vunpack.c.h.b16 %v551
    %v3113 = vunpack.c.l.b16 %v552
    %v3114 = vunpack.c.h.b16 %v552
    %v3115 = vunpack.c.l.b16 %v553
    %v3116 = vunpack.c.h.b16 %v553
    %v3117 = vunpack.c.l.b16 %v554
    %v3118 = vunpack.c.h.b16 %v554
    %v3119 = vunpack.c.l.b16 %v555
    %v3120 = vunpack.c.h.b16 %v555
    %v3121 = vunpack.c.l.b16 %v556
    %v3122 = vunpack.c.h.b16 %v556
    %v3123 = vunpack.c.l.b16 %v557
    %v3124 = vunpack.c.h.b16 %v557
    %v3125 = vunpack.c.l.b16 %v558
    %v3126 = vunpack.c.h.b16 %v558
    %v3127 = vunpack.c.l.b16 %v559
    %v3128 = vunpack.c.h.b16 %v559
    %v3129 = vunpack.c.l.b16 %v560
    %v3130 = vunpack.c.h.b16 %v560
    %v3131 = vunpack.c.l.b16 %v561
    %v3132 = vunpack.c.h.b16 %v561
    %v3133 = vunpack.c.l.b16 %v562
    %v3134 = vunpack.c.h.b16 %v562
    %v3135 = vunpack.c.l.b16 %v563
    %v3136 = vunpack.c.h.b16 %v563
    %v3137 = vunpack.c.l.b16 %v564
    %v3138 = vunpack.c.h.b16 %v564
    %v3139 = vunpack.c.l.b16 %v565
    %v3140 = vunpack.c.h.b16 %v565
    %v3141 = vunpack.c.l.b16 %v566
    %v3142 = vunpack.c.h.b16 %v566
    %v3143 = vunpack.c.l.b16 %v567
    %v3144 = vunpack.c.h.b16 %v567
    %v3145 = vunpack.c.l.b16 %v568
    %v3146 = vunpack.c.h.b16 %v568
    %v3147 = vunpack.c.l.b16 %v569
    %v3148 = vunpack.c.h.b16 %v569
    %v3149 = vunpack.c.l.b16 %v570
    %v3150 = vunpack.c.h.b16 %v570
    %v3151 = vunpack.c.l.b16 %v571
    %v3152 = vunpack.c.h.b16 %v571
    %v3153 = vunpack.c.l.b16 %v572
    %v3154 = vunpack.c.h.b16 %v572
    %v3155 = vunpack.c.l.b16 %v573
    %v3156 = vunpack.c.h.b16 %v573
    %v3157 = vunpack.c.l.b16 %v574
    %v3158 = vunpack.c.h.b16 %v574
    %v3159 = vunpack.c.l.b16 %v575
    %v3160 = vunpack.c.h.b16 %v575
    %v3161 = vunpack.c.l.b16 %v576
    %v3162 = vunpack.c.h.b16 %v576
    %v3163 = vunpack.c.l.b16 %v577
    %v3164 = vunpack.c.h.b16 %v577
    %v3165 = vunpack.c.l.b16 %v578
    %v3166 = vunpack.c.h.b16 %v578
    %v3167 = vunpack.c.l.b16 %v579
    %v3168 = vunpack.c.h.b16 %v579
    %v3169 = vunpack.c.l.b16 %v580
    %v3170 = vunpack.c.h.b16 %v580
    %v3171 = vunpack.c.l.b16 %v581
    %v3172 = vunpack.c.h.b16 %v581
    %v3173 = vunpack.c.l.b16 %v582
    %v3174 = vunpack.c.h.b16 %v582
    %v3175 = vunpack.c.l.b16 %v583
    %v3176 = vunpack.c.h.b16 %v583
    %v3177 = vunpack.c.l.b16 %v584
    %v3178 = vunpack.c.h.b16 %v584
    %v3179 = vunpack.c.l.b16 %v585
    %v3180 = vunpack.c.h.b16 %v585
    %v3181 = vunpack.c.l.b16 %v586
    %v3182 = vunpack.c.h.b16 %v586
    %v3183 = vunpack.c.l.b16 %v587
    %v3184 = vunpack.c.h.b16 %v587
    %v3185 = vunpack.c.l.b16 %v588
    %v3186 = vunpack.c.h.b16 %v588
    %v3187 = vunpack.c.l.b16 %v589
    %v3188 = vunpack.c.h.b16 %v589
    %v3189 = vunpack.c.l.b16 %v590
    %v3190 = vunpack.c.h.b16 %v590
    %v3191 = vunpack.c.l.b16 %v591
    %v3192 = vunpack.c.h.b16 %v591
    %v3193 = vunpack.c.l.b16 %v592
    %v3194 = vunpack.c.h.b16 %v592
    %v3195 = vunpack.c.l.b16 %v593
    %v3196 = vunpack.c.h.b16 %v593
    %v3197 = vunpack.c.l.b16 %v594
    %v3198 = vunpack.c.h.b16 %v594
    %v3199 = vunpack.c.l.b16 %v595
    %v3200 = vunpack.c.h.b16 %v595
    %v3201 = vunpack.c.l.b16 %v596
    %v3202 = vunpack.c.h.b16 %v596
    %v3203 = vunpack.c.l.b16 %v597
    %v3204 = vunpack.c.h.b16 %v597
    %v3205 = vunpack.c.l.b16 %v598
    %v3206 = vunpack.c.h.b16 %v598
    %v3207 = vunpack.c.l.b16 %v599
    %v3208 = vunpack.c.h.b16 %v599
    %v3209 = vunpack.c.l.b16 %v600
    %v3210 = vunpack.c.h.b16 %v600
    %v3211 = vunpack.c.l.b16 %v601
    %v3212 = vunpack.c.h.b16 %v601
    %v3213 = vunpack.c.l.b16 %v602
    %v3214 = vunpack.c.h.b16 %v602
    %v3215 = vunpack.c.l.b16 %v603
    %v3216 = vunpack.c.h.b16 %v603
    %v3217 = vunpack.c.l.b16 %v604
    %v3218 = vunpack.c.h.b16 %v604
    %v3219 = vunpack.c.l.b16 %v605
    %v3220 = vunpack.c.h.b16 %v605
    %v3221 = vunpack.c.l.b16 %v606
    %v3222 = vunpack.c.h.b16 %v606
    %v3223 = vunpack.c.l.b16 %v607
    %v3224 = vunpack.c.h.b16 %v607
    %v3225 = vunpack.c.l.b16 %v608
    %v3226 = vunpack.c.h.b16 %v608
    %v3227 = vunpack.c.l.b16 %v609
    %v3228 = vunpack.c.h.b16 %v609
    %v3229 = vunpack.c.l.b16 %v610
    %v3230 = vunpack.c.h.b16 %v610
    %v3231 = vunpack.c.l.b16 %v611
    %v3232 = vunpack.c.h.b16 %v611
    %v3233 = vunpack.c.l.b16 %v612
    %v3234 = vunpack.c.h.b16 %v612
    %v3235 = vunpack.c.l.b16 %v613
    %v3236 = vunpack.c.h.b16 %v613
    %v3237 = vunpack.c.l.b16 %v614
    %v3238 = vunpack.c.h.b16 %v614
    %v3239 = vunpack.c.l.b16 %v615
    %v3240 = vunpack.c.h.b16 %v615
    %v3241 = vunpack.c.l.b16 %v616
    %v3242 = vunpack.c.h.b16 %v616
    %v3243 = vunpack.c.l.b16 %v617
    %v3244 = vunpack.c.h.b16 %v617
    %v3245 = vunpack.c.l.b16 %v618
    %v3246 = vunpack.c.h.b16 %v618
    %v3247 = vunpack.c.l.b16 %v619
    %v3248 = vunpack.c.h.b16 %v619
    %v3249 = vunpack.c.l.b16 %v620
    %v3250 = vunpack.c.h.b16 %v620
    %v3251 = vunpack.c.l.b16 %v621
    %v3252 = vunpack.c.h.b16 %v621
    %v3253 = vunpack.c.l.b16 %v622
    %v3254 = vunpack.c.h.b16 %v622
    %v3255 = vunpack.c.l.b16 %v623
    %v3256 = vunpack.c.h.b16 %v623
    %v3257 = vunpack.c.l.b16 %v624
    %v3258 = vunpack.c.h.b16 %v624
    %v3259 = vunpack.c.l.b16 %v625
    %v3260 = vunpack.c.h.b16 %v625
    %v3261 = vunpack.c.l.b16 %v626
    %v3262 = vunpack.c.h.b16 %v626
    %v3263 = vunpack.c.l.b16 %v627
    %v3264 = vunpack.c.h.b16 %v627
    %v3265 = vunpack.c.l.b16 %v628
    %v3266 = vunpack.c.h.b16 %v628
    %v3267 = vunpack.c.l.b16 %v629
    %v3268 = vunpack.c.h.b16 %v629
    %v3269 = vunpack.c.l.b16 %v630
    %v3270 = vunpack.c.h.b16 %v630
    %v3271 = vunpack.c.l.b16 %v631
    %v3272 = vunpack.c.h.b16 %v631
    %v3273 = vunpack.c.l.b16 %v632
    %v3274 = vunpack.c.h.b16 %v632
    %v3275 = vunpack.c.l.b16 %v633
    %v3276 = vunpack.c.h.b16 %v633
    %v3277 = vunpack.c.l.b16 %v634
    %v3278 = vunpack.c.h.b16 %v634
    %v3279 = vunpack.c.l.b16 %v635
    %v3280 = vunpack.c.h.b16 %v635
    %v3281 = vunpack.c.l.b16 %v636
    %v3282 = vunpack.c.h.b16 %v636
    %v3283 = vunpack.c.l.b16 %v637
    %v3284 = vunpack.c.h.b16 %v637
    %v3285 = vunpack.c.l.b16 %v638
    %v3286 = vunpack.c.h.b16 %v638
    %v3287 = vunpack.c.l.b16 %v639
    %v3288 = vunpack.c.h.b16 %v639
    %v3289 = vunpack.c.l.b16 %v640
    %v3290 = vunpack.c.h.b16 %v640
    %v3291 = vunpack.c.l.b16 %v641
    %v3292 = vunpack.c.h.b16 %v641
    %v3293 = vunpack.c.l.b16 %v642
    %v3294 = vunpack.c.h.b16 %v642
    %v3295 = vunpack.c.l.b16 %v643
    %v3296 = vunpack.c.h.b16 %v643
    %v3297 = vunpack.c.l.b16 %v644
    %v3298 = vunpack.c.h.b16 %v644
    %v3299 = vunpack.c.l.b16 %v645
    %v3300 = vunpack.c.h.b16 %v645
    %v3301 = vunpack.c.l.b16 %v646
    %v3302 = vunpack.c.h.b16 %v646
    %v3303 = vunpack.c.l.b16 %v647
    %v3304 = vunpack.c.h.b16 %v647
    %v3305 = vunpack.c.l.b16 %v648
    %v3306 = vunpack.c.h.b16 %v648
    %v3307 = vunpack.c.l.b16 %v649
    %v3308 = vunpack.c.h.b16 %v649
    %v3309 = vunpack.c.l.b16 %v650
    %v3310 = vunpack.c.h.b16 %v650
    %v3311 = vunpack.c.l.b16 %v651
    %v3312 = vunpack.c.h.b16 %v651
    %v3313 = vunpack.c.l.b16 %v652
    %v3314 = vunpack.c.h.b16 %v652
    %v3315 = vunpack.c.l.b16 %v653
    %v3316 = vunpack.c.h.b16 %v653
    %v3317 = vunpack.c.l.b16 %v654
    %v3318 = vunpack.c.h.b16 %v654
    %v3319 = vunpack.c.l.b16 %v655
    %v3320 = vunpack.c.h.b16 %v655
    %v3321 = vunpack.c.l.b16 %v656
    %v3322 = vunpack.c.h.b16 %v656
    %v3323 = vunpack.c.l.b16 %v657
    %v3324 = vunpack.c.h.b16 %v657
    %v3325 = vunpack.c.l.b16 %v658
    %v3326 = vunpack.c.h.b16 %v658
    %v3327 = vunpack.c.l.b16 %v659
    %v3328 = vunpack.c.h.b16 %v659
    %v3329 = vunpack.c.l.b16 %v660
    %v3330 = vunpack.c.h.b16 %v660
    %v3331 = vunpack.c.l.b16 %v661
    %v3332 = vunpack.c.h.b16 %v661
    %v3333 = vunpack.c.l.b16 %v662
    %v3334 = vunpack.c.h.b16 %v662
    %v3335 = vunpack.c.l.b16 %v663
    %v3336 = vunpack.c.h.b16 %v663
    %v3337 = vunpack.c.l.b16 %v664
    %v3338 = vunpack.c.h.b16 %v664
    %v3339 = vunpack.c.l.b16 %v665
    %v3340 = vunpack.c.h.b16 %v665
    %v3341 = vunpack.c.l.b16 %v666
    %v3342 = vunpack.c.h.b16 %v666
    %v3343 = vunpack.c.l.b16 %v667
    %v3344 = vunpack.c.h.b16 %v667
    %v3345 = vunpack.c.l.b16 %v668
    %v3346 = vunpack.c.h.b16 %v668
    %v3347 = vunpack.c.l.b16 %v669
    %v3348 = vunpack.c.h.b16 %v669
    %v3349 = vunpack.c.l.b16 %v670
    %v3350 = vunpack.c.h.b16 %v670
    %v3351 = vunpack.c.l.b16 %v671
    %v3352 = vunpack.c.h.b16 %v671
    %v3353 = vunpack.c.l.b16 %v672
    %v3354 = vunpack.c.h.b16 %v672
    %v3355 = vunpack.c.l.b16 %v673
    %v3356 = vunpack.c.h.b16 %v673
    %v3357 = vunpack.c.l.b16 %v674
    %v3358 = vunpack.c.h.b16 %v674
    %v3359 = vunpack.c.l.b16 %v675
    %v3360 = vunpack.c.h.b16 %v675
    %v3361 = vunpack.c.l.b16 %v676
    %v3362 = vunpack.c.h.b16 %v676
    %v3363 = vunpack.c.l.b16 %v677
    %v3364 = vunpack.c.h.b16 %v677
    %v3365 = vunpack.c.l.b16 %v678
    %v3366 = vunpack.c.h.b16 %v678
    %v3367 = vunpack.c.l.b16 %v679
    %v3368 = vunpack.c.h.b16 %v679
    %v3369 = vunpack.c.l.b16 %v680
    %v3370 = vunpack.c.h.b16 %v680
    %v3371 = vunpack.c.l.b16 %v681
    %v3372 = vunpack.c.h.b16 %v681
    %v3373 = vunpack.c.l.b16 %v682
    %v3374 = vunpack.c.h.b16 %v682
    %v3375 = vunpack.c.l.b16 %v683
    %v3376 = vunpack.c.h.b16 %v683
    %v3377 = vunpack.c.l.b16 %v684
    %v3378 = vunpack.c.h.b16 %v684
    %v3379 = vunpack.c.l.b16 %v685
    %v3380 = vunpack.c.h.b16 %v685
    %v3381 = vunpack.c.l.b16 %v686
    %v3382 = vunpack.c.h.b16 %v686
    %v3383 = vunpack.c.l.b16 %v687
    %v3384 = vunpack.c.h.b16 %v687
    %v3385 = vunpack.c.l.b16 %v688
    %v3386 = vunpack.c.h.b16 %v688
    %v3387 = vunpack.c.l.b16 %v689
    %v3388 = vunpack.c.h.b16 %v689
    %v3389 = vunpack.c.l.b16 %v690
    %v3390 = vunpack.c.h.b16 %v690
    %v3391 = vunpack.c.l.b16 %v691
    %v3392 = vunpack.c.h.b16 %v691
    %v3393 = vunpack.c.l.b16 %v692
    %v3394 = vunpack.c.h.b16 %v692
    %v3395 = vunpack.c.l.b16 %v693
    %v3396 = vunpack.c.h.b16 %v693
    %v3397 = vunpack.c.l.b16 %v694
    %v3398 = vunpack.c.h.b16 %v694
    %v3399 = vunpack.c.l.b16 %v695
    %v3400 = vunpack.c.h.b16 %v695
    %v3401 = vunpack.c.l.b16 %v696
    %v3402 = vunpack.c.h.b16 %v696
    %v3403 = vunpack.c.l.b16 %v697
    %v3404 = vunpack.c.h.b16 %v697
    %v3405 = vunpack.c.l.b16 %v698
    %v3406 = vunpack.c.h.b16 %v698
    %v3407 = vunpack.c.l.b16 %v699
    %v3408 = vunpack.c.h.b16 %v699
    %v3409 = vunpack.c.l.b16 %v700
    %v3410 = vunpack.c.h.b16 %v700
    %v3411 = vunpack.c.l.b16 %v701
    %v3412 = vunpack.c.h.b16 %v701
    %v3413 = vunpack.c.l.b16 %v702
    %v3414 = vunpack.c.h.b16 %v702
    %v3415 = vunpack.c.l.b16 %v703
    %v3416 = vunpack.c.h.b16 %v703
    %v3417 = vunpack.c.l.b16 %v704
    %v3418 = vunpack.c.h.b16 %v704
    %v3419 = vunpack.c.l.b16 %v705
    %v3420 = vunpack.c.h.b16 %v705
    %v3421 = vunpack.c.l.b16 %v706
    %v3422 = vunpack.c.h.b16 %v706
    %v3423 = vunpack.c.l.b16 %v707
    %v3424 = vunpack.c.h.b16 %v707
    %v3425 = vunpack.c.l.b16 %v708
    %v3426 = vunpack.c.h.b16 %v708
    %v3427 = vunpack.c.l.b16 %v709
    %v3428 = vunpack.c.h.b16 %v709
    %v3429 = vunpack.c.l.b16 %v710
    %v3430 = vunpack.c.h.b16 %v710
    %v3431 = vunpack.c.l.b16 %v711
    %v3432 = vunpack.c.h.b16 %v711
    %v3433 = vunpack.c.l.b16 %v712
    %v3434 = vunpack.c.h.b16 %v712
    %v3435 = vunpack.c.l.b16 %v713
    %v3436 = vunpack.c.h.b16 %v713
    %v3437 = vunpack.c.l.b16 %v714
    %v3438 = vunpack.c.h.b16 %v714
    %v3439 = vunpack.c.l.b16 %v715
    %v3440 = vunpack.c.h.b16 %v715
    %v3441 = vunpack.c.l.b16 %v716
    %v3442 = vunpack.c.h.b16 %v716
    %v3443 = vunpack.c.l.b16 %v717
    %v3444 = vunpack.c.h.b16 %v717
    %v3445 = vunpack.c.l.b16 %v718
    %v3446 = vunpack.c.h.b16 %v718
    %v3447 = vunpack.c.l.b16 %v719
    %v3448 = vunpack.c.h.b16 %v719
    %v3449 = vunpack.c.l.b16 %v720
    %v3450 = vunpack.c.h.b16 %v720
    %v3451 = vunpack.c.l.b16 %v721
    %v3452 = vunpack.c.h.b16 %v721
    %v3453 = vunpack.c.l.b16 %v722
    %v3454 = vunpack.c.h.b16 %v722
    %v3455 = vunpack.c.l.b16 %v723
    %v3456 = vunpack.c.h.b16 %v723
    %v3457 = vunpack.c.l.b16 %v724
    %v3458 = vunpack.c.h.b16 %v724
    %v3459 = vunpack.c.l.b16 %v725
    %v3460 = vunpack.c.h.b16 %v725
    %v3461 = vunpack.c.l.b16 %v726
    %v3462 = vunpack.c.h.b16 %v726
    %v3463 = vunpack.c.l.b16 %v727
    %v3464 = vunpack.c.h.b16 %v727
    %v3465 = vunpack.c.l.b16 %v728
    %v3466 = vunpack.c.h.b16 %v728
    %v3467 = vunpack.c.l.b16 %v729
    %v3468 = vunpack.c.h.b16 %v729
    %v3469 = vunpack.c.l.b16 %v730
    %v3470 = vunpack.c.h.b16 %v730
    %v3471 = vunpack.c.l.b16 %v731
    %v3472 = vunpack.c.h.b16 %v731
    %v3473 = vunpack.c.l.b16 %v732
    %v3474 = vunpack.c.h.b16 %v732
    %v3475 = vunpack.c.l.b16 %v733
    %v3476 = vunpack.c.h.b16 %v733
    %v3477 = vunpack.c.l.b16 %v734
    %v3478 = vunpack.c.h.b16 %v734
    %v3479 = vunpack.c.l.b16 %v735
    %v3480 = vunpack.c.h.b16 %v735
    %v3481 = vunpack.c.l.b16 %v736
    %v3482 = vunpack.c.h.b16 %v736
    %v3483 = vunpack.c.l.b16 %v737
    %v3484 = vunpack.c.h.b16 %v737
    %v3485 = vunpack.c.l.b16 %v738
    %v3486 = vunpack.c.h.b16 %v738
    %v3487 = vunpack.c.l.b16 %v739
    %v3488 = vunpack.c.h.b16 %v739
    %v3489 = vunpack.c.l.b16 %v740
    %v3490 = vunpack.c.h.b16 %v740
    %v3491 = vunpack.c.l.b16 %v741
    %v3492 = vunpack.c.h.b16 %v741
    %v3493 = vunpack.c.l.b16 %v742
    %v3494 = vunpack.c.h.b16 %v742
    %v3495 = vunpack.c.l.b16 %v743
    %v3496 = vunpack.c.h.b16 %v743
    %v3497 = vunpack.c.l.b16 %v744
    %v3498 = vunpack.c.h.b16 %v744
    %v3499 = vunpack.c.l.b16 %v745
    %v3500 = vunpack.c.h.b16 %v745
    %v3501 = vunpack.c.l.b16 %v746
    %v3502 = vunpack.c.h.b16 %v746
    %v3503 = vunpack.c.l.b16 %v747
    %v3504 = vunpack.c.h.b16 %v747
    %v3505 = vunpack.c.l.b16 %v748
    %v3506 = vunpack.c.h.b16 %v748
    %v3507 = vunpack.c.l.b16 %v749
    %v3508 = vunpack.c.h.b16 %v749
    %v3509 = vunpack.c.l.b16 %v750
    %v3510 = vunpack.c.h.b16 %v750
    %v3511 = vunpack.c.l.b16 %v751
    %v3512 = vunpack.c.h.b16 %v751
    %v3513 = vunpack.c.l.b16 %v752
    %v3514 = vunpack.c.h.b16 %v752
    %v3515 = vunpack.c.l.b16 %v753
    %v3516 = vunpack.c.h.b16 %v753
    %v3517 = vunpack.c.l.b16 %v754
    %v3518 = vunpack.c.h.b16 %v754
    %v3519 = vunpack.c.l.b16 %v755
    %v3520 = vunpack.c.h.b16 %v755
    %v3521 = vunpack.c.l.b16 %v756
    %v3522 = vunpack.c.h.b16 %v756
    %v3523 = vunpack.c.l.b16 %v757
    %v3524 = vunpack.c.h.b16 %v757
    %v3525 = vunpack.c.l.b16 %v758
    %v3526 = vunpack.c.h.b16 %v758
    %v3527 = vunpack.c.l.b16 %v759
    %v3528 = vunpack.c.h.b16 %v759
    %v3529 = vunpack.c.l.b16 %v760
    %v3530 = vunpack.c.h.b16 %v760
    %v3531 = vunpack.c.l.b16 %v761
    %v3532 = vunpack.c.h.b16 %v761
    %v3533 = vunpack.c.l.b16 %v762
    %v3534 = vunpack.c.h.b16 %v762
    %v3535 = vunpack.c.l.b16 %v763
    %v3536 = vunpack.c.h.b16 %v763
    %v3537 = vunpack.c.l.b16 %v764
    %v3538 = vunpack.c.h.b16 %v764
    %v3539 = vunpack.c.l.b16 %v765
    %v3540 = vunpack.c.h.b16 %v765
    %v3541 = vunpack.c.l.b16 %v766
    %v3542 = vunpack.c.h.b16 %v766
    %v3543 = vunpack.c.l.b16 %v767
    %v3544 = vunpack.c.h.b16 %v767
    %v3545 = vunpack.c.l.b16 %v768
    %v3546 = vunpack.c.h.b16 %v768
    %v3547 = vunpack.c.l.b16 %v769
    %v3548 = vunpack.c.h.b16 %v769
    %v3549 = vunpack.c.l.b16 %v770
    %v3550 = vunpack.c.h.b16 %v770
    %v3551 = vunpack.c.l.b16 %v771
    %v3552 = vunpack.c.h.b16 %v771
    %v3553 = vunpack.c.l.b16 %v772
    %v3554 = vunpack.c.h.b16 %v772
    %v3555 = vunpack.c.l.b16 %v773
    %v3556 = vunpack.c.h.b16 %v773
    %v3557 = vunpack.c.l.b16 %v774
    %v3558 = vunpack.c.h.b16 %v774
    %v3559 = vunpack.c.l.b16 %v775
    %v3560 = vunpack.c.h.b16 %v775
    %v3561 = vunpack.c.l.b16 %v776
    %v3562 = vunpack.c.h.b16 %v776
    %v3563 = vunpack.c.l.b16 %v777
    %v3564 = vunpack.c.h.b16 %v777
    %v3565 = vunpack.c.l.b16 %v778
    %v3566 = vunpack.c.h.b16 %v778
    %v3567 = vunpack.c.l.b16 %v779
    %v3568 = vunpack.c.h.b16 %v779
    %v3569 = vunpack.c.l.b16 %v780
    %v3570 = vunpack.c.h.b16 %v780
    %v3571 = vunpack.c.l.b16 %v781
    %v3572 = vunpack.c.h.b16 %v781
    %v3573 = vunpack.c.l.b16 %v782
    %v3574 = vunpack.c.h.b16 %v782
    %v3575 = vunpack.c.l.b16 %v783
    %v3576 = vunpack.c.h.b16 %v783
    %v3577 = vunpack.c.l.b16 %v784
    %v3578 = vunpack.c.h.b16 %v784
    %v3579 = vunpack.c.l.b16 %v785
    %v3580 = vunpack.c.h.b16 %v785
    %v3581 = vunpack.c.l.b16 %v786
    %v3582 = vunpack.c.h.b16 %v786
    %v3583 = vunpack.c.l.b16 %v787
    %v3584 = vunpack.c.h.b16 %v787
    %v3585 = vunpack.c.l.b16 %v788
    %v3586 = vunpack.c.h.b16 %v788
    %v3587 = vunpack.c.l.b16 %v789
    %v3588 = vunpack.c.h.b16 %v789
    %v3589 = vunpack.c.l.b16 %v790
    %v3590 = vunpack.c.h.b16 %v790
    %v3591 = vunpack.c.l.b16 %v791
    %v3592 = vunpack.c.h.b16 %v791
    %v3593 = vunpack.c.l.b16 %v792
    %v3594 = vunpack.c.h.b16 %v792
    %v3595 = vunpack.c.l.b16 %v793
    %v3596 = vunpack.c.h.b16 %v793
    %v3597 = vunpack.c.l.b16 %v794
    %v3598 = vunpack.c.h.b16 %v794
    %v3599 = vunpack.c.l.b16 %v795
    %v3600 = vunpack.c.h.b16 %v795
    %v3601 = vunpack.c.l.b16 %v796
    %v3602 = vunpack.c.h.b16 %v796
    %v3603 = vunpack.c.l.b16 %v797
    %v3604 = vunpack.c.h.b16 %v797
    %v3605 = vunpack.c.l.b16 %v798
    %v3606 = vunpack.c.h.b16 %v798
    %v3607 = vunpack.c.l.b16 %v799
    %v3608 = vunpack.c.h.b16 %v799
    %v3609 = vunpack.c.l.b16 %v800
    %v3610 = vunpack.c.h.b16 %v800
    %v3611 = vunpack.c.l.b16 %v801
    %v3612 = vunpack.c.h.b16 %v801
    %v3613 = vunpack.c.l.b16 %v802
    %v3614 = vunpack.c.h.b16 %v802
    %v3615 = vunpack.c.l.b16 %v803
    %v3616 = vunpack.c.h.b16 %v803
    %v3617 = vunpack.c.l.b16 %v804
    %v3618 = vunpack.c.h.b16 %v804
    %v3619 = vunpack.c.l.b16 %v805
    %v3620 = vunpack.c.h.b16 %v805
    %v3621 = vunpack.c.l.b16 %v806
    %v3622 = vunpack.c.h.b16 %v806
    %v3623 = vunpack.c.l.b16 %v807
    %v3624 = vunpack.c.h.b16 %v807
    %v3625 = vunpack.c.l.b16 %v808
    %v3626 = vunpack.c.h.b16 %v808
    %v3627 = vunpack.c.l.b16 %v809
    %v3628 = vunpack.c.h.b16 %v809
    %v3629 = vunpack.c.l.b16 %v810
    %v3630 = vunpack.c.h.b16 %v810
    %v3631 = vunpack.c.l.b16 %v811
    %v3632 = vunpack.c.h.b16 %v811
    %v3633 = vunpack.c.l.b16 %v812
    %v3634 = vunpack.c.h.b16 %v812
    %v3635 = vunpack.c.l.b16 %v813
    %v3636 = vunpack.c.h.b16 %v813
    %v3637 = vunpack.c.l.b16 %v814
    %v3638 = vunpack.c.h.b16 %v814
    %v3639 = vunpack.c.l.b16 %v815
    %v3640 = vunpack.c.h.b16 %v815
    %v3641 = vunpack.c.l.b16 %v816
    %v3642 = vunpack.c.h.b16 %v816
    %v3643 = vunpack.c.l.b16 %v817
    %v3644 = vunpack.c.h.b16 %v817
    %v3645 = vunpack.c.l.b16 %v818
    %v3646 = vunpack.c.h.b16 %v818
    %v3647 = vunpack.c.l.b16 %v819
    %v3648 = vunpack.c.h.b16 %v819
    %v3649 = vunpack.c.l.b16 %v820
    %v3650 = vunpack.c.h.b16 %v820
    %v3651 = vunpack.c.l.b16 %v821
    %v3652 = vunpack.c.h.b16 %v821
    %v3653 = vunpack.c.l.b16 %v822
    %v3654 = vunpack.c.h.b16 %v822
    %v3655 = vunpack.c.l.b16 %v823
    %v3656 = vunpack.c.h.b16 %v823
    %v3657 = vunpack.c.l.b16 %v824
    %v3658 = vunpack.c.h.b16 %v824
    %v3659 = vunpack.c.l.b16 %v825
    %v3660 = vunpack.c.h.b16 %v825
    %v3661 = vunpack.c.l.b16 %v826
    %v3662 = vunpack.c.h.b16 %v826
    %v3663 = vunpack.c.l.b16 %v827
    %v3664 = vunpack.c.h.b16 %v827
    %v3665 = vunpack.c.l.b16 %v828
    %v3666 = vunpack.c.h.b16 %v828
    %v3667 = vunpack.c.l.b16 %v829
    %v3668 = vunpack.c.h.b16 %v829
    %v3669 = vunpack.c.l.b16 %v830
    %v3670 = vunpack.c.h.b16 %v830
    %v3671 = vunpack.c.l.b16 %v831
    %v3672 = vunpack.c.h.b16 %v831
    %v3673 = vunpack.c.l.b16 %v832
    %v3674 = vunpack.c.h.b16 %v832
    %v3675 = vunpack.c.l.b16 %v833
    %v3676 = vunpack.c.h.b16 %v833
    %v3677 = vunpack.c.l.b16 %v834
    %v3678 = vunpack.c.h.b16 %v834
    %v3679 = vunpack.c.l.b16 %v835
    %v3680 = vunpack.c.h.b16 %v835
    %v3681 = vunpack.c.l.b16 %v836
    %v3682 = vunpack.c.h.b16 %v836
    %v3683 = vunpack.c.l.b16 %v837
    %v3684 = vunpack.c.h.b16 %v837
    %v3685 = vunpack.c.l.b16 %v838
    %v3686 = vunpack.c.h.b16 %v838
    %v3687 = vunpack.c.l.b16 %v839
    %v3688 = vunpack.c.h.b16 %v839
    %v3689 = vunpack.c.l.b16 %v840
    %v3690 = vunpack.c.h.b16 %v840
    %v3691 = vunpack.c.l.b16 %v841
    %v3692 = vunpack.c.h.b16 %v841
    %v3693 = vunpack.c.l.b16 %v842
    %v3694 = vunpack.c.h.b16 %v842
    %v3695 = vunpack.c.l.b16 %v843
    %v3696 = vunpack.c.h.b16 %v843
    %v3697 = vunpack.c.l.b16 %v844
    %v3698 = vunpack.c.h.b16 %v844
    %v3699 = vunpack.c.l.b16 %v845
    %v3700 = vunpack.c.h.b16 %v845
    %v3701 = vunpack.c.l.b16 %v846
    %v3702 = vunpack.c.h.b16 %v846
    %v3703 = vunpack.c.l.b16 %v847
    %v3704 = vunpack.c.h.b16 %v847
    %v3705 = vunpack.c.l.b16 %v848
    %v3706 = vunpack.c.h.b16 %v848
    %v3707 = vunpack.c.l.b16 %v849
    %v3708 = vunpack.c.h.b16 %v849
    %v3709 = vunpack.c.l.b16 %v850
    %v3710 = vunpack.c.h.b16 %v850
    %v3711 = vunpack.c.l.b16 %v851
    %v3712 = vunpack.c.h.b16 %v851
    %v3713 = vunpack.c.l.b16 %v852
    %v3714 = vunpack.c.h.b16 %v852
    %v3715 = vunpack.c.l.b16 %v853
    %v3716 = vunpack.c.h.b16 %v853
    %v3717 = vunpack.c.l.b16 %v854
    %v3718 = vunpack.c.h.b16 %v854
    %v3719 = vunpack.c.l.b16 %v855
    %v3720 = vunpack.c.h.b16 %v855
    %v3721 = vunpack.c.l.b16 %v856
    %v3722 = vunpack.c.h.b16 %v856
    %v3723 = vunpack.c.l.b16 %v857
    %v3724 = vunpack.c.h.b16 %v857
    %v3725 = vunpack.c.l.b16 %v858
    %v3726 = vunpack.c.h.b16 %v858
    %v3727 = vunpack.c.l.b16 %v859
    %v3728 = vunpack.c.h.b16 %v859
    %v3729 = vunpack.c.l.b16 %v860
    %v3730 = vunpack.c.h.b16 %v860
    %v3731 = vunpack.c.l.b16 %v861
    %v3732 = vunpack.c.h.b16 %v861
    %v3733 = vunpack.c.l.b16 %v862
    %v3734 = vunpack.c.h.b16 %v862
    %v3735 = vunpack.c.l.b16 %v863
    %v3736 = vunpack.c.h.b16 %v863
    %v3737 = vunpack.c.l.b16 %v864
    %v3738 = vunpack.c.h.b16 %v864
    %v3739 = vunpack.c.l.b16 %v865
    %v3740 = vunpack.c.h.b16 %v865
    %v3741 = vunpack.c.l.b16 %v866
    %v3742 = vunpack.c.h.b16 %v866
    %v3743 = vunpack.c.l.b16 %v867
    %v3744 = vunpack.c.h.b16 %v867
    %v3745 = vunpack.c.l.b16 %v868
    %v3746 = vunpack.c.h.b16 %v868
    %v3747 = vunpack.c.l.b16 %v869
    %v3748 = vunpack.c.h.b16 %v869
    %v3749 = vunpack.c.l.b16 %v870
    %v3750 = vunpack.c.h.b16 %v870
    %v3751 = vunpack.c.l.b16 %v871
    %v3752 = vunpack.c.h.b16 %v871
    %v3753 = vunpack.c.l.b16 %v872
    %v3754 = vunpack.c.h.b16 %v872
    %v3755 = vunpack.c.l.b16 %v873
    %v3756 = vunpack.c.h.b16 %v873
    %v3757 = vunpack.c.l.b16 %v874
    %v3758 = vunpack.c.h.b16 %v874
    %v3759 = vunpack.c.l.b16 %v875
    %v3760 = vunpack.c.h.b16 %v875
    %v3761 = vunpack.c.l.b16 %v876
    %v3762 = vunpack.c.h.b16 %v876
    %v3763 = vunpack.c.l.b16 %v877
    %v3764 = vunpack.c.h.b16 %v877
    %v3765 = vunpack.c.l.b16 %v878
    %v3766 = vunpack.c.h.b16 %v878
    %v3767 = vunpack.c.l.b16 %v879
    %v3768 = vunpack.c.h.b16 %v879
    %v3769 = vunpack.c.l.b16 %v880
    %v3770 = vunpack.c.h.b16 %v880
    %v3771 = vunpack.c.l.b16 %v881
    %v3772 = vunpack.c.h.b16 %v881
    %v3773 = vunpack.c.l.b16 %v882
    %v3774 = vunpack.c.h.b16 %v882
    %v3775 = vunpack.c.l.b16 %v883
    %v3776 = vunpack.c.h.b16 %v883
    %v3777 = vunpack.c.l.b16 %v884
    %v3778 = vunpack.c.h.b16 %v884
    %v3779 = vunpack.c.l.b16 %v885
    %v3780 = vunpack.c.h.b16 %v885
    %v3781 = vunpack.c.l.b16 %v886
    %v3782 = vunpack.c.h.b16 %v886
    %v3783 = vunpack.c.l.b16 %v887
    %v3784 = vunpack.c.h.b16 %v887
    %v3785 = vunpack.c.l.b16 %v888
    %v3786 = vunpack.c.h.b16 %v888
    %v3787 = vunpack.c.l.b16 %v889
    %v3788 = vunpack.c.h.b16 %v889
    %v3789 = vunpack.c.l.b16 %v890
    %v3790 = vunpack.c.h.b16 %v890
    %v3791 = vunpack.c.l.b16 %v891
    %v3792 = vunpack.c.h.b16 %v891
    %v3793 = vunpack.c.l.b16 %v892
    %v3794 = vunpack.c.h.b16 %v892
    %v3795 = vunpack.c.l.b16 %v893
    %v3796 = vunpack.c.h.b16 %v893
    %v3797 = vunpack.c.l.b16 %v894
    %v3798 = vunpack.c.h.b16 %v894
    %v3799 = vunpack.c.l.b16 %v895
    %v3800 = vunpack.c.h.b16 %v895
    %v3801 = vunpack.c.l.b16 %v896
    %v3802 = vunpack.c.h.b16 %v896
    %v3803 = vunpack.c.l.b16 %v897
    %v3804 = vunpack.c.h.b16 %v897
    %v3805 = vunpack.c.l.b16 %v898
    %v3806 = vunpack.c.h.b16 %v898
    %v3807 = vunpack.c.l.b16 %v899
    %v3808 = vunpack.c.h.b16 %v899
    %v3809 = vunpack.c.l.b16 %v900
    %v3810 = vunpack.c.h.b16 %v900
    %v3811 = vunpack.c.l.b16 %v901
    %v3812 = vunpack.c.h.b16 %v901
    %v3813 = vunpack.c.l.b16 %v902
    %v3814 = vunpack.c.h.b16 %v902
    %v3815 = vunpack.c.l.b16 %v903
    %v3816 = vunpack.c.h.b16 %v903
    %v3817 = vunpack.c.l.b16 %v904
    %v3818 = vunpack.c.h.b16 %v904
    %v3819 = vunpack.c.l.b16 %v905
    %v3820 = vunpack.c.h.b16 %v905
    %v3821 = vunpack.c.l.b16 %v906
    %v3822 = vunpack.c.h.b16 %v906
    %v3823 = vunpack.c.l.b16 %v907
    %v3824 = vunpack.c.h.b16 %v907
    %v3825 = vunpack.c.l.b16 %v908
    %v3826 = vunpack.c.h.b16 %v908
    %v3827 = vunpack.c.l.b16 %v909
    %v3828 = vunpack.c.h.b16 %v909
    %v3829 = vunpack.c.l.b16 %v910
    %v3830 = vunpack.c.h.b16 %v910
    %v3831 = vunpack.c.l.b16 %v911
    %v3832 = vunpack.c.h.b16 %v911
    %v3833 = vunpack.c.l.b16 %v912
    %v3834 = vunpack.c.h.b16 %v912
    %v3835 = vunpack.c.l.b16 %v913
    %v3836 = vunpack.c.h.b16 %v913
    %v3837 = vunpack.c.l.b16 %v914
    %v3838 = vunpack.c.h.b16 %v914
    %v3839 = vunpack.c.l.b16 %v915
    %v3840 = vunpack.c.h.b16 %v915
    %v3841 = vunpack.c.l.b16 %v916
    %v3842 = vunpack.c.h.b16 %v916
    %v3843 = vunpack.c.l.b16 %v917
    %v3844 = vunpack.c.h.b16 %v917
    %v3845 = vunpack.c.l.b16 %v918
    %v3846 = vunpack.c.h.b16 %v918
    %v3847 = vunpack.c.l.b16 %v919
    %v3848 = vunpack.c.h.b16 %v919
    %v3849 = vunpack.c.l.b16 %v920
    %v3850 = vunpack.c.h.b16 %v920
    %v3851 = vunpack.c.l.b16 %v921
    %v3852 = vunpack.c.h.b16 %v921
    %v3853 = vunpack.c.l.b16 %v922
    %v3854 = vunpack.c.h.b16 %v922
    %v3855 = vunpack.c.l.b16 %v923
    %v3856 = vunpack.c.h.b16 %v923
    %v3857 = vunpack.c.l.b16 %v924
    %v3858 = vunpack.c.h.b16 %v924
    %v3859 = vunpack.c.l.b16 %v925
    %v3860 = vunpack.c.h.b16 %v925
    %v3861 = vunpack.c.l.b16 %v926
    %v3862 = vunpack.c.h.b16 %v926
    %v3863 = vunpack.c.l.b16 %v927
    %v3864 = vunpack.c.h.b16 %v927
    %v3865 = vunpack.c.l.b16 %v928
    %v3866 = vunpack.c.h.b16 %v928
    %v3867 = vunpack.c.l.b16 %v929
    %v3868 = vunpack.c.h.b16 %v929
    %v3869 = vunpack.c.l.b16 %v930
    %v3870 = vunpack.c.h.b16 %v930
    %v3871 = vunpack.c.l.b16 %v931
    %v3872 = vunpack.c.h.b16 %v931
    %v3873 = vunpack.c.l.b16 %v932
    %v3874 = vunpack.c.h.b16 %v932
    %v3875 = vunpack.c.l.b16 %v933
    %v3876 = vunpack.c.h.b16 %v933
    %v3877 = vunpack.c.l.b16 %v934
    %v3878 = vunpack.c.h.b16 %v934
    %v3879 = vunpack.c.l.b16 %v935
    %v3880 = vunpack.c.h.b16 %v935
    %v3881 = vunpack.c.l.b16 %v936
    %v3882 = vunpack.c.h.b16 %v936
    %v3883 = vunpack.c.l.b16 %v937
    %v3884 = vunpack.c.h.b16 %v937
    %v3885 = vunpack.c.l.b16 %v938
    %v3886 = vunpack.c.h.b16 %v938
    %v3887 = vunpack.c.l.b16 %v939
    %v3888 = vunpack.c.h.b16 %v939
    %v3889 = vunpack.c.l.b16 %v940
    %v3890 = vunpack.c.h.b16 %v940
    %v3891 = vunpack.c.l.b16 %v941
    %v3892 = vunpack.c.h.b16 %v941
    %v3893 = vunpack.c.l.b16 %v942
    %v3894 = vunpack.c.h.b16 %v942
    %v3895 = vunpack.c.l.b16 %v943
    %v3896 = vunpack.c.h.b16 %v943
    %v3897 = vunpack.c.l.b16 %v944
    %v3898 = vunpack.c.h.b16 %v944
    %v3899 = vunpack.c.l.b16 %v945
    %v3900 = vunpack.c.h.b16 %v945
    %v3901 = vunpack.c.l.b16 %v946
    %v3902 = vunpack.c.h.b16 %v946
    %v3903 = vunpack.c.l.b16 %v947
    %v3904 = vunpack.c.h.b16 %v947
    %v3905 = vunpack.c.l.b16 %v948
    %v3906 = vunpack.c.h.b16 %v948
    %v3907 = vunpack.c.l.b16 %v949
    %v3908 = vunpack.c.h.b16 %v949
    %v3909 = vunpack.c.l.b16 %v950
    %v3910 = vunpack.c.h.b16 %v950
    %v3911 = vunpack.c.l.b16 %v951
    %v3912 = vunpack.c.h.b16 %v951
    %v3913 = vunpack.c.l.b16 %v952
    %v3914 = vunpack.c.h.b16 %v952
    %v3915 = vunpack.c.l.b16 %v953
    %v3916 = vunpack.c.h.b16 %v953
    %v3917 = vunpack.c.l.b16 %v954
    %v3918 = vunpack.c.h.b16 %v954
    %v3919 = vunpack.c.l.b16 %v955
    %v3920 = vunpack.c.h.b16 %v955
    %v3921 = vunpack.c.l.b16 %v956
    %v3922 = vunpack.c.h.b16 %v956
    %v3923 = vunpack.c.l.b16 %v957
    %v3924 = vunpack.c.h.b16 %v957
    %v3925 = vunpack.c.l.b16 %v958
    %v3926 = vunpack.c.h.b16 %v958
    %v3927 = vunpack.c.l.b16 %v959
    %v3928 = vunpack.c.h.b16 %v959
    %v3929 = vunpack.c.l.b16 %v960
    %v3930 = vunpack.c.h.b16 %v960
    %v3931 = vunpack.c.l.b16 %v961
    %v3932 = vunpack.c.h.b16 %v961
    %v3933 = vunpack.c.l.b16 %v962
    %v3934 = vunpack.c.h.b16 %v962
    %v3935 = vunpack.c.l.b16 %v963
    %v3936 = vunpack.c.h.b16 %v963
    %v3937 = vunpack.c.l.b16 %v964
    %v3938 = vunpack.c.h.b16 %v964
    %v3939 = vunpack.c.l.b16 %v965
    %v3940 = vunpack.c.h.b16 %v965
    %v3941 = vunpack.c.l.b16 %v966
    %v3942 = vunpack.c.h.b16 %v966
    %v3943 = vunpack.c.l.b16 %v967
    %v3944 = vunpack.c.h.b16 %v967
    %v3945 = vunpack.c.l.b16 %v968
    %v3946 = vunpack.c.h.b16 %v968
    %v3947 = vunpack.c.l.b16 %v969
    %v3948 = vunpack.c.h.b16 %v969
    %v3949 = vunpack.c.l.b16 %v970
    %v3950 = vunpack.c.h.b16 %v970
    %v3951 = vunpack.c.l.b16 %v971
    %v3952 = vunpack.c.h.b16 %v971
    %v3953 = vunpack.c.l.b16 %v972
    %v3954 = vunpack.c.h.b16 %v972
    %v3955 = vunpack.c.l.b16 %v973
    %v3956 = vunpack.c.h.b16 %v973
    %v3957 = vunpack.c.l.b16 %v974
    %v3958 = vunpack.c.h.b16 %v974
    %v3959 = vunpack.c.l.b16 %v975
    %v3960 = vunpack.c.h.b16 %v975
    %v3961 = vunpack.c.l.b16 %v976
    %v3962 = vunpack.c.h.b16 %v976
    %v3963 = vunpack.c.l.b16 %v977
    %v3964 = vunpack.c.h.b16 %v977
    %v3965 = vunpack.c.l.b16 %v978
    %v3966 = vunpack.c.h.b16 %v978
    %v3967 = vunpack.c.l.b16 %v979
    %v3968 = vunpack.c.h.b16 %v979
    %v3969 = vunpack.c.l.b16 %v980
    %v3970 = vunpack.c.h.b16 %v980
    %v3971 = vunpack.c.l.b16 %v981
    %v3972 = vunpack.c.h.b16 %v981
    %v3973 = vunpack.c.l.b16 %v982
    %v3974 = vunpack.c.h.b16 %v982
    %v3975 = vunpack.c.l.b16 %v983
    %v3976 = vunpack.c.h.b16 %v983
    %v3977 = vunpack.c.l.b16 %v984
    %v3978 = vunpack.c.h.b16 %v984
    %v3979 = vunpack.c.l.b16 %v985
    %v3980 = vunpack.c.h.b16 %v985
    %v3981 = vunpack.c.l.b16 %v986
    %v3982 = vunpack.c.h.b16 %v986
    %v3983 = vunpack.c.l.b16 %v987
    %v3984 = vunpack.c.h.b16 %v987
    %v3985 = vunpack.c.l.b16 %v988
    %v3986 = vunpack.c.h.b16 %v988
    %v3987 = vunpack.c.l.b16 %v989
    %v3988 = vunpack.c.h.b16 %v989
    %v3989 = vunpack.c.l.b16 %v990
    %v3990 = vunpack.c.h.b16 %v990
    %v3991 = vunpack.c.l.b16 %v991
    %v3992 = vunpack.c.h.b16 %v991
    %v3993 = vunpack.c.l.b16 %v992
    %v3994 = vunpack.c.h.b16 %v992
    %v3995 = vunpack.c.l.b16 %v993
    %v3996 = vunpack.c.h.b16 %v993
    %v3997 = vunpack.c.l.b16 %v994
    %v3998 = vunpack.c.h.b16 %v994
    %v3999 = vunpack.c.l.b16 %v995
    %v4000 = vunpack.c.h.b16 %v995
    %v4001 = vunpack.c.l.b16 %v996
    %v4002 = vunpack.c.h.b16 %v996
    %v4003 = vunpack.c.l.b16 %v997
    %v4004 = vunpack.c.h.b16 %v997
    %v4005 = vunpack.c.l.b16 %v998
    %v4006 = vunpack.c.h.b16 %v998
    %v4007 = vunpack.c.l.b16 %v999
    %v4008 = vunpack.c.h.b16 %v999
    %v4009 = vunpack.c.l.b16 %v1000
    %v4010 = vunpack.c.h.b16 %v1000
    %v4011 = vunpack.c.l.b16 %v1001
    %v4012 = vunpack.c.h.b16 %v1001
    %v4013 = vunpack.c.l.b16 %v1002
    %v4014 = vunpack.c.h.b16 %v1002
    %v4015 = vunpack.c.l.b16 %v1003
    %v4016 = vunpack.c.h.b16 %v1003
    %v4017 = vunpack.c.l.b16 %v1004
    %v4018 = vunpack.c.h.b16 %v1004
    %v4019 = vunpack.c.l.b16 %v1005
    %v4020 = vunpack.c.h.b16 %v1005
    %v4021 = vunpack.c.l.b16 %v1006
    %v4022 = vunpack.c.h.b16 %v1006
    %v4023 = vunpack.c.l.b16 %v1007
    %v4024 = vunpack.c.h.b16 %v1007
    %v4025 = vunpack.c.l.b16 %v1008
    %v4026 = vunpack.c.h.b16 %v1008
    %v4027 = vunpack.c.l.b16 %v1009
    %v4028 = vunpack.c.h.b16 %v1009
    %v4029 = vunpack.c.l.b16 %v1010
    %v4030 = vunpack.c.h.b16 %v1010
    %v4031 = vunpack.c.l.b16 %v1011
    %v4032 = vunpack.c.h.b16 %v1011
    %v4033 = vunpack.c.l.b16 %v1012
    %v4034 = vunpack.c.h.b16 %v1012
    %v4035 = vunpack.c.l.b16 %v1013
    %v4036 = vunpack.c.h.b16 %v1013
    %v4037 = vunpack.c.l.b16 %v1014
    %v4038 = vunpack.c.h.b16 %v1014
    %v4039 = vunpack.c.l.b16 %v1015
    %v4040 = vunpack.c.h.b16 %v1015
    %v4041 = vunpack.c.l.b16 %v1016
    %v4042 = vunpack.c.h.b16 %v1016
    %v4043 = vunpack.c.l.b16 %v1017
    %v4044 = vunpack.c.h.b16 %v1017
    %v4045 = vunpack.c.l.b16 %v1018
    %v4046 = vunpack.c.h.b16 %v1018
    %v4047 = vunpack.c.l.b16 %v1019
    %v4048 = vunpack.c.h.b16 %v1019
    %v4049 = vunpack.c.l.b16 %v1020
    %v4050 = vunpack.c.h.b16 %v1020
    %v4051 = vunpack.c.l.b16 %v1021
    %v4052 = vunpack.c.h.b16 %v1021
    %v4053 = vunpack.c.l.b16 %v1022
    %v4054 = vunpack.c.h.b16 %v1022
    %v4055 = vunpack.c.l.b16 %v1023
    %v4056 = vunpack.c.h.b16 %v1023
    %v4057 = vunpack.c.l.b16 %v1024
    %v4058 = vunpack.c.h.b16 %v1024
    %v4059 = vunpack.c.l.b16 %v1025
    %v4060 = vunpack.c.h.b16 %v1025
    %v4061 = vunpack.c.l.b16 %v1026
    %v4062 = vunpack.c.h.b16 %v1026
    %v4063 = vunpack.c.l.b16 %v1027
    %v4064 = vunpack.c.h.b16 %v1027
    %v4065 = vunpack.c.l.b16 %v1028
    %v4066 = vunpack.c.h.b16 %v1028
    %v4067 = vunpack.c.l.b16 %v1029
    %v4068 = vunpack.c.h.b16 %v1029
    %v4069 = vunpack.c.l.b16 %v1030
    %v4070 = vunpack.c.h.b16 %v1030
    %v4071 = vunpack.c.l.b16 %v1031
    %v4072 = vunpack.c.h.b16 %v1031
    %v4073 = vunpack.c.l.b16 %v1032
    %v4074 = vunpack.c.h.b16 %v1032
    %v4075 = vunpack.c.l.b16 %v1033
    %v4076 = vunpack.c.h.b16 %v1033
    %v4077 = vunpack.c.l.b16 %v1034
    %v4078 = vunpack.c.h.b16 %v1034
    %v4079 = vunpack.c.l.b16 %v1035
    %v4080 = vunpack.c.h.b16 %v1035
    %v4081 = vunpack.c.l.b16 %v1036
    %v4082 = vunpack.c.h.b16 %v1036
    %v4083 = vunpack.c.l.b16 %v1037
    %v4084 = vunpack.c.h.b16 %v1037
    %v4085 = vunpack.c.l.b16 %v1038
    %v4086 = vunpack.c.h.b16 %v1038
    %v4087 = vunpack.c.l.b16 %v1039
    %v4088 = vunpack.c.h.b16 %v1039
    %v4089 = vunpack.c.l.b16 %v1040
    %v4090 = vunpack.c.h.b16 %v1040
    %v4091 = vunpack.c.l.b16 %v1041
    %v4092 = vunpack.c.h.b16 %v1041
    %v4093 = vunpack.c.l.b16 %v1042
    %v4094 = vunpack.c.h.b16 %v1042
    %v4095 = vunpack.c.l.b16 %v1043
    %v4096 = vunpack.c.h.b16 %v1043
    %v4097 = vunpack.c.l.b16 %v1044
    %v4098 = vunpack.c.h.b16 %v1044
    %v4099 = vunpack.c.l.b16 %v1045
    %v4100 = vunpack.c.h.b16 %v1045
    %v4101 = vunpack.c.l.b16 %v1046
    %v4102 = vunpack.c.h.b16 %v1046
    %v4103 = vunpack.c.l.b16 %v1047
    %v4104 = vunpack.c.h.b16 %v1047
    %v4105 = vunpack.c.l.b16 %v1048
    %v4106 = vunpack.c.h.b16 %v1048
    %v4107 = vunpack.c.l.b16 %v1049
    %v4108 = vunpack.c.h.b16 %v1049
    %v4109 = vunpack.c.l.b16 %v1050
    %v4110 = vunpack.c.h.b16 %v1050
    %v4111 = vunpack.c.l.b16 %v1051
    %v4112 = vunpack.c.h.b16 %v1051
    %v4113 = vunpack.c.l.b16 %v1052
    %v4114 = vunpack.c.h.b16 %v1052
    %v4115 = vunpack.c.l.b16 %v1053
    %v4116 = vunpack.c.h.b16 %v1053
    %v4117 = vunpack.c.l.b16 %v1054
    %v4118 = vunpack.c.h.b16 %v1054
    %v4119 = vunpack.c.l.b16 %v1055
    %v4120 = vunpack.c.h.b16 %v1055
    %v4121 = vunpack.c.l.b16 %v1056
    %v4122 = vunpack.c.h.b16 %v1056
    %v4123 = vunpack.c.l.b16 %v1057
    %v4124 = vunpack.c.h.b16 %v1057
    %v4125 = vunpack.c.l.b16 %v1058
    %v4126 = vunpack.c.h.b16 %v1058
    %v4127 = vunpack.c.l.b16 %v1059
    %v4128 = vunpack.c.h.b16 %v1059
    %v4129 = vunpack.c.l.b16 %v1060
    %v4130 = vunpack.c.h.b16 %v1060
    %v4131 = vunpack.c.l.b16 %v1061
    %v4132 = vunpack.c.h.b16 %v1061
    %v4133 = vunpack.c.l.b16 %v1062
    %v4134 = vunpack.c.h.b16 %v1062
    %v4135 = vunpack.c.l.b16 %v1063
    %v4136 = vunpack.c.h.b16 %v1063
    %v4137 = vunpack.c.l.b16 %v1064
    %v4138 = vunpack.c.h.b16 %v1064
    %v4139 = vunpack.c.l.b16 %v1065
    %v4140 = vunpack.c.h.b16 %v1065
    %v4141 = vunpack.c.l.b16 %v1066
    %v4142 = vunpack.c.h.b16 %v1066
    %v4143 = vunpack.c.l.b16 %v1067
    %v4144 = vunpack.c.h.b16 %v1067
    %v4145 = vunpack.c.l.b16 %v1068
    %v4146 = vunpack.c.h.b16 %v1068
    %v4147 = vunpack.c.l.b16 %v1069
    %v4148 = vunpack.c.h.b16 %v1069
    %v4149 = vunpack.c.l.b16 %v1070
    %v4150 = vunpack.c.h.b16 %v1070
    %v4151 = vunpack.c.l.b16 %v1071
    %v4152 = vunpack.c.h.b16 %v1071
    %v4153 = vunpack.c.l.b16 %v1072
    %v4154 = vunpack.c.h.b16 %v1072
    %v4155 = vunpack.c.l.b16 %v1073
    %v4156 = vunpack.c.h.b16 %v1073
    %v4157 = vunpack.c.l.b16 %v1074
    %v4158 = vunpack.c.h.b16 %v1074
    %v4159 = vunpack.c.l.b16 %v1075
    %v4160 = vunpack.c.h.b16 %v1075
    %v4161 = vunpack.c.l.b16 %v1076
    %v4162 = vunpack.c.h.b16 %v1076
    %v4163 = vunpack.c.l.b16 %v1077
    %v4164 = vunpack.c.h.b16 %v1077
    %v4165 = vunpack.c.l.b16 %v1078
    %v4166 = vunpack.c.h.b16 %v1078
    %v4167 = vunpack.c.l.b16 %v1079
    %v4168 = vunpack.c.h.b16 %v1079
    %v4169 = vunpack.c.l.b16 %v1080
    %v4170 = vunpack.c.h.b16 %v1080
    %v4171 = vunpack.c.l.b16 %v1081
    %v4172 = vunpack.c.h.b16 %v1081
    %v4173 = vunpack.c.l.b16 %v1082
    %v4174 = vunpack.c.h.b16 %v1082
    %v4175 = vunpack.c.l.b16 %v1083
    %v4176 = vunpack.c.h.b16 %v1083
    %v4177 = vunpack.c.l.b16 %v1084
    %v4178 = vunpack.c.h.b16 %v1084
    %v4179 = vunpack.c.l.b16 %v1085
    %v4180 = vunpack.c.h.b16 %v1085
    %v4181 = vunpack.c.l.b16 %v1086
    %v4182 = vunpack.c.h.b16 %v1086
    %v4183 = vunpack.c.l.b16 %v1087
    %v4184 = vunpack.c.h.b16 %v1087
    %v4185 = vunpack.c.l.b16 %v1088
    %v4186 = vunpack.c.h.b16 %v1088
    %v4187 = vunpack.c.l.b16 %v1089
    %v4188 = vunpack.c.h.b16 %v1089
    %v4189 = vunpack.c.l.b16 %v1090
    %v4190 = vunpack.c.h.b16 %v1090
    %v4191 = vunpack.c.l.b16 %v1091
    %v4192 = vunpack.c.h.b16 %v1091
    %v4193 = vunpack.c.l.b16 %v1092
    %v4194 = vunpack.c.h.b16 %v1092
    %v4195 = vunpack.c.l.b16 %v1093
    %v4196 = vunpack.c.h.b16 %v1093
    %v4197 = vunpack.c.l.b16 %v1094
    %v4198 = vunpack.c.h.b16 %v1094
    %v4199 = vunpack.c.l.b16 %v1095
    %v4200 = vunpack.c.h.b16 %v1095
    %v4201 = vunpack.c.l.b16 %v1096
    %v4202 = vunpack.c.h.b16 %v1096
    %v4203 = vunpack.c.l.b16 %v1097
    %v4204 = vunpack.c.h.b16 %v1097
    %v4205 = vunpack.c.l.b16 %v1098
    %v4206 = vunpack.c.h.b16 %v1098
    %v4207 = vunpack.c.l.b16 %v1099
    %v4208 = vunpack.c.h.b16 %v1099
    %v4209 = vunpack.c.l.b16 %v1100
    %v4210 = vunpack.c.h.b16 %v1100
    %v4211 = vunpack.c.l.b16 %v1101
    %v4212 = vunpack.c.h.b16 %v1101
    %v4213 = vunpack.c.l.b16 %v1102
    %v4214 = vunpack.c.h.b16 %v1102
    %v4215 = vunpack.c.l.b16 %v1103
    %v4216 = vunpack.c.h.b16 %v1103
    %v4217 = vunpack.c.l.b16 %v1104
    %v4218 = vunpack.c.h.b16 %v1104
    %v4219 = vunpack.c.l.b16 %v1105
    %v4220 = vunpack.c.h.b16 %v1105
    %v4221 = vunpack.c.l.b16 %v1106
    %v4222 = vunpack.c.h.b16 %v1106
    %v4223 = vunpack.c.l.b16 %v1107
    %v4224 = vunpack.c.h.b16 %v1107
    %v4225 = vunpack.c.l.b16 %v1108
    %v4226 = vunpack.c.h.b16 %v1108
    %v4227 = vunpack.c.l.b16 %v1109
    %v4228 = vunpack.c.h.b16 %v1109
    %v4229 = vunpack.c.l.b16 %v1110
    %v4230 = vunpack.c.h.b16 %v1110
    %v4231 = vunpack.c.l.b16 %v1111
    %v4232 = vunpack.c.h.b16 %v1111
    %v4233 = vunpack.c.l.b16 %v1112
    %v4234 = vunpack.c.h.b16 %v1112
    %v4235 = vunpack.c.l.b16 %v1113
    %v4236 = vunpack.c.h.b16 %v1113
    %v4237 = vunpack.c.l.b16 %v1114
    %v4238 = vunpack.c.h.b16 %v1114
    %v4239 = vunpack.c.l.b16 %v1115
    %v4240 = vunpack.c.h.b16 %v1115
    %v4241 = vunpack.c.l.b16 %v1116
    %v4242 = vunpack.c.h.b16 %v1116
    %v4243 = vunpack.c.l.b16 %v1117
    %v4244 = vunpack.c.h.b16 %v1117
    %v4245 = vunpack.c.l.b16 %v1118
    %v4246 = vunpack.c.h.b16 %v1118
    %v4247 = vunpack.c.l.b16 %v1119
    %v4248 = vunpack.c.h.b16 %v1119
    %v4249 = vunpack.c.l.b16 %v1120
    %v4250 = vunpack.c.h.b16 %v1120
    %v4251 = vunpack.c.l.b16 %v1121
    %v4252 = vunpack.c.h.b16 %v1121
    %v4253 = vunpack.c.l.b16 %v1122
    %v4254 = vunpack.c.h.b16 %v1122
    %v4255 = vunpack.c.l.b16 %v1123
    %v4256 = vunpack.c.h.b16 %v1123
    %v4257 = vunpack.c.l.b16 %v1124
    %v4258 = vunpack.c.h.b16 %v1124
    %v4259 = vunpack.c.l.b16 %v1125
    %v4260 = vunpack.c.h.b16 %v1125
    %v4261 = vunpack.c.l.b16 %v1126
    %v4262 = vunpack.c.h.b16 %v1126
    %v4263 = vpack.c.b16 %v2231, %v2215
    %v4264 = vpack.c.b16 %v2232, %v2216
    %v4265 = vpack.c.b16 %v2233, %v2217
    %v4266 = vpack.c.b16 %v2234, %v2218
    %v4267 = vpack.c.b16 %v2235, %v2219
    %v4268 = vpack.c.b16 %v2236, %v2220
    %v4269 = vpack.c.b16 %v2237, %v2221
    %v4270 = vpack.c.b16 %v2238, %v2222
    %v4271 = vpack.c.b16 %v2239, %v2223
    %v4272 = vpack.c.b16 %v2240, %v2224
    %v4273 = vpack.c.b16 %v2241, %v2225
    %v4274 = vpack.c.b16 %v2242, %v2226
    %v4275 = vpack.c.b16 %v2243, %v2227
    %v4276 = vpack.c.b16 %v2244, %v2228
    %v4277 = vpack.c.b16 %v2245, %v2229
    %v4278 = vpack.c.b16 %v2246, %v2230
    %v4279 = vpack.c.b16 %v2263, %v2247
    %v4280 = vpack.c.b16 %v2264, %v2248
    %v4281 = vpack.c.b16 %v2265, %v2249
    %v4282 = vpack.c.b16 %v2266, %v2250
    %v4283 = vpack.c.b16 %v2267, %v2251
    %v4284 = vpack.c.b16 %v2268, %v2252
    %v4285 = vpack.c.b16 %v2269, %v2253
    %v4286 = vpack.c.b16 %v2270, %v2254
    %v4287 = vpack.c.b16 %v2271, %v2255
    %v4288 = vpack.c.b16 %v2272, %v2256
    %v4289 = vpack.c.b16 %v2273, %v2257
    %v4290 = vpack.c.b16 %v2274, %v2258
    %v4291 = vpack.c.b16 %v2275, %v2259
    %v4292 = vpack.c.b16 %v2276, %v2260
    %v4293 = vpack.c.b16 %v2277, %v2261
    %v4294 = vpack.c.b16 %v2278, %v2262
    %v4295 = vpack.c.b16 %v2295, %v2279
    %v4296 = vpack.c.b16 %v2296, %v2280
    %v4297 = vpack.c.b16 %v2297, %v2281
    %v4298 = vpack.c.b16 %v2298, %v2282
    %v4299 = vpack.c.b16 %v2299, %v2283
    %v4300 = vpack.c.b16 %v2300, %v2284
    %v4301 = vpack.c.b16 %v2301, %v2285
    %v4302 = vpack.c.b16 %v2302, %v2286
    %v4303 = vpack.c.b16 %v2303, %v2287
    %v4304 = vpack.c.b16 %v2304, %v2288
    %v4305 = vpack.c.b16 %v2305, %v2289
    %v4306 = vpack.c.b16 %v2306, %v2290
    %v4307 = vpack.c.b16 %v2307, %v2291
    %v4308 = vpack.c.b16 %v2308, %v2292
    %v4309 = vpack.c.b16 %v2309, %v2293
    %v4310 = vpack.c.b16 %v2310, %v2294
    %v4311 = vpack.c.b16 %v2327, %v2311
    %v4312 = vpack.c.b16 %v2328, %v2312
    %v4313 = vpack.c.b16 %v2329, %v2313
    %v4314 = vpack.c.b16 %v2330, %v2314
    %v4315 = vpack.c.b16 %v2331, %v2315
    %v4316 = vpack.c.b16 %v2332, %v2316
    %v4317 = vpack.c.b16 %v2333, %v2317
    %v4318 = vpack.c.b16 %v2334, %v2318
    %v4319 = vpack.c.b16 %v2335, %v2319
    %v4320 = vpack.c.b16 %v2336, %v2320
    %v4321 = vpack.c.b16 %v2337, %v2321
    %v4322 = vpack.c.b16 %v2338, %v2322
    %v4323 = vpack.c.b16 %v2339, %v2323
    %v4324 = vpack.c.b16 %v2340, %v2324
    %v4325 = vpack.c.b16 %v2341, %v2325
    %v4326 = vpack.c.b16 %v2342, %v2326
    %v4327 = vpack.c.b16 %v2359, %v2343
    %v4328 = vpack.c.b16 %v2360, %v2344
    %v4329 = vpack.c.b16 %v2361, %v2345
    %v4330 = vpack.c.b16 %v2362, %v2346
    %v4331 = vpack.c.b16 %v2363, %v2347
    %v4332 = vpack.c.b16 %v2364, %v2348
    %v4333 = vpack.c.b16 %v2365, %v2349
    %v4334 = vpack.c.b16 %v2366, %v2350
    %v4335 = vpack.c.b16 %v2367, %v2351
    %v4336 = vpack.c.b16 %v2368, %v2352
    %v4337 = vpack.c.b16 %v2369, %v2353
    %v4338 = vpack.c.b16 %v2370, %v2354
    %v4339 = vpack.c.b16 %v2371, %v2355
    %v4340 = vpack.c.b16 %v2372, %v2356
    %v4341 = vpack.c.b16 %v2373, %v2357
    %v4342 = vpack.c.b16 %v2374, %v2358
    %v4343 = vpack.c.b16 %v2391, %v2375
    %v4344 = vpack.c.b16 %v2392, %v2376
    %v4345 = vpack.c.b16 %v2393, %v2377
    %v4346 = vpack.c.b16 %v2394, %v2378
    %v4347 = vpack.c.b16 %v2395, %v2379
    %v4348 = vpack.c.b16 %v2396, %v2380
    %v4349 = vpack.c.b16 %v2397, %v2381
    %v4350 = vpack.c.b16 %v2398, %v2382
    %v4351 = vpack.c.b16 %v2399, %v2383
    %v4352 = vpack.c.b16 %v2400, %v2384
    %v4353 = vpack.c.b16 %v2401, %v2385
    %v4354 = vpack.c.b16 %v2402, %v2386
    %v4355 = vpack.c.b16 %v2403, %v2387
    %v4356 = vpack.c.b16 %v2404, %v2388
    %v4357 = vpack.c.b16 %v2405, %v2389
    %v4358 = vpack.c.b16 %v2406, %v2390
    %v4359 = vpack.c.b16 %v2423, %v2407
    %v4360 = vpack.c.b16 %v2424, %v2408
    %v4361 = vpack.c.b16 %v2425, %v2409
    %v4362 = vpack.c.b16 %v2426, %v2410
    %v4363 = vpack.c.b16 %v2427, %v2411
    %v4364 = vpack.c.b16 %v2428, %v2412
    %v4365 = vpack.c.b16 %v2429, %v2413
    %v4366 = vpack.c.b16 %v2430, %v2414
    %v4367 = vpack.c.b16 %v2431, %v2415
    %v4368 = vpack.c.b16 %v2432, %v2416
    %v4369 = vpack.c.b16 %v2433, %v2417
    %v4370 = vpack.c.b16 %v2434, %v2418
    %v4371 = vpack.c.b16 %v2435, %v2419
    %v4372 = vpack.c.b16 %v2436, %v2420
    %v4373 = vpack.c.b16 %v2437, %v2421
    %v4374 = vpack.c.b16 %v2438, %v2422
    %v4375 = vpack.c.b16 %v2455, %v2439
    %v4376 = vpack.c.b16 %v2456, %v2440
    %v4377 = vpack.c.b16 %v2457, %v2441
    %v4378 = vpack.c.b16 %v2458, %v2442
    %v4379 = vpack.c.b16 %v2459, %v2443
    %v4380 = vpack.c.b16 %v2460, %v2444
    %v4381 = vpack.c.b16 %v2461, %v2445
    %v4382 = vpack.c.b16 %v2462, %v2446
    %v4383 = vpack.c.b16 %v2463, %v2447
    %v4384 = vpack.c.b16 %v2464, %v2448
    %v4385 = vpack.c.b16 %v2465, %v2449
    %v4386 = vpack.c.b16 %v2466, %v2450
    %v4387 = vpack.c.b16 %v2467, %v2451
    %v4388 = vpack.c.b16 %v2468, %v2452
    %v4389 = vpack.c.b16 %v2469, %v2453
    %v4390 = vpack.c.b16 %v2470, %v2454
    %v4391 = vpack.c.b16 %v2487, %v2471
    %v4392 = vpack.c.b16 %v2488, %v2472
    %v4393 = vpack.c.b16 %v2489, %v2473
    %v4394 = vpack.c.b16 %v2490, %v2474
    %v4395 = vpack.c.b16 %v2491, %v2475
    %v4396 = vpack.c.b16 %v2492, %v2476
    %v4397 = vpack.c.b16 %v2493, %v2477
    %v4398 = vpack.c.b16 %v2494, %v2478
    %v4399 = vpack.c.b16 %v2495, %v2479
    %v4400 = vpack.c.b16 %v2496, %v2480
    %v4401 = vpack.c.b16 %v2497, %v2481
    %v4402 = vpack.c.b16 %v2498, %v2482
    %v4403 = vpack.c.b16 %v2499, %v2483
    %v4404 = vpack.c.b16 %v2500, %v2484
    %v4405 = vpack.c.b16 %v2501, %v2485
    %v4406 = vpack.c.b16 %v2502, %v2486
    %v4407 = vpack.c.b16 %v2519, %v2503
    %v4408 = vpack.c.b16 %v2520, %v2504
    %v4409 = vpack.c.b16 %v2521, %v2505
    %v4410 = vpack.c.b16 %v2522, %v2506
    %v4411 = vpack.c.b16 %v2523, %v2507
    %v4412 = vpack.c.b16 %v2524, %v2508
    %v4413 = vpack.c.b16 %v2525, %v2509
    %v4414 = vpack.c.b16 %v2526, %v2510
    %v4415 = vpack.c.b16 %v2527, %v2511
    %v4416 = vpack.c.b16 %v2528, %v2512
    %v4417 = vpack.c.b16 %v2529, %v2513
    %v4418 = vpack.c.b16 %v2530, %v2514
    %v4419 = vpack.c.b16 %v2531, %v2515
    %v4420 = vpack.c.b16 %v2532, %v2516
    %v4421 = vpack.c.b16 %v2533, %v2517
    %v4422 = vpack.c.b16 %v2534, %v2518
    %v4423 = vpack.c.b16 %v2551, %v2535
    %v4424 = vpack.c.b16 %v2552, %v2536
    %v4425 = vpack.c.b16 %v2553, %v2537
    %v4426 = vpack.c.b16 %v2554, %v2538
    %v4427 = vpack.c.b16 %v2555, %v2539
    %v4428 = vpack.c.b16 %v2556, %v2540
    %v4429 = vpack.c.b16 %v2557, %v2541
    %v4430 = vpack.c.b16 %v2558, %v2542
    %v4431 = vpack.c.b16 %v2559, %v2543
    %v4432 = vpack.c.b16 %v2560, %v2544
    %v4433 = vpack.c.b16 %v2561, %v2545
    %v4434 = vpack.c.b16 %v2562, %v2546
    %v4435 = vpack.c.b16 %v2563, %v2547
    %v4436 = vpack.c.b16 %v2564, %v2548
    %v4437 = vpack.c.b16 %v2565, %v2549
    %v4438 = vpack.c.b16 %v2566, %v2550
    %v4439 = vpack.c.b16 %v2583, %v2567
    %v4440 = vpack.c.b16 %v2584, %v2568
    %v4441 = vpack.c.b16 %v2585, %v2569
    %v4442 = vpack.c.b16 %v2586, %v2570
    %v4443 = vpack.c.b16 %v2587, %v2571
    %v4444 = vpack.c.b16 %v2588, %v2572
    %v4445 = vpack.c.b16 %v2589, %v2573
    %v4446 = vpack.c.b16 %v2590, %v2574
    %v4447 = vpack.c.b16 %v2591, %v2575
    %v4448 = vpack.c.b16 %v2592, %v2576
    %v4449 = vpack.c.b16 %v2593, %v2577
    %v4450 = vpack.c.b16 %v2594, %v2578
    %v4451 = vpack.c.b16 %v2595, %v2579
    %v4452 = vpack.c.b16 %v2596, %v2580
    %v4453 = vpack.c.b16 %v2597, %v2581
    %v4454 = vpack.c.b16 %v2598, %v2582
    %v4455 = vpack.c.b16 %v2615, %v2599
    %v4456 = vpack.c.b16 %v2616, %v2600
    %v4457 = vpack.c.b16 %v2617, %v2601
    %v4458 = vpack.c.b16 %v2618, %v2602
    %v4459 = vpack.c.b16 %v2619, %v2603
    %v4460 = vpack.c.b16 %v2620, %v2604
    %v4461 = vpack.c.b16 %v2621, %v2605
    %v4462 = vpack.c.b16 %v2622, %v2606
    %v4463 = vpack.c.b16 %v2623, %v2607
    %v4464 = vpack.c.b16 %v2624, %v2608
    %v4465 = vpack.c.b16 %v2625, %v2609
    %v4466 = vpack.c.b16 %v2626, %v2610
    %v4467 = vpack.c.b16 %v2627, %v2611
    %v4468 = vpack.c.b16 %v2628, %v2612
    %v4469 = vpack.c.b16 %v2629, %v2613
    %v4470 = vpack.c.b16 %v2630, %v2614
    %v4471 = vpack.c.b16 %v2647, %v2631
    %v4472 = vpack.c.b16 %v2648, %v2632
    %v4473 = vpack.c.b16 %v2649, %v2633
    %v4474 = vpack.c.b16 %v2650, %v2634
    %v4475 = vpack.c.b16 %v2651, %v2635
    %v4476 = vpack.c.b16 %v2652, %v2636
    %v4477 = vpack.c.b16 %v2653, %v2637
    %v4478 = vpack.c.b16 %v2654, %v2638
    %v4479 = vpack.c.b16 %v2655, %v2639
    %v4480 = vpack.c.b16 %v2656, %v2640
    %v4481 = vpack.c.b16 %v2657, %v2641
    %v4482 = vpack.c.b16 %v2658, %v2642
    %v4483 = vpack.c.b16 %v2659, %v2643
    %v4484 = vpack.c.b16 %v2660, %v2644
    %v4485 = vpack.c.b16 %v2661, %v2645
    %v4486 = vpack.c.b16 %v2662, %v2646
    %v4487 = vpack.c.b16 %v2679, %v2663
    %v4488 = vpack.c.b16 %v2680, %v2664
    %v4489 = vpack.c.b16 %v2681, %v2665
    %v4490 = vpack.c.b16 %v2682, %v2666
    %v4491 = vpack.c.b16 %v2683, %v2667
    %v4492 = vpack.c.b16 %v2684, %v2668
    %v4493 = vpack.c.b16 %v2685, %v2669
    %v4494 = vpack.c.b16 %v2686, %v2670
    %v4495 = vpack.c.b16 %v2687, %v2671
    %v4496 = vpack.c.b16 %v2688, %v2672
    %v4497 = vpack.c.b16 %v2689, %v2673
    %v4498 = vpack.c.b16 %v2690, %v2674
    %v4499 = vpack.c.b16 %v2691, %v2675
    %v4500 = vpack.c.b16 %v2692, %v2676
    %v4501 = vpack.c.b16 %v2693, %v2677
    %v4502 = vpack.c.b16 %v2694, %v2678
    %v4503 = vpack.c.b16 %v2711, %v2695
    %v4504 = vpack.c.b16 %v2712, %v2696
    %v4505 = vpack.c.b16 %v2713, %v2697
    %v4506 = vpack.c.b16 %v2714, %v2698
    %v4507 = vpack.c.b16 %v2715, %v2699
    %v4508 = vpack.c.b16 %v2716, %v2700
    %v4509 = vpack.c.b16 %v2717, %v2701
    %v4510 = vpack.c.b16 %v2718, %v2702
    %v4511 = vpack.c.b16 %v2719, %v2703
    %v4512 = vpack.c.b16 %v2720, %v2704
    %v4513 = vpack.c.b16 %v2721, %v2705
    %v4514 = vpack.c.b16 %v2722, %v2706
    %v4515 = vpack.c.b16 %v2723, %v2707
    %v4516 = vpack.c.b16 %v2724, %v2708
    %v4517 = vpack.c.b16 %v2725, %v2709
    %v4518 = vpack.c.b16 %v2726, %v2710
    %v4519 = vpack.c.b16 %v2743, %v2727
    %v4520 = vpack.c.b16 %v2744, %v2728
    %v4521 = vpack.c.b16 %v2745, %v2729
    %v4522 = vpack.c.b16 %v2746, %v2730
    %v4523 = vpack.c.b16 %v2747, %v2731
    %v4524 = vpack.c.b16 %v2748, %v2732
    %v4525 = vpack.c.b16 %v2749, %v2733
    %v4526 = vpack.c.b16 %v2750, %v2734
    %v4527 = vpack.c.b16 %v2751, %v2735
    %v4528 = vpack.c.b16 %v2752, %v2736
    %v4529 = vpack.c.b16 %v2753, %v2737
    %v4530 = vpack.c.b16 %v2754, %v2738
    %v4531 = vpack.c.b16 %v2755, %v2739
    %v4532 = vpack.c.b16 %v2756, %v2740
    %v4533 = vpack.c.b16 %v2757, %v2741
    %v4534 = vpack.c.b16 %v2758, %v2742
    %v4535 = vpack.c.b16 %v2775, %v2759
    %v4536 = vpack.c.b16 %v2776, %v2760
    %v4537 = vpack.c.b16 %v2777, %v2761
    %v4538 = vpack.c.b16 %v2778, %v2762
    %v4539 = vpack.c.b16 %v2779, %v2763
    %v4540 = vpack.c.b16 %v2780, %v2764
    %v4541 = vpack.c.b16 %v2781, %v2765
    %v4542 = vpack.c.b16 %v2782, %v2766
    %v4543 = vpack.c.b16 %v2783, %v2767
    %v4544 = vpack.c.b16 %v2784, %v2768
    %v4545 = vpack.c.b16 %v2785, %v2769
    %v4546 = vpack.c.b16 %v2786, %v2770
    %v4547 = vpack.c.b16 %v2787, %v2771
    %v4548 = vpack.c.b16 %v2788, %v2772
    %v4549 = vpack.c.b16 %v2789, %v2773
    %v4550 = vpack.c.b16 %v2790, %v2774
    %v4551 = vpack.c.b16 %v2807, %v2791
    %v4552 = vpack.c.b16 %v2808, %v2792
    %v4553 = vpack.c.b16 %v2809, %v2793
    %v4554 = vpack.c.b16 %v2810, %v2794
    %v4555 = vpack.c.b16 %v2811, %v2795
    %v4556 = vpack.c.b16 %v2812, %v2796
    %v4557 = vpack.c.b16 %v2813, %v2797
    %v4558 = vpack.c.b16 %v2814, %v2798
    %v4559 = vpack.c.b16 %v2815, %v2799
    %v4560 = vpack.c.b16 %v2816, %v2800
    %v4561 = vpack.c.b16 %v2817, %v2801
    %v4562 = vpack.c.b16 %v2818, %v2802
    %v4563 = vpack.c.b16 %v2819, %v2803
    %v4564 = vpack.c.b16 %v2820, %v2804
    %v4565 = vpack.c.b16 %v2821, %v2805
    %v4566 = vpack.c.b16 %v2822, %v2806
    %v4567 = vpack.c.b16 %v2839, %v2823
    %v4568 = vpack.c.b16 %v2840, %v2824
    %v4569 = vpack.c.b16 %v2841, %v2825
    %v4570 = vpack.c.b16 %v2842, %v2826
    %v4571 = vpack.c.b16 %v2843, %v2827
    %v4572 = vpack.c.b16 %v2844, %v2828
    %v4573 = vpack.c.b16 %v2845, %v2829
    %v4574 = vpack.c.b16 %v2846, %v2830
    %v4575 = vpack.c.b16 %v2847, %v2831
    %v4576 = vpack.c.b16 %v2848, %v2832
    %v4577 = vpack.c.b16 %v2849, %v2833
    %v4578 = vpack.c.b16 %v2850, %v2834
    %v4579 = vpack.c.b16 %v2851, %v2835
    %v4580 = vpack.c.b16 %v2852, %v2836
    %v4581 = vpack.c.b16 %v2853, %v2837
    %v4582 = vpack.c.b16 %v2854, %v2838
    %v4583 = vpack.c.b16 %v2871, %v2855
    %v4584 = vpack.c.b16 %v2872, %v2856
    %v4585 = vpack.c.b16 %v2873, %v2857
    %v4586 = vpack.c.b16 %v2874, %v2858
    %v4587 = vpack.c.b16 %v2875, %v2859
    %v4588 = vpack.c.b16 %v2876, %v2860
    %v4589 = vpack.c.b16 %v2877, %v2861
    %v4590 = vpack.c.b16 %v2878, %v2862
    %v4591 = vpack.c.b16 %v2879, %v2863
    %v4592 = vpack.c.b16 %v2880, %v2864
    %v4593 = vpack.c.b16 %v2881, %v2865
    %v4594 = vpack.c.b16 %v2882, %v2866
    %v4595 = vpack.c.b16 %v2883, %v2867
    %v4596 = vpack.c.b16 %v2884, %v2868
    %v4597 = vpack.c.b16 %v2885, %v2869
    %v4598 = vpack.c.b16 %v2886, %v2870
    %v4599 = vpack.c.b16 %v2903, %v2887
    %v4600 = vpack.c.b16 %v2904, %v2888
    %v4601 = vpack.c.b16 %v2905, %v2889
    %v4602 = vpack.c.b16 %v2906, %v2890
    %v4603 = vpack.c.b16 %v2907, %v2891
    %v4604 = vpack.c.b16 %v2908, %v2892
    %v4605 = vpack.c.b16 %v2909, %v2893
    %v4606 = vpack.c.b16 %v2910, %v2894
    %v4607 = vpack.c.b16 %v2911, %v2895
    %v4608 = vpack.c.b16 %v2912, %v2896
    %v4609 = vpack.c.b16 %v2913, %v2897
    %v4610 = vpack.c.b16 %v2914, %v2898
    %v4611 = vpack.c.b16 %v2915, %v2899
    %v4612 = vpack.c.b16 %v2916, %v2900
    %v4613 = vpack.c.b16 %v2917, %v2901
    %v4614 = vpack.c.b16 %v2918, %v2902
    %v4615 = vpack.c.b16 %v2935, %v2919
    %v4616 = vpack.c.b16 %v2936, %v2920
    %v4617 = vpack.c.b16 %v2937, %v2921
    %v4618 = vpack.c.b16 %v2938, %v2922
    %v4619 = vpack.c.b16 %v2939, %v2923
    %v4620 = vpack.c.b16 %v2940, %v2924
    %v4621 = vpack.c.b16 %v2941, %v2925
    %v4622 = vpack.c.b16 %v2942, %v2926
    %v4623 = vpack.c.b16 %v2943, %v2927
    %v4624 = vpack.c.b16 %v2944, %v2928
    %v4625 = vpack.c.b16 %v2945, %v2929
    %v4626 = vpack.c.b16 %v2946, %v2930
    %v4627 = vpack.c.b16 %v2947, %v2931
    %v4628 = vpack.c.b16 %v2948, %v2932
    %v4629 = vpack.c.b16 %v2949, %v2933
    %v4630 = vpack.c.b16 %v2950, %v2934
    %v4631 = vpack.c.b16 %v2967, %v2951
    %v4632 = vpack.c.b16 %v2968, %v2952
    %v4633 = vpack.c.b16 %v2969, %v2953
    %v4634 = vpack.c.b16 %v2970, %v2954
    %v4635 = vpack.c.b16 %v2971, %v2955
    %v4636 = vpack.c.b16 %v2972, %v2956
    %v4637 = vpack.c.b16 %v2973, %v2957
    %v4638 = vpack.c.b16 %v2974, %v2958
    %v4639 = vpack.c.b16 %v2975, %v2959
    %v4640 = vpack.c.b16 %v2976, %v2960
    %v4641 = vpack.c.b16 %v2977, %v2961
    %v4642 = vpack.c.b16 %v2978, %v2962
    %v4643 = vpack.c.b16 %v2979, %v2963
    %v4644 = vpack.c.b16 %v2980, %v2964
    %v4645 = vpack.c.b16 %v2981, %v2965
    %v4646 = vpack.c.b16 %v2982, %v2966
    %v4647 = vpack.c.b16 %v2999, %v2983
    %v4648 = vpack.c.b16 %v3000, %v2984
    %v4649 = vpack.c.b16 %v3001, %v2985
    %v4650 = vpack.c.b16 %v3002, %v2986
    %v4651 = vpack.c.b16 %v3003, %v2987
    %v4652 = vpack.c.b16 %v3004, %v2988
    %v4653 = vpack.c.b16 %v3005, %v2989
    %v4654 = vpack.c.b16 %v3006, %v2990
    %v4655 = vpack.c.b16 %v3007, %v2991
    %v4656 = vpack.c.b16 %v3008, %v2992
    %v4657 = vpack.c.b16 %v3009, %v2993
    %v4658 = vpack.c.b16 %v3010, %v2994
    %v4659 = vpack.c.b16 %v3011, %v2995
    %v4660 = vpack.c.b16 %v3012, %v2996
    %v4661 = vpack.c.b16 %v3013, %v2997
    %v4662 = vpack.c.b16 %v3014, %v2998
    %v4663 = vpack.c.b16 %v3031, %v3015
    %v4664 = vpack.c.b16 %v3032, %v3016
    %v4665 = vpack.c.b16 %v3033, %v3017
    %v4666 = vpack.c.b16 %v3034, %v3018
    %v4667 = vpack.c.b16 %v3035, %v3019
    %v4668 = vpack.c.b16 %v3036, %v3020
    %v4669 = vpack.c.b16 %v3037, %v3021
    %v4670 = vpack.c.b16 %v3038, %v3022
    %v4671 = vpack.c.b16 %v3039, %v3023
    %v4672 = vpack.c.b16 %v3040, %v3024
    %v4673 = vpack.c.b16 %v3041, %v3025
    %v4674 = vpack.c.b16 %v3042, %v3026
    %v4675 = vpack.c.b16 %v3043, %v3027
    %v4676 = vpack.c.b16 %v3044, %v3028
    %v4677 = vpack.c.b16 %v3045, %v3029
    %v4678 = vpack.c.b16 %v3046, %v3030
    %v4679 = vpack.c.b16 %v3063, %v3047
    %v4680 = vpack.c.b16 %v3064, %v3048
    %v4681 = vpack.c.b16 %v3065, %v3049
    %v4682 = vpack.c.b16 %v3066, %v3050
    %v4683 = vpack.c.b16 %v3067, %v3051
    %v4684 = vpack.c.b16 %v3068, %v3052
    %v4685 = vpack.c.b16 %v3069, %v3053
    %v4686 = vpack.c.b16 %v3070, %v3054
    %v4687 = vpack.c.b16 %v3071, %v3055
    %v4688 = vpack.c.b16 %v3072, %v3056
    %v4689 = vpack.c.b16 %v3073, %v3057
    %v4690 = vpack.c.b16 %v3074, %v3058
    %v4691 = vpack.c.b16 %v3075, %v3059
    %v4692 = vpack.c.b16 %v3076, %v3060
    %v4693 = vpack.c.b16 %v3077, %v3061
    %v4694 = vpack.c.b16 %v3078, %v3062
    %v4695 = vpack.c.b16 %v3095, %v3079
    %v4696 = vpack.c.b16 %v3096, %v3080
    %v4697 = vpack.c.b16 %v3097, %v3081
    %v4698 = vpack.c.b16 %v3098, %v3082
    %v4699 = vpack.c.b16 %v3099, %v3083
    %v4700 = vpack.c.b16 %v3100, %v3084
    %v4701 = vpack.c.b16 %v3101, %v3085
    %v4702 = vpack.c.b16 %v3102, %v3086
    %v4703 = vpack.c.b16 %v3103, %v3087
    %v4704 = vpack.c.b16 %v3104, %v3088
    %v4705 = vpack.c.b16 %v3105, %v3089
    %v4706 = vpack.c.b16 %v3106, %v3090
    %v4707 = vpack.c.b16 %v3107, %v3091
    %v4708 = vpack.c.b16 %v3108, %v3092
    %v4709 = vpack.c.b16 %v3109, %v3093
    %v4710 = vpack.c.b16 %v3110, %v3094
    %v4711 = vpack.c.b16 %v3127, %v3111
    %v4712 = vpack.c.b16 %v3128, %v3112
    %v4713 = vpack.c.b16 %v3129, %v3113
    %v4714 = vpack.c.b16 %v3130, %v3114
    %v4715 = vpack.c.b16 %v3131, %v3115
    %v4716 = vpack.c.b16 %v3132, %v3116
    %v4717 = vpack.c.b16 %v3133, %v3117
    %v4718 = vpack.c.b16 %v3134, %v3118
    %v4719 = vpack.c.b16 %v3135, %v3119
    %v4720 = vpack.c.b16 %v3136, %v3120
    %v4721 = vpack.c.b16 %v3137, %v3121
    %v4722 = vpack.c.b16 %v3138, %v3122
    %v4723 = vpack.c.b16 %v3139, %v3123
    %v4724 = vpack.c.b16 %v3140, %v3124
    %v4725 = vpack.c.b16 %v3141, %v3125
    %v4726 = vpack.c.b16 %v3142, %v3126
    %v4727 = vpack.c.b16 %v3159, %v3143
    %v4728 = vpack.c.b16 %v3160, %v3144
    %v4729 = vpack.c.b16 %v3161, %v3145
    %v4730 = vpack.c.b16 %v3162, %v3146
    %v4731 = vpack.c.b16 %v3163, %v3147
    %v4732 = vpack.c.b16 %v3164, %v3148
    %v4733 = vpack.c.b16 %v3165, %v3149
    %v4734 = vpack.c.b16 %v3166, %v3150
    %v4735 = vpack.c.b16 %v3167, %v3151
    %v4736 = vpack.c.b16 %v3168, %v3152
    %v4737 = vpack.c.b16 %v3169, %v3153
    %v4738 = vpack.c.b16 %v3170, %v3154
    %v4739 = vpack.c.b16 %v3171, %v3155
    %v4740 = vpack.c.b16 %v3172, %v3156
    %v4741 = vpack.c.b16 %v3173, %v3157
    %v4742 = vpack.c.b16 %v3174, %v3158
    %v4743 = vpack.c.b16 %v3191, %v3175
    %v4744 = vpack.c.b16 %v3192, %v3176
    %v4745 = vpack.c.b16 %v3193, %v3177
    %v4746 = vpack.c.b16 %v3194, %v3178
    %v4747 = vpack.c.b16 %v3195, %v3179
    %v4748 = vpack.c.b16 %v3196, %v3180
    %v4749 = vpack.c.b16 %v3197, %v3181
    %v4750 = vpack.c.b16 %v3198, %v3182
    %v4751 = vpack.c.b16 %v3199, %v3183
    %v4752 = vpack.c.b16 %v3200, %v3184
    %v4753 = vpack.c.b16 %v3201, %v3185
    %v4754 = vpack.c.b16 %v3202, %v3186
    %v4755 = vpack.c.b16 %v3203, %v3187
    %v4756 = vpack.c.b16 %v3204, %v3188
    %v4757 = vpack.c.b16 %v3205, %v3189
    %v4758 = vpack.c.b16 %v3206, %v3190
    %v4759 = vpack.c.b16 %v3223, %v3207
    %v4760 = vpack.c.b16 %v3224, %v3208
    %v4761 = vpack.c.b16 %v3225, %v3209
    %v4762 = vpack.c.b16 %v3226, %v3210
    %v4763 = vpack.c.b16 %v3227, %v3211
    %v4764 = vpack.c.b16 %v3228, %v3212
    %v4765 = vpack.c.b16 %v3229, %v3213
    %v4766 = vpack.c.b16 %v3230, %v3214
    %v4767 = vpack.c.b16 %v3231, %v3215
    %v4768 = vpack.c.b16 %v3232, %v3216
    %v4769 = vpack.c.b16 %v3233, %v3217
    %v4770 = vpack.c.b16 %v3234, %v3218
    %v4771 = vpack.c.b16 %v3235, %v3219
    %v4772 = vpack.c.b16 %v3236, %v3220
    %v4773 = vpack.c.b16 %v3237, %v3221
    %v4774 = vpack.c.b16 %v3238, %v3222
    %v4775 = vpack.c.b16 %v3255, %v3239
    %v4776 = vpack.c.b16 %v3256, %v3240
    %v4777 = vpack.c.b16 %v3257, %v3241
    %v4778 = vpack.c.b16 %v3258, %v3242
    %v4779 = vpack.c.b16 %v3259, %v3243
    %v4780 = vpack.c.b16 %v3260, %v3244
    %v4781 = vpack.c.b16 %v3261, %v3245
    %v4782 = vpack.c.b16 %v3262, %v3246
    %v4783 = vpack.c.b16 %v3263, %v3247
    %v4784 = vpack.c.b16 %v3264, %v3248
    %v4785 = vpack.c.b16 %v3265, %v3249
    %v4786 = vpack.c.b16 %v3266, %v3250
    %v4787 = vpack.c.b16 %v3267, %v3251
    %v4788 = vpack.c.b16 %v3268, %v3252
    %v4789 = vpack.c.b16 %v3269, %v3253
    %v4790 = vpack.c.b16 %v3270, %v3254
    %v4791 = vpack.c.b16 %v3287, %v3271
    %v4792 = vpack.c.b16 %v3288, %v3272
    %v4793 = vpack.c.b16 %v3289, %v3273
    %v4794 = vpack.c.b16 %v3290, %v3274
    %v4795 = vpack.c.b16 %v3291, %v3275
    %v4796 = vpack.c.b16 %v3292, %v3276
    %v4797 = vpack.c.b16 %v3293, %v3277
    %v4798 = vpack.c.b16 %v3294, %v3278
    %v4799 = vpack.c.b16 %v3295, %v3279
    %v4800 = vpack.c.b16 %v3296, %v3280
    %v4801 = vpack.c.b16 %v3297, %v3281
    %v4802 = vpack.c.b16 %v3298, %v3282
    %v4803 = vpack.c.b16 %v3299, %v3283
    %v4804 = vpack.c.b16 %v3300, %v3284
    %v4805 = vpack.c.b16 %v3301, %v3285
    %v4806 = vpack.c.b16 %v3302, %v3286
    %v4807 = vpack.c.b16 %v3319, %v3303
    %v4808 = vpack.c.b16 %v3320, %v3304
    %v4809 = vpack.c.b16 %v3321, %v3305
    %v4810 = vpack.c.b16 %v3322, %v3306
    %v4811 = vpack.c.b16 %v3323, %v3307
    %v4812 = vpack.c.b16 %v3324, %v3308
    %v4813 = vpack.c.b16 %v3325, %v3309
    %v4814 = vpack.c.b16 %v3326, %v3310
    %v4815 = vpack.c.b16 %v3327, %v3311
    %v4816 = vpack.c.b16 %v3328, %v3312
    %v4817 = vpack.c.b16 %v3329, %v3313
    %v4818 = vpack.c.b16 %v3330, %v3314
    %v4819 = vpack.c.b16 %v3331, %v3315
    %v4820 = vpack.c.b16 %v3332, %v3316
    %v4821 = vpack.c.b16 %v3333, %v3317
    %v4822 = vpack.c.b16 %v3334, %v3318
    %v4823 = vpack.c.b16 %v3351, %v3335
    %v4824 = vpack.c.b16 %v3352, %v3336
    %v4825 = vpack.c.b16 %v3353, %v3337
    %v4826 = vpack.c.b16 %v3354, %v3338
    %v4827 = vpack.c.b16 %v3355, %v3339
    %v4828 = vpack.c.b16 %v3356, %v3340
    %v4829 = vpack.c.b16 %v3357, %v3341
    %v4830 = vpack.c.b16 %v3358, %v3342
    %v4831 = vpack.c.b16 %v3359, %v3343
    %v4832 = vpack.c.b16 %v3360, %v3344
    %v4833 = vpack.c.b16 %v3361, %v3345
    %v4834 = vpack.c.b16 %v3362, %v3346
    %v4835 = vpack.c.b16 %v3363, %v3347
    %v4836 = vpack.c.b16 %v3364, %v3348
    %v4837 = vpack.c.b16 %v3365, %v3349
    %v4838 = vpack.c.b16 %v3366, %v3350
    %v4839 = vpack.c.b16 %v3383, %v3367
    %v4840 = vpack.c.b16 %v3384, %v3368
    %v4841 = vpack.c.b16 %v3385, %v3369
    %v4842 = vpack.c.b16 %v3386, %v3370
    %v4843 = vpack.c.b16 %v3387, %v3371
    %v4844 = vpack.c.b16 %v3388, %v3372
    %v4845 = vpack.c.b16 %v3389, %v3373
    %v4846 = vpack.c.b16 %v3390, %v3374
    %v4847 = vpack.c.b16 %v3391, %v3375
    %v4848 = vpack.c.b16 %v3392, %v3376
    %v4849 = vpack.c.b16 %v3393, %v3377
    %v4850 = vpack.c.b16 %v3394, %v3378
    %v4851 = vpack.c.b16 %v3395, %v3379
    %v4852 = vpack.c.b16 %v3396, %v3380
    %v4853 = vpack.c.b16 %v3397, %v3381
    %v4854 = vpack.c.b16 %v3398, %v3382
    %v4855 = vpack.c.b16 %v3415, %v3399
    %v4856 = vpack.c.b16 %v3416, %v3400
    %v4857 = vpack.c.b16 %v3417, %v3401
    %v4858 = vpack.c.b16 %v3418, %v3402
    %v4859 = vpack.c.b16 %v3419, %v3403
    %v4860 = vpack.c.b16 %v3420, %v3404
    %v4861 = vpack.c.b16 %v3421, %v3405
    %v4862 = vpack.c.b16 %v3422, %v3406
    %v4863 = vpack.c.b16 %v3423, %v3407
    %v4864 = vpack.c.b16 %v3424, %v3408
    %v4865 = vpack.c.b16 %v3425, %v3409
    %v4866 = vpack.c.b16 %v3426, %v3410
    %v4867 = vpack.c.b16 %v3427, %v3411
    %v4868 = vpack.c.b16 %v3428, %v3412
    %v4869 = vpack.c.b16 %v3429, %v3413
    %v4870 = vpack.c.b16 %v3430, %v3414
    %v4871 = vpack.c.b16 %v3447, %v3431
    %v4872 = vpack.c.b16 %v3448, %v3432
    %v4873 = vpack.c.b16 %v3449, %v3433
    %v4874 = vpack.c.b16 %v3450, %v3434
    %v4875 = vpack.c.b16 %v3451, %v3435
    %v4876 = vpack.c.b16 %v3452, %v3436
    %v4877 = vpack.c.b16 %v3453, %v3437
    %v4878 = vpack.c.b16 %v3454, %v3438
    %v4879 = vpack.c.b16 %v3455, %v3439
    %v4880 = vpack.c.b16 %v3456, %v3440
    %v4881 = vpack.c.b16 %v3457, %v3441
    %v4882 = vpack.c.b16 %v3458, %v3442
    %v4883 = vpack.c.b16 %v3459, %v3443
    %v4884 = vpack.c.b16 %v3460, %v3444
    %v4885 = vpack.c.b16 %v3461, %v3445
    %v4886 = vpack.c.b16 %v3462, %v3446
    %v4887 = vpack.c.b16 %v3479, %v3463
    %v4888 = vpack.c.b16 %v3480, %v3464
    %v4889 = vpack.c.b16 %v3481, %v3465
    %v4890 = vpack.c.b16 %v3482, %v3466
    %v4891 = vpack.c.b16 %v3483, %v3467
    %v4892 = vpack.c.b16 %v3484, %v3468
    %v4893 = vpack.c.b16 %v3485, %v3469
    %v4894 = vpack.c.b16 %v3486, %v3470
    %v4895 = vpack.c.b16 %v3487, %v3471
    %v4896 = vpack.c.b16 %v3488, %v3472
    %v4897 = vpack.c.b16 %v3489, %v3473
    %v4898 = vpack.c.b16 %v3490, %v3474
    %v4899 = vpack.c.b16 %v3491, %v3475
    %v4900 = vpack.c.b16 %v3492, %v3476
    %v4901 = vpack.c.b16 %v3493, %v3477
    %v4902 = vpack.c.b16 %v3494, %v3478
    %v4903 = vpack.c.b16 %v3511, %v3495
    %v4904 = vpack.c.b16 %v3512, %v3496
    %v4905 = vpack.c.b16 %v3513, %v3497
    %v4906 = vpack.c.b16 %v3514, %v3498
    %v4907 = vpack.c.b16 %v3515, %v3499
    %v4908 = vpack.c.b16 %v3516, %v3500
    %v4909 = vpack.c.b16 %v3517, %v3501
    %v4910 = vpack.c.b16 %v3518, %v3502
    %v4911 = vpack.c.b16 %v3519, %v3503
    %v4912 = vpack.c.b16 %v3520, %v3504
    %v4913 = vpack.c.b16 %v3521, %v3505
    %v4914 = vpack.c.b16 %v3522, %v3506
    %v4915 = vpack.c.b16 %v3523, %v3507
    %v4916 = vpack.c.b16 %v3524, %v3508
    %v4917 = vpack.c.b16 %v3525, %v3509
    %v4918 = vpack.c.b16 %v3526, %v3510
    %v4919 = vpack.c.b16 %v3543, %v3527
    %v4920 = vpack.c.b16 %v3544, %v3528
    %v4921 = vpack.c.b16 %v3545, %v3529
    %v4922 = vpack.c.b16 %v3546, %v3530
    %v4923 = vpack.c.b16 %v3547, %v3531
    %v4924 = vpack.c.b16 %v3548, %v3532
    %v4925 = vpack.c.b16 %v3549, %v3533
    %v4926 = vpack.c.b16 %v3550, %v3534
    %v4927 = vpack.c.b16 %v3551, %v3535
    %v4928 = vpack.c.b16 %v3552, %v3536
    %v4929 = vpack.c.b16 %v3553, %v3537
    %v4930 = vpack.c.b16 %v3554, %v3538
    %v4931 = vpack.c.b16 %v3555, %v3539
    %v4932 = vpack.c.b16 %v3556, %v3540
    %v4933 = vpack.c.b16 %v3557, %v3541
    %v4934 = vpack.c.b16 %v3558, %v3542
    %v4935 = vpack.c.b16 %v3575, %v3559
    %v4936 = vpack.c.b16 %v3576, %v3560
    %v4937 = vpack.c.b16 %v3577, %v3561
    %v4938 = vpack.c.b16 %v3578, %v3562
    %v4939 = vpack.c.b16 %v3579, %v3563
    %v4940 = vpack.c.b16 %v3580, %v3564
    %v4941 = vpack.c.b16 %v3581, %v3565
    %v4942 = vpack.c.b16 %v3582, %v3566
    %v4943 = vpack.c.b16 %v3583, %v3567
    %v4944 = vpack.c.b16 %v3584, %v3568
    %v4945 = vpack.c.b16 %v3585, %v3569
    %v4946 = vpack.c.b16 %v3586, %v3570
    %v4947 = vpack.c.b16 %v3587, %v3571
    %v4948 = vpack.c.b16 %v3588, %v3572
    %v4949 = vpack.c.b16 %v3589, %v3573
    %v4950 = vpack.c.b16 %v3590, %v3574
    %v4951 = vpack.c.b16 %v3607, %v3591
    %v4952 = vpack.c.b16 %v3608, %v3592
    %v4953 = vpack.c.b16 %v3609, %v3593
    %v4954 = vpack.c.b16 %v3610, %v3594
    %v4955 = vpack.c.b16 %v3611, %v3595
    %v4956 = vpack.c.b16 %v3612, %v3596
    %v4957 = vpack.c.b16 %v3613, %v3597
    %v4958 = vpack.c.b16 %v3614, %v3598
    %v4959 = vpack.c.b16 %v3615, %v3599
    %v4960 = vpack.c.b16 %v3616, %v3600
    %v4961 = vpack.c.b16 %v3617, %v3601
    %v4962 = vpack.c.b16 %v3618, %v3602
    %v4963 = vpack.c.b16 %v3619, %v3603
    %v4964 = vpack.c.b16 %v3620, %v3604
    %v4965 = vpack.c.b16 %v3621, %v3605
    %v4966 = vpack.c.b16 %v3622, %v3606
    %v4967 = vpack.c.b16 %v3639, %v3623
    %v4968 = vpack.c.b16 %v3640, %v3624
    %v4969 = vpack.c.b16 %v3641, %v3625
    %v4970 = vpack.c.b16 %v3642, %v3626
    %v4971 = vpack.c.b16 %v3643, %v3627
    %v4972 = vpack.c.b16 %v3644, %v3628
    %v4973 = vpack.c.b16 %v3645, %v3629
    %v4974 = vpack.c.b16 %v3646, %v3630
    %v4975 = vpack.c.b16 %v3647, %v3631
    %v4976 = vpack.c.b16 %v3648, %v3632
    %v4977 = vpack.c.b16 %v3649, %v3633
    %v4978 = vpack.c.b16 %v3650, %v3634
    %v4979 = vpack.c.b16 %v3651, %v3635
    %v4980 = vpack.c.b16 %v3652, %v3636
    %v4981 = vpack.c.b16 %v3653, %v3637
    %v4982 = vpack.c.b16 %v3654, %v3638
    %v4983 = vpack.c.b16 %v3671, %v3655
    %v4984 = vpack.c.b16 %v3672, %v3656
    %v4985 = vpack.c.b16 %v3673, %v3657
    %v4986 = vpack.c.b16 %v3674, %v3658
    %v4987 = vpack.c.b16 %v3675, %v3659
    %v4988 = vpack.c.b16 %v3676, %v3660
    %v4989 = vpack.c.b16 %v3677, %v3661
    %v4990 = vpack.c.b16 %v3678, %v3662
    %v4991 = vpack.c.b16 %v3679, %v3663
    %v4992 = vpack.c.b16 %v3680, %v3664
    %v4993 = vpack.c.b16 %v3681, %v3665
    %v4994 = vpack.c.b16 %v3682, %v3666
    %v4995 = vpack.c.b16 %v3683, %v3667
    %v4996 = vpack.c.b16 %v3684, %v3668
    %v4997 = vpack.c.b16 %v3685, %v3669
    %v4998 = vpack.c.b16 %v3686, %v3670
    %v4999 = vpack.c.b16 %v3703, %v3687
    %v5000 = vpack.c.b16 %v3704, %v3688
    %v5001 = vpack.c.b16 %v3705, %v3689
    %v5002 = vpack.c.b16 %v3706, %v3690
    %v5003 = vpack.c.b16 %v3707, %v3691
    %v5004 = vpack.c.b16 %v3708, %v3692
    %v5005 = vpack.c.b16 %v3709, %v3693
    %v5006 = vpack.c.b16 %v3710, %v3694
    %v5007 = vpack.c.b16 %v3711, %v3695
    %v5008 = vpack.c.b16 %v3712, %v3696
    %v5009 = vpack.c.b16 %v3713, %v3697
    %v5010 = vpack.c.b16 %v3714, %v3698
    %v5011 = vpack.c.b16 %v3715, %v3699
    %v5012 = vpack.c.b16 %v3716, %v3700
    %v5013 = vpack.c.b16 %v3717, %v3701
    %v5014 = vpack.c.b16 %v3718, %v3702
    %v5015 = vpack.c.b16 %v3735, %v3719
    %v5016 = vpack.c.b16 %v3736, %v3720
    %v5017 = vpack.c.b16 %v3737, %v3721
    %v5018 = vpack.c.b16 %v3738, %v3722
    %v5019 = vpack.c.b16 %v3739, %v3723
    %v5020 = vpack.c.b16 %v3740, %v3724
    %v5021 = vpack.c.b16 %v3741, %v3725
    %v5022 = vpack.c.b16 %v3742, %v3726
    %v5023 = vpack.c.b16 %v3743, %v3727
    %v5024 = vpack.c.b16 %v3744, %v3728
    %v5025 = vpack.c.b16 %v3745, %v3729
    %v5026 = vpack.c.b16 %v3746, %v3730
    %v5027 = vpack.c.b16 %v3747, %v3731
    %v5028 = vpack.c.b16 %v3748, %v3732
    %v5029 = vpack.c.b16 %v3749, %v3733
    %v5030 = vpack.c.b16 %v3750, %v3734
    %v5031 = vpack.c.b16 %v3767, %v3751
    %v5032 = vpack.c.b16 %v3768, %v3752
    %v5033 = vpack.c.b16 %v3769, %v3753
    %v5034 = vpack.c.b16 %v3770, %v3754
    %v5035 = vpack.c.b16 %v3771, %v3755
    %v5036 = vpack.c.b16 %v3772, %v3756
    %v5037 = vpack.c.b16 %v3773, %v3757
    %v5038 = vpack.c.b16 %v3774, %v3758
    %v5039 = vpack.c.b16 %v3775, %v3759
    %v5040 = vpack.c.b16 %v3776, %v3760
    %v5041 = vpack.c.b16 %v3777, %v3761
    %v5042 = vpack.c.b16 %v3778, %v3762
    %v5043 = vpack.c.b16 %v3779, %v3763
    %v5044 = vpack.c.b16 %v3780, %v3764
    %v5045 = vpack.c.b16 %v3781, %v3765
    %v5046 = vpack.c.b16 %v3782, %v3766
    %v5047 = vpack.c.b16 %v3799, %v3783
    %v5048 = vpack.c.b16 %v3800, %v3784
    %v5049 = vpack.c.b16 %v3801, %v3785
    %v5050 = vpack.c.b16 %v3802, %v3786
    %v5051 = vpack.c.b16 %v3803, %v3787
    %v5052 = vpack.c.b16 %v3804, %v3788
    %v5053 = vpack.c.b16 %v3805, %v3789
    %v5054 = vpack.c.b16 %v3806, %v3790
    %v5055 = vpack.c.b16 %v3807, %v3791
    %v5056 = vpack.c.b16 %v3808, %v3792
    %v5057 = vpack.c.b16 %v3809, %v3793
    %v5058 = vpack.c.b16 %v3810, %v3794
    %v5059 = vpack.c.b16 %v3811, %v3795
    %v5060 = vpack.c.b16 %v3812, %v3796
    %v5061 = vpack.c.b16 %v3813, %v3797
    %v5062 = vpack.c.b16 %v3814, %v3798
    %v5063 = vpack.c.b16 %v3831, %v3815
    %v5064 = vpack.c.b16 %v3832, %v3816
    %v5065 = vpack.c.b16 %v3833, %v3817
    %v5066 = vpack.c.b16 %v3834, %v3818
    %v5067 = vpack.c.b16 %v3835, %v3819
    %v5068 = vpack.c.b16 %v3836, %v3820
    %v5069 = vpack.c.b16 %v3837, %v3821
    %v5070 = vpack.c.b16 %v3838, %v3822
    %v5071 = vpack.c.b16 %v3839, %v3823
    %v5072 = vpack.c.b16 %v3840, %v3824
    %v5073 = vpack.c.b16 %v3841, %v3825
    %v5074 = vpack.c.b16 %v3842, %v3826
    %v5075 = vpack.c.b16 %v3843, %v3827
    %v5076 = vpack.c.b16 %v3844, %v3828
    %v5077 = vpack.c.b16 %v3845, %v3829
    %v5078 = vpack.c.b16 %v3846, %v3830
    %v5079 = vpack.c.b16 %v3863, %v3847
    %v5080 = vpack.c.b16 %v3864, %v3848
    %v5081 = vpack.c.b16 %v3865, %v3849
    %v5082 = vpack.c.b16 %v3866, %v3850
    %v5083 = vpack.c.b16 %v3867, %v3851
    %v5084 = vpack.c.b16 %v3868, %v3852
    %v5085 = vpack.c.b16 %v3869, %v3853
    %v5086 = vpack.c.b16 %v3870, %v3854
    %v5087 = vpack.c.b16 %v3871, %v3855
    %v5088 = vpack.c.b16 %v3872, %v3856
    %v5089 = vpack.c.b16 %v3873, %v3857
    %v5090 = vpack.c.b16 %v3874, %v3858
    %v5091 = vpack.c.b16 %v3875, %v3859
    %v5092 = vpack.c.b16 %v3876, %v3860
    %v5093 = vpack.c.b16 %v3877, %v3861
    %v5094 = vpack.c.b16 %v3878, %v3862
    %v5095 = vpack.c.b16 %v3895, %v3879
    %v5096 = vpack.c.b16 %v3896, %v3880
    %v5097 = vpack.c.b16 %v3897, %v3881
    %v5098 = vpack.c.b16 %v3898, %v3882
    %v5099 = vpack.c.b16 %v3899, %v3883
    %v5100 = vpack.c.b16 %v3900, %v3884
    %v5101 = vpack.c.b16 %v3901, %v3885
    %v5102 = vpack.c.b16 %v3902, %v3886
    %v5103 = vpack.c.b16 %v3903, %v3887
    %v5104 = vpack.c.b16 %v3904, %v3888
    %v5105 = vpack.c.b16 %v3905, %v3889
    %v5106 = vpack.c.b16 %v3906, %v3890
    %v5107 = vpack.c.b16 %v3907, %v3891
    %v5108 = vpack.c.b16 %v3908, %v3892
    %v5109 = vpack.c.b16 %v3909, %v3893
    %v5110 = vpack.c.b16 %v3910, %v3894
    %v5111 = vpack.c.b16 %v3927, %v3911
    %v5112 = vpack.c.b16 %v3928, %v3912
    %v5113 = vpack.c.b16 %v3929, %v3913
    %v5114 = vpack.c.b16 %v3930, %v3914
    %v5115 = vpack.c.b16 %v3931, %v3915
    %v5116 = vpack.c.b16 %v3932, %v3916
    %v5117 = vpack.c.b16 %v3933, %v3917
    %v5118 = vpack.c.b16 %v3934, %v3918
    %v5119 = vpack.c.b16 %v3935, %v3919
    %v5120 = vpack.c.b16 %v3936, %v3920
    %v5121 = vpack.c.b16 %v3937, %v3921
    %v5122 = vpack.c.b16 %v3938, %v3922
    %v5123 = vpack.c.b16 %v3939, %v3923
    %v5124 = vpack.c.b16 %v3940, %v3924
    %v5125 = vpack.c.b16 %v3941, %v3925
    %v5126 = vpack.c.b16 %v3942, %v3926
    %v5127 = vpack.c.b16 %v3959, %v3943
    %v5128 = vpack.c.b16 %v3960, %v3944
    %v5129 = vpack.c.b16 %v3961, %v3945
    %v5130 = vpack.c.b16 %v3962, %v3946
    %v5131 = vpack.c.b16 %v3963, %v3947
    %v5132 = vpack.c.b16 %v3964, %v3948
    %v5133 = vpack.c.b16 %v3965, %v3949
    %v5134 = vpack.c.b16 %v3966, %v3950
    %v5135 = vpack.c.b16 %v3967, %v3951
    %v5136 = vpack.c.b16 %v3968, %v3952
    %v5137 = vpack.c.b16 %v3969, %v3953
    %v5138 = vpack.c.b16 %v3970, %v3954
    %v5139 = vpack.c.b16 %v3971, %v3955
    %v5140 = vpack.c.b16 %v3972, %v3956
    %v5141 = vpack.c.b16 %v3973, %v3957
    %v5142 = vpack.c.b16 %v3974, %v3958
    %v5143 = vpack.c.b16 %v3991, %v3975
    %v5144 = vpack.c.b16 %v3992, %v3976
    %v5145 = vpack.c.b16 %v3993, %v3977
    %v5146 = vpack.c.b16 %v3994, %v3978
    %v5147 = vpack.c.b16 %v3995, %v3979
    %v5148 = vpack.c.b16 %v3996, %v3980
    %v5149 = vpack.c.b16 %v3997, %v3981
    %v5150 = vpack.c.b16 %v3998, %v3982
    %v5151 = vpack.c.b16 %v3999, %v3983
    %v5152 = vpack.c.b16 %v4000, %v3984
    %v5153 = vpack.c.b16 %v4001, %v3985
    %v5154 = vpack.c.b16 %v4002, %v3986
    %v5155 = vpack.c.b16 %v4003, %v3987
    %v5156 = vpack.c.b16 %v4004, %v3988
    %v5157 = vpack.c.b16 %v4005, %v3989
    %v5158 = vpack.c.b16 %v4006, %v3990
    %v5159 = vpack.c.b16 %v4023, %v4007
    %v5160 = vpack.c.b16 %v4024, %v4008
    %v5161 = vpack.c.b16 %v4025, %v4009
    %v5162 = vpack.c.b16 %v4026, %v4010
    %v5163 = vpack.c.b16 %v4027, %v4011
    %v5164 = vpack.c.b16 %v4028, %v4012
    %v5165 = vpack.c.b16 %v4029, %v4013
    %v5166 = vpack.c.b16 %v4030, %v4014
    %v5167 = vpack.c.b16 %v4031, %v4015
    %v5168 = vpack.c.b16 %v4032, %v4016
    %v5169 = vpack.c.b16 %v4033, %v4017
    %v5170 = vpack.c.b16 %v4034, %v4018
    %v5171 = vpack.c.b16 %v4035, %v4019
    %v5172 = vpack.c.b16 %v4036, %v4020
    %v5173 = vpack.c.b16 %v4037, %v4021
    %v5174 = vpack.c.b16 %v4038, %v4022
    %v5175 = vpack.c.b16 %v4055, %v4039
    %v5176 = vpack.c.b16 %v4056, %v4040
    %v5177 = vpack.c.b16 %v4057, %v4041
    %v5178 = vpack.c.b16 %v4058, %v4042
    %v5179 = vpack.c.b16 %v4059, %v4043
    %v5180 = vpack.c.b16 %v4060, %v4044
    %v5181 = vpack.c.b16 %v4061, %v4045
    %v5182 = vpack.c.b16 %v4062, %v4046
    %v5183 = vpack.c.b16 %v4063, %v4047
    %v5184 = vpack.c.b16 %v4064, %v4048
    %v5185 = vpack.c.b16 %v4065, %v4049
    %v5186 = vpack.c.b16 %v4066, %v4050
    %v5187 = vpack.c.b16 %v4067, %v4051
    %v5188 = vpack.c.b16 %v4068, %v4052
    %v5189 = vpack.c.b16 %v4069, %v4053
    %v5190 = vpack.c.b16 %v4070, %v4054
    %v5191 = vpack.c.b16 %v4087, %v4071
    %v5192 = vpack.c.b16 %v4088, %v4072
    %v5193 = vpack.c.b16 %v4089, %v4073
    %v5194 = vpack.c.b16 %v4090, %v4074
    %v5195 = vpack.c.b16 %v4091, %v4075
    %v5196 = vpack.c.b16 %v4092, %v4076
    %v5197 = vpack.c.b16 %v4093, %v4077
    %v5198 = vpack.c.b16 %v4094, %v4078
    %v5199 = vpack.c.b16 %v4095, %v4079
    %v5200 = vpack.c.b16 %v4096, %v4080
    %v5201 = vpack.c.b16 %v4097, %v4081
    %v5202 = vpack.c.b16 %v4098, %v4082
    %v5203 = vpack.c.b16 %v4099, %v4083
    %v5204 = vpack.c.b16 %v4100, %v4084
    %v5205 = vpack.c.b16 %v4101, %v4085
    %v5206 = vpack.c.b16 %v4102, %v4086
    %v5207 = vpack.c.b16 %v4119, %v4103
    %v5208 = vpack.c.b16 %v4120, %v4104
    %v5209 = vpack.c.b16 %v4121, %v4105
    %v5210 = vpack.c.b16 %v4122, %v4106
    %v5211 = vpack.c.b16 %v4123, %v4107
    %v5212 = vpack.c.b16 %v4124, %v4108
    %v5213 = vpack.c.b16 %v4125, %v4109
    %v5214 = vpack.c.b16 %v4126, %v4110
    %v5215 = vpack.c.b16 %v4127, %v4111
    %v5216 = vpack.c.b16 %v4128, %v4112
    %v5217 = vpack.c.b16 %v4129, %v4113
    %v5218 = vpack.c.b16 %v4130, %v4114
    %v5219 = vpack.c.b16 %v4131, %v4115
    %v5220 = vpack.c.b16 %v4132, %v4116
    %v5221 = vpack.c.b16 %v4133, %v4117
    %v5222 = vpack.c.b16 %v4134, %v4118
    %v5223 = vpack.c.b16 %v4151, %v4135
    %v5224 = vpack.c.b16 %v4152, %v4136
    %v5225 = vpack.c.b16 %v4153, %v4137
    %v5226 = vpack.c.b16 %v4154, %v4138
    %v5227 = vpack.c.b16 %v4155, %v4139
    %v5228 = vpack.c.b16 %v4156, %v4140
    %v5229 = vpack.c.b16 %v4157, %v4141
    %v5230 = vpack.c.b16 %v4158, %v4142
    %v5231 = vpack.c.b16 %v4159, %v4143
    %v5232 = vpack.c.b16 %v4160, %v4144
    %v5233 = vpack.c.b16 %v4161, %v4145
    %v5234 = vpack.c.b16 %v4162, %v4146
    %v5235 = vpack.c.b16 %v4163, %v4147
    %v5236 = vpack.c.b16 %v4164, %v4148
    %v5237 = vpack.c.b16 %v4165, %v4149
    %v5238 = vpack.c.b16 %v4166, %v4150
    %v5239 = vpack.c.b16 %v4183, %v4167
    %v5240 = vpack.c.b16 %v4184, %v4168
    %v5241 = vpack.c.b16 %v4185, %v4169
    %v5242 = vpack.c.b16 %v4186, %v4170
    %v5243 = vpack.c.b16 %v4187, %v4171
    %v5244 = vpack.c.b16 %v4188, %v4172
    %v5245 = vpack.c.b16 %v4189, %v4173
    %v5246 = vpack.c.b16 %v4190, %v4174
    %v5247 = vpack.c.b16 %v4191, %v4175
    %v5248 = vpack.c.b16 %v4192, %v4176
    %v5249 = vpack.c.b16 %v4193, %v4177
    %v5250 = vpack.c.b16 %v4194, %v4178
    %v5251 = vpack.c.b16 %v4195, %v4179
    %v5252 = vpack.c.b16 %v4196, %v4180
    %v5253 = vpack.c.b16 %v4197, %v4181
    %v5254 = vpack.c.b16 %v4198, %v4182
    %v5255 = vpack.c.b16 %v4215, %v4199
    %v5256 = vpack.c.b16 %v4216, %v4200
    %v5257 = vpack.c.b16 %v4217, %v4201
    %v5258 = vpack.c.b16 %v4218, %v4202
    %v5259 = vpack.c.b16 %v4219, %v4203
    %v5260 = vpack.c.b16 %v4220, %v4204
    %v5261 = vpack.c.b16 %v4221, %v4205
    %v5262 = vpack.c.b16 %v4222, %v4206
    %v5263 = vpack.c.b16 %v4223, %v4207
    %v5264 = vpack.c.b16 %v4224, %v4208
    %v5265 = vpack.c.b16 %v4225, %v4209
    %v5266 = vpack.c.b16 %v4226, %v4210
    %v5267 = vpack.c.b16 %v4227, %v4211
    %v5268 = vpack.c.b16 %v4228, %v4212
    %v5269 = vpack.c.b16 %v4229, %v4213
    %v5270 = vpack.c.b16 %v4230, %v4214
    %v5271 = vpack.c.b16 %v4247, %v4231
    %v5272 = vpack.c.b16 %v4248, %v4232
    %v5273 = vpack.c.b16 %v4249, %v4233
    %v5274 = vpack.c.b16 %v4250, %v4234
    %v5275 = vpack.c.b16 %v4251, %v4235
    %v5276 = vpack.c.b16 %v4252, %v4236
    %v5277 = vpack.c.b16 %v4253, %v4237
    %v5278 = vpack.c.b16 %v4254, %v4238
    %v5279 = vpack.c.b16 %v4255, %v4239
    %v5280 = vpack.c.b16 %v4256, %v4240
    %v5281 = vpack.c.b16 %v4257, %v4241
    %v5282 = vpack.c.b16 %v4258, %v4242
    %v5283 = vpack.c.b16 %v4259, %v4243
    %v5284 = vpack.c.b16 %v4260, %v4244
    %v5285 = vpack.c.b16 %v4261, %v4245
    %v5286 = vpack.c.b16 %v4262, %v4246
    %6311 = vmatpush.bf16.msra.mxu0 %v4375
    %6312 = vmatpush.bf16.msra.mxu0 %v4359
    %6313 = vmatpush.bf16.msra.mxu0 %v4343
    %6314 = vmatpush.bf16.msra.mxu0 %v4327
    %6315 = vmatpush.bf16.msra.mxu0 %v4311
    %6316 = vmatpush.bf16.msra.mxu0 %v4295
    %6317 = vmatpush.bf16.msra.mxu0 %v4279
    %6318 = vmatpush.bf16.msra.mxu0 %v4263
    %6319 = vmatmul.bf16.gmra.mxu0 %v1175
    %v6320 = vpop.f32.mrf.mxu0
    %v6321 = vadd.f32 %v1131, %v6320
    %v6322 = vpop.f32.mrf.mxu0
    %6323 = vdwg.mxu0
    %6324 = vmatpush.bf16.msra.mxu0 %v4503
    %6325 = vmatpush.bf16.msra.mxu0 %v4487
    %6326 = vmatpush.bf16.msra.mxu0 %v4471
    %6327 = vmatpush.bf16.msra.mxu0 %v4455
    %6328 = vmatpush.bf16.msra.mxu0 %v4439
    %6329 = vmatpush.bf16.msra.mxu0 %v4423
    %6330 = vmatpush.bf16.msra.mxu0 %v4407
    %6331 = vmatpush.bf16.msra.mxu0 %v4391
    %6332 = vmatmul.bf16.gmra.mxu0 %v1176
    %v6333 = vpop.f32.mrf.mxu0
    %v6334 = vadd.f32 %v6321, %v6333
    %v6335 = vpop.f32.mrf.mxu0
    %6336 = vdwg.mxu0
    %6337 = vmatpush.bf16.msra.mxu0 %v4631
    %6338 = vmatpush.bf16.msra.mxu0 %v4615
    %6339 = vmatpush.bf16.msra.mxu0 %v4599
    %6340 = vmatpush.bf16.msra.mxu0 %v4583
    %6341 = vmatpush.bf16.msra.mxu0 %v4567
    %6342 = vmatpush.bf16.msra.mxu0 %v4551
    %6343 = vmatpush.bf16.msra.mxu0 %v4535
    %6344 = vmatpush.bf16.msra.mxu0 %v4519
    %6345 = vmatmul.bf16.gmra.mxu0 %v1177
    %v6346 = vpop.f32.mrf.mxu0
    %v6347 = vadd.f32 %v6334, %v6346
    %v6348 = vpop.f32.mrf.mxu0
    %6349 = vdwg.mxu0
    %6350 = vmatpush.bf16.msra.mxu0 %v4759
    %6351 = vmatpush.bf16.msra.mxu0 %v4743
    %6352 = vmatpush.bf16.msra.mxu0 %v4727
    %6353 = vmatpush.bf16.msra.mxu0 %v4711
    %6354 = vmatpush.bf16.msra.mxu0 %v4695
    %6355 = vmatpush.bf16.msra.mxu0 %v4679
    %6356 = vmatpush.bf16.msra.mxu0 %v4663
    %6357 = vmatpush.bf16.msra.mxu0 %v4647
    %6358 = vmatmul.bf16.gmra.mxu0 %v1178
    %v6359 = vpop.f32.mrf.mxu0
    %v6360 = vadd.f32 %v6347, %v6359
    %v6361 = vpop.f32.mrf.mxu0
    %6362 = vdwg.mxu0
    %6363 = vmatpush.bf16.msra.mxu0 %v4887
    %6364 = vmatpush.bf16.msra.mxu0 %v4871
    %6365 = vmatpush.bf16.msra.mxu0 %v4855
    %6366 = vmatpush.bf16.msra.mxu0 %v4839
    %6367 = vmatpush.bf16.msra.mxu0 %v4823
    %6368 = vmatpush.bf16.msra.mxu0 %v4807
    %6369 = vmatpush.bf16.msra.mxu0 %v4791
    %6370 = vmatpush.bf16.msra.mxu0 %v4775
    %6371 = vmatmul.bf16.gmra.mxu0 %v1179
    %v6372 = vpop.f32.mrf.mxu0
    %v6373 = vadd.f32 %v6360, %v6372
    %v6374 = vpop.f32.mrf.mxu0
    %6375 = vdwg.mxu0
    %6376 = vmatpush.bf16.msra.mxu0 %v5015
    %6377 = vmatpush.bf16.msra.mxu0 %v4999
    %6378 = vmatpush.bf16.msra.mxu0 %v4983
    %6379 = vmatpush.bf16.msra.mxu0 %v4967
    %6380 = vmatpush.bf16.msra.mxu0 %v4951
    %6381 = vmatpush.bf16.msra.mxu0 %v4935
    %6382 = vmatpush.bf16.msra.mxu0 %v4919
    %6383 = vmatpush.bf16.msra.mxu0 %v4903
    %6384 = vmatmul.bf16.gmra.mxu0 %v1180
    %v6385 = vpop.f32.mrf.mxu0
    %v6386 = vadd.f32 %v6373, %v6385
    %v6387 = vpop.f32.mrf.mxu0
    %6388 = vdwg.mxu0
    %6389 = vmatpush.bf16.msra.mxu0 %v5143
    %6390 = vmatpush.bf16.msra.mxu0 %v5127
    %6391 = vmatpush.bf16.msra.mxu0 %v5111
    %6392 = vmatpush.bf16.msra.mxu0 %v5095
    %6393 = vmatpush.bf16.msra.mxu0 %v5079
    %6394 = vmatpush.bf16.msra.mxu0 %v5063
    %6395 = vmatpush.bf16.msra.mxu0 %v5047
    %6396 = vmatpush.bf16.msra.mxu0 %v5031
    %6397 = vmatmul.bf16.gmra.mxu0 %v1181
    %v6398 = vpop.f32.mrf.mxu0
    %v6399 = vadd.f32 %v6386, %v6398
    %v6400 = vpop.f32.mrf.mxu0
    %6401 = vdwg.mxu0
    %6402 = vmatpush.bf16.msra.mxu0 %v5271
    %6403 = vmatpush.bf16.msra.mxu0 %v5255
    %6404 = vmatpush.bf16.msra.mxu0 %v5239
    %6405 = vmatpush.bf16.msra.mxu0 %v5223
    %6406 = vmatpush.bf16.msra.mxu0 %v5207
    %6407 = vmatpush.bf16.msra.mxu0 %v5191
    %6408 = vmatpush.bf16.msra.mxu0 %v5175
    %6409 = vmatpush.bf16.msra.mxu0 %v5159
    %6410 = vmatmul.bf16.gmra.mxu0 %v1182
    %v6411 = vpop.f32.mrf.mxu0
    %v6412 = vadd.f32 %v6399, %v6411
    %v6413 = vpop.f32.mrf.mxu0
    %6414 = vdwg.mxu0
    %6415 = vmatpush.bf16.msra.mxu0 %v4376
    %6416 = vmatpush.bf16.msra.mxu0 %v4360
    %6417 = vmatpush.bf16.msra.mxu0 %v4344
    %6418 = vmatpush.bf16.msra.mxu0 %v4328
    %6419 = vmatpush.bf16.msra.mxu0 %v4312
    %6420 = vmatpush.bf16.msra.mxu0 %v4296
    %6421 = vmatpush.bf16.msra.mxu0 %v4280
    %6422 = vmatpush.bf16.msra.mxu0 %v4264
    %6423 = vmatmul.bf16.gmra.mxu0 %v1175
    %v6424 = vpop.f32.mrf.mxu0
    %v6425 = vadd.f32 %v1132, %v6424
    %v6426 = vpop.f32.mrf.mxu0
    %6427 = vdwg.mxu0
    %6428 = vmatpush.bf16.msra.mxu0 %v4504
    %6429 = vmatpush.bf16.msra.mxu0 %v4488
    %6430 = vmatpush.bf16.msra.mxu0 %v4472
    %6431 = vmatpush.bf16.msra.mxu0 %v4456
    %6432 = vmatpush.bf16.msra.mxu0 %v4440
    %6433 = vmatpush.bf16.msra.mxu0 %v4424
    %6434 = vmatpush.bf16.msra.mxu0 %v4408
    %6435 = vmatpush.bf16.msra.mxu0 %v4392
    %6436 = vmatmul.bf16.gmra.mxu0 %v1176
    %v6437 = vpop.f32.mrf.mxu0
    %v6438 = vadd.f32 %v6425, %v6437
    %v6439 = vpop.f32.mrf.mxu0
    %6440 = vdwg.mxu0
    %6441 = vmatpush.bf16.msra.mxu0 %v4632
    %6442 = vmatpush.bf16.msra.mxu0 %v4616
    %6443 = vmatpush.bf16.msra.mxu0 %v4600
    %6444 = vmatpush.bf16.msra.mxu0 %v4584
    %6445 = vmatpush.bf16.msra.mxu0 %v4568
    %6446 = vmatpush.bf16.msra.mxu0 %v4552
    %6447 = vmatpush.bf16.msra.mxu0 %v4536
    %6448 = vmatpush.bf16.msra.mxu0 %v4520
    %6449 = vmatmul.bf16.gmra.mxu0 %v1177
    %v6450 = vpop.f32.mrf.mxu0
    %v6451 = vadd.f32 %v6438, %v6450
    %v6452 = vpop.f32.mrf.mxu0
    %6453 = vdwg.mxu0
    %6454 = vmatpush.bf16.msra.mxu0 %v4760
    %6455 = vmatpush.bf16.msra.mxu0 %v4744
    %6456 = vmatpush.bf16.msra.mxu0 %v4728
    %6457 = vmatpush.bf16.msra.mxu0 %v4712
    %6458 = vmatpush.bf16.msra.mxu0 %v4696
    %6459 = vmatpush.bf16.msra.mxu0 %v4680
    %6460 = vmatpush.bf16.msra.mxu0 %v4664
    %6461 = vmatpush.bf16.msra.mxu0 %v4648
    %6462 = vmatmul.bf16.gmra.mxu0 %v1178
    %v6463 = vpop.f32.mrf.mxu0
    %v6464 = vadd.f32 %v6451, %v6463
    %v6465 = vpop.f32.mrf.mxu0
    %6466 = vdwg.mxu0
    %6467 = vmatpush.bf16.msra.mxu0 %v4888
    %6468 = vmatpush.bf16.msra.mxu0 %v4872
    %6469 = vmatpush.bf16.msra.mxu0 %v4856
    %6470 = vmatpush.bf16.msra.mxu0 %v4840
    %6471 = vmatpush.bf16.msra.mxu0 %v4824
    %6472 = vmatpush.bf16.msra.mxu0 %v4808
    %6473 = vmatpush.bf16.msra.mxu0 %v4792
    %6474 = vmatpush.bf16.msra.mxu0 %v4776
    %6475 = vmatmul.bf16.gmra.mxu0 %v1179
    %v6476 = vpop.f32.mrf.mxu0
    %v6477 = vadd.f32 %v6464, %v6476
    %v6478 = vpop.f32.mrf.mxu0
    %6479 = vdwg.mxu0
    %6480 = vmatpush.bf16.msra.mxu0 %v5016
    %6481 = vmatpush.bf16.msra.mxu0 %v5000
    %6482 = vmatpush.bf16.msra.mxu0 %v4984
    %6483 = vmatpush.bf16.msra.mxu0 %v4968
    %6484 = vmatpush.bf16.msra.mxu0 %v4952
    %6485 = vmatpush.bf16.msra.mxu0 %v4936
    %6486 = vmatpush.bf16.msra.mxu0 %v4920
    %6487 = vmatpush.bf16.msra.mxu0 %v4904
    %6488 = vmatmul.bf16.gmra.mxu0 %v1180
    %v6489 = vpop.f32.mrf.mxu0
    %v6490 = vadd.f32 %v6477, %v6489
    %v6491 = vpop.f32.mrf.mxu0
    %6492 = vdwg.mxu0
    %6493 = vmatpush.bf16.msra.mxu0 %v5144
    %6494 = vmatpush.bf16.msra.mxu0 %v5128
    %6495 = vmatpush.bf16.msra.mxu0 %v5112
    %6496 = vmatpush.bf16.msra.mxu0 %v5096
    %6497 = vmatpush.bf16.msra.mxu0 %v5080
    %6498 = vmatpush.bf16.msra.mxu0 %v5064
    %6499 = vmatpush.bf16.msra.mxu0 %v5048
    %6500 = vmatpush.bf16.msra.mxu0 %v5032
    %6501 = vmatmul.bf16.gmra.mxu0 %v1181
    %v6502 = vpop.f32.mrf.mxu0
    %v6503 = vadd.f32 %v6490, %v6502
    %v6504 = vpop.f32.mrf.mxu0
    %6505 = vdwg.mxu0
    %6506 = vmatpush.bf16.msra.mxu0 %v5272
    %6507 = vmatpush.bf16.msra.mxu0 %v5256
    %6508 = vmatpush.bf16.msra.mxu0 %v5240
    %6509 = vmatpush.bf16.msra.mxu0 %v5224
    %6510 = vmatpush.bf16.msra.mxu0 %v5208
    %6511 = vmatpush.bf16.msra.mxu0 %v5192
    %6512 = vmatpush.bf16.msra.mxu0 %v5176
    %6513 = vmatpush.bf16.msra.mxu0 %v5160
    %6514 = vmatmul.bf16.gmra.mxu0 %v1182
    %v6515 = vpop.f32.mrf.mxu0
    %v6516 = vadd.f32 %v6503, %v6515
    %v6517 = vpop.f32.mrf.mxu0
    %6518 = vdwg.mxu0
    %6519 = vmatpush.bf16.msra.mxu0 %v4377
    %6520 = vmatpush.bf16.msra.mxu0 %v4361
    %6521 = vmatpush.bf16.msra.mxu0 %v4345
    %6522 = vmatpush.bf16.msra.mxu0 %v4329
    %6523 = vmatpush.bf16.msra.mxu0 %v4313
    %6524 = vmatpush.bf16.msra.mxu0 %v4297
    %6525 = vmatpush.bf16.msra.mxu0 %v4281
    %6526 = vmatpush.bf16.msra.mxu0 %v4265
    %6527 = vmatmul.bf16.gmra.mxu0 %v1175
    %v6528 = vpop.f32.mrf.mxu0
    %v6529 = vadd.f32 %v1133, %v6528
    %v6530 = vpop.f32.mrf.mxu0
    %6531 = vdwg.mxu0
    %6532 = vmatpush.bf16.msra.mxu0 %v4505
    %6533 = vmatpush.bf16.msra.mxu0 %v4489
    %6534 = vmatpush.bf16.msra.mxu0 %v4473
    %6535 = vmatpush.bf16.msra.mxu0 %v4457
    %6536 = vmatpush.bf16.msra.mxu0 %v4441
    %6537 = vmatpush.bf16.msra.mxu0 %v4425
    %6538 = vmatpush.bf16.msra.mxu0 %v4409
    %6539 = vmatpush.bf16.msra.mxu0 %v4393
    %6540 = vmatmul.bf16.gmra.mxu0 %v1176
    %v6541 = vpop.f32.mrf.mxu0
    %v6542 = vadd.f32 %v6529, %v6541
    %v6543 = vpop.f32.mrf.mxu0
    %6544 = vdwg.mxu0
    %6545 = vmatpush.bf16.msra.mxu0 %v4633
    %6546 = vmatpush.bf16.msra.mxu0 %v4617
    %6547 = vmatpush.bf16.msra.mxu0 %v4601
    %6548 = vmatpush.bf16.msra.mxu0 %v4585
    %6549 = vmatpush.bf16.msra.mxu0 %v4569
    %6550 = vmatpush.bf16.msra.mxu0 %v4553
    %6551 = vmatpush.bf16.msra.mxu0 %v4537
    %6552 = vmatpush.bf16.msra.mxu0 %v4521
    %6553 = vmatmul.bf16.gmra.mxu0 %v1177
    %v6554 = vpop.f32.mrf.mxu0
    %v6555 = vadd.f32 %v6542, %v6554
    %v6556 = vpop.f32.mrf.mxu0
    %6557 = vdwg.mxu0
    %6558 = vmatpush.bf16.msra.mxu0 %v4761
    %6559 = vmatpush.bf16.msra.mxu0 %v4745
    %6560 = vmatpush.bf16.msra.mxu0 %v4729
    %6561 = vmatpush.bf16.msra.mxu0 %v4713
    %6562 = vmatpush.bf16.msra.mxu0 %v4697
    %6563 = vmatpush.bf16.msra.mxu0 %v4681
    %6564 = vmatpush.bf16.msra.mxu0 %v4665
    %6565 = vmatpush.bf16.msra.mxu0 %v4649
    %6566 = vmatmul.bf16.gmra.mxu0 %v1178
    %v6567 = vpop.f32.mrf.mxu0
    %v6568 = vadd.f32 %v6555, %v6567
    %v6569 = vpop.f32.mrf.mxu0
    %6570 = vdwg.mxu0
    %6571 = vmatpush.bf16.msra.mxu0 %v4889
    %6572 = vmatpush.bf16.msra.mxu0 %v4873
    %6573 = vmatpush.bf16.msra.mxu0 %v4857
    %6574 = vmatpush.bf16.msra.mxu0 %v4841
    %6575 = vmatpush.bf16.msra.mxu0 %v4825
    %6576 = vmatpush.bf16.msra.mxu0 %v4809
    %6577 = vmatpush.bf16.msra.mxu0 %v4793
    %6578 = vmatpush.bf16.msra.mxu0 %v4777
    %6579 = vmatmul.bf16.gmra.mxu0 %v1179
    %v6580 = vpop.f32.mrf.mxu0
    %v6581 = vadd.f32 %v6568, %v6580
    %v6582 = vpop.f32.mrf.mxu0
    %6583 = vdwg.mxu0
    %6584 = vmatpush.bf16.msra.mxu0 %v5017
    %6585 = vmatpush.bf16.msra.mxu0 %v5001
    %6586 = vmatpush.bf16.msra.mxu0 %v4985
    %6587 = vmatpush.bf16.msra.mxu0 %v4969
    %6588 = vmatpush.bf16.msra.mxu0 %v4953
    %6589 = vmatpush.bf16.msra.mxu0 %v4937
    %6590 = vmatpush.bf16.msra.mxu0 %v4921
    %6591 = vmatpush.bf16.msra.mxu0 %v4905
    %6592 = vmatmul.bf16.gmra.mxu0 %v1180
    %v6593 = vpop.f32.mrf.mxu0
    %v6594 = vadd.f32 %v6581, %v6593
    %v6595 = vpop.f32.mrf.mxu0
    %6596 = vdwg.mxu0
    %6597 = vmatpush.bf16.msra.mxu0 %v5145
    %6598 = vmatpush.bf16.msra.mxu0 %v5129
    %6599 = vmatpush.bf16.msra.mxu0 %v5113
    %6600 = vmatpush.bf16.msra.mxu0 %v5097
    %6601 = vmatpush.bf16.msra.mxu0 %v5081
    %6602 = vmatpush.bf16.msra.mxu0 %v5065
    %6603 = vmatpush.bf16.msra.mxu0 %v5049
    %6604 = vmatpush.bf16.msra.mxu0 %v5033
    %6605 = vmatmul.bf16.gmra.mxu0 %v1181
    %v6606 = vpop.f32.mrf.mxu0
    %v6607 = vadd.f32 %v6594, %v6606
    %v6608 = vpop.f32.mrf.mxu0
    %6609 = vdwg.mxu0
    %6610 = vmatpush.bf16.msra.mxu0 %v5273
    %6611 = vmatpush.bf16.msra.mxu0 %v5257
    %6612 = vmatpush.bf16.msra.mxu0 %v5241
    %6613 = vmatpush.bf16.msra.mxu0 %v5225
    %6614 = vmatpush.bf16.msra.mxu0 %v5209
    %6615 = vmatpush.bf16.msra.mxu0 %v5193
    %6616 = vmatpush.bf16.msra.mxu0 %v5177
    %6617 = vmatpush.bf16.msra.mxu0 %v5161
    %6618 = vmatmul.bf16.gmra.mxu0 %v1182
    %v6619 = vpop.f32.mrf.mxu0
    %v6620 = vadd.f32 %v6607, %v6619
    %v6621 = vpop.f32.mrf.mxu0
    %6622 = vdwg.mxu0
    %6623 = vmatpush.bf16.msra.mxu0 %v4378
    %6624 = vmatpush.bf16.msra.mxu0 %v4362
    %6625 = vmatpush.bf16.msra.mxu0 %v4346
    %6626 = vmatpush.bf16.msra.mxu0 %v4330
    %6627 = vmatpush.bf16.msra.mxu0 %v4314
    %6628 = vmatpush.bf16.msra.mxu0 %v4298
    %6629 = vmatpush.bf16.msra.mxu0 %v4282
    %6630 = vmatpush.bf16.msra.mxu0 %v4266
    %6631 = vmatmul.bf16.gmra.mxu0 %v1175
    %v6632 = vpop.f32.mrf.mxu0
    %v6633 = vadd.f32 %v1134, %v6632
    %v6634 = vpop.f32.mrf.mxu0
    %6635 = vdwg.mxu0
    %6636 = vmatpush.bf16.msra.mxu0 %v4506
    %6637 = vmatpush.bf16.msra.mxu0 %v4490
    %6638 = vmatpush.bf16.msra.mxu0 %v4474
    %6639 = vmatpush.bf16.msra.mxu0 %v4458
    %6640 = vmatpush.bf16.msra.mxu0 %v4442
    %6641 = vmatpush.bf16.msra.mxu0 %v4426
    %6642 = vmatpush.bf16.msra.mxu0 %v4410
    %6643 = vmatpush.bf16.msra.mxu0 %v4394
    %6644 = vmatmul.bf16.gmra.mxu0 %v1176
    %v6645 = vpop.f32.mrf.mxu0
    %v6646 = vadd.f32 %v6633, %v6645
    %v6647 = vpop.f32.mrf.mxu0
    %6648 = vdwg.mxu0
    %6649 = vmatpush.bf16.msra.mxu0 %v4634
    %6650 = vmatpush.bf16.msra.mxu0 %v4618
    %6651 = vmatpush.bf16.msra.mxu0 %v4602
    %6652 = vmatpush.bf16.msra.mxu0 %v4586
    %6653 = vmatpush.bf16.msra.mxu0 %v4570
    %6654 = vmatpush.bf16.msra.mxu0 %v4554
    %6655 = vmatpush.bf16.msra.mxu0 %v4538
    %6656 = vmatpush.bf16.msra.mxu0 %v4522
    %6657 = vmatmul.bf16.gmra.mxu0 %v1177
    %v6658 = vpop.f32.mrf.mxu0
    %v6659 = vadd.f32 %v6646, %v6658
    %v6660 = vpop.f32.mrf.mxu0
    %6661 = vdwg.mxu0
    %6662 = vmatpush.bf16.msra.mxu0 %v4762
    %6663 = vmatpush.bf16.msra.mxu0 %v4746
    %6664 = vmatpush.bf16.msra.mxu0 %v4730
    %6665 = vmatpush.bf16.msra.mxu0 %v4714
    %6666 = vmatpush.bf16.msra.mxu0 %v4698
    %6667 = vmatpush.bf16.msra.mxu0 %v4682
    %6668 = vmatpush.bf16.msra.mxu0 %v4666
    %6669 = vmatpush.bf16.msra.mxu0 %v4650
    %6670 = vmatmul.bf16.gmra.mxu0 %v1178
    %v6671 = vpop.f32.mrf.mxu0
    %v6672 = vadd.f32 %v6659, %v6671
    %v6673 = vpop.f32.mrf.mxu0
    %6674 = vdwg.mxu0
    %6675 = vmatpush.bf16.msra.mxu0 %v4890
    %6676 = vmatpush.bf16.msra.mxu0 %v4874
    %6677 = vmatpush.bf16.msra.mxu0 %v4858
    %6678 = vmatpush.bf16.msra.mxu0 %v4842
    %6679 = vmatpush.bf16.msra.mxu0 %v4826
    %6680 = vmatpush.bf16.msra.mxu0 %v4810
    %6681 = vmatpush.bf16.msra.mxu0 %v4794
    %6682 = vmatpush.bf16.msra.mxu0 %v4778
    %6683 = vmatmul.bf16.gmra.mxu0 %v1179
    %v6684 = vpop.f32.mrf.mxu0
    %v6685 = vadd.f32 %v6672, %v6684
    %v6686 = vpop.f32.mrf.mxu0
    %6687 = vdwg.mxu0
    %6688 = vmatpush.bf16.msra.mxu0 %v5018
    %6689 = vmatpush.bf16.msra.mxu0 %v5002
    %6690 = vmatpush.bf16.msra.mxu0 %v4986
    %6691 = vmatpush.bf16.msra.mxu0 %v4970
    %6692 = vmatpush.bf16.msra.mxu0 %v4954
    %6693 = vmatpush.bf16.msra.mxu0 %v4938
    %6694 = vmatpush.bf16.msra.mxu0 %v4922
    %6695 = vmatpush.bf16.msra.mxu0 %v4906
    %6696 = vmatmul.bf16.gmra.mxu0 %v1180
    %v6697 = vpop.f32.mrf.mxu0
    %v6698 = vadd.f32 %v6685, %v6697
    %v6699 = vpop.f32.mrf.mxu0
    %6700 = vdwg.mxu0
    %6701 = vmatpush.bf16.msra.mxu0 %v5146
    %6702 = vmatpush.bf16.msra.mxu0 %v5130
    %6703 = vmatpush.bf16.msra.mxu0 %v5114
    %6704 = vmatpush.bf16.msra.mxu0 %v5098
    %6705 = vmatpush.bf16.msra.mxu0 %v5082
    %6706 = vmatpush.bf16.msra.mxu0 %v5066
    %6707 = vmatpush.bf16.msra.mxu0 %v5050
    %6708 = vmatpush.bf16.msra.mxu0 %v5034
    %6709 = vmatmul.bf16.gmra.mxu0 %v1181
    %v6710 = vpop.f32.mrf.mxu0
    %v6711 = vadd.f32 %v6698, %v6710
    %v6712 = vpop.f32.mrf.mxu0
    %6713 = vdwg.mxu0
    %6714 = vmatpush.bf16.msra.mxu0 %v5274
    %6715 = vmatpush.bf16.msra.mxu0 %v5258
    %6716 = vmatpush.bf16.msra.mxu0 %v5242
    %6717 = vmatpush.bf16.msra.mxu0 %v5226
    %6718 = vmatpush.bf16.msra.mxu0 %v5210
    %6719 = vmatpush.bf16.msra.mxu0 %v5194
    %6720 = vmatpush.bf16.msra.mxu0 %v5178
    %6721 = vmatpush.bf16.msra.mxu0 %v5162
    %6722 = vmatmul.bf16.gmra.mxu0 %v1182
    %v6723 = vpop.f32.mrf.mxu0
    %v6724 = vadd.f32 %v6711, %v6723
    %v6725 = vpop.f32.mrf.mxu0
    %6726 = vdwg.mxu0
    %6727 = vmatpush.bf16.msra.mxu0 %v4379
    %6728 = vmatpush.bf16.msra.mxu0 %v4363
    %6729 = vmatpush.bf16.msra.mxu0 %v4347
    %6730 = vmatpush.bf16.msra.mxu0 %v4331
    %6731 = vmatpush.bf16.msra.mxu0 %v4315
    %6732 = vmatpush.bf16.msra.mxu0 %v4299
    %6733 = vmatpush.bf16.msra.mxu0 %v4283
    %6734 = vmatpush.bf16.msra.mxu0 %v4267
    %6735 = vmatmul.bf16.gmra.mxu0 %v1175
    %v6736 = vpop.f32.mrf.mxu0
    %v6737 = vadd.f32 %v1135, %v6736
    %v6738 = vpop.f32.mrf.mxu0
    %6739 = vdwg.mxu0
    %6740 = vmatpush.bf16.msra.mxu0 %v4507
    %6741 = vmatpush.bf16.msra.mxu0 %v4491
    %6742 = vmatpush.bf16.msra.mxu0 %v4475
    %6743 = vmatpush.bf16.msra.mxu0 %v4459
    %6744 = vmatpush.bf16.msra.mxu0 %v4443
    %6745 = vmatpush.bf16.msra.mxu0 %v4427
    %6746 = vmatpush.bf16.msra.mxu0 %v4411
    %6747 = vmatpush.bf16.msra.mxu0 %v4395
    %6748 = vmatmul.bf16.gmra.mxu0 %v1176
    %v6749 = vpop.f32.mrf.mxu0
    %v6750 = vadd.f32 %v6737, %v6749
    %v6751 = vpop.f32.mrf.mxu0
    %6752 = vdwg.mxu0
    %6753 = vmatpush.bf16.msra.mxu0 %v4635
    %6754 = vmatpush.bf16.msra.mxu0 %v4619
    %6755 = vmatpush.bf16.msra.mxu0 %v4603
    %6756 = vmatpush.bf16.msra.mxu0 %v4587
    %6757 = vmatpush.bf16.msra.mxu0 %v4571
    %6758 = vmatpush.bf16.msra.mxu0 %v4555
    %6759 = vmatpush.bf16.msra.mxu0 %v4539
    %6760 = vmatpush.bf16.msra.mxu0 %v4523
    %6761 = vmatmul.bf16.gmra.mxu0 %v1177
    %v6762 = vpop.f32.mrf.mxu0
    %v6763 = vadd.f32 %v6750, %v6762
    %v6764 = vpop.f32.mrf.mxu0
    %6765 = vdwg.mxu0
    %6766 = vmatpush.bf16.msra.mxu0 %v4763
    %6767 = vmatpush.bf16.msra.mxu0 %v4747
    %6768 = vmatpush.bf16.msra.mxu0 %v4731
    %6769 = vmatpush.bf16.msra.mxu0 %v4715
    %6770 = vmatpush.bf16.msra.mxu0 %v4699
    %6771 = vmatpush.bf16.msra.mxu0 %v4683
    %6772 = vmatpush.bf16.msra.mxu0 %v4667
    %6773 = vmatpush.bf16.msra.mxu0 %v4651
    %6774 = vmatmul.bf16.gmra.mxu0 %v1178
    %v6775 = vpop.f32.mrf.mxu0
    %v6776 = vadd.f32 %v6763, %v6775
    %v6777 = vpop.f32.mrf.mxu0
    %6778 = vdwg.mxu0
    %6779 = vmatpush.bf16.msra.mxu0 %v4891
    %6780 = vmatpush.bf16.msra.mxu0 %v4875
    %6781 = vmatpush.bf16.msra.mxu0 %v4859
    %6782 = vmatpush.bf16.msra.mxu0 %v4843
    %6783 = vmatpush.bf16.msra.mxu0 %v4827
    %6784 = vmatpush.bf16.msra.mxu0 %v4811
    %6785 = vmatpush.bf16.msra.mxu0 %v4795
    %6786 = vmatpush.bf16.msra.mxu0 %v4779
    %6787 = vmatmul.bf16.gmra.mxu0 %v1179
    %v6788 = vpop.f32.mrf.mxu0
    %v6789 = vadd.f32 %v6776, %v6788
    %v6790 = vpop.f32.mrf.mxu0
    %6791 = vdwg.mxu0
    %6792 = vmatpush.bf16.msra.mxu0 %v5019
    %6793 = vmatpush.bf16.msra.mxu0 %v5003
    %6794 = vmatpush.bf16.msra.mxu0 %v4987
    %6795 = vmatpush.bf16.msra.mxu0 %v4971
    %6796 = vmatpush.bf16.msra.mxu0 %v4955
    %6797 = vmatpush.bf16.msra.mxu0 %v4939
    %6798 = vmatpush.bf16.msra.mxu0 %v4923
    %6799 = vmatpush.bf16.msra.mxu0 %v4907
    %6800 = vmatmul.bf16.gmra.mxu0 %v1180
    %v6801 = vpop.f32.mrf.mxu0
    %v6802 = vadd.f32 %v6789, %v6801
    %v6803 = vpop.f32.mrf.mxu0
    %6804 = vdwg.mxu0
    %6805 = vmatpush.bf16.msra.mxu0 %v5147
    %6806 = vmatpush.bf16.msra.mxu0 %v5131
    %6807 = vmatpush.bf16.msra.mxu0 %v5115
    %6808 = vmatpush.bf16.msra.mxu0 %v5099
    %6809 = vmatpush.bf16.msra.mxu0 %v5083
    %6810 = vmatpush.bf16.msra.mxu0 %v5067
    %6811 = vmatpush.bf16.msra.mxu0 %v5051
    %6812 = vmatpush.bf16.msra.mxu0 %v5035
    %6813 = vmatmul.bf16.gmra.mxu0 %v1181
    %v6814 = vpop.f32.mrf.mxu0
    %v6815 = vadd.f32 %v6802, %v6814
    %v6816 = vpop.f32.mrf.mxu0
    %6817 = vdwg.mxu0
    %6818 = vmatpush.bf16.msra.mxu0 %v5275
    %6819 = vmatpush.bf16.msra.mxu0 %v5259
    %6820 = vmatpush.bf16.msra.mxu0 %v5243
    %6821 = vmatpush.bf16.msra.mxu0 %v5227
    %6822 = vmatpush.bf16.msra.mxu0 %v5211
    %6823 = vmatpush.bf16.msra.mxu0 %v5195
    %6824 = vmatpush.bf16.msra.mxu0 %v5179
    %6825 = vmatpush.bf16.msra.mxu0 %v5163
    %6826 = vmatmul.bf16.gmra.mxu0 %v1182
    %v6827 = vpop.f32.mrf.mxu0
    %v6828 = vadd.f32 %v6815, %v6827
    %v6829 = vpop.f32.mrf.mxu0
    %6830 = vdwg.mxu0
    %6831 = vmatpush.bf16.msra.mxu0 %v4380
    %6832 = vmatpush.bf16.msra.mxu0 %v4364
    %6833 = vmatpush.bf16.msra.mxu0 %v4348
    %6834 = vmatpush.bf16.msra.mxu0 %v4332
    %6835 = vmatpush.bf16.msra.mxu0 %v4316
    %6836 = vmatpush.bf16.msra.mxu0 %v4300
    %6837 = vmatpush.bf16.msra.mxu0 %v4284
    %6838 = vmatpush.bf16.msra.mxu0 %v4268
    %6839 = vmatmul.bf16.gmra.mxu0 %v1175
    %v6840 = vpop.f32.mrf.mxu0
    %v6841 = vadd.f32 %v1136, %v6840
    %v6842 = vpop.f32.mrf.mxu0
    %6843 = vdwg.mxu0
    %6844 = vmatpush.bf16.msra.mxu0 %v4508
    %6845 = vmatpush.bf16.msra.mxu0 %v4492
    %6846 = vmatpush.bf16.msra.mxu0 %v4476
    %6847 = vmatpush.bf16.msra.mxu0 %v4460
    %6848 = vmatpush.bf16.msra.mxu0 %v4444
    %6849 = vmatpush.bf16.msra.mxu0 %v4428
    %6850 = vmatpush.bf16.msra.mxu0 %v4412
    %6851 = vmatpush.bf16.msra.mxu0 %v4396
    %6852 = vmatmul.bf16.gmra.mxu0 %v1176
    %v6853 = vpop.f32.mrf.mxu0
    %v6854 = vadd.f32 %v6841, %v6853
    %v6855 = vpop.f32.mrf.mxu0
    %6856 = vdwg.mxu0
    %6857 = vmatpush.bf16.msra.mxu0 %v4636
    %6858 = vmatpush.bf16.msra.mxu0 %v4620
    %6859 = vmatpush.bf16.msra.mxu0 %v4604
    %6860 = vmatpush.bf16.msra.mxu0 %v4588
    %6861 = vmatpush.bf16.msra.mxu0 %v4572
    %6862 = vmatpush.bf16.msra.mxu0 %v4556
    %6863 = vmatpush.bf16.msra.mxu0 %v4540
    %6864 = vmatpush.bf16.msra.mxu0 %v4524
    %6865 = vmatmul.bf16.gmra.mxu0 %v1177
    %v6866 = vpop.f32.mrf.mxu0
    %v6867 = vadd.f32 %v6854, %v6866
    %v6868 = vpop.f32.mrf.mxu0
    %6869 = vdwg.mxu0
    %6870 = vmatpush.bf16.msra.mxu0 %v4764
    %6871 = vmatpush.bf16.msra.mxu0 %v4748
    %6872 = vmatpush.bf16.msra.mxu0 %v4732
    %6873 = vmatpush.bf16.msra.mxu0 %v4716
    %6874 = vmatpush.bf16.msra.mxu0 %v4700
    %6875 = vmatpush.bf16.msra.mxu0 %v4684
    %6876 = vmatpush.bf16.msra.mxu0 %v4668
    %6877 = vmatpush.bf16.msra.mxu0 %v4652
    %6878 = vmatmul.bf16.gmra.mxu0 %v1178
    %v6879 = vpop.f32.mrf.mxu0
    %v6880 = vadd.f32 %v6867, %v6879
    %v6881 = vpop.f32.mrf.mxu0
    %6882 = vdwg.mxu0
    %6883 = vmatpush.bf16.msra.mxu0 %v4892
    %6884 = vmatpush.bf16.msra.mxu0 %v4876
    %6885 = vmatpush.bf16.msra.mxu0 %v4860
    %6886 = vmatpush.bf16.msra.mxu0 %v4844
    %6887 = vmatpush.bf16.msra.mxu0 %v4828
    %6888 = vmatpush.bf16.msra.mxu0 %v4812
    %6889 = vmatpush.bf16.msra.mxu0 %v4796
    %6890 = vmatpush.bf16.msra.mxu0 %v4780
    %6891 = vmatmul.bf16.gmra.mxu0 %v1179
    %v6892 = vpop.f32.mrf.mxu0
    %v6893 = vadd.f32 %v6880, %v6892
    %v6894 = vpop.f32.mrf.mxu0
    %6895 = vdwg.mxu0
    %6896 = vmatpush.bf16.msra.mxu0 %v5020
    %6897 = vmatpush.bf16.msra.mxu0 %v5004
    %6898 = vmatpush.bf16.msra.mxu0 %v4988
    %6899 = vmatpush.bf16.msra.mxu0 %v4972
    %6900 = vmatpush.bf16.msra.mxu0 %v4956
    %6901 = vmatpush.bf16.msra.mxu0 %v4940
    %6902 = vmatpush.bf16.msra.mxu0 %v4924
    %6903 = vmatpush.bf16.msra.mxu0 %v4908
    %6904 = vmatmul.bf16.gmra.mxu0 %v1180
    %v6905 = vpop.f32.mrf.mxu0
    %v6906 = vadd.f32 %v6893, %v6905
    %v6907 = vpop.f32.mrf.mxu0
    %6908 = vdwg.mxu0
    %6909 = vmatpush.bf16.msra.mxu0 %v5148
    %6910 = vmatpush.bf16.msra.mxu0 %v5132
    %6911 = vmatpush.bf16.msra.mxu0 %v5116
    %6912 = vmatpush.bf16.msra.mxu0 %v5100
    %6913 = vmatpush.bf16.msra.mxu0 %v5084
    %6914 = vmatpush.bf16.msra.mxu0 %v5068
    %6915 = vmatpush.bf16.msra.mxu0 %v5052
    %6916 = vmatpush.bf16.msra.mxu0 %v5036
    %6917 = vmatmul.bf16.gmra.mxu0 %v1181
    %v6918 = vpop.f32.mrf.mxu0
    %v6919 = vadd.f32 %v6906, %v6918
    %v6920 = vpop.f32.mrf.mxu0
    %6921 = vdwg.mxu0
    %6922 = vmatpush.bf16.msra.mxu0 %v5276
    %6923 = vmatpush.bf16.msra.mxu0 %v5260
    %6924 = vmatpush.bf16.msra.mxu0 %v5244
    %6925 = vmatpush.bf16.msra.mxu0 %v5228
    %6926 = vmatpush.bf16.msra.mxu0 %v5212
    %6927 = vmatpush.bf16.msra.mxu0 %v5196
    %6928 = vmatpush.bf16.msra.mxu0 %v5180
    %6929 = vmatpush.bf16.msra.mxu0 %v5164
    %6930 = vmatmul.bf16.gmra.mxu0 %v1182
    %v6931 = vpop.f32.mrf.mxu0
    %v6932 = vadd.f32 %v6919, %v6931
    %v6933 = vpop.f32.mrf.mxu0
    %6934 = vdwg.mxu0
    %6935 = vmatpush.bf16.msra.mxu0 %v4381
    %6936 = vmatpush.bf16.msra.mxu0 %v4365
    %6937 = vmatpush.bf16.msra.mxu0 %v4349
    %6938 = vmatpush.bf16.msra.mxu0 %v4333
    %6939 = vmatpush.bf16.msra.mxu0 %v4317
    %6940 = vmatpush.bf16.msra.mxu0 %v4301
    %6941 = vmatpush.bf16.msra.mxu0 %v4285
    %6942 = vmatpush.bf16.msra.mxu0 %v4269
    %6943 = vmatmul.bf16.gmra.mxu0 %v1175
    %v6944 = vpop.f32.mrf.mxu0
    %v6945 = vadd.f32 %v1137, %v6944
    %v6946 = vpop.f32.mrf.mxu0
    %6947 = vdwg.mxu0
    %6948 = vmatpush.bf16.msra.mxu0 %v4509
    %6949 = vmatpush.bf16.msra.mxu0 %v4493
    %6950 = vmatpush.bf16.msra.mxu0 %v4477
    %6951 = vmatpush.bf16.msra.mxu0 %v4461
    %6952 = vmatpush.bf16.msra.mxu0 %v4445
    %6953 = vmatpush.bf16.msra.mxu0 %v4429
    %6954 = vmatpush.bf16.msra.mxu0 %v4413
    %6955 = vmatpush.bf16.msra.mxu0 %v4397
    %6956 = vmatmul.bf16.gmra.mxu0 %v1176
    %v6957 = vpop.f32.mrf.mxu0
    %v6958 = vadd.f32 %v6945, %v6957
    %v6959 = vpop.f32.mrf.mxu0
    %6960 = vdwg.mxu0
    %6961 = vmatpush.bf16.msra.mxu0 %v4637
    %6962 = vmatpush.bf16.msra.mxu0 %v4621
    %6963 = vmatpush.bf16.msra.mxu0 %v4605
    %6964 = vmatpush.bf16.msra.mxu0 %v4589
    %6965 = vmatpush.bf16.msra.mxu0 %v4573
    %6966 = vmatpush.bf16.msra.mxu0 %v4557
    %6967 = vmatpush.bf16.msra.mxu0 %v4541
    %6968 = vmatpush.bf16.msra.mxu0 %v4525
    %6969 = vmatmul.bf16.gmra.mxu0 %v1177
    %v6970 = vpop.f32.mrf.mxu0
    %v6971 = vadd.f32 %v6958, %v6970
    %v6972 = vpop.f32.mrf.mxu0
    %6973 = vdwg.mxu0
    %6974 = vmatpush.bf16.msra.mxu0 %v4765
    %6975 = vmatpush.bf16.msra.mxu0 %v4749
    %6976 = vmatpush.bf16.msra.mxu0 %v4733
    %6977 = vmatpush.bf16.msra.mxu0 %v4717
    %6978 = vmatpush.bf16.msra.mxu0 %v4701
    %6979 = vmatpush.bf16.msra.mxu0 %v4685
    %6980 = vmatpush.bf16.msra.mxu0 %v4669
    %6981 = vmatpush.bf16.msra.mxu0 %v4653
    %6982 = vmatmul.bf16.gmra.mxu0 %v1178
    %v6983 = vpop.f32.mrf.mxu0
    %v6984 = vadd.f32 %v6971, %v6983
    %v6985 = vpop.f32.mrf.mxu0
    %6986 = vdwg.mxu0
    %6987 = vmatpush.bf16.msra.mxu0 %v4893
    %6988 = vmatpush.bf16.msra.mxu0 %v4877
    %6989 = vmatpush.bf16.msra.mxu0 %v4861
    %6990 = vmatpush.bf16.msra.mxu0 %v4845
    %6991 = vmatpush.bf16.msra.mxu0 %v4829
    %6992 = vmatpush.bf16.msra.mxu0 %v4813
    %6993 = vmatpush.bf16.msra.mxu0 %v4797
    %6994 = vmatpush.bf16.msra.mxu0 %v4781
    %6995 = vmatmul.bf16.gmra.mxu0 %v1179
    %v6996 = vpop.f32.mrf.mxu0
    %v6997 = vadd.f32 %v6984, %v6996
    %v6998 = vpop.f32.mrf.mxu0
    %6999 = vdwg.mxu0
    %7000 = vmatpush.bf16.msra.mxu0 %v5021
    %7001 = vmatpush.bf16.msra.mxu0 %v5005
    %7002 = vmatpush.bf16.msra.mxu0 %v4989
    %7003 = vmatpush.bf16.msra.mxu0 %v4973
    %7004 = vmatpush.bf16.msra.mxu0 %v4957
    %7005 = vmatpush.bf16.msra.mxu0 %v4941
    %7006 = vmatpush.bf16.msra.mxu0 %v4925
    %7007 = vmatpush.bf16.msra.mxu0 %v4909
    %7008 = vmatmul.bf16.gmra.mxu0 %v1180
    %v7009 = vpop.f32.mrf.mxu0
    %v7010 = vadd.f32 %v6997, %v7009
    %v7011 = vpop.f32.mrf.mxu0
    %7012 = vdwg.mxu0
    %7013 = vmatpush.bf16.msra.mxu0 %v5149
    %7014 = vmatpush.bf16.msra.mxu0 %v5133
    %7015 = vmatpush.bf16.msra.mxu0 %v5117
    %7016 = vmatpush.bf16.msra.mxu0 %v5101
    %7017 = vmatpush.bf16.msra.mxu0 %v5085
    %7018 = vmatpush.bf16.msra.mxu0 %v5069
    %7019 = vmatpush.bf16.msra.mxu0 %v5053
    %7020 = vmatpush.bf16.msra.mxu0 %v5037
    %7021 = vmatmul.bf16.gmra.mxu0 %v1181
    %v7022 = vpop.f32.mrf.mxu0
    %v7023 = vadd.f32 %v7010, %v7022
    %v7024 = vpop.f32.mrf.mxu0
    %7025 = vdwg.mxu0
    %7026 = vmatpush.bf16.msra.mxu0 %v5277
    %7027 = vmatpush.bf16.msra.mxu0 %v5261
    %7028 = vmatpush.bf16.msra.mxu0 %v5245
    %7029 = vmatpush.bf16.msra.mxu0 %v5229
    %7030 = vmatpush.bf16.msra.mxu0 %v5213
    %7031 = vmatpush.bf16.msra.mxu0 %v5197
    %7032 = vmatpush.bf16.msra.mxu0 %v5181
    %7033 = vmatpush.bf16.msra.mxu0 %v5165
    %7034 = vmatmul.bf16.gmra.mxu0 %v1182
    %v7035 = vpop.f32.mrf.mxu0
    %v7036 = vadd.f32 %v7023, %v7035
    %v7037 = vpop.f32.mrf.mxu0
    %7038 = vdwg.mxu0
    %7039 = vmatpush.bf16.msra.mxu0 %v4382
    %7040 = vmatpush.bf16.msra.mxu0 %v4366
    %7041 = vmatpush.bf16.msra.mxu0 %v4350
    %7042 = vmatpush.bf16.msra.mxu0 %v4334
    %7043 = vmatpush.bf16.msra.mxu0 %v4318
    %7044 = vmatpush.bf16.msra.mxu0 %v4302
    %7045 = vmatpush.bf16.msra.mxu0 %v4286
    %7046 = vmatpush.bf16.msra.mxu0 %v4270
    %7047 = vmatmul.bf16.gmra.mxu0 %v1175
    %v7048 = vpop.f32.mrf.mxu0
    %v7049 = vadd.f32 %v1138, %v7048
    %v7050 = vpop.f32.mrf.mxu0
    %7051 = vdwg.mxu0
    %7052 = vmatpush.bf16.msra.mxu0 %v4510
    %7053 = vmatpush.bf16.msra.mxu0 %v4494
    %7054 = vmatpush.bf16.msra.mxu0 %v4478
    %7055 = vmatpush.bf16.msra.mxu0 %v4462
    %7056 = vmatpush.bf16.msra.mxu0 %v4446
    %7057 = vmatpush.bf16.msra.mxu0 %v4430
    %7058 = vmatpush.bf16.msra.mxu0 %v4414
    %7059 = vmatpush.bf16.msra.mxu0 %v4398
    %7060 = vmatmul.bf16.gmra.mxu0 %v1176
    %v7061 = vpop.f32.mrf.mxu0
    %v7062 = vadd.f32 %v7049, %v7061
    %v7063 = vpop.f32.mrf.mxu0
    %7064 = vdwg.mxu0
    %7065 = vmatpush.bf16.msra.mxu0 %v4638
    %7066 = vmatpush.bf16.msra.mxu0 %v4622
    %7067 = vmatpush.bf16.msra.mxu0 %v4606
    %7068 = vmatpush.bf16.msra.mxu0 %v4590
    %7069 = vmatpush.bf16.msra.mxu0 %v4574
    %7070 = vmatpush.bf16.msra.mxu0 %v4558
    %7071 = vmatpush.bf16.msra.mxu0 %v4542
    %7072 = vmatpush.bf16.msra.mxu0 %v4526
    %7073 = vmatmul.bf16.gmra.mxu0 %v1177
    %v7074 = vpop.f32.mrf.mxu0
    %v7075 = vadd.f32 %v7062, %v7074
    %v7076 = vpop.f32.mrf.mxu0
    %7077 = vdwg.mxu0
    %7078 = vmatpush.bf16.msra.mxu0 %v4766
    %7079 = vmatpush.bf16.msra.mxu0 %v4750
    %7080 = vmatpush.bf16.msra.mxu0 %v4734
    %7081 = vmatpush.bf16.msra.mxu0 %v4718
    %7082 = vmatpush.bf16.msra.mxu0 %v4702
    %7083 = vmatpush.bf16.msra.mxu0 %v4686
    %7084 = vmatpush.bf16.msra.mxu0 %v4670
    %7085 = vmatpush.bf16.msra.mxu0 %v4654
    %7086 = vmatmul.bf16.gmra.mxu0 %v1178
    %v7087 = vpop.f32.mrf.mxu0
    %v7088 = vadd.f32 %v7075, %v7087
    %v7089 = vpop.f32.mrf.mxu0
    %7090 = vdwg.mxu0
    %7091 = vmatpush.bf16.msra.mxu0 %v4894
    %7092 = vmatpush.bf16.msra.mxu0 %v4878
    %7093 = vmatpush.bf16.msra.mxu0 %v4862
    %7094 = vmatpush.bf16.msra.mxu0 %v4846
    %7095 = vmatpush.bf16.msra.mxu0 %v4830
    %7096 = vmatpush.bf16.msra.mxu0 %v4814
    %7097 = vmatpush.bf16.msra.mxu0 %v4798
    %7098 = vmatpush.bf16.msra.mxu0 %v4782
    %7099 = vmatmul.bf16.gmra.mxu0 %v1179
    %v7100 = vpop.f32.mrf.mxu0
    %v7101 = vadd.f32 %v7088, %v7100
    %v7102 = vpop.f32.mrf.mxu0
    %7103 = vdwg.mxu0
    %7104 = vmatpush.bf16.msra.mxu0 %v5022
    %7105 = vmatpush.bf16.msra.mxu0 %v5006
    %7106 = vmatpush.bf16.msra.mxu0 %v4990
    %7107 = vmatpush.bf16.msra.mxu0 %v4974
    %7108 = vmatpush.bf16.msra.mxu0 %v4958
    %7109 = vmatpush.bf16.msra.mxu0 %v4942
    %7110 = vmatpush.bf16.msra.mxu0 %v4926
    %7111 = vmatpush.bf16.msra.mxu0 %v4910
    %7112 = vmatmul.bf16.gmra.mxu0 %v1180
    %v7113 = vpop.f32.mrf.mxu0
    %v7114 = vadd.f32 %v7101, %v7113
    %v7115 = vpop.f32.mrf.mxu0
    %7116 = vdwg.mxu0
    %7117 = vmatpush.bf16.msra.mxu0 %v5150
    %7118 = vmatpush.bf16.msra.mxu0 %v5134
    %7119 = vmatpush.bf16.msra.mxu0 %v5118
    %7120 = vmatpush.bf16.msra.mxu0 %v5102
    %7121 = vmatpush.bf16.msra.mxu0 %v5086
    %7122 = vmatpush.bf16.msra.mxu0 %v5070
    %7123 = vmatpush.bf16.msra.mxu0 %v5054
    %7124 = vmatpush.bf16.msra.mxu0 %v5038
    %7125 = vmatmul.bf16.gmra.mxu0 %v1181
    %v7126 = vpop.f32.mrf.mxu0
    %v7127 = vadd.f32 %v7114, %v7126
    %v7128 = vpop.f32.mrf.mxu0
    %7129 = vdwg.mxu0
    %7130 = vmatpush.bf16.msra.mxu0 %v5278
    %7131 = vmatpush.bf16.msra.mxu0 %v5262
    %7132 = vmatpush.bf16.msra.mxu0 %v5246
    %7133 = vmatpush.bf16.msra.mxu0 %v5230
    %7134 = vmatpush.bf16.msra.mxu0 %v5214
    %7135 = vmatpush.bf16.msra.mxu0 %v5198
    %7136 = vmatpush.bf16.msra.mxu0 %v5182
    %7137 = vmatpush.bf16.msra.mxu0 %v5166
    %7138 = vmatmul.bf16.gmra.mxu0 %v1182
    %v7139 = vpop.f32.mrf.mxu0
    %v7140 = vadd.f32 %v7127, %v7139
    %v7141 = vpop.f32.mrf.mxu0
    %7142 = vdwg.mxu0
    %7143 = vmatpush.bf16.msra.mxu0 %v4383
    %7144 = vmatpush.bf16.msra.mxu0 %v4367
    %7145 = vmatpush.bf16.msra.mxu0 %v4351
    %7146 = vmatpush.bf16.msra.mxu0 %v4335
    %7147 = vmatpush.bf16.msra.mxu0 %v4319
    %7148 = vmatpush.bf16.msra.mxu0 %v4303
    %7149 = vmatpush.bf16.msra.mxu0 %v4287
    %7150 = vmatpush.bf16.msra.mxu0 %v4271
    %7151 = vmatmul.bf16.gmra.mxu0 %v1175
    %v7152 = vpop.f32.mrf.mxu0
    %v7153 = vadd.f32 %v1139, %v7152
    %v7154 = vpop.f32.mrf.mxu0
    %7155 = vdwg.mxu0
    %7156 = vmatpush.bf16.msra.mxu0 %v4511
    %7157 = vmatpush.bf16.msra.mxu0 %v4495
    %7158 = vmatpush.bf16.msra.mxu0 %v4479
    %7159 = vmatpush.bf16.msra.mxu0 %v4463
    %7160 = vmatpush.bf16.msra.mxu0 %v4447
    %7161 = vmatpush.bf16.msra.mxu0 %v4431
    %7162 = vmatpush.bf16.msra.mxu0 %v4415
    %7163 = vmatpush.bf16.msra.mxu0 %v4399
    %7164 = vmatmul.bf16.gmra.mxu0 %v1176
    %v7165 = vpop.f32.mrf.mxu0
    %v7166 = vadd.f32 %v7153, %v7165
    %v7167 = vpop.f32.mrf.mxu0
    %7168 = vdwg.mxu0
    %7169 = vmatpush.bf16.msra.mxu0 %v4639
    %7170 = vmatpush.bf16.msra.mxu0 %v4623
    %7171 = vmatpush.bf16.msra.mxu0 %v4607
    %7172 = vmatpush.bf16.msra.mxu0 %v4591
    %7173 = vmatpush.bf16.msra.mxu0 %v4575
    %7174 = vmatpush.bf16.msra.mxu0 %v4559
    %7175 = vmatpush.bf16.msra.mxu0 %v4543
    %7176 = vmatpush.bf16.msra.mxu0 %v4527
    %7177 = vmatmul.bf16.gmra.mxu0 %v1177
    %v7178 = vpop.f32.mrf.mxu0
    %v7179 = vadd.f32 %v7166, %v7178
    %v7180 = vpop.f32.mrf.mxu0
    %7181 = vdwg.mxu0
    %7182 = vmatpush.bf16.msra.mxu0 %v4767
    %7183 = vmatpush.bf16.msra.mxu0 %v4751
    %7184 = vmatpush.bf16.msra.mxu0 %v4735
    %7185 = vmatpush.bf16.msra.mxu0 %v4719
    %7186 = vmatpush.bf16.msra.mxu0 %v4703
    %7187 = vmatpush.bf16.msra.mxu0 %v4687
    %7188 = vmatpush.bf16.msra.mxu0 %v4671
    %7189 = vmatpush.bf16.msra.mxu0 %v4655
    %7190 = vmatmul.bf16.gmra.mxu0 %v1178
    %v7191 = vpop.f32.mrf.mxu0
    %v7192 = vadd.f32 %v7179, %v7191
    %v7193 = vpop.f32.mrf.mxu0
    %7194 = vdwg.mxu0
    %7195 = vmatpush.bf16.msra.mxu0 %v4895
    %7196 = vmatpush.bf16.msra.mxu0 %v4879
    %7197 = vmatpush.bf16.msra.mxu0 %v4863
    %7198 = vmatpush.bf16.msra.mxu0 %v4847
    %7199 = vmatpush.bf16.msra.mxu0 %v4831
    %7200 = vmatpush.bf16.msra.mxu0 %v4815
    %7201 = vmatpush.bf16.msra.mxu0 %v4799
    %7202 = vmatpush.bf16.msra.mxu0 %v4783
    %7203 = vmatmul.bf16.gmra.mxu0 %v1179
    %v7204 = vpop.f32.mrf.mxu0
    %v7205 = vadd.f32 %v7192, %v7204
    %v7206 = vpop.f32.mrf.mxu0
    %7207 = vdwg.mxu0
    %7208 = vmatpush.bf16.msra.mxu0 %v5023
    %7209 = vmatpush.bf16.msra.mxu0 %v5007
    %7210 = vmatpush.bf16.msra.mxu0 %v4991
    %7211 = vmatpush.bf16.msra.mxu0 %v4975
    %7212 = vmatpush.bf16.msra.mxu0 %v4959
    %7213 = vmatpush.bf16.msra.mxu0 %v4943
    %7214 = vmatpush.bf16.msra.mxu0 %v4927
    %7215 = vmatpush.bf16.msra.mxu0 %v4911
    %7216 = vmatmul.bf16.gmra.mxu0 %v1180
    %v7217 = vpop.f32.mrf.mxu0
    %v7218 = vadd.f32 %v7205, %v7217
    %v7219 = vpop.f32.mrf.mxu0
    %7220 = vdwg.mxu0
    %7221 = vmatpush.bf16.msra.mxu0 %v5151
    %7222 = vmatpush.bf16.msra.mxu0 %v5135
    %7223 = vmatpush.bf16.msra.mxu0 %v5119
    %7224 = vmatpush.bf16.msra.mxu0 %v5103
    %7225 = vmatpush.bf16.msra.mxu0 %v5087
    %7226 = vmatpush.bf16.msra.mxu0 %v5071
    %7227 = vmatpush.bf16.msra.mxu0 %v5055
    %7228 = vmatpush.bf16.msra.mxu0 %v5039
    %7229 = vmatmul.bf16.gmra.mxu0 %v1181
    %v7230 = vpop.f32.mrf.mxu0
    %v7231 = vadd.f32 %v7218, %v7230
    %v7232 = vpop.f32.mrf.mxu0
    %7233 = vdwg.mxu0
    %7234 = vmatpush.bf16.msra.mxu0 %v5279
    %7235 = vmatpush.bf16.msra.mxu0 %v5263
    %7236 = vmatpush.bf16.msra.mxu0 %v5247
    %7237 = vmatpush.bf16.msra.mxu0 %v5231
    %7238 = vmatpush.bf16.msra.mxu0 %v5215
    %7239 = vmatpush.bf16.msra.mxu0 %v5199
    %7240 = vmatpush.bf16.msra.mxu0 %v5183
    %7241 = vmatpush.bf16.msra.mxu0 %v5167
    %7242 = vmatmul.bf16.gmra.mxu0 %v1182
    %v7243 = vpop.f32.mrf.mxu0
    %v7244 = vadd.f32 %v7231, %v7243
    %v7245 = vpop.f32.mrf.mxu0
    %7246 = vdwg.mxu0
    %7247 = vmatpush.bf16.msra.mxu0 %v4384
    %7248 = vmatpush.bf16.msra.mxu0 %v4368
    %7249 = vmatpush.bf16.msra.mxu0 %v4352
    %7250 = vmatpush.bf16.msra.mxu0 %v4336
    %7251 = vmatpush.bf16.msra.mxu0 %v4320
    %7252 = vmatpush.bf16.msra.mxu0 %v4304
    %7253 = vmatpush.bf16.msra.mxu0 %v4288
    %7254 = vmatpush.bf16.msra.mxu0 %v4272
    %7255 = vmatmul.bf16.gmra.mxu0 %v1175
    %v7256 = vpop.f32.mrf.mxu0
    %v7257 = vadd.f32 %v1140, %v7256
    %v7258 = vpop.f32.mrf.mxu0
    %7259 = vdwg.mxu0
    %7260 = vmatpush.bf16.msra.mxu0 %v4512
    %7261 = vmatpush.bf16.msra.mxu0 %v4496
    %7262 = vmatpush.bf16.msra.mxu0 %v4480
    %7263 = vmatpush.bf16.msra.mxu0 %v4464
    %7264 = vmatpush.bf16.msra.mxu0 %v4448
    %7265 = vmatpush.bf16.msra.mxu0 %v4432
    %7266 = vmatpush.bf16.msra.mxu0 %v4416
    %7267 = vmatpush.bf16.msra.mxu0 %v4400
    %7268 = vmatmul.bf16.gmra.mxu0 %v1176
    %v7269 = vpop.f32.mrf.mxu0
    %v7270 = vadd.f32 %v7257, %v7269
    %v7271 = vpop.f32.mrf.mxu0
    %7272 = vdwg.mxu0
    %7273 = vmatpush.bf16.msra.mxu0 %v4640
    %7274 = vmatpush.bf16.msra.mxu0 %v4624
    %7275 = vmatpush.bf16.msra.mxu0 %v4608
    %7276 = vmatpush.bf16.msra.mxu0 %v4592
    %7277 = vmatpush.bf16.msra.mxu0 %v4576
    %7278 = vmatpush.bf16.msra.mxu0 %v4560
    %7279 = vmatpush.bf16.msra.mxu0 %v4544
    %7280 = vmatpush.bf16.msra.mxu0 %v4528
    %7281 = vmatmul.bf16.gmra.mxu0 %v1177
    %v7282 = vpop.f32.mrf.mxu0
    %v7283 = vadd.f32 %v7270, %v7282
    %v7284 = vpop.f32.mrf.mxu0
    %7285 = vdwg.mxu0
    %7286 = vmatpush.bf16.msra.mxu0 %v4768
    %7287 = vmatpush.bf16.msra.mxu0 %v4752
    %7288 = vmatpush.bf16.msra.mxu0 %v4736
    %7289 = vmatpush.bf16.msra.mxu0 %v4720
    %7290 = vmatpush.bf16.msra.mxu0 %v4704
    %7291 = vmatpush.bf16.msra.mxu0 %v4688
    %7292 = vmatpush.bf16.msra.mxu0 %v4672
    %7293 = vmatpush.bf16.msra.mxu0 %v4656
    %7294 = vmatmul.bf16.gmra.mxu0 %v1178
    %v7295 = vpop.f32.mrf.mxu0
    %v7296 = vadd.f32 %v7283, %v7295
    %v7297 = vpop.f32.mrf.mxu0
    %7298 = vdwg.mxu0
    %7299 = vmatpush.bf16.msra.mxu0 %v4896
    %7300 = vmatpush.bf16.msra.mxu0 %v4880
    %7301 = vmatpush.bf16.msra.mxu0 %v4864
    %7302 = vmatpush.bf16.msra.mxu0 %v4848
    %7303 = vmatpush.bf16.msra.mxu0 %v4832
    %7304 = vmatpush.bf16.msra.mxu0 %v4816
    %7305 = vmatpush.bf16.msra.mxu0 %v4800
    %7306 = vmatpush.bf16.msra.mxu0 %v4784
    %7307 = vmatmul.bf16.gmra.mxu0 %v1179
    %v7308 = vpop.f32.mrf.mxu0
    %v7309 = vadd.f32 %v7296, %v7308
    %v7310 = vpop.f32.mrf.mxu0
    %7311 = vdwg.mxu0
    %7312 = vmatpush.bf16.msra.mxu0 %v5024
    %7313 = vmatpush.bf16.msra.mxu0 %v5008
    %7314 = vmatpush.bf16.msra.mxu0 %v4992
    %7315 = vmatpush.bf16.msra.mxu0 %v4976
    %7316 = vmatpush.bf16.msra.mxu0 %v4960
    %7317 = vmatpush.bf16.msra.mxu0 %v4944
    %7318 = vmatpush.bf16.msra.mxu0 %v4928
    %7319 = vmatpush.bf16.msra.mxu0 %v4912
    %7320 = vmatmul.bf16.gmra.mxu0 %v1180
    %v7321 = vpop.f32.mrf.mxu0
    %v7322 = vadd.f32 %v7309, %v7321
    %v7323 = vpop.f32.mrf.mxu0
    %7324 = vdwg.mxu0
    %7325 = vmatpush.bf16.msra.mxu0 %v5152
    %7326 = vmatpush.bf16.msra.mxu0 %v5136
    %7327 = vmatpush.bf16.msra.mxu0 %v5120
    %7328 = vmatpush.bf16.msra.mxu0 %v5104
    %7329 = vmatpush.bf16.msra.mxu0 %v5088
    %7330 = vmatpush.bf16.msra.mxu0 %v5072
    %7331 = vmatpush.bf16.msra.mxu0 %v5056
    %7332 = vmatpush.bf16.msra.mxu0 %v5040
    %7333 = vmatmul.bf16.gmra.mxu0 %v1181
    %v7334 = vpop.f32.mrf.mxu0
    %v7335 = vadd.f32 %v7322, %v7334
    %v7336 = vpop.f32.mrf.mxu0
    %7337 = vdwg.mxu0
    %7338 = vmatpush.bf16.msra.mxu0 %v5280
    %7339 = vmatpush.bf16.msra.mxu0 %v5264
    %7340 = vmatpush.bf16.msra.mxu0 %v5248
    %7341 = vmatpush.bf16.msra.mxu0 %v5232
    %7342 = vmatpush.bf16.msra.mxu0 %v5216
    %7343 = vmatpush.bf16.msra.mxu0 %v5200
    %7344 = vmatpush.bf16.msra.mxu0 %v5184
    %7345 = vmatpush.bf16.msra.mxu0 %v5168
    %7346 = vmatmul.bf16.gmra.mxu0 %v1182
    %v7347 = vpop.f32.mrf.mxu0
    %v7348 = vadd.f32 %v7335, %v7347
    %v7349 = vpop.f32.mrf.mxu0
    %7350 = vdwg.mxu0
    %7351 = vmatpush.bf16.msra.mxu0 %v4385
    %7352 = vmatpush.bf16.msra.mxu0 %v4369
    %7353 = vmatpush.bf16.msra.mxu0 %v4353
    %7354 = vmatpush.bf16.msra.mxu0 %v4337
    %7355 = vmatpush.bf16.msra.mxu0 %v4321
    %7356 = vmatpush.bf16.msra.mxu0 %v4305
    %7357 = vmatpush.bf16.msra.mxu0 %v4289
    %7358 = vmatpush.bf16.msra.mxu0 %v4273
    %7359 = vmatmul.bf16.gmra.mxu0 %v1175
    %v7360 = vpop.f32.mrf.mxu0
    %v7361 = vadd.f32 %v1141, %v7360
    %v7362 = vpop.f32.mrf.mxu0
    %7363 = vdwg.mxu0
    %7364 = vmatpush.bf16.msra.mxu0 %v4513
    %7365 = vmatpush.bf16.msra.mxu0 %v4497
    %7366 = vmatpush.bf16.msra.mxu0 %v4481
    %7367 = vmatpush.bf16.msra.mxu0 %v4465
    %7368 = vmatpush.bf16.msra.mxu0 %v4449
    %7369 = vmatpush.bf16.msra.mxu0 %v4433
    %7370 = vmatpush.bf16.msra.mxu0 %v4417
    %7371 = vmatpush.bf16.msra.mxu0 %v4401
    %7372 = vmatmul.bf16.gmra.mxu0 %v1176
    %v7373 = vpop.f32.mrf.mxu0
    %v7374 = vadd.f32 %v7361, %v7373
    %v7375 = vpop.f32.mrf.mxu0
    %7376 = vdwg.mxu0
    %7377 = vmatpush.bf16.msra.mxu0 %v4641
    %7378 = vmatpush.bf16.msra.mxu0 %v4625
    %7379 = vmatpush.bf16.msra.mxu0 %v4609
    %7380 = vmatpush.bf16.msra.mxu0 %v4593
    %7381 = vmatpush.bf16.msra.mxu0 %v4577
    %7382 = vmatpush.bf16.msra.mxu0 %v4561
    %7383 = vmatpush.bf16.msra.mxu0 %v4545
    %7384 = vmatpush.bf16.msra.mxu0 %v4529
    %7385 = vmatmul.bf16.gmra.mxu0 %v1177
    %v7386 = vpop.f32.mrf.mxu0
    %v7387 = vadd.f32 %v7374, %v7386
    %v7388 = vpop.f32.mrf.mxu0
    %7389 = vdwg.mxu0
    %7390 = vmatpush.bf16.msra.mxu0 %v4769
    %7391 = vmatpush.bf16.msra.mxu0 %v4753
    %7392 = vmatpush.bf16.msra.mxu0 %v4737
    %7393 = vmatpush.bf16.msra.mxu0 %v4721
    %7394 = vmatpush.bf16.msra.mxu0 %v4705
    %7395 = vmatpush.bf16.msra.mxu0 %v4689
    %7396 = vmatpush.bf16.msra.mxu0 %v4673
    %7397 = vmatpush.bf16.msra.mxu0 %v4657
    %7398 = vmatmul.bf16.gmra.mxu0 %v1178
    %v7399 = vpop.f32.mrf.mxu0
    %v7400 = vadd.f32 %v7387, %v7399
    %v7401 = vpop.f32.mrf.mxu0
    %7402 = vdwg.mxu0
    %7403 = vmatpush.bf16.msra.mxu0 %v4897
    %7404 = vmatpush.bf16.msra.mxu0 %v4881
    %7405 = vmatpush.bf16.msra.mxu0 %v4865
    %7406 = vmatpush.bf16.msra.mxu0 %v4849
    %7407 = vmatpush.bf16.msra.mxu0 %v4833
    %7408 = vmatpush.bf16.msra.mxu0 %v4817
    %7409 = vmatpush.bf16.msra.mxu0 %v4801
    %7410 = vmatpush.bf16.msra.mxu0 %v4785
    %7411 = vmatmul.bf16.gmra.mxu0 %v1179
    %v7412 = vpop.f32.mrf.mxu0
    %v7413 = vadd.f32 %v7400, %v7412
    %v7414 = vpop.f32.mrf.mxu0
    %7415 = vdwg.mxu0
    %7416 = vmatpush.bf16.msra.mxu0 %v5025
    %7417 = vmatpush.bf16.msra.mxu0 %v5009
    %7418 = vmatpush.bf16.msra.mxu0 %v4993
    %7419 = vmatpush.bf16.msra.mxu0 %v4977
    %7420 = vmatpush.bf16.msra.mxu0 %v4961
    %7421 = vmatpush.bf16.msra.mxu0 %v4945
    %7422 = vmatpush.bf16.msra.mxu0 %v4929
    %7423 = vmatpush.bf16.msra.mxu0 %v4913
    %7424 = vmatmul.bf16.gmra.mxu0 %v1180
    %v7425 = vpop.f32.mrf.mxu0
    %v7426 = vadd.f32 %v7413, %v7425
    %v7427 = vpop.f32.mrf.mxu0
    %7428 = vdwg.mxu0
    %7429 = vmatpush.bf16.msra.mxu0 %v5153
    %7430 = vmatpush.bf16.msra.mxu0 %v5137
    %7431 = vmatpush.bf16.msra.mxu0 %v5121
    %7432 = vmatpush.bf16.msra.mxu0 %v5105
    %7433 = vmatpush.bf16.msra.mxu0 %v5089
    %7434 = vmatpush.bf16.msra.mxu0 %v5073
    %7435 = vmatpush.bf16.msra.mxu0 %v5057
    %7436 = vmatpush.bf16.msra.mxu0 %v5041
    %7437 = vmatmul.bf16.gmra.mxu0 %v1181
    %v7438 = vpop.f32.mrf.mxu0
    %v7439 = vadd.f32 %v7426, %v7438
    %v7440 = vpop.f32.mrf.mxu0
    %7441 = vdwg.mxu0
    %7442 = vmatpush.bf16.msra.mxu0 %v5281
    %7443 = vmatpush.bf16.msra.mxu0 %v5265
    %7444 = vmatpush.bf16.msra.mxu0 %v5249
    %7445 = vmatpush.bf16.msra.mxu0 %v5233
    %7446 = vmatpush.bf16.msra.mxu0 %v5217
    %7447 = vmatpush.bf16.msra.mxu0 %v5201
    %7448 = vmatpush.bf16.msra.mxu0 %v5185
    %7449 = vmatpush.bf16.msra.mxu0 %v5169
    %7450 = vmatmul.bf16.gmra.mxu0 %v1182
    %v7451 = vpop.f32.mrf.mxu0
    %v7452 = vadd.f32 %v7439, %v7451
    %v7453 = vpop.f32.mrf.mxu0
    %7454 = vdwg.mxu0
    %7455 = vmatpush.bf16.msra.mxu0 %v4386
    %7456 = vmatpush.bf16.msra.mxu0 %v4370
    %7457 = vmatpush.bf16.msra.mxu0 %v4354
    %7458 = vmatpush.bf16.msra.mxu0 %v4338
    %7459 = vmatpush.bf16.msra.mxu0 %v4322
    %7460 = vmatpush.bf16.msra.mxu0 %v4306
    %7461 = vmatpush.bf16.msra.mxu0 %v4290
    %7462 = vmatpush.bf16.msra.mxu0 %v4274
    %7463 = vmatmul.bf16.gmra.mxu0 %v1175
    %v7464 = vpop.f32.mrf.mxu0
    %v7465 = vadd.f32 %v1142, %v7464
    %v7466 = vpop.f32.mrf.mxu0
    %7467 = vdwg.mxu0
    %7468 = vmatpush.bf16.msra.mxu0 %v4514
    %7469 = vmatpush.bf16.msra.mxu0 %v4498
    %7470 = vmatpush.bf16.msra.mxu0 %v4482
    %7471 = vmatpush.bf16.msra.mxu0 %v4466
    %7472 = vmatpush.bf16.msra.mxu0 %v4450
    %7473 = vmatpush.bf16.msra.mxu0 %v4434
    %7474 = vmatpush.bf16.msra.mxu0 %v4418
    %7475 = vmatpush.bf16.msra.mxu0 %v4402
    %7476 = vmatmul.bf16.gmra.mxu0 %v1176
    %v7477 = vpop.f32.mrf.mxu0
    %v7478 = vadd.f32 %v7465, %v7477
    %v7479 = vpop.f32.mrf.mxu0
    %7480 = vdwg.mxu0
    %7481 = vmatpush.bf16.msra.mxu0 %v4642
    %7482 = vmatpush.bf16.msra.mxu0 %v4626
    %7483 = vmatpush.bf16.msra.mxu0 %v4610
    %7484 = vmatpush.bf16.msra.mxu0 %v4594
    %7485 = vmatpush.bf16.msra.mxu0 %v4578
    %7486 = vmatpush.bf16.msra.mxu0 %v4562
    %7487 = vmatpush.bf16.msra.mxu0 %v4546
    %7488 = vmatpush.bf16.msra.mxu0 %v4530
    %7489 = vmatmul.bf16.gmra.mxu0 %v1177
    %v7490 = vpop.f32.mrf.mxu0
    %v7491 = vadd.f32 %v7478, %v7490
    %v7492 = vpop.f32.mrf.mxu0
    %7493 = vdwg.mxu0
    %7494 = vmatpush.bf16.msra.mxu0 %v4770
    %7495 = vmatpush.bf16.msra.mxu0 %v4754
    %7496 = vmatpush.bf16.msra.mxu0 %v4738
    %7497 = vmatpush.bf16.msra.mxu0 %v4722
    %7498 = vmatpush.bf16.msra.mxu0 %v4706
    %7499 = vmatpush.bf16.msra.mxu0 %v4690
    %7500 = vmatpush.bf16.msra.mxu0 %v4674
    %7501 = vmatpush.bf16.msra.mxu0 %v4658
    %7502 = vmatmul.bf16.gmra.mxu0 %v1178
    %v7503 = vpop.f32.mrf.mxu0
    %v7504 = vadd.f32 %v7491, %v7503
    %v7505 = vpop.f32.mrf.mxu0
    %7506 = vdwg.mxu0
    %7507 = vmatpush.bf16.msra.mxu0 %v4898
    %7508 = vmatpush.bf16.msra.mxu0 %v4882
    %7509 = vmatpush.bf16.msra.mxu0 %v4866
    %7510 = vmatpush.bf16.msra.mxu0 %v4850
    %7511 = vmatpush.bf16.msra.mxu0 %v4834
    %7512 = vmatpush.bf16.msra.mxu0 %v4818
    %7513 = vmatpush.bf16.msra.mxu0 %v4802
    %7514 = vmatpush.bf16.msra.mxu0 %v4786
    %7515 = vmatmul.bf16.gmra.mxu0 %v1179
    %v7516 = vpop.f32.mrf.mxu0
    %v7517 = vadd.f32 %v7504, %v7516
    %v7518 = vpop.f32.mrf.mxu0
    %7519 = vdwg.mxu0
    %7520 = vmatpush.bf16.msra.mxu0 %v5026
    %7521 = vmatpush.bf16.msra.mxu0 %v5010
    %7522 = vmatpush.bf16.msra.mxu0 %v4994
    %7523 = vmatpush.bf16.msra.mxu0 %v4978
    %7524 = vmatpush.bf16.msra.mxu0 %v4962
    %7525 = vmatpush.bf16.msra.mxu0 %v4946
    %7526 = vmatpush.bf16.msra.mxu0 %v4930
    %7527 = vmatpush.bf16.msra.mxu0 %v4914
    %7528 = vmatmul.bf16.gmra.mxu0 %v1180
    %v7529 = vpop.f32.mrf.mxu0
    %v7530 = vadd.f32 %v7517, %v7529
    %v7531 = vpop.f32.mrf.mxu0
    %7532 = vdwg.mxu0
    %7533 = vmatpush.bf16.msra.mxu0 %v5154
    %7534 = vmatpush.bf16.msra.mxu0 %v5138
    %7535 = vmatpush.bf16.msra.mxu0 %v5122
    %7536 = vmatpush.bf16.msra.mxu0 %v5106
    %7537 = vmatpush.bf16.msra.mxu0 %v5090
    %7538 = vmatpush.bf16.msra.mxu0 %v5074
    %7539 = vmatpush.bf16.msra.mxu0 %v5058
    %7540 = vmatpush.bf16.msra.mxu0 %v5042
    %7541 = vmatmul.bf16.gmra.mxu0 %v1181
    %v7542 = vpop.f32.mrf.mxu0
    %v7543 = vadd.f32 %v7530, %v7542
    %v7544 = vpop.f32.mrf.mxu0
    %7545 = vdwg.mxu0
    %7546 = vmatpush.bf16.msra.mxu0 %v5282
    %7547 = vmatpush.bf16.msra.mxu0 %v5266
    %7548 = vmatpush.bf16.msra.mxu0 %v5250
    %7549 = vmatpush.bf16.msra.mxu0 %v5234
    %7550 = vmatpush.bf16.msra.mxu0 %v5218
    %7551 = vmatpush.bf16.msra.mxu0 %v5202
    %7552 = vmatpush.bf16.msra.mxu0 %v5186
    %7553 = vmatpush.bf16.msra.mxu0 %v5170
    %7554 = vmatmul.bf16.gmra.mxu0 %v1182
    %v7555 = vpop.f32.mrf.mxu0
    %v7556 = vadd.f32 %v7543, %v7555
    %v7557 = vpop.f32.mrf.mxu0
    %7558 = vdwg.mxu0
    %7559 = vmatpush.bf16.msra.mxu0 %v4387
    %7560 = vmatpush.bf16.msra.mxu0 %v4371
    %7561 = vmatpush.bf16.msra.mxu0 %v4355
    %7562 = vmatpush.bf16.msra.mxu0 %v4339
    %7563 = vmatpush.bf16.msra.mxu0 %v4323
    %7564 = vmatpush.bf16.msra.mxu0 %v4307
    %7565 = vmatpush.bf16.msra.mxu0 %v4291
    %7566 = vmatpush.bf16.msra.mxu0 %v4275
    %7567 = vmatmul.bf16.gmra.mxu0 %v1175
    %v7568 = vpop.f32.mrf.mxu0
    %v7569 = vadd.f32 %v1143, %v7568
    %v7570 = vpop.f32.mrf.mxu0
    %7571 = vdwg.mxu0
    %7572 = vmatpush.bf16.msra.mxu0 %v4515
    %7573 = vmatpush.bf16.msra.mxu0 %v4499
    %7574 = vmatpush.bf16.msra.mxu0 %v4483
    %7575 = vmatpush.bf16.msra.mxu0 %v4467
    %7576 = vmatpush.bf16.msra.mxu0 %v4451
    %7577 = vmatpush.bf16.msra.mxu0 %v4435
    %7578 = vmatpush.bf16.msra.mxu0 %v4419
    %7579 = vmatpush.bf16.msra.mxu0 %v4403
    %7580 = vmatmul.bf16.gmra.mxu0 %v1176
    %v7581 = vpop.f32.mrf.mxu0
    %v7582 = vadd.f32 %v7569, %v7581
    %v7583 = vpop.f32.mrf.mxu0
    %7584 = vdwg.mxu0
    %7585 = vmatpush.bf16.msra.mxu0 %v4643
    %7586 = vmatpush.bf16.msra.mxu0 %v4627
    %7587 = vmatpush.bf16.msra.mxu0 %v4611
    %7588 = vmatpush.bf16.msra.mxu0 %v4595
    %7589 = vmatpush.bf16.msra.mxu0 %v4579
    %7590 = vmatpush.bf16.msra.mxu0 %v4563
    %7591 = vmatpush.bf16.msra.mxu0 %v4547
    %7592 = vmatpush.bf16.msra.mxu0 %v4531
    %7593 = vmatmul.bf16.gmra.mxu0 %v1177
    %v7594 = vpop.f32.mrf.mxu0
    %v7595 = vadd.f32 %v7582, %v7594
    %v7596 = vpop.f32.mrf.mxu0
    %7597 = vdwg.mxu0
    %7598 = vmatpush.bf16.msra.mxu0 %v4771
    %7599 = vmatpush.bf16.msra.mxu0 %v4755
    %7600 = vmatpush.bf16.msra.mxu0 %v4739
    %7601 = vmatpush.bf16.msra.mxu0 %v4723
    %7602 = vmatpush.bf16.msra.mxu0 %v4707
    %7603 = vmatpush.bf16.msra.mxu0 %v4691
    %7604 = vmatpush.bf16.msra.mxu0 %v4675
    %7605 = vmatpush.bf16.msra.mxu0 %v4659
    %7606 = vmatmul.bf16.gmra.mxu0 %v1178
    %v7607 = vpop.f32.mrf.mxu0
    %v7608 = vadd.f32 %v7595, %v7607
    %v7609 = vpop.f32.mrf.mxu0
    %7610 = vdwg.mxu0
    %7611 = vmatpush.bf16.msra.mxu0 %v4899
    %7612 = vmatpush.bf16.msra.mxu0 %v4883
    %7613 = vmatpush.bf16.msra.mxu0 %v4867
    %7614 = vmatpush.bf16.msra.mxu0 %v4851
    %7615 = vmatpush.bf16.msra.mxu0 %v4835
    %7616 = vmatpush.bf16.msra.mxu0 %v4819
    %7617 = vmatpush.bf16.msra.mxu0 %v4803
    %7618 = vmatpush.bf16.msra.mxu0 %v4787
    %7619 = vmatmul.bf16.gmra.mxu0 %v1179
    %v7620 = vpop.f32.mrf.mxu0
    %v7621 = vadd.f32 %v7608, %v7620
    %v7622 = vpop.f32.mrf.mxu0
    %7623 = vdwg.mxu0
    %7624 = vmatpush.bf16.msra.mxu0 %v5027
    %7625 = vmatpush.bf16.msra.mxu0 %v5011
    %7626 = vmatpush.bf16.msra.mxu0 %v4995
    %7627 = vmatpush.bf16.msra.mxu0 %v4979
    %7628 = vmatpush.bf16.msra.mxu0 %v4963
    %7629 = vmatpush.bf16.msra.mxu0 %v4947
    %7630 = vmatpush.bf16.msra.mxu0 %v4931
    %7631 = vmatpush.bf16.msra.mxu0 %v4915
    %7632 = vmatmul.bf16.gmra.mxu0 %v1180
    %v7633 = vpop.f32.mrf.mxu0
    %v7634 = vadd.f32 %v7621, %v7633
    %v7635 = vpop.f32.mrf.mxu0
    %7636 = vdwg.mxu0
    %7637 = vmatpush.bf16.msra.mxu0 %v5155
    %7638 = vmatpush.bf16.msra.mxu0 %v5139
    %7639 = vmatpush.bf16.msra.mxu0 %v5123
    %7640 = vmatpush.bf16.msra.mxu0 %v5107
    %7641 = vmatpush.bf16.msra.mxu0 %v5091
    %7642 = vmatpush.bf16.msra.mxu0 %v5075
    %7643 = vmatpush.bf16.msra.mxu0 %v5059
    %7644 = vmatpush.bf16.msra.mxu0 %v5043
    %7645 = vmatmul.bf16.gmra.mxu0 %v1181
    %v7646 = vpop.f32.mrf.mxu0
    %v7647 = vadd.f32 %v7634, %v7646
    %v7648 = vpop.f32.mrf.mxu0
    %7649 = vdwg.mxu0
    %7650 = vmatpush.bf16.msra.mxu0 %v5283
    %7651 = vmatpush.bf16.msra.mxu0 %v5267
    %7652 = vmatpush.bf16.msra.mxu0 %v5251
    %7653 = vmatpush.bf16.msra.mxu0 %v5235
    %7654 = vmatpush.bf16.msra.mxu0 %v5219
    %7655 = vmatpush.bf16.msra.mxu0 %v5203
    %7656 = vmatpush.bf16.msra.mxu0 %v5187
    %7657 = vmatpush.bf16.msra.mxu0 %v5171
    %7658 = vmatmul.bf16.gmra.mxu0 %v1182
    %v7659 = vpop.f32.mrf.mxu0
    %v7660 = vadd.f32 %v7647, %v7659
    %v7661 = vpop.f32.mrf.mxu0
    %7662 = vdwg.mxu0
    %7663 = vmatpush.bf16.msra.mxu0 %v4388
    %7664 = vmatpush.bf16.msra.mxu0 %v4372
    %7665 = vmatpush.bf16.msra.mxu0 %v4356
    %7666 = vmatpush.bf16.msra.mxu0 %v4340
    %7667 = vmatpush.bf16.msra.mxu0 %v4324
    %7668 = vmatpush.bf16.msra.mxu0 %v4308
    %7669 = vmatpush.bf16.msra.mxu0 %v4292
    %7670 = vmatpush.bf16.msra.mxu0 %v4276
    %7671 = vmatmul.bf16.gmra.mxu0 %v1175
    %v7672 = vpop.f32.mrf.mxu0
    %v7673 = vadd.f32 %v1144, %v7672
    %v7674 = vpop.f32.mrf.mxu0
    %7675 = vdwg.mxu0
    %7676 = vmatpush.bf16.msra.mxu0 %v4516
    %7677 = vmatpush.bf16.msra.mxu0 %v4500
    %7678 = vmatpush.bf16.msra.mxu0 %v4484
    %7679 = vmatpush.bf16.msra.mxu0 %v4468
    %7680 = vmatpush.bf16.msra.mxu0 %v4452
    %7681 = vmatpush.bf16.msra.mxu0 %v4436
    %7682 = vmatpush.bf16.msra.mxu0 %v4420
    %7683 = vmatpush.bf16.msra.mxu0 %v4404
    %7684 = vmatmul.bf16.gmra.mxu0 %v1176
    %v7685 = vpop.f32.mrf.mxu0
    %v7686 = vadd.f32 %v7673, %v7685
    %v7687 = vpop.f32.mrf.mxu0
    %7688 = vdwg.mxu0
    %7689 = vmatpush.bf16.msra.mxu0 %v4644
    %7690 = vmatpush.bf16.msra.mxu0 %v4628
    %7691 = vmatpush.bf16.msra.mxu0 %v4612
    %7692 = vmatpush.bf16.msra.mxu0 %v4596
    %7693 = vmatpush.bf16.msra.mxu0 %v4580
    %7694 = vmatpush.bf16.msra.mxu0 %v4564
    %7695 = vmatpush.bf16.msra.mxu0 %v4548
    %7696 = vmatpush.bf16.msra.mxu0 %v4532
    %7697 = vmatmul.bf16.gmra.mxu0 %v1177
    %v7698 = vpop.f32.mrf.mxu0
    %v7699 = vadd.f32 %v7686, %v7698
    %v7700 = vpop.f32.mrf.mxu0
    %7701 = vdwg.mxu0
    %7702 = vmatpush.bf16.msra.mxu0 %v4772
    %7703 = vmatpush.bf16.msra.mxu0 %v4756
    %7704 = vmatpush.bf16.msra.mxu0 %v4740
    %7705 = vmatpush.bf16.msra.mxu0 %v4724
    %7706 = vmatpush.bf16.msra.mxu0 %v4708
    %7707 = vmatpush.bf16.msra.mxu0 %v4692
    %7708 = vmatpush.bf16.msra.mxu0 %v4676
    %7709 = vmatpush.bf16.msra.mxu0 %v4660
    %7710 = vmatmul.bf16.gmra.mxu0 %v1178
    %v7711 = vpop.f32.mrf.mxu0
    %v7712 = vadd.f32 %v7699, %v7711
    %v7713 = vpop.f32.mrf.mxu0
    %7714 = vdwg.mxu0
    %7715 = vmatpush.bf16.msra.mxu0 %v4900
    %7716 = vmatpush.bf16.msra.mxu0 %v4884
    %7717 = vmatpush.bf16.msra.mxu0 %v4868
    %7718 = vmatpush.bf16.msra.mxu0 %v4852
    %7719 = vmatpush.bf16.msra.mxu0 %v4836
    %7720 = vmatpush.bf16.msra.mxu0 %v4820
    %7721 = vmatpush.bf16.msra.mxu0 %v4804
    %7722 = vmatpush.bf16.msra.mxu0 %v4788
    %7723 = vmatmul.bf16.gmra.mxu0 %v1179
    %v7724 = vpop.f32.mrf.mxu0
    %v7725 = vadd.f32 %v7712, %v7724
    %v7726 = vpop.f32.mrf.mxu0
    %7727 = vdwg.mxu0
    %7728 = vmatpush.bf16.msra.mxu0 %v5028
    %7729 = vmatpush.bf16.msra.mxu0 %v5012
    %7730 = vmatpush.bf16.msra.mxu0 %v4996
    %7731 = vmatpush.bf16.msra.mxu0 %v4980
    %7732 = vmatpush.bf16.msra.mxu0 %v4964
    %7733 = vmatpush.bf16.msra.mxu0 %v4948
    %7734 = vmatpush.bf16.msra.mxu0 %v4932
    %7735 = vmatpush.bf16.msra.mxu0 %v4916
    %7736 = vmatmul.bf16.gmra.mxu0 %v1180
    %v7737 = vpop.f32.mrf.mxu0
    %v7738 = vadd.f32 %v7725, %v7737
    %v7739 = vpop.f32.mrf.mxu0
    %7740 = vdwg.mxu0
    %7741 = vmatpush.bf16.msra.mxu0 %v5156
    %7742 = vmatpush.bf16.msra.mxu0 %v5140
    %7743 = vmatpush.bf16.msra.mxu0 %v5124
    %7744 = vmatpush.bf16.msra.mxu0 %v5108
    %7745 = vmatpush.bf16.msra.mxu0 %v5092
    %7746 = vmatpush.bf16.msra.mxu0 %v5076
    %7747 = vmatpush.bf16.msra.mxu0 %v5060
    %7748 = vmatpush.bf16.msra.mxu0 %v5044
    %7749 = vmatmul.bf16.gmra.mxu0 %v1181
    %v7750 = vpop.f32.mrf.mxu0
    %v7751 = vadd.f32 %v7738, %v7750
    %v7752 = vpop.f32.mrf.mxu0
    %7753 = vdwg.mxu0
    %7754 = vmatpush.bf16.msra.mxu0 %v5284
    %7755 = vmatpush.bf16.msra.mxu0 %v5268
    %7756 = vmatpush.bf16.msra.mxu0 %v5252
    %7757 = vmatpush.bf16.msra.mxu0 %v5236
    %7758 = vmatpush.bf16.msra.mxu0 %v5220
    %7759 = vmatpush.bf16.msra.mxu0 %v5204
    %7760 = vmatpush.bf16.msra.mxu0 %v5188
    %7761 = vmatpush.bf16.msra.mxu0 %v5172
    %7762 = vmatmul.bf16.gmra.mxu0 %v1182
    %v7763 = vpop.f32.mrf.mxu0
    %v7764 = vadd.f32 %v7751, %v7763
    %v7765 = vpop.f32.mrf.mxu0
    %7766 = vdwg.mxu0
    %7767 = vmatpush.bf16.msra.mxu0 %v4389
    %7768 = vmatpush.bf16.msra.mxu0 %v4373
    %7769 = vmatpush.bf16.msra.mxu0 %v4357
    %7770 = vmatpush.bf16.msra.mxu0 %v4341
    %7771 = vmatpush.bf16.msra.mxu0 %v4325
    %7772 = vmatpush.bf16.msra.mxu0 %v4309
    %7773 = vmatpush.bf16.msra.mxu0 %v4293
    %7774 = vmatpush.bf16.msra.mxu0 %v4277
    %7775 = vmatmul.bf16.gmra.mxu0 %v1175
    %v7776 = vpop.f32.mrf.mxu0
    %v7777 = vadd.f32 %v1145, %v7776
    %v7778 = vpop.f32.mrf.mxu0
    %7779 = vdwg.mxu0
    %7780 = vmatpush.bf16.msra.mxu0 %v4517
    %7781 = vmatpush.bf16.msra.mxu0 %v4501
    %7782 = vmatpush.bf16.msra.mxu0 %v4485
    %7783 = vmatpush.bf16.msra.mxu0 %v4469
    %7784 = vmatpush.bf16.msra.mxu0 %v4453
    %7785 = vmatpush.bf16.msra.mxu0 %v4437
    %7786 = vmatpush.bf16.msra.mxu0 %v4421
    %7787 = vmatpush.bf16.msra.mxu0 %v4405
    %7788 = vmatmul.bf16.gmra.mxu0 %v1176
    %v7789 = vpop.f32.mrf.mxu0
    %v7790 = vadd.f32 %v7777, %v7789
    %v7791 = vpop.f32.mrf.mxu0
    %7792 = vdwg.mxu0
    %7793 = vmatpush.bf16.msra.mxu0 %v4645
    %7794 = vmatpush.bf16.msra.mxu0 %v4629
    %7795 = vmatpush.bf16.msra.mxu0 %v4613
    %7796 = vmatpush.bf16.msra.mxu0 %v4597
    %7797 = vmatpush.bf16.msra.mxu0 %v4581
    %7798 = vmatpush.bf16.msra.mxu0 %v4565
    %7799 = vmatpush.bf16.msra.mxu0 %v4549
    %7800 = vmatpush.bf16.msra.mxu0 %v4533
    %7801 = vmatmul.bf16.gmra.mxu0 %v1177
    %v7802 = vpop.f32.mrf.mxu0
    %v7803 = vadd.f32 %v7790, %v7802
    %v7804 = vpop.f32.mrf.mxu0
    %7805 = vdwg.mxu0
    %7806 = vmatpush.bf16.msra.mxu0 %v4773
    %7807 = vmatpush.bf16.msra.mxu0 %v4757
    %7808 = vmatpush.bf16.msra.mxu0 %v4741
    %7809 = vmatpush.bf16.msra.mxu0 %v4725
    %7810 = vmatpush.bf16.msra.mxu0 %v4709
    %7811 = vmatpush.bf16.msra.mxu0 %v4693
    %7812 = vmatpush.bf16.msra.mxu0 %v4677
    %7813 = vmatpush.bf16.msra.mxu0 %v4661
    %7814 = vmatmul.bf16.gmra.mxu0 %v1178
    %v7815 = vpop.f32.mrf.mxu0
    %v7816 = vadd.f32 %v7803, %v7815
    %v7817 = vpop.f32.mrf.mxu0
    %7818 = vdwg.mxu0
    %7819 = vmatpush.bf16.msra.mxu0 %v4901
    %7820 = vmatpush.bf16.msra.mxu0 %v4885
    %7821 = vmatpush.bf16.msra.mxu0 %v4869
    %7822 = vmatpush.bf16.msra.mxu0 %v4853
    %7823 = vmatpush.bf16.msra.mxu0 %v4837
    %7824 = vmatpush.bf16.msra.mxu0 %v4821
    %7825 = vmatpush.bf16.msra.mxu0 %v4805
    %7826 = vmatpush.bf16.msra.mxu0 %v4789
    %7827 = vmatmul.bf16.gmra.mxu0 %v1179
    %v7828 = vpop.f32.mrf.mxu0
    %v7829 = vadd.f32 %v7816, %v7828
    %v7830 = vpop.f32.mrf.mxu0
    %7831 = vdwg.mxu0
    %7832 = vmatpush.bf16.msra.mxu0 %v5029
    %7833 = vmatpush.bf16.msra.mxu0 %v5013
    %7834 = vmatpush.bf16.msra.mxu0 %v4997
    %7835 = vmatpush.bf16.msra.mxu0 %v4981
    %7836 = vmatpush.bf16.msra.mxu0 %v4965
    %7837 = vmatpush.bf16.msra.mxu0 %v4949
    %7838 = vmatpush.bf16.msra.mxu0 %v4933
    %7839 = vmatpush.bf16.msra.mxu0 %v4917
    %7840 = vmatmul.bf16.gmra.mxu0 %v1180
    %v7841 = vpop.f32.mrf.mxu0
    %v7842 = vadd.f32 %v7829, %v7841
    %v7843 = vpop.f32.mrf.mxu0
    %7844 = vdwg.mxu0
    %7845 = vmatpush.bf16.msra.mxu0 %v5157
    %7846 = vmatpush.bf16.msra.mxu0 %v5141
    %7847 = vmatpush.bf16.msra.mxu0 %v5125
    %7848 = vmatpush.bf16.msra.mxu0 %v5109
    %7849 = vmatpush.bf16.msra.mxu0 %v5093
    %7850 = vmatpush.bf16.msra.mxu0 %v5077
    %7851 = vmatpush.bf16.msra.mxu0 %v5061
    %7852 = vmatpush.bf16.msra.mxu0 %v5045
    %7853 = vmatmul.bf16.gmra.mxu0 %v1181
    %v7854 = vpop.f32.mrf.mxu0
    %v7855 = vadd.f32 %v7842, %v7854
    %v7856 = vpop.f32.mrf.mxu0
    %7857 = vdwg.mxu0
    %7858 = vmatpush.bf16.msra.mxu0 %v5285
    %7859 = vmatpush.bf16.msra.mxu0 %v5269
    %7860 = vmatpush.bf16.msra.mxu0 %v5253
    %7861 = vmatpush.bf16.msra.mxu0 %v5237
    %7862 = vmatpush.bf16.msra.mxu0 %v5221
    %7863 = vmatpush.bf16.msra.mxu0 %v5205
    %7864 = vmatpush.bf16.msra.mxu0 %v5189
    %7865 = vmatpush.bf16.msra.mxu0 %v5173
    %7866 = vmatmul.bf16.gmra.mxu0 %v1182
    %v7867 = vpop.f32.mrf.mxu0
    %v7868 = vadd.f32 %v7855, %v7867
    %v7869 = vpop.f32.mrf.mxu0
    %7870 = vdwg.mxu0
    %7871 = vmatpush.bf16.msra.mxu0 %v4390
    %7872 = vmatpush.bf16.msra.mxu0 %v4374
    %7873 = vmatpush.bf16.msra.mxu0 %v4358
    %7874 = vmatpush.bf16.msra.mxu0 %v4342
    %7875 = vmatpush.bf16.msra.mxu0 %v4326
    %7876 = vmatpush.bf16.msra.mxu0 %v4310
    %7877 = vmatpush.bf16.msra.mxu0 %v4294
    %7878 = vmatpush.bf16.msra.mxu0 %v4278
    %7879 = vmatmul.bf16.gmra.mxu0 %v1175
    %v7880 = vpop.f32.mrf.mxu0
    %v7881 = vadd.f32 %v1146, %v7880
    %v7882 = vpop.f32.mrf.mxu0
    %7883 = vdwg.mxu0
    %7884 = vmatpush.bf16.msra.mxu0 %v4518
    %7885 = vmatpush.bf16.msra.mxu0 %v4502
    %7886 = vmatpush.bf16.msra.mxu0 %v4486
    %7887 = vmatpush.bf16.msra.mxu0 %v4470
    %7888 = vmatpush.bf16.msra.mxu0 %v4454
    %7889 = vmatpush.bf16.msra.mxu0 %v4438
    %7890 = vmatpush.bf16.msra.mxu0 %v4422
    %7891 = vmatpush.bf16.msra.mxu0 %v4406
    %7892 = vmatmul.bf16.gmra.mxu0 %v1176
    %v7893 = vpop.f32.mrf.mxu0
    %v7894 = vadd.f32 %v7881, %v7893
    %v7895 = vpop.f32.mrf.mxu0
    %7896 = vdwg.mxu0
    %7897 = vmatpush.bf16.msra.mxu0 %v4646
    %7898 = vmatpush.bf16.msra.mxu0 %v4630
    %7899 = vmatpush.bf16.msra.mxu0 %v4614
    %7900 = vmatpush.bf16.msra.mxu0 %v4598
    %7901 = vmatpush.bf16.msra.mxu0 %v4582
    %7902 = vmatpush.bf16.msra.mxu0 %v4566
    %7903 = vmatpush.bf16.msra.mxu0 %v4550
    %7904 = vmatpush.bf16.msra.mxu0 %v4534
    %7905 = vmatmul.bf16.gmra.mxu0 %v1177
    %v7906 = vpop.f32.mrf.mxu0
    %v7907 = vadd.f32 %v7894, %v7906
    %v7908 = vpop.f32.mrf.mxu0
    %7909 = vdwg.mxu0
    %7910 = vmatpush.bf16.msra.mxu0 %v4774
    %7911 = vmatpush.bf16.msra.mxu0 %v4758
    %7912 = vmatpush.bf16.msra.mxu0 %v4742
    %7913 = vmatpush.bf16.msra.mxu0 %v4726
    %7914 = vmatpush.bf16.msra.mxu0 %v4710
    %7915 = vmatpush.bf16.msra.mxu0 %v4694
    %7916 = vmatpush.bf16.msra.mxu0 %v4678
    %7917 = vmatpush.bf16.msra.mxu0 %v4662
    %7918 = vmatmul.bf16.gmra.mxu0 %v1178
    %v7919 = vpop.f32.mrf.mxu0
    %v7920 = vadd.f32 %v7907, %v7919
    %v7921 = vpop.f32.mrf.mxu0
    %7922 = vdwg.mxu0
    %7923 = vmatpush.bf16.msra.mxu0 %v4902
    %7924 = vmatpush.bf16.msra.mxu0 %v4886
    %7925 = vmatpush.bf16.msra.mxu0 %v4870
    %7926 = vmatpush.bf16.msra.mxu0 %v4854
    %7927 = vmatpush.bf16.msra.mxu0 %v4838
    %7928 = vmatpush.bf16.msra.mxu0 %v4822
    %7929 = vmatpush.bf16.msra.mxu0 %v4806
    %7930 = vmatpush.bf16.msra.mxu0 %v4790
    %7931 = vmatmul.bf16.gmra.mxu0 %v1179
    %v7932 = vpop.f32.mrf.mxu0
    %v7933 = vadd.f32 %v7920, %v7932
    %v7934 = vpop.f32.mrf.mxu0
    %7935 = vdwg.mxu0
    %7936 = vmatpush.bf16.msra.mxu0 %v5030
    %7937 = vmatpush.bf16.msra.mxu0 %v5014
    %7938 = vmatpush.bf16.msra.mxu0 %v4998
    %7939 = vmatpush.bf16.msra.mxu0 %v4982
    %7940 = vmatpush.bf16.msra.mxu0 %v4966
    %7941 = vmatpush.bf16.msra.mxu0 %v4950
    %7942 = vmatpush.bf16.msra.mxu0 %v4934
    %7943 = vmatpush.bf16.msra.mxu0 %v4918
    %7944 = vmatmul.bf16.gmra.mxu0 %v1180
    %v7945 = vpop.f32.mrf.mxu0
    %v7946 = vadd.f32 %v7933, %v7945
    %v7947 = vpop.f32.mrf.mxu0
    %7948 = vdwg.mxu0
    %7949 = vmatpush.bf16.msra.mxu0 %v5158
    %7950 = vmatpush.bf16.msra.mxu0 %v5142
    %7951 = vmatpush.bf16.msra.mxu0 %v5126
    %7952 = vmatpush.bf16.msra.mxu0 %v5110
    %7953 = vmatpush.bf16.msra.mxu0 %v5094
    %7954 = vmatpush.bf16.msra.mxu0 %v5078
    %7955 = vmatpush.bf16.msra.mxu0 %v5062
    %7956 = vmatpush.bf16.msra.mxu0 %v5046
    %7957 = vmatmul.bf16.gmra.mxu0 %v1181
    %v7958 = vpop.f32.mrf.mxu0
    %v7959 = vadd.f32 %v7946, %v7958
    %v7960 = vpop.f32.mrf.mxu0
    %7961 = vdwg.mxu0
    %7962 = vmatpush.bf16.msra.mxu0 %v5286
    %7963 = vmatpush.bf16.msra.mxu0 %v5270
    %7964 = vmatpush.bf16.msra.mxu0 %v5254
    %7965 = vmatpush.bf16.msra.mxu0 %v5238
    %7966 = vmatpush.bf16.msra.mxu0 %v5222
    %7967 = vmatpush.bf16.msra.mxu0 %v5206
    %7968 = vmatpush.bf16.msra.mxu0 %v5190
    %7969 = vmatpush.bf16.msra.mxu0 %v5174
    %7970 = vmatmul.bf16.gmra.mxu0 %v1182
    %v7971 = vpop.f32.mrf.mxu0
    %v7972 = vadd.f32 %v7959, %v7971
    %v7973 = vpop.f32.mrf.mxu0
    %7974 = vdwg.mxu0
    %v7975 = vmax.f32 %v6412, 0.0
    %v7976 = vmax.f32 %v6516, 0.0
    %v7977 = vmax.f32 %v6620, 0.0
    %v7978 = vmax.f32 %v6724, 0.0
    %v7979 = vmax.f32 %v6828, 0.0
    %v7980 = vmax.f32 %v6932, 0.0
    %v7981 = vmax.f32 %v7036, 0.0
    %v7982 = vmax.f32 %v7140, 0.0
    %v7983 = vmax.f32 %v7244, 0.0
    %v7984 = vmax.f32 %v7348, 0.0
    %v7985 = vmax.f32 %v7452, 0.0
    %v7986 = vmax.f32 %v7556, 0.0
    %v7987 = vmax.f32 %v7660, 0.0
    %v7988 = vmax.f32 %v7764, 0.0
    %v7989 = vmax.f32 %v7868, 0.0
    %v7990 = vmax.f32 %v7972, 0.0
    %v7991 = vpack.c.bf16 %v7975, %v7975
    %v7992 = vpack.c.bf16 %v7976, %v7976
    %v7993 = vpack.c.bf16 %v7977, %v7977
    %v7994 = vpack.c.bf16 %v7978, %v7978
    %v7995 = vpack.c.bf16 %v7979, %v7979
    %v7996 = vpack.c.bf16 %v7980, %v7980
    %v7997 = vpack.c.bf16 %v7981, %v7981
    %v7998 = vpack.c.bf16 %v7982, %v7982
    %v7999 = vpack.c.bf16 %v7983, %v7983
    %v8000 = vpack.c.bf16 %v7984, %v7984
    %v8001 = vpack.c.bf16 %v7985, %v7985
    %v8002 = vpack.c.bf16 %v7986, %v7986
    %v8003 = vpack.c.bf16 %v7987, %v7987
    %v8004 = vpack.c.bf16 %v7988, %v7988
    %v8005 = vpack.c.bf16 %v7989, %v7989
    %v8006 = vpack.c.bf16 %v7990, %v7990
    %v8007 = vld [vmem:[#allocation6] sm:$0xff]
    %v8008 = vld [vmem:[#allocation6 + $0x8] sm:$0xff]
    %v8009 = vld [vmem:[#allocation6 + $0x10] sm:$0xff]
    %v8010 = vld [vmem:[#allocation6 + $0x18] sm:$0xff]
    %v8011 = vld [vmem:[#allocation6 + $0x20] sm:$0xff]
    %v8012 = vld [vmem:[#allocation6 + $0x28] sm:$0xff]
    %v8013 = vld [vmem:[#allocation6 + $0x30] sm:$0xff]
    %v8014 = vld [vmem:[#allocation6 + $0x38] sm:$0xff]
    %v8015 = vld [vmem:[#allocation6 + $0x40] sm:$0xff]
    %v8016 = vld [vmem:[#allocation6 + $0x48] sm:$0xff]
    %v8017 = vld [vmem:[#allocation6 + $0x50] sm:$0xff]
    %v8018 = vld [vmem:[#allocation6 + $0x58] sm:$0xff]
    %v8019 = vld [vmem:[#allocation6 + $0x60] sm:$0xff]
    %v8020 = vld [vmem:[#allocation6 + $0x68] sm:$0xff]
    %v8021 = vld [vmem:[#allocation6 + $0x70] sm:$0xff]
    %v8022 = vld [vmem:[#allocation6 + $0x78] sm:$0xff]
    %v8023 = vld [vmem:[#allocation6 + $0x80] sm:$0xff]
    %v8024 = vld [vmem:[#allocation6 + $0x88] sm:$0xff]
    %v8025 = vld [vmem:[#allocation6 + $0x90] sm:$0xff]
    %v8026 = vld [vmem:[#allocation6 + $0x98] sm:$0xff]
    %v8027 = vld [vmem:[#allocation6 + $0xa0] sm:$0xff]
    %v8028 = vld [vmem:[#allocation6 + $0xa8] sm:$0xff]
    %v8029 = vld [vmem:[#allocation6 + $0xb0] sm:$0xff]
    %v8030 = vld [vmem:[#allocation6 + $0xb8] sm:$0xff]
    %v8031 = vld [vmem:[#allocation6 + $0xc0] sm:$0xff]
    %v8032 = vld [vmem:[#allocation6 + $0xc8] sm:$0xff]
    %v8033 = vld [vmem:[#allocation6 + $0xd0] sm:$0xff]
    %v8034 = vld [vmem:[#allocation6 + $0xd8] sm:$0xff]
    %v8035 = vld [vmem:[#allocation6 + $0xe0] sm:$0xff]
    %v8036 = vld [vmem:[#allocation6 + $0xe8] sm:$0xff]
    %v8037 = vld [vmem:[#allocation6 + $0xf0] sm:$0xff]
    %v8038 = vld [vmem:[#allocation6 + $0xf8] sm:$0xff]
    %v8039 = vld [vmem:[#allocation7] sm:$0x1]
    %v8041 = vperm.slane %v8039, 0
    %v8075 = vunpack.c.l.b16 %v8007
    %v8076 = vunpack.c.h.b16 %v8007
    %v8077 = vunpack.c.l.b16 %v8008
    %v8078 = vunpack.c.h.b16 %v8008
    %v8079 = vunpack.c.l.b16 %v8009
    %v8080 = vunpack.c.h.b16 %v8009
    %v8081 = vunpack.c.l.b16 %v8010
    %v8082 = vunpack.c.h.b16 %v8010
    %v8083 = vunpack.c.l.b16 %v8011
    %v8084 = vunpack.c.h.b16 %v8011
    %v8085 = vunpack.c.l.b16 %v8012
    %v8086 = vunpack.c.h.b16 %v8012
    %v8087 = vunpack.c.l.b16 %v8013
    %v8088 = vunpack.c.h.b16 %v8013
    %v8089 = vunpack.c.l.b16 %v8014
    %v8090 = vunpack.c.h.b16 %v8014
    %v8091 = vunpack.c.l.b16 %v8015
    %v8092 = vunpack.c.h.b16 %v8015
    %v8093 = vunpack.c.l.b16 %v8016
    %v8094 = vunpack.c.h.b16 %v8016
    %v8095 = vunpack.c.l.b16 %v8017
    %v8096 = vunpack.c.h.b16 %v8017
    %v8097 = vunpack.c.l.b16 %v8018
    %v8098 = vunpack.c.h.b16 %v8018
    %v8099 = vunpack.c.l.b16 %v8019
    %v8100 = vunpack.c.h.b16 %v8019
    %v8101 = vunpack.c.l.b16 %v8020
    %v8102 = vunpack.c.h.b16 %v8020
    %v8103 = vunpack.c.l.b16 %v8021
    %v8104 = vunpack.c.h.b16 %v8021
    %v8105 = vunpack.c.l.b16 %v8022
    %v8106 = vunpack.c.h.b16 %v8022
    %v8107 = vunpack.c.l.b16 %v8023
    %v8108 = vunpack.c.h.b16 %v8023
    %v8109 = vunpack.c.l.b16 %v8024
    %v8110 = vunpack.c.h.b16 %v8024
    %v8111 = vunpack.c.l.b16 %v8025
    %v8112 = vunpack.c.h.b16 %v8025
    %v8113 = vunpack.c.l.b16 %v8026
    %v8114 = vunpack.c.h.b16 %v8026
    %v8115 = vunpack.c.l.b16 %v8027
    %v8116 = vunpack.c.h.b16 %v8027
    %v8117 = vunpack.c.l.b16 %v8028
    %v8118 = vunpack.c.h.b16 %v8028
    %v8119 = vunpack.c.l.b16 %v8029
    %v8120 = vunpack.c.h.b16 %v8029
    %v8121 = vunpack.c.l.b16 %v8030
    %v8122 = vunpack.c.h.b16 %v8030
    %v8123 = vunpack.c.l.b16 %v8031
    %v8124 = vunpack.c.h.b16 %v8031
    %v8125 = vunpack.c.l.b16 %v8032
    %v8126 = vunpack.c.h.b16 %v8032
    %v8127 = vunpack.c.l.b16 %v8033
    %v8128 = vunpack.c.h.b16 %v8033
    %v8129 = vunpack.c.l.b16 %v8034
    %v8130 = vunpack.c.h.b16 %v8034
    %v8131 = vunpack.c.l.b16 %v8035
    %v8132 = vunpack.c.h.b16 %v8035
    %v8133 = vunpack.c.l.b16 %v8036
    %v8134 = vunpack.c.h.b16 %v8036
    %v8135 = vunpack.c.l.b16 %v8037
    %v8136 = vunpack.c.h.b16 %v8037
    %v8137 = vunpack.c.l.b16 %v8038
    %v8138 = vunpack.c.h.b16 %v8038
    %v8139 = vpack.c.b16 %v8091, %v8075
    %v8140 = vpack.c.b16 %v8092, %v8076
    %v8141 = vpack.c.b16 %v8093, %v8077
    %v8142 = vpack.c.b16 %v8094, %v8078
    %v8143 = vpack.c.b16 %v8095, %v8079
    %v8144 = vpack.c.b16 %v8096, %v8080
    %v8145 = vpack.c.b16 %v8097, %v8081
    %v8146 = vpack.c.b16 %v8098, %v8082
    %v8147 = vpack.c.b16 %v8099, %v8083
    %v8148 = vpack.c.b16 %v8100, %v8084
    %v8149 = vpack.c.b16 %v8101, %v8085
    %v8150 = vpack.c.b16 %v8102, %v8086
    %v8151 = vpack.c.b16 %v8103, %v8087
    %v8152 = vpack.c.b16 %v8104, %v8088
    %v8153 = vpack.c.b16 %v8105, %v8089
    %v8154 = vpack.c.b16 %v8106, %v8090
    %v8155 = vpack.c.b16 %v8123, %v8107
    %v8156 = vpack.c.b16 %v8124, %v8108
    %v8157 = vpack.c.b16 %v8125, %v8109
    %v8158 = vpack.c.b16 %v8126, %v8110
    %v8159 = vpack.c.b16 %v8127, %v8111
    %v8160 = vpack.c.b16 %v8128, %v8112
    %v8161 = vpack.c.b16 %v8129, %v8113
    %v8162 = vpack.c.b16 %v8130, %v8114
    %v8163 = vpack.c.b16 %v8131, %v8115
    %v8164 = vpack.c.b16 %v8132, %v8116
    %v8165 = vpack.c.b16 %v8133, %v8117
    %v8166 = vpack.c.b16 %v8134, %v8118
    %v8167 = vpack.c.b16 %v8135, %v8119
    %v8168 = vpack.c.b16 %v8136, %v8120
    %v8169 = vpack.c.b16 %v8137, %v8121
    %v8170 = vpack.c.b16 %v8138, %v8122
    %8203 = vmatpush.bf16.xpose.msra.mxu0 0
    %8204 = vmatpush.bf16.xpose.msra.mxu0 0
    %8205 = vmatpush.bf16.xpose.msra.mxu0 0
    %8206 = vmatpush.bf16.xpose.msra.mxu0 0
    %8207 = vmatpush.bf16.xpose.msra.mxu0 0
    %8208 = vmatpush.bf16.xpose.msra.mxu0 0
    %8209 = vmatpush.bf16.xpose.msra.mxu0 %v8155
    %8210 = vmatpush.bf16.xpose.msra.mxu0 %v8139
    %8211 = vmatmul.bf16.gmra.mxu0 %v7991
    %v8212 = vpop.f32.mrf.mxu0
    %v8213 = vadd.f32 %v8041, %v8212
    %v8214 = vpop.f32.mrf.mxu0
    %8215 = vdwg.mxu0
    %8216 = vmatpush.bf16.xpose.msra.mxu0 0
    %8217 = vmatpush.bf16.xpose.msra.mxu0 0
    %8218 = vmatpush.bf16.xpose.msra.mxu0 0
    %8219 = vmatpush.bf16.xpose.msra.mxu0 0
    %8220 = vmatpush.bf16.xpose.msra.mxu0 0
    %8221 = vmatpush.bf16.xpose.msra.mxu0 0
    %8222 = vmatpush.bf16.xpose.msra.mxu0 %v8156
    %8223 = vmatpush.bf16.xpose.msra.mxu0 %v8140
    %8224 = vmatmul.bf16.gmra.mxu0 %v7992
    %v8225 = vpop.f32.mrf.mxu0
    %v8226 = vadd.f32 %v8213, %v8225
    %v8227 = vpop.f32.mrf.mxu0
    %8228 = vdwg.mxu0
    %8229 = vmatpush.bf16.xpose.msra.mxu0 0
    %8230 = vmatpush.bf16.xpose.msra.mxu0 0
    %8231 = vmatpush.bf16.xpose.msra.mxu0 0
    %8232 = vmatpush.bf16.xpose.msra.mxu0 0
    %8233 = vmatpush.bf16.xpose.msra.mxu0 0
    %8234 = vmatpush.bf16.xpose.msra.mxu0 0
    %8235 = vmatpush.bf16.xpose.msra.mxu0 %v8157
    %8236 = vmatpush.bf16.xpose.msra.mxu0 %v8141
    %8237 = vmatmul.bf16.gmra.mxu0 %v7993
    %v8238 = vpop.f32.mrf.mxu0
    %v8239 = vadd.f32 %v8226, %v8238
    %v8240 = vpop.f32.mrf.mxu0
    %8241 = vdwg.mxu0
    %8242 = vmatpush.bf16.xpose.msra.mxu0 0
    %8243 = vmatpush.bf16.xpose.msra.mxu0 0
    %8244 = vmatpush.bf16.xpose.msra.mxu0 0
    %8245 = vmatpush.bf16.xpose.msra.mxu0 0
    %8246 = vmatpush.bf16.xpose.msra.mxu0 0
    %8247 = vmatpush.bf16.xpose.msra.mxu0 0
    %8248 = vmatpush.bf16.xpose.msra.mxu0 %v8158
    %8249 = vmatpush.bf16.xpose.msra.mxu0 %v8142
    %8250 = vmatmul.bf16.gmra.mxu0 %v7994
    %v8251 = vpop.f32.mrf.mxu0
    %v8252 = vadd.f32 %v8239, %v8251
    %v8253 = vpop.f32.mrf.mxu0
    %8254 = vdwg.mxu0
    %8255 = vmatpush.bf16.xpose.msra.mxu0 0
    %8256 = vmatpush.bf16.xpose.msra.mxu0 0
    %8257 = vmatpush.bf16.xpose.msra.mxu0 0
    %8258 = vmatpush.bf16.xpose.msra.mxu0 0
    %8259 = vmatpush.bf16.xpose.msra.mxu0 0
    %8260 = vmatpush.bf16.xpose.msra.mxu0 0
    %8261 = vmatpush.bf16.xpose.msra.mxu0 %v8159
    %8262 = vmatpush.bf16.xpose.msra.mxu0 %v8143
    %8263 = vmatmul.bf16.gmra.mxu0 %v7995
    %v8264 = vpop.f32.mrf.mxu0
    %v8265 = vadd.f32 %v8252, %v8264
    %v8266 = vpop.f32.mrf.mxu0
    %8267 = vdwg.mxu0
    %8268 = vmatpush.bf16.xpose.msra.mxu0 0
    %8269 = vmatpush.bf16.xpose.msra.mxu0 0
    %8270 = vmatpush.bf16.xpose.msra.mxu0 0
    %8271 = vmatpush.bf16.xpose.msra.mxu0 0
    %8272 = vmatpush.bf16.xpose.msra.mxu0 0
    %8273 = vmatpush.bf16.xpose.msra.mxu0 0
    %8274 = vmatpush.bf16.xpose.msra.mxu0 %v8160
    %8275 = vmatpush.bf16.xpose.msra.mxu0 %v8144
    %8276 = vmatmul.bf16.gmra.mxu0 %v7996
    %v8277 = vpop.f32.mrf.mxu0
    %v8278 = vadd.f32 %v8265, %v8277
    %v8279 = vpop.f32.mrf.mxu0
    %8280 = vdwg.mxu0
    %8281 = vmatpush.bf16.xpose.msra.mxu0 0
    %8282 = vmatpush.bf16.xpose.msra.mxu0 0
    %8283 = vmatpush.bf16.xpose.msra.mxu0 0
    %8284 = vmatpush.bf16.xpose.msra.mxu0 0
    %8285 = vmatpush.bf16.xpose.msra.mxu0 0
    %8286 = vmatpush.bf16.xpose.msra.mxu0 0
    %8287 = vmatpush.bf16.xpose.msra.mxu0 %v8161
    %8288 = vmatpush.bf16.xpose.msra.mxu0 %v8145
    %8289 = vmatmul.bf16.gmra.mxu0 %v7997
    %v8290 = vpop.f32.mrf.mxu0
    %v8291 = vadd.f32 %v8278, %v8290
    %v8292 = vpop.f32.mrf.mxu0
    %8293 = vdwg.mxu0
    %8294 = vmatpush.bf16.xpose.msra.mxu0 0
    %8295 = vmatpush.bf16.xpose.msra.mxu0 0
    %8296 = vmatpush.bf16.xpose.msra.mxu0 0
    %8297 = vmatpush.bf16.xpose.msra.mxu0 0
    %8298 = vmatpush.bf16.xpose.msra.mxu0 0
    %8299 = vmatpush.bf16.xpose.msra.mxu0 0
    %8300 = vmatpush.bf16.xpose.msra.mxu0 %v8162
    %8301 = vmatpush.bf16.xpose.msra.mxu0 %v8146
    %8302 = vmatmul.bf16.gmra.mxu0 %v7998
    %v8303 = vpop.f32.mrf.mxu0
    %v8304 = vadd.f32 %v8291, %v8303
    %v8305 = vpop.f32.mrf.mxu0
    %8306 = vdwg.mxu0
    %8307 = vmatpush.bf16.xpose.msra.mxu0 0
    %8308 = vmatpush.bf16.xpose.msra.mxu0 0
    %8309 = vmatpush.bf16.xpose.msra.mxu0 0
    %8310 = vmatpush.bf16.xpose.msra.mxu0 0
    %8311 = vmatpush.bf16.xpose.msra.mxu0 0
    %8312 = vmatpush.bf16.xpose.msra.mxu0 0
    %8313 = vmatpush.bf16.xpose.msra.mxu0 %v8163
    %8314 = vmatpush.bf16.xpose.msra.mxu0 %v8147
    %8315 = vmatmul.bf16.gmra.mxu0 %v7999
    %v8316 = vpop.f32.mrf.mxu0
    %v8317 = vadd.f32 %v8304, %v8316
    %v8318 = vpop.f32.mrf.mxu0
    %8319 = vdwg.mxu0
    %8320 = vmatpush.bf16.xpose.msra.mxu0 0
    %8321 = vmatpush.bf16.xpose.msra.mxu0 0
    %8322 = vmatpush.bf16.xpose.msra.mxu0 0
    %8323 = vmatpush.bf16.xpose.msra.mxu0 0
    %8324 = vmatpush.bf16.xpose.msra.mxu0 0
    %8325 = vmatpush.bf16.xpose.msra.mxu0 0
    %8326 = vmatpush.bf16.xpose.msra.mxu0 %v8164
    %8327 = vmatpush.bf16.xpose.msra.mxu0 %v8148
    %8328 = vmatmul.bf16.gmra.mxu0 %v8000
    %v8329 = vpop.f32.mrf.mxu0
    %v8330 = vadd.f32 %v8317, %v8329
    %v8331 = vpop.f32.mrf.mxu0
    %8332 = vdwg.mxu0
    %8333 = vmatpush.bf16.xpose.msra.mxu0 0
    %8334 = vmatpush.bf16.xpose.msra.mxu0 0
    %8335 = vmatpush.bf16.xpose.msra.mxu0 0
    %8336 = vmatpush.bf16.xpose.msra.mxu0 0
    %8337 = vmatpush.bf16.xpose.msra.mxu0 0
    %8338 = vmatpush.bf16.xpose.msra.mxu0 0
    %8339 = vmatpush.bf16.xpose.msra.mxu0 %v8165
    %8340 = vmatpush.bf16.xpose.msra.mxu0 %v8149
    %8341 = vmatmul.bf16.gmra.mxu0 %v8001
    %v8342 = vpop.f32.mrf.mxu0
    %v8343 = vadd.f32 %v8330, %v8342
    %v8344 = vpop.f32.mrf.mxu0
    %8345 = vdwg.mxu0
    %8346 = vmatpush.bf16.xpose.msra.mxu0 0
    %8347 = vmatpush.bf16.xpose.msra.mxu0 0
    %8348 = vmatpush.bf16.xpose.msra.mxu0 0
    %8349 = vmatpush.bf16.xpose.msra.mxu0 0
    %8350 = vmatpush.bf16.xpose.msra.mxu0 0
    %8351 = vmatpush.bf16.xpose.msra.mxu0 0
    %8352 = vmatpush.bf16.xpose.msra.mxu0 %v8166
    %8353 = vmatpush.bf16.xpose.msra.mxu0 %v8150
    %8354 = vmatmul.bf16.gmra.mxu0 %v8002
    %v8355 = vpop.f32.mrf.mxu0
    %v8356 = vadd.f32 %v8343, %v8355
    %v8357 = vpop.f32.mrf.mxu0
    %8358 = vdwg.mxu0
    %8359 = vmatpush.bf16.xpose.msra.mxu0 0
    %8360 = vmatpush.bf16.xpose.msra.mxu0 0
    %8361 = vmatpush.bf16.xpose.msra.mxu0 0
    %8362 = vmatpush.bf16.xpose.msra.mxu0 0
    %8363 = vmatpush.bf16.xpose.msra.mxu0 0
    %8364 = vmatpush.bf16.xpose.msra.mxu0 0
    %8365 = vmatpush.bf16.xpose.msra.mxu0 %v8167
    %8366 = vmatpush.bf16.xpose.msra.mxu0 %v8151
    %8367 = vmatmul.bf16.gmra.mxu0 %v8003
    %v8368 = vpop.f32.mrf.mxu0
    %v8369 = vadd.f32 %v8356, %v8368
    %v8370 = vpop.f32.mrf.mxu0
    %8371 = vdwg.mxu0
    %8372 = vmatpush.bf16.xpose.msra.mxu0 0
    %8373 = vmatpush.bf16.xpose.msra.mxu0 0
    %8374 = vmatpush.bf16.xpose.msra.mxu0 0
    %8375 = vmatpush.bf16.xpose.msra.mxu0 0
    %8376 = vmatpush.bf16.xpose.msra.mxu0 0
    %8377 = vmatpush.bf16.xpose.msra.mxu0 0
    %8378 = vmatpush.bf16.xpose.msra.mxu0 %v8168
    %8379 = vmatpush.bf16.xpose.msra.mxu0 %v8152
    %8380 = vmatmul.bf16.gmra.mxu0 %v8004
    %v8381 = vpop.f32.mrf.mxu0
    %v8382 = vadd.f32 %v8369, %v8381
    %v8383 = vpop.f32.mrf.mxu0
    %8384 = vdwg.mxu0
    %8385 = vmatpush.bf16.xpose.msra.mxu0 0
    %8386 = vmatpush.bf16.xpose.msra.mxu0 0
    %8387 = vmatpush.bf16.xpose.msra.mxu0 0
    %8388 = vmatpush.bf16.xpose.msra.mxu0 0
    %8389 = vmatpush.bf16.xpose.msra.mxu0 0
    %8390 = vmatpush.bf16.xpose.msra.mxu0 0
    %8391 = vmatpush.bf16.xpose.msra.mxu0 %v8169
    %8392 = vmatpush.bf16.xpose.msra.mxu0 %v8153
    %8393 = vmatmul.bf16.gmra.mxu0 %v8005
    %v8394 = vpop.f32.mrf.mxu0
    %v8395 = vadd.f32 %v8382, %v8394
    %v8396 = vpop.f32.mrf.mxu0
    %8397 = vdwg.mxu0
    %8398 = vmatpush.bf16.xpose.msra.mxu0 0
    %8399 = vmatpush.bf16.xpose.msra.mxu0 0
    %8400 = vmatpush.bf16.xpose.msra.mxu0 0
    %8401 = vmatpush.bf16.xpose.msra.mxu0 0
    %8402 = vmatpush.bf16.xpose.msra.mxu0 0
    %8403 = vmatpush.bf16.xpose.msra.mxu0 0
    %8404 = vmatpush.bf16.xpose.msra.mxu0 %v8170
    %8405 = vmatpush.bf16.xpose.msra.mxu0 %v8154
    %8406 = vmatmul.bf16.gmra.mxu0 %v8006
    %v8407 = vpop.f32.mrf.mxu0
    %v8408 = vadd.f32 %v8395, %v8407
    %v8409 = vpop.f32.mrf.mxu0
    %8410 = vdwg.mxu0
    %v8411 = vmax.f32 %v8408, 0.0
    %v8412 = vld [vmem:[%s5] sm:$0xff]
    %v8413 = vld [vmem:[%s5 + $0x8] sm:$0xff]
    %v8414 = vld [vmem:[%s5 + $0x10] sm:$0xff]
    %v8415 = vld [vmem:[%s5 + $0x18] sm:$0xff]
    %v8416 = vld [vmem:[#allocation9] sm:$0x1]
    %v8418 = vperm.slane %v8416, 0
    %vm8420 = vcmask 261120
    %v8422 = vsel %vm8420, %v8411, 0
    %8424 = vmatpush.msra.mxu0 0.0
    %8425 = vmatpush.msra.mxu0 0.0
    %8426 = vmatpush.msra.mxu0 0.0
    %8427 = vmatpush.msra.mxu0 0.0
    %8428 = vmatpush.msra.mxu0 0.0
    %8429 = vmatpush.msra.mxu0 0.0
    %8430 = vmatpush.msra.mxu0 0.0
    %8431 = vmatpush.msra.mxu0 0.0
    %8432 = vmatpush.msra.mxu0 0.0
    %8433 = vmatpush.msra.mxu0 0.0
    %8434 = vmatpush.msra.mxu0 0.0
    %8435 = vmatpush.msra.mxu0 0.0
    %8436 = vmatpush.msra.mxu0 %v8415
    %8437 = vmatpush.msra.mxu0 %v8414
    %8438 = vmatpush.msra.mxu0 %v8413
    %8439 = vmatpush.msra.mxu0 %v8412
    %8440 = vmatmul.f32.gmra.mxu0 %v8422
    %v8441 = vpop.f32.mrf.mxu0
    %v8442 = vadd.f32 %v8418, %v8441
    %8443 = vdwg.mxu0
    %vm8444 = vcmask 80896
    %8445 = vst.msk [vmem:[%s7] sm:$0xff] %vm8444, %v8442
    // Predicated region
    $region50: #{merge_models_forward.1} parent=1 // pred_check
      _
    $region51: #{merge_models_forward.1} parent=1 // pred_check_branch
      %8447 = sbr.rel (0) target = $region53
    $region52: #{merge_models_forward.1} parent=1 // pred_region
      _
    $region53: #{merge_models_forward.1} parent=1 // pred_fallthru
      _
    // Predicated region
    $region54: #{merge_models_forward.1} parent=1 // pred_check
      _
    $region55: #{merge_models_forward.1} parent=1 // pred_check_branch
      %8449 = sbr.rel (0) target = $region57
    $region56: #{merge_models_forward.1} parent=1 // pred_region
      _
    $region57: #{merge_models_forward.1} parent=1 // pred_fallthru
      _
    %8450 = vsyncpa [#allocation3], 1
    %8451 = vsyncpa [#allocation5], 1
    %8452 = vsyncpa [#allocation8], 1

</llo_original>
